<compile_context>
chip_gen: v6e
topology: v6e:2x2x1
jax: 0.10.0
libtpu: 0.0.40
codegen_flags: <defaults>
</compile_context>

<pallas_src>
import functools

import numpy as np
import jax
import jax.numpy as jnp
from jax import lax
from jax.experimental import pallas as pl
from jax.experimental.pallas import tpu as pltpu

EPS = 1e-5          # nn.GroupNorm default eps
NEG_SLOPE = 0.01    # nn.LeakyReLU default negative_slope

_VMEM = pl.BlockSpec(memory_space=pltpu.MemorySpace.VMEM)


# ------------------------------ fused kernel --------------------------------

def _unet_kernel(meta, x_ref, a_ref, b_ref, v_ref, out_ref):
    refs = {"A": a_ref, "B": b_ref, "V": v_ref}

    def ld(ent):
        sid, off, r, c = ent
        return refs[sid][off:off + r, 0:c]

    def bf(v):
        return v.astype(jnp.bfloat16)

    def dot(a, b):
        return jnp.dot(a, b, preferred_element_type=jnp.float32)

    def gn(y, g_ent, b_ent, lrelu):
        # GroupNorm(num_groups=1): single-pass stats over the whole (C, L) tensor.
        inv_n = 1.0 / float(y.shape[0] * y.shape[1])
        mu = jnp.sum(y) * inv_n
        var = jnp.maximum(jnp.sum(y * y) * inv_n - mu * mu, 0.0)
        yn = (y - mu) * (lax.rsqrt(var + EPS) * ld(g_ent)) + ld(b_ent)
        if lrelu:
            yn = jnp.where(yn >= 0.0, yn, NEG_SLOPE * yn)
        return yn

    def conv3(xv, w_ent, b_ent, shifts):
        # k=3, s=1, p=1 conv as ONE K=3*cin matmul on an im2col-stacked input.
        if shifts is None:                       # L == 1: side taps are all padding
            xm = jnp.zeros_like(xv)
            xp = jnp.zeros_like(xv)
        else:
            xb = bf(xv)
            xm = dot(xb, ld(shifts[0]))          # x[:, j-1]
            xp = dot(xb, ld(shifts[1]))          # x[:, j+1]
        stacked = bf(jnp.concatenate([xm, xv, xp], axis=0))      # (3*cin, L)
        return dot(ld(w_ent), stacked) + ld(b_ent)

    def conv3_wide(h, w_taps, b_ent, shifts):
        # T0a's second conv (cin == 300): per-tap K=300 matmuls keep the slab narrow.
        hb = bf(h)
        hm = bf(dot(hb, ld(shifts[0])))
        hp = bf(dot(hb, ld(shifts[1])))
        y = dot(ld(w_taps[0]), hm)
        y = y + dot(ld(w_taps[1]), hb)
        y = y + dot(ld(w_taps[2]), hp)
        return y + ld(b_ent)

    def conv_down(xv, w_ent, b_ent, s_ents):
        # stride == kernel_size, p=0 conv as ONE K=k*cin matmul (im2col stacking).
        xb = bf(xv)
        taps = [dot(xb, ld(e)) for e in s_ents]                   # x[:, j*k + kk]
        stacked = bf(jnp.concatenate(taps, axis=0))               # (k*cin, L_out)
        return dot(ld(w_ent), stacked) + ld(b_ent)

    def block(xv, m, shifts_in, shifts_out, s_ents, lane_major_x=False):
        # res_path and conv[0] are computed together (row-stacked weights).
        cout = m["cout"]
        if lane_major_x:
            # T0a (1x1 conv); x arrives L-major (L, Cin): contract dim 1 of both.
            yrc = lax.dot_general(
                ld(m["wrc"]), bf(xv), (((1,), (1,)), ((), ())),
                preferred_element_type=jnp.float32) + ld(m["brc"])
        elif s_ents is not None:
            yrc = conv_down(xv, m["wrc"], m["brc"], s_ents)
        else:
            yrc = conv3(xv, m["wrc"], m["brc"], shifts_in)
        res = yrc[:cout, :]
        h = gn(yrc[cout:, :], m["gn1_g"], m["gn1_b"], True)
        if m["w2_taps"] is not None:
            h = conv3_wide(h, m["w2_taps"], m["b2"], shifts_out)
        else:
            h = conv3(h, m["w2"], m["b2"], shifts_out)
        return gn(res + h, m["gno_g"], m["gno_b"], True)

    def merge(skip, xv, m):
        l_out = skip.shape[1]
        if m["u"] is None:                       # upsample from L == 1 == broadcast
            xu = jnp.broadcast_to(xv, (xv.shape[0], l_out))
        else:                                    # nearest upsample via 0/1 matmul
            xu = dot(bf(xv), ld(m["u"]))
        xu = gn(xu, m["n1_g"], m["n1_b"], False)
        sk = gn(skip, m["n2_g"], m["n2_b"], False)
        both = bf(jnp.concatenate([xu, sk], axis=0))              # [x_up; skip]
        return dot(ld(m["p"]), both) + ld(m["pb"])                # fused p1/p2

    x = x_ref[...]                                                # (100, 300) f32

    t0a = block(x, meta["T0a"], None, meta["r100"], None, lane_major_x=True)  # (h,100)
    t1a = block(t0a, meta["T1a"], None, meta["r20"], meta["S1"])              # (h, 20)
    t2a = block(t1a, meta["T2a"], None, meta["r4"], meta["S2"])               # (h, 4)
    t3a = block(t2a, meta["T3a"], None, None, meta["S3"])                     # (h, 1)
    m3 = merge(t2a, t3a, meta["M3"])                                          # (h, 4)
    t2b = block(m3, meta["T2b"], meta["r4"], meta["r4"], None)                # (h, 4)
    m2 = merge(t1a, t2b, meta["M2"])                                          # (h, 20)
    t1b = block(m2, meta["T1b"], meta["r20"], meta["r20"], None)              # (h, 20)
    m1 = merge(t0a, t1b, meta["M1"])                                          # (h,100)
    t0b = block(m1, meta["T0b"], meta["r100"], meta["r100"], None)            # (h,100)

    out_ref[...] = dot(ld(meta["head_w"]), bf(t0b)) + ld(meta["head_b"])      # (300,100)


# ------------------- host-side packing into contiguous slabs -----------------

class _Slab:
    """Row-stacked 2D slab builder; every entry starts at an 8-aligned row."""

    def __init__(self, width, sid):
        self.width = width
        self.sid = sid
        self.blocks = []
        self.n = 0

    def add(self, arr):
        arr = np.asarray(arr, np.float32)
        if arr.ndim == 1:
            arr = arr[:, None]
        r, c = arr.shape
        assert c <= self.width, (arr.shape, self.width)
        rp = -(-r // 8) * 8
        blk = np.zeros((rp, self.width), np.float32)
        blk[:r, :c] = arr
        ent = (self.sid, self.n, r, c)
        self.blocks.append(blk)
        self.n += rp
        return ent

    def finish(self, dtype):
        return jnp.asarray(np.concatenate(self.blocks, axis=0), dtype=dtype)


def _pack_conv_w(w):
    # (cout, cin, k) -> (cout, k*cin), tap-major column blocks (matches im2col stack)
    w = np.asarray(w, np.float32)
    cout, cin, k = w.shape
    return w.transpose(0, 2, 1).reshape(cout, k * cin)


def _shift_mats(l):
    # r0: (x @ r0)[:, j] == x[:, j-1] (zero at j=0);  r1: (x @ r1)[:, j] == x[:, j+1]
    r = np.zeros((2, l, l), np.float32)
    for j in range(1, l):
        r[0, j - 1, j] = 1.0
        r[1, j, j - 1] = 1.0
    return r


def _down_taps(l_in, k):
    # stride == kernel_size, p=0:  (x @ s[kk])[:, j] == x[:, j*k + kk]
    l_out = l_in // k
    s = np.zeros((k, l_in, l_out), np.float32)
    for kk in range(k):
        for j in range(l_out):
            s[kk, j * k + kk, j] = 1.0
    return s


def _upsample_mat(l_small, scale):
    # (x @ u)[:, j] == x[:, j // scale]   (nn.Upsample, mode='nearest')
    u = np.zeros((l_small, l_small * scale), np.float32)
    for j in range(l_small * scale):
        u[j // scale, j] = 1.0
    return u


def prepare_inputs(params):
    """Pack every parameter / selection matrix into 3 contiguous slabs.

    Returns (slabs, meta) where slabs = {"A": bf16, "B": bf16, "V": f32} and meta
    holds only static (slab-id, row-offset, rows, cols) tuples + ints."""
    A = _Slab(300, "A")      # bf16: wide weights (K up to 300)
    B = _Slab(100, "B")      # bf16: narrow weights + 0/1 selection matrices
    V = _Slab(1, "V")        # f32: biases and GroupNorm gamma/beta columns

    def wadd(arr):
        arr = np.asarray(arr, np.float32)
        return (B if arr.shape[1] <= 100 else A).add(arr)

    meta = {}

    def prep_block(name, p):
        cout = int(np.asarray(p["res_w"]).shape[0])
        wrc = np.concatenate([_pack_conv_w(p["res_w"]), _pack_conv_w(p["c1_w"])], axis=0)
        m = dict(
            cout=cout,
            wrc=wadd(wrc),
            brc=V.add(np.concatenate([np.asarray(p["res_b"]), np.asarray(p["c1_b"])])),
            gn1_g=V.add(p["gn1_g"]), gn1_b=V.add(p["gn1_b"]),
            b2=V.add(p["c2_b"]),
            gno_g=V.add(p["gno_g"]), gno_b=V.add(p["gno_b"]),
            w2=None, w2_taps=None,
        )
        w2 = _pack_conv_w(p["c2_w"])
        if w2.shape[1] <= A.width:
            m["w2"] = wadd(w2)
        else:   # T0a: embed = 300 -> keep per-tap K=300 blocks instead of K=900
            c2 = np.asarray(p["c2_w"], np.float32)
            m["w2_taps"] = tuple(wadd(c2[:, :, t]) for t in range(c2.shape[2]))
        meta[name] = m

    for name in ("T0a", "T1a", "T2a", "T3a", "T2b", "T1b", "T0b"):
        prep_block(name, params[name])

    def prep_merge(name, p, l_small, scale):
        pcat = np.concatenate([np.asarray(p["p1_w"])[:, :, 0],
                               np.asarray(p["p2_w"])[:, :, 0]], axis=1)
        meta[name] = dict(
            p=wadd(pcat),
            pb=V.add(np.asarray(p["p1_b"]) + np.asarray(p["p2_b"])),
            n1_g=V.add(p["n1_g"]), n1_b=V.add(p["n1_b"]),
            n2_g=V.add(p["n2_g"]), n2_b=V.add(p["n2_b"]),
            u=None if l_small == 1 else wadd(_upsample_mat(l_small, scale)),
        )

    prep_merge("M3", params["M3"], 1, 4)
    prep_merge("M2", params["M2"], 4, 5)
    prep_merge("M1", params["M1"], 20, 5)

    meta["head_w"] = wadd(params["head"]["w"])             # (300, h)
    meta["head_b"] = V.add(params["head"]["b"])

    for l in (100, 20, 4):
        r = _shift_mats(l)
        meta[f"r{l}"] = (wadd(r[0]), wadd(r[1]))
    meta["S1"] = tuple(wadd(s) for s in _down_taps(100, 5))   # T1a: L=100, k=s=5
    meta["S2"] = tuple(wadd(s) for s in _down_taps(20, 5))    # T2a: L=20,  k=s=5
    meta["S3"] = tuple(wadd(s) for s in _down_taps(4, 4))     # T3a: L=4,   k=s=4

    slabs = dict(A=A.finish(jnp.bfloat16), B=B.finish(jnp.bfloat16),
                 V=V.finish(jnp.float32))
    return slabs, meta


# ------------------------------ wrapper / glue -------------------------------

def build_forward(meta):
    kernel = functools.partial(_unet_kernel, meta)
    cost = pl.CostEstimate(flops=50_000_000, transcendentals=64,
                           bytes_accessed=1_200_000)

    def forward(slabs, x1, x2):
        del x2   # x2 is unused in the reference forward()
        # get_patch (without the final permute): (2*5000, 3) -> (100, 300), L-major
        x = x1.reshape(2, 100, 50, 3).transpose(1, 0, 2, 3).reshape(100, 300)
        head = pl.pallas_call(
            kernel,
            out_shape=jax.ShapeDtypeStruct((300, 100), jnp.float32),
            in_specs=[_VMEM, _VMEM, _VMEM, _VMEM],
            out_specs=_VMEM,
            compiler_params=pltpu.CompilerParams(vmem_limit_bytes=32 * 1024 * 1024),
            cost_estimate=cost,
        )(x, slabs["A"], slabs["B"], slabs["V"])
        # un_patch: (300, 100) -> (100, 2, 50, 3) -> (2, 100, 50, 3) -> (10000, 3)
        return head.T.reshape(100, 2, 50, 3).transpose(1, 0, 2, 3).reshape(-1, 3)

    return forward


# --------------------------- deterministic init ------------------------------

def init_conv(key, cout, cin, k):
    kw, kb = jax.random.split(key)
    lim = 1.0 / np.sqrt(cin * k)
    w = jax.random.uniform(kw, (cout, cin, k), jnp.float32, -lim, lim)
    b = jax.random.uniform(kb, (cout,), jnp.float32, -lim, lim)
    return w, b


def init_block(key, cin, cout, k):
    embed = max(cin, cout)
    k0, k1, k2 = jax.random.split(key, 3)
    rw, rb = init_conv(k0, cout, cin, k)
    c1w, c1b = init_conv(k1, embed, cin, k)
    c2w, c2b = init_conv(k2, cout, embed, 3)
    return dict(
        res_w=rw, res_b=rb,
        c1_w=c1w, c1_b=c1b,
        gn1_g=jnp.ones((embed,), jnp.float32), gn1_b=jnp.zeros((embed,), jnp.float32),
        c2_w=c2w, c2_b=c2b,
        gno_g=jnp.ones((cout,), jnp.float32), gno_b=jnp.zeros((cout,), jnp.float32),
    )


def init_merge(key, cin, cout, cskip):
    k0, k1 = jax.random.split(key)
    p1w, p1b = init_conv(k0, cout, cin, 1)
    p2w, p2b = init_conv(k1, cout, cskip, 1)
    return dict(
        n1_g=jnp.ones((cin,), jnp.float32), n1_b=jnp.zeros((cin,), jnp.float32),
        n2_g=jnp.ones((cskip,), jnp.float32), n2_b=jnp.zeros((cskip,), jnp.float32),
        p1_w=p1w, p1_b=p1b, p2_w=p2w, p2_b=p2b,
    )


def init_linear(key, cout, cin):
    kw, kb = jax.random.split(key)
    lim = 1.0 / np.sqrt(cin)
    w = jax.random.uniform(kw, (cout, cin), jnp.float32, -lim, lim)
    b = jax.random.uniform(kb, (cout,), jnp.float32, -lim, lim)
    return w, b


def init_unet(key, h_dim):
    ks = jax.random.split(key, 11)
    in_ch = 50 * 2 * 3  # 300
    params = {
        "T0a": init_block(ks[0], in_ch, h_dim, 1),
        "T1a": init_block(ks[1], h_dim, h_dim, 5),
        "T2a": init_block(ks[2], h_dim, h_dim, 5),
        "T3a": init_block(ks[3], h_dim, h_dim, 4),
        "M3": init_merge(ks[4], h_dim, h_dim, h_dim),
        "T2b": init_block(ks[5], h_dim, h_dim, 3),
        "M2": init_merge(ks[6], h_dim, h_dim, h_dim),
        "T1b": init_block(ks[7], h_dim, h_dim, 3),
        "M1": init_merge(ks[8], h_dim, h_dim, h_dim),
        "T0b": init_block(ks[9], h_dim, h_dim, 3),
    }
    hw, hb = init_linear(ks[10], 50 * 3 * 2, h_dim)
    params["head"] = dict(w=hw, b=hb)
    return params


# ---------------------------------- main -------------------------------------

if __name__ == "__main__":
    key = jax.random.PRNGKey(0)
    k_param, k_x1, k_x2 = jax.random.split(key, 3)

    h_dim = 32  # hidden dim; patch geometry (C=300, L=100) is fixed by get_patch
    params = init_unet(k_param, h_dim)
    slabs, meta = prepare_inputs(params)   # host-side packing, done once

    # get_patch requires x1 to view as (2, 5000, 3)  ->  x1: (10000, 3)
    x1 = jax.random.normal(k_x1, (2 * 5000, 3), jnp.float32)
    x2 = jax.random.normal(k_x2, (8,), jnp.float32)  # unused by forward()

    fwd = jax.jit(build_forward(meta))
    out = jax.block_until_ready(fwd(slabs, x1, x2))

    assert out.shape == (10000, 3) and out.dtype == jnp.float32
    assert bool(jnp.all(jnp.isfinite(out)))
    print("KERNEL_OK")
</pallas_src>

<mosaic_0001>
module attributes {stable_mosaic.version = 11 : i64} {
  func.func @_unet_kernel(%arg0: memref<100x300xf32, #tpu.memory_space<vmem>>, %arg1: memref<624x300xbf16, #tpu.memory_space<vmem>>, %arg2: memref<1760x100xbf16, #tpu.memory_space<vmem>>, %arg3: memref<3168x1xf32, #tpu.memory_space<vmem>>, %arg4: memref<300x100xf32, #tpu.memory_space<vmem>>) attributes {dimension_semantics = [], scalar_prefetch = 0 : i64, scratch_operands = 0 : i64, tpu.core_type = #tpu.core_type<tc>} {
    %c0 = arith.constant 0 : index
    %c0_0 = arith.constant 0 : index
    %0 = vector.load %arg0[%c0, %c0_0] : memref<100x300xf32, #tpu.memory_space<vmem>>, vector<100x300xf32>
    %c0_1 = arith.constant 0 : index
    %c0_2 = arith.constant 0 : index
    %1 = vector.load %arg1[%c0_1, %c0_2] : memref<624x300xbf16, #tpu.memory_space<vmem>>, vector<332x300xbf16>
    %2 = arith.truncf %0 : vector<100x300xf32> to vector<100x300xbf16>
    %cst = arith.constant dense<0.000000e+00> : vector<332x100xf32>
    %3 = tpu.matmul %1, %2, %cst {dimension_numbers = #tpu.dot_dimension_numbers<[1], [1], [0], [0], [0, 0, 1, 0], [], []>} : vector<332x300xbf16>, vector<100x300xbf16>, vector<332x100xf32> -> vector<332x100xf32>
    %c0_3 = arith.constant 0 : index
    %c0_4 = arith.constant 0 : index
    %4 = vector.load %arg3[%c0_3, %c0_4] : memref<3168x1xf32, #tpu.memory_space<vmem>>, vector<332x1xf32>
    %5 = vector.broadcast %4 : vector<332x1xf32> to vector<332x100xf32>
    %6 = arith.addf %3, %5 : vector<332x100xf32>
    %7 = vector.extract_strided_slice %6 {offsets = [0, 0], sizes = [32, 100], strides = [1, 1]} : vector<332x100xf32> to vector<32x100xf32>
    %8 = vector.extract_strided_slice %6 {offsets = [32, 0], sizes = [300, 100], strides = [1, 1]} : vector<332x100xf32> to vector<300x100xf32>
    %9 = vector.shape_cast %8 : vector<300x100xf32> to vector<1x300x100xf32>
    %cst_5 = arith.constant dense<0.000000e+00> : vector<1xf32>
    %10 = vector.multi_reduction <add>, %9, %cst_5 [1, 2] : vector<1x300x100xf32> to vector<1xf32>
    %11 = vector.shape_cast %10 : vector<1xf32> to vector<1x1x1xf32>
    %12 = vector.extract %11[0, 0, 0] : f32 from vector<1x1x1xf32>
    %cst_6 = arith.constant 3.33333337E-5 : f32
    %13 = arith.mulf %12, %cst_6 : f32
    %14 = arith.mulf %8, %8 : vector<300x100xf32>
    %15 = vector.shape_cast %14 : vector<300x100xf32> to vector<1x300x100xf32>
    %cst_7 = arith.constant dense<0.000000e+00> : vector<1xf32>
    %16 = vector.multi_reduction <add>, %15, %cst_7 [1, 2] : vector<1x300x100xf32> to vector<1xf32>
    %17 = vector.shape_cast %16 : vector<1xf32> to vector<1x1x1xf32>
    %18 = vector.extract %17[0, 0, 0] : f32 from vector<1x1x1xf32>
    %cst_8 = arith.constant 3.33333337E-5 : f32
    %19 = arith.mulf %18, %cst_8 : f32
    %20 = arith.mulf %13, %13 : f32
    %21 = arith.subf %19, %20 : f32
    %cst_9 = arith.constant 0.000000e+00 : f32
    %22 = arith.maximumf %21, %cst_9 : f32
    %23 = vector.broadcast %13 : f32 to vector<300x100xf32>
    %24 = arith.subf %8, %23 : vector<300x100xf32>
    %cst_10 = arith.constant 9.99999974E-6 : f32
    %25 = arith.addf %22, %cst_10 : f32
    %26 = math.rsqrt %25 : f32
    %c336 = arith.constant 336 : index
    %c0_11 = arith.constant 0 : index
    %27 = vector.load %arg3[%c336, %c0_11] : memref<3168x1xf32, #tpu.memory_space<vmem>>, vector<300x1xf32>
    %28 = vector.broadcast %26 : f32 to vector<300x1xf32>
    %29 = arith.mulf %28, %27 : vector<300x1xf32>
    %30 = vector.broadcast %29 : vector<300x1xf32> to vector<300x100xf32>
    %31 = arith.mulf %24, %30 : vector<300x100xf32>
    %c640 = arith.constant 640 : index
    %c0_12 = arith.constant 0 : index
    %32 = vector.load %arg3[%c640, %c0_12] : memref<3168x1xf32, #tpu.memory_space<vmem>>, vector<300x1xf32>
    %33 = vector.broadcast %32 : vector<300x1xf32> to vector<300x100xf32>
    %34 = arith.addf %31, %33 : vector<300x100xf32>
    %cst_13 = arith.constant 0.000000e+00 : f32
    %35 = vector.broadcast %cst_13 : f32 to vector<300x100xf32>
    %36 = arith.cmpf oge, %34, %35 : vector<300x100xf32>
    %cst_14 = arith.constant 0.00999999977 : f32
    %37 = vector.broadcast %cst_14 : f32 to vector<300x100xf32>
    %38 = arith.mulf %37, %34 : vector<300x100xf32>
    %39 = arith.select %36, %34, %38 : vector<300x100xi1>, vector<300x100xf32>
    %40 = arith.truncf %39 : vector<300x100xf32> to vector<300x100xbf16>
    %c816 = arith.constant 816 : index
    %c0_15 = arith.constant 0 : index
    %41 = vector.load %arg2[%c816, %c0_15] : memref<1760x100xbf16, #tpu.memory_space<vmem>>, vector<100x100xbf16>
    %cst_16 = arith.constant dense<0.000000e+00> : vector<300x100xf32>
    %42 = tpu.matmul %40, %41, %cst_16 {dimension_numbers = #tpu.dot_dimension_numbers<[1], [0], [0], [1], [0, 0, 1, 1], [], []>} : vector<300x100xbf16>, vector<100x100xbf16>, vector<300x100xf32> -> vector<300x100xf32>
    %43 = arith.truncf %42 : vector<300x100xf32> to vector<300x100xbf16>
    %c920 = arith.constant 920 : index
    %c0_17 = arith.constant 0 : index
    %44 = vector.load %arg2[%c920, %c0_17] : memref<1760x100xbf16, #tpu.memory_space<vmem>>, vector<100x100xbf16>
    %cst_18 = arith.constant dense<0.000000e+00> : vector<300x100xf32>
    %45 = tpu.matmul %40, %44, %cst_18 {dimension_numbers = #tpu.dot_dimension_numbers<[1], [0], [0], [1], [0, 0, 1, 1], [], []>} : vector<300x100xbf16>, vector<100x100xbf16>, vector<300x100xf32> -> vector<300x100xf32>
    %46 = arith.truncf %45 : vector<300x100xf32> to vector<300x100xbf16>
    %c336_19 = arith.constant 336 : index
    %c0_20 = arith.constant 0 : index
    %47 = vector.load %arg1[%c336_19, %c0_20] : memref<624x300xbf16, #tpu.memory_space<vmem>>, vector<32x300xbf16>
    %cst_21 = arith.constant dense<0.000000e+00> : vector<32x100xf32>
    %48 = tpu.matmul %47, %43, %cst_21 {dimension_numbers = #tpu.dot_dimension_numbers<[1], [0], [0], [1], [0, 0, 1, 1], [], []>} : vector<32x300xbf16>, vector<300x100xbf16>, vector<32x100xf32> -> vector<32x100xf32>
    %c368 = arith.constant 368 : index
    %c0_22 = arith.constant 0 : index
    %49 = vector.load %arg1[%c368, %c0_22] : memref<624x300xbf16, #tpu.memory_space<vmem>>, vector<32x300xbf16>
    %cst_23 = arith.constant dense<0.000000e+00> : vector<32x100xf32>
    %50 = tpu.matmul %49, %40, %cst_23 {dimension_numbers = #tpu.dot_dimension_numbers<[1], [0], [0], [1], [0, 0, 1, 1], [], []>} : vector<32x300xbf16>, vector<300x100xbf16>, vector<32x100xf32> -> vector<32x100xf32>
    %51 = arith.addf %48, %50 : vector<32x100xf32>
    %c400 = arith.constant 400 : index
    %c0_24 = arith.constant 0 : index
    %52 = vector.load %arg1[%c400, %c0_24] : memref<624x300xbf16, #tpu.memory_space<vmem>>, vector<32x300xbf16>
    %cst_25 = arith.constant dense<0.000000e+00> : vector<32x100xf32>
    %53 = tpu.matmul %52, %46, %cst_25 {dimension_numbers = #tpu.dot_dimension_numbers<[1], [0], [0], [1], [0, 0, 1, 1], [], []>} : vector<32x300xbf16>, vector<300x100xbf16>, vector<32x100xf32> -> vector<32x100xf32>
    %54 = arith.addf %51, %53 : vector<32x100xf32>
    %c944 = arith.constant 944 : index
    %c0_26 = arith.constant 0 : index
    %55 = vector.load %arg3[%c944, %c0_26] : memref<3168x1xf32, #tpu.memory_space<vmem>>, vector<32x1xf32>
    %56 = vector.broadcast %55 : vector<32x1xf32> to vector<32x100xf32>
    %57 = arith.addf %54, %56 : vector<32x100xf32>
    %58 = arith.addf %7, %57 : vector<32x100xf32>
    %59 = vector.shape_cast %58 : vector<32x100xf32> to vector<1x32x100xf32>
    %cst_27 = arith.constant dense<0.000000e+00> : vector<1xf32>
    %60 = vector.multi_reduction <add>, %59, %cst_27 [1, 2] : vector<1x32x100xf32> to vector<1xf32>
    %61 = vector.shape_cast %60 : vector<1xf32> to vector<1x1x1xf32>
    %62 = vector.extract %61[0, 0, 0] : f32 from vector<1x1x1xf32>
    %cst_28 = arith.constant 3.125000e-04 : f32
    %63 = arith.mulf %62, %cst_28 : f32
    %64 = arith.mulf %58, %58 : vector<32x100xf32>
    %65 = vector.shape_cast %64 : vector<32x100xf32> to vector<1x32x100xf32>
    %cst_29 = arith.constant dense<0.000000e+00> : vector<1xf32>
    %66 = vector.multi_reduction <add>, %65, %cst_29 [1, 2] : vector<1x32x100xf32> to vector<1xf32>
    %67 = vector.shape_cast %66 : vector<1xf32> to vector<1x1x1xf32>
    %68 = vector.extract %67[0, 0, 0] : f32 from vector<1x1x1xf32>
    %cst_30 = arith.constant 3.125000e-04 : f32
    %69 = arith.mulf %68, %cst_30 : f32
    %70 = arith.mulf %63, %63 : f32
    %71 = arith.subf %69, %70 : f32
    %cst_31 = arith.constant 0.000000e+00 : f32
    %72 = arith.maximumf %71, %cst_31 : f32
    %73 = vector.broadcast %63 : f32 to vector<32x100xf32>
    %74 = arith.subf %58, %73 : vector<32x100xf32>
    %cst_32 = arith.constant 9.99999974E-6 : f32
    %75 = arith.addf %72, %cst_32 : f32
    %76 = math.rsqrt %75 : f32
    %c976 = arith.constant 976 : index
    %c0_33 = arith.constant 0 : index
    %77 = vector.load %arg3[%c976, %c0_33] : memref<3168x1xf32, #tpu.memory_space<vmem>>, vector<32x1xf32>
    %78 = vector.broadcast %76 : f32 to vector<32x1xf32>
    %79 = arith.mulf %78, %77 : vector<32x1xf32>
    %80 = vector.broadcast %79 : vector<32x1xf32> to vector<32x100xf32>
    %81 = arith.mulf %74, %80 : vector<32x100xf32>
    %c1008 = arith.constant 1008 : index
    %c0_34 = arith.constant 0 : index
    %82 = vector.load %arg3[%c1008, %c0_34] : memref<3168x1xf32, #tpu.memory_space<vmem>>, vector<32x1xf32>
    %83 = vector.broadcast %82 : vector<32x1xf32> to vector<32x100xf32>
    %84 = arith.addf %81, %83 : vector<32x100xf32>
    %cst_35 = arith.constant 0.000000e+00 : f32
    %85 = vector.broadcast %cst_35 : f32 to vector<32x100xf32>
    %86 = arith.cmpf oge, %84, %85 : vector<32x100xf32>
    %cst_36 = arith.constant 0.00999999977 : f32
    %87 = vector.broadcast %cst_36 : f32 to vector<32x100xf32>
    %88 = arith.mulf %87, %84 : vector<32x100xf32>
    %89 = arith.select %86, %84, %88 : vector<32x100xi1>, vector<32x100xf32>
    %90 = arith.truncf %89 : vector<32x100xf32> to vector<32x100xbf16>
    %c1088 = arith.constant 1088 : index
    %c0_37 = arith.constant 0 : index
    %91 = vector.load %arg2[%c1088, %c0_37] : memref<1760x100xbf16, #tpu.memory_space<vmem>>, vector<100x20xbf16>
    %cst_38 = arith.constant dense<0.000000e+00> : vector<32x20xf32>
    %92 = tpu.matmul %90, %91, %cst_38 {dimension_numbers = #tpu.dot_dimension_numbers<[1], [0], [0], [1], [0, 0, 1, 1], [], []>} : vector<32x100xbf16>, vector<100x20xbf16>, vector<32x20xf32> -> vector<32x20xf32>
    %c1192 = arith.constant 1192 : index
    %c0_39 = arith.constant 0 : index
    %93 = vector.load %arg2[%c1192, %c0_39] : memref<1760x100xbf16, #tpu.memory_space<vmem>>, vector<100x20xbf16>
    %cst_40 = arith.constant dense<0.000000e+00> : vector<32x20xf32>
    %94 = tpu.matmul %90, %93, %cst_40 {dimension_numbers = #tpu.dot_dimension_numbers<[1], [0], [0], [1], [0, 0, 1, 1], [], []>} : vector<32x100xbf16>, vector<100x20xbf16>, vector<32x20xf32> -> vector<32x20xf32>
    %c1296 = arith.constant 1296 : index
    %c0_41 = arith.constant 0 : index
    %95 = vector.load %arg2[%c1296, %c0_41] : memref<1760x100xbf16, #tpu.memory_space<vmem>>, vector<100x20xbf16>
    %cst_42 = arith.constant dense<0.000000e+00> : vector<32x20xf32>
    %96 = tpu.matmul %90, %95, %cst_42 {dimension_numbers = #tpu.dot_dimension_numbers<[1], [0], [0], [1], [0, 0, 1, 1], [], []>} : vector<32x100xbf16>, vector<100x20xbf16>, vector<32x20xf32> -> vector<32x20xf32>
    %c1400 = arith.constant 1400 : index
    %c0_43 = arith.constant 0 : index
    %97 = vector.load %arg2[%c1400, %c0_43] : memref<1760x100xbf16, #tpu.memory_space<vmem>>, vector<100x20xbf16>
    %cst_44 = arith.constant dense<0.000000e+00> : vector<32x20xf32>
    %98 = tpu.matmul %90, %97, %cst_44 {dimension_numbers = #tpu.dot_dimension_numbers<[1], [0], [0], [1], [0, 0, 1, 1], [], []>} : vector<32x100xbf16>, vector<100x20xbf16>, vector<32x20xf32> -> vector<32x20xf32>
    %c1504 = arith.constant 1504 : index
    %c0_45 = arith.constant 0 : index
    %99 = vector.load %arg2[%c1504, %c0_45] : memref<1760x100xbf16, #tpu.memory_space<vmem>>, vector<100x20xbf16>
    %cst_46 = arith.constant dense<0.000000e+00> : vector<32x20xf32>
    %100 = tpu.matmul %90, %99, %cst_46 {dimension_numbers = #tpu.dot_dimension_numbers<[1], [0], [0], [1], [0, 0, 1, 1], [], []>} : vector<32x100xbf16>, vector<100x20xbf16>, vector<32x20xf32> -> vector<32x20xf32>
    %101 = tpu.concatenate %92, %94, %96, %98, %100 in 0 : vector<32x20xf32>, vector<32x20xf32>, vector<32x20xf32>, vector<32x20xf32>, vector<32x20xf32> -> vector<160x20xf32>
    %102 = arith.truncf %101 : vector<160x20xf32> to vector<160x20xbf16>
    %c432 = arith.constant 432 : index
    %c0_47 = arith.constant 0 : index
    %103 = vector.load %arg1[%c432, %c0_47] : memref<624x300xbf16, #tpu.memory_space<vmem>>, vector<64x160xbf16>
    %cst_48 = arith.constant dense<0.000000e+00> : vector<64x20xf32>
    %104 = tpu.matmul %103, %102, %cst_48 {dimension_numbers = #tpu.dot_dimension_numbers<[1], [0], [0], [1], [0, 0, 1, 1], [], []>} : vector<64x160xbf16>, vector<160x20xbf16>, vector<64x20xf32> -> vector<64x20xf32>
    %c1040 = arith.constant 1040 : index
    %c0_49 = arith.constant 0 : index
    %105 = vector.load %arg3[%c1040, %c0_49] : memref<3168x1xf32, #tpu.memory_space<vmem>>, vector<64x1xf32>
    %106 = vector.broadcast %105 : vector<64x1xf32> to vector<64x20xf32>
    %107 = arith.addf %104, %106 : vector<64x20xf32>
    %108 = vector.extract_strided_slice %107 {offsets = [0, 0], sizes = [32, 20], strides = [1, 1]} : vector<64x20xf32> to vector<32x20xf32>
    %109 = vector.extract_strided_slice %107 {offsets = [32, 0], sizes = [32, 20], strides = [1, 1]} : vector<64x20xf32> to vector<32x20xf32>
    %110 = vector.shape_cast %109 : vector<32x20xf32> to vector<1x32x20xf32>
    %cst_50 = arith.constant dense<0.000000e+00> : vector<1xf32>
    %111 = vector.multi_reduction <add>, %110, %cst_50 [1, 2] : vector<1x32x20xf32> to vector<1xf32>
    %112 = vector.shape_cast %111 : vector<1xf32> to vector<1x1x1xf32>
    %113 = vector.extract %112[0, 0, 0] : f32 from vector<1x1x1xf32>
    %cst_51 = arith.constant 1.562500e-03 : f32
    %114 = arith.mulf %113, %cst_51 : f32
    %115 = arith.mulf %109, %109 : vector<32x20xf32>
    %116 = vector.shape_cast %115 : vector<32x20xf32> to vector<1x32x20xf32>
    %cst_52 = arith.constant dense<0.000000e+00> : vector<1xf32>
    %117 = vector.multi_reduction <add>, %116, %cst_52 [1, 2] : vector<1x32x20xf32> to vector<1xf32>
    %118 = vector.shape_cast %117 : vector<1xf32> to vector<1x1x1xf32>
    %119 = vector.extract %118[0, 0, 0] : f32 from vector<1x1x1xf32>
    %cst_53 = arith.constant 1.562500e-03 : f32
    %120 = arith.mulf %119, %cst_53 : f32
    %121 = arith.mulf %114, %114 : f32
    %122 = arith.subf %120, %121 : f32
    %cst_54 = arith.constant 0.000000e+00 : f32
    %123 = arith.maximumf %122, %cst_54 : f32
    %124 = vector.broadcast %114 : f32 to vector<32x20xf32>
    %125 = arith.subf %109, %124 : vector<32x20xf32>
    %cst_55 = arith.constant 9.99999974E-6 : f32
    %126 = arith.addf %123, %cst_55 : f32
    %127 = math.rsqrt %126 : f32
    %c1104 = arith.constant 1104 : index
    %c0_56 = arith.constant 0 : index
    %128 = vector.load %arg3[%c1104, %c0_56] : memref<3168x1xf32, #tpu.memory_space<vmem>>, vector<32x1xf32>
    %129 = vector.broadcast %127 : f32 to vector<32x1xf32>
    %130 = arith.mulf %129, %128 : vector<32x1xf32>
    %131 = vector.broadcast %130 : vector<32x1xf32> to vector<32x20xf32>
    %132 = arith.mulf %125, %131 : vector<32x20xf32>
    %c1136 = arith.constant 1136 : index
    %c0_57 = arith.constant 0 : index
    %133 = vector.load %arg3[%c1136, %c0_57] : memref<3168x1xf32, #tpu.memory_space<vmem>>, vector<32x1xf32>
    %134 = vector.broadcast %133 : vector<32x1xf32> to vector<32x20xf32>
    %135 = arith.addf %132, %134 : vector<32x20xf32>
    %cst_58 = arith.constant 0.000000e+00 : f32
    %136 = vector.broadcast %cst_58 : f32 to vector<32x20xf32>
    %137 = arith.cmpf oge, %135, %136 : vector<32x20xf32>
    %cst_59 = arith.constant 0.00999999977 : f32
    %138 = vector.broadcast %cst_59 : f32 to vector<32x20xf32>
    %139 = arith.mulf %138, %135 : vector<32x20xf32>
    %140 = arith.select %137, %135, %139 : vector<32x20xi1>, vector<32x20xf32>
    %141 = arith.truncf %140 : vector<32x20xf32> to vector<32x20xbf16>
    %c1024 = arith.constant 1024 : index
    %c0_60 = arith.constant 0 : index
    %142 = vector.load %arg2[%c1024, %c0_60] : memref<1760x100xbf16, #tpu.memory_space<vmem>>, vector<20x20xbf16>
    %cst_61 = arith.constant dense<0.000000e+00> : vector<32x20xf32>
    %143 = tpu.matmul %141, %142, %cst_61 {dimension_numbers = #tpu.dot_dimension_numbers<[1], [0], [0], [1], [0, 0, 1, 1], [], []>} : vector<32x20xbf16>, vector<20x20xbf16>, vector<32x20xf32> -> vector<32x20xf32>
    %c1048 = arith.constant 1048 : index
    %c0_62 = arith.constant 0 : index
    %144 = vector.load %arg2[%c1048, %c0_62] : memref<1760x100xbf16, #tpu.memory_space<vmem>>, vector<20x20xbf16>
    %cst_63 = arith.constant dense<0.000000e+00> : vector<32x20xf32>
    %145 = tpu.matmul %141, %144, %cst_63 {dimension_numbers = #tpu.dot_dimension_numbers<[1], [0], [0], [1], [0, 0, 1, 1], [], []>} : vector<32x20xbf16>, vector<20x20xbf16>, vector<32x20xf32> -> vector<32x20xf32>
    %146 = tpu.concatenate %143, %140, %145 in 0 : vector<32x20xf32>, vector<32x20xf32>, vector<32x20xf32> -> vector<96x20xf32>
    %147 = arith.truncf %146 : vector<96x20xf32> to vector<96x20xbf16>
    %c0_64 = arith.constant 0 : index
    %c0_65 = arith.constant 0 : index
    %148 = vector.load %arg2[%c0_64, %c0_65] : memref<1760x100xbf16, #tpu.memory_space<vmem>>, vector<32x96xbf16>
    %cst_66 = arith.constant dense<0.000000e+00> : vector<32x20xf32>
    %149 = tpu.matmul %148, %147, %cst_66 {dimension_numbers = #tpu.dot_dimension_numbers<[1], [0], [0], [1], [0, 0, 1, 1], [], []>} : vector<32x96xbf16>, vector<96x20xbf16>, vector<32x20xf32> -> vector<32x20xf32>
    %c1168 = arith.constant 1168 : index
    %c0_67 = arith.constant 0 : index
    %150 = vector.load %arg3[%c1168, %c0_67] : memref<3168x1xf32, #tpu.memory_space<vmem>>, vector<32x1xf32>
    %151 = vector.broadcast %150 : vector<32x1xf32> to vector<32x20xf32>
    %152 = arith.addf %149, %151 : vector<32x20xf32>
    %153 = arith.addf %108, %152 : vector<32x20xf32>
    %154 = vector.shape_cast %153 : vector<32x20xf32> to vector<1x32x20xf32>
    %cst_68 = arith.constant dense<0.000000e+00> : vector<1xf32>
    %155 = vector.multi_reduction <add>, %154, %cst_68 [1, 2] : vector<1x32x20xf32> to vector<1xf32>
    %156 = vector.shape_cast %155 : vector<1xf32> to vector<1x1x1xf32>
    %157 = vector.extract %156[0, 0, 0] : f32 from vector<1x1x1xf32>
    %cst_69 = arith.constant 1.562500e-03 : f32
    %158 = arith.mulf %157, %cst_69 : f32
    %159 = arith.mulf %153, %153 : vector<32x20xf32>
    %160 = vector.shape_cast %159 : vector<32x20xf32> to vector<1x32x20xf32>
    %cst_70 = arith.constant dense<0.000000e+00> : vector<1xf32>
    %161 = vector.multi_reduction <add>, %160, %cst_70 [1, 2] : vector<1x32x20xf32> to vector<1xf32>
    %162 = vector.shape_cast %161 : vector<1xf32> to vector<1x1x1xf32>
    %163 = vector.extract %162[0, 0, 0] : f32 from vector<1x1x1xf32>
    %cst_71 = arith.constant 1.562500e-03 : f32
    %164 = arith.mulf %163, %cst_71 : f32
    %165 = arith.mulf %158, %158 : f32
    %166 = arith.subf %164, %165 : f32
    %cst_72 = arith.constant 0.000000e+00 : f32
    %167 = arith.maximumf %166, %cst_72 : f32
    %168 = vector.broadcast %158 : f32 to vector<32x20xf32>
    %169 = arith.subf %153, %168 : vector<32x20xf32>
    %cst_73 = arith.constant 9.99999974E-6 : f32
    %170 = arith.addf %167, %cst_73 : f32
    %171 = math.rsqrt %170 : f32
    %c1200 = arith.constant 1200 : index
    %c0_74 = arith.constant 0 : index
    %172 = vector.load %arg3[%c1200, %c0_74] : memref<3168x1xf32, #tpu.memory_space<vmem>>, vector<32x1xf32>
    %173 = vector.broadcast %171 : f32 to vector<32x1xf32>
    %174 = arith.mulf %173, %172 : vector<32x1xf32>
    %175 = vector.broadcast %174 : vector<32x1xf32> to vector<32x20xf32>
    %176 = arith.mulf %169, %175 : vector<32x20xf32>
    %c1232 = arith.constant 1232 : index
    %c0_75 = arith.constant 0 : index
    %177 = vector.load %arg3[%c1232, %c0_75] : memref<3168x1xf32, #tpu.memory_space<vmem>>, vector<32x1xf32>
    %178 = vector.broadcast %177 : vector<32x1xf32> to vector<32x20xf32>
    %179 = arith.addf %176, %178 : vector<32x20xf32>
    %cst_76 = arith.constant 0.000000e+00 : f32
    %180 = vector.broadcast %cst_76 : f32 to vector<32x20xf32>
    %181 = arith.cmpf oge, %179, %180 : vector<32x20xf32>
    %cst_77 = arith.constant 0.00999999977 : f32
    %182 = vector.broadcast %cst_77 : f32 to vector<32x20xf32>
    %183 = arith.mulf %182, %179 : vector<32x20xf32>
    %184 = arith.select %181, %179, %183 : vector<32x20xi1>, vector<32x20xf32>
    %185 = arith.truncf %184 : vector<32x20xf32> to vector<32x20xbf16>
    %c1608 = arith.constant 1608 : index
    %c0_78 = arith.constant 0 : index
    %186 = vector.load %arg2[%c1608, %c0_78] : memref<1760x100xbf16, #tpu.memory_space<vmem>>, vector<20x4xbf16>
    %cst_79 = arith.constant dense<0.000000e+00> : vector<32x4xf32>
    %187 = tpu.matmul %185, %186, %cst_79 {dimension_numbers = #tpu.dot_dimension_numbers<[1], [0], [0], [1], [0, 0, 1, 1], [], []>} : vector<32x20xbf16>, vector<20x4xbf16>, vector<32x4xf32> -> vector<32x4xf32>
    %c1632 = arith.constant 1632 : index
    %c0_80 = arith.constant 0 : index
    %188 = vector.load %arg2[%c1632, %c0_80] : memref<1760x100xbf16, #tpu.memory_space<vmem>>, vector<20x4xbf16>
    %cst_81 = arith.constant dense<0.000000e+00> : vector<32x4xf32>
    %189 = tpu.matmul %185, %188, %cst_81 {dimension_numbers = #tpu.dot_dimension_numbers<[1], [0], [0], [1], [0, 0, 1, 1], [], []>} : vector<32x20xbf16>, vector<20x4xbf16>, vector<32x4xf32> -> vector<32x4xf32>
    %c1656 = arith.constant 1656 : index
    %c0_82 = arith.constant 0 : index
    %190 = vector.load %arg2[%c1656, %c0_82] : memref<1760x100xbf16, #tpu.memory_space<vmem>>, vector<20x4xbf16>
    %cst_83 = arith.constant dense<0.000000e+00> : vector<32x4xf32>
    %191 = tpu.matmul %185, %190, %cst_83 {dimension_numbers = #tpu.dot_dimension_numbers<[1], [0], [0], [1], [0, 0, 1, 1], [], []>} : vector<32x20xbf16>, vector<20x4xbf16>, vector<32x4xf32> -> vector<32x4xf32>
    %c1680 = arith.constant 1680 : index
    %c0_84 = arith.constant 0 : index
    %192 = vector.load %arg2[%c1680, %c0_84] : memref<1760x100xbf16, #tpu.memory_space<vmem>>, vector<20x4xbf16>
    %cst_85 = arith.constant dense<0.000000e+00> : vector<32x4xf32>
    %193 = tpu.matmul %185, %192, %cst_85 {dimension_numbers = #tpu.dot_dimension_numbers<[1], [0], [0], [1], [0, 0, 1, 1], [], []>} : vector<32x20xbf16>, vector<20x4xbf16>, vector<32x4xf32> -> vector<32x4xf32>
    %c1704 = arith.constant 1704 : index
    %c0_86 = arith.constant 0 : index
    %194 = vector.load %arg2[%c1704, %c0_86] : memref<1760x100xbf16, #tpu.memory_space<vmem>>, vector<20x4xbf16>
    %cst_87 = arith.constant dense<0.000000e+00> : vector<32x4xf32>
    %195 = tpu.matmul %185, %194, %cst_87 {dimension_numbers = #tpu.dot_dimension_numbers<[1], [0], [0], [1], [0, 0, 1, 1], [], []>} : vector<32x20xbf16>, vector<20x4xbf16>, vector<32x4xf32> -> vector<32x4xf32>
    %196 = tpu.concatenate %187, %189, %191, %193, %195 in 0 : vector<32x4xf32>, vector<32x4xf32>, vector<32x4xf32>, vector<32x4xf32>, vector<32x4xf32> -> vector<160x4xf32>
    %197 = arith.truncf %196 : vector<160x4xf32> to vector<160x4xbf16>
    %c496 = arith.constant 496 : index
    %c0_88 = arith.constant 0 : index
    %198 = vector.load %arg1[%c496, %c0_88] : memref<624x300xbf16, #tpu.memory_space<vmem>>, vector<64x160xbf16>
    %cst_89 = arith.constant dense<0.000000e+00> : vector<64x4xf32>
    %199 = tpu.matmul %198, %197, %cst_89 {dimension_numbers = #tpu.dot_dimension_numbers<[1], [0], [0], [1], [0, 0, 1, 1], [], []>} : vector<64x160xbf16>, vector<160x4xbf16>, vector<64x4xf32> -> vector<64x4xf32>
    %c1264 = arith.constant 1264 : index
    %c0_90 = arith.constant 0 : index
    %200 = vector.load %arg3[%c1264, %c0_90] : memref<3168x1xf32, #tpu.memory_space<vmem>>, vector<64x1xf32>
    %201 = vector.broadcast %200 : vector<64x1xf32> to vector<64x4xf32>
    %202 = arith.addf %199, %201 : vector<64x4xf32>
    %203 = vector.extract_strided_slice %202 {offsets = [0, 0], sizes = [32, 4], strides = [1, 1]} : vector<64x4xf32> to vector<32x4xf32>
    %204 = vector.extract_strided_slice %202 {offsets = [32, 0], sizes = [32, 4], strides = [1, 1]} : vector<64x4xf32> to vector<32x4xf32>
    %205 = vector.shape_cast %204 : vector<32x4xf32> to vector<1x32x4xf32>
    %cst_91 = arith.constant dense<0.000000e+00> : vector<1xf32>
    %206 = vector.multi_reduction <add>, %205, %cst_91 [1, 2] : vector<1x32x4xf32> to vector<1xf32>
    %207 = vector.shape_cast %206 : vector<1xf32> to vector<1x1x1xf32>
    %208 = vector.extract %207[0, 0, 0] : f32 from vector<1x1x1xf32>
    %cst_92 = arith.constant 7.812500e-03 : f32
    %209 = arith.mulf %208, %cst_92 : f32
    %210 = arith.mulf %204, %204 : vector<32x4xf32>
    %211 = vector.shape_cast %210 : vector<32x4xf32> to vector<1x32x4xf32>
    %cst_93 = arith.constant dense<0.000000e+00> : vector<1xf32>
    %212 = vector.multi_reduction <add>, %211, %cst_93 [1, 2] : vector<1x32x4xf32> to vector<1xf32>
    %213 = vector.shape_cast %212 : vector<1xf32> to vector<1x1x1xf32>
    %214 = vector.extract %213[0, 0, 0] : f32 from vector<1x1x1xf32>
    %cst_94 = arith.constant 7.812500e-03 : f32
    %215 = arith.mulf %214, %cst_94 : f32
    %216 = arith.mulf %209, %209 : f32
    %217 = arith.subf %215, %216 : f32
    %cst_95 = arith.constant 0.000000e+00 : f32
    %218 = arith.maximumf %217, %cst_95 : f32
    %219 = vector.broadcast %209 : f32 to vector<32x4xf32>
    %220 = arith.subf %204, %219 : vector<32x4xf32>
    %cst_96 = arith.constant 9.99999974E-6 : f32
    %221 = arith.addf %218, %cst_96 : f32
    %222 = math.rsqrt %221 : f32
    %c1328 = arith.constant 1328 : index
    %c0_97 = arith.constant 0 : index
    %223 = vector.load %arg3[%c1328, %c0_97] : memref<3168x1xf32, #tpu.memory_space<vmem>>, vector<32x1xf32>
    %224 = vector.broadcast %222 : f32 to vector<32x1xf32>
    %225 = arith.mulf %224, %223 : vector<32x1xf32>
    %226 = vector.broadcast %225 : vector<32x1xf32> to vector<32x4xf32>
    %227 = arith.mulf %220, %226 : vector<32x4xf32>
    %c1360 = arith.constant 1360 : index
    %c0_98 = arith.constant 0 : index
    %228 = vector.load %arg3[%c1360, %c0_98] : memref<3168x1xf32, #tpu.memory_space<vmem>>, vector<32x1xf32>
    %229 = vector.broadcast %228 : vector<32x1xf32> to vector<32x4xf32>
    %230 = arith.addf %227, %229 : vector<32x4xf32>
    %cst_99 = arith.constant 0.000000e+00 : f32
    %231 = vector.broadcast %cst_99 : f32 to vector<32x4xf32>
    %232 = arith.cmpf oge, %230, %231 : vector<32x4xf32>
    %cst_100 = arith.constant 0.00999999977 : f32
    %233 = vector.broadcast %cst_100 : f32 to vector<32x4xf32>
    %234 = arith.mulf %233, %230 : vector<32x4xf32>
    %235 = arith.select %232, %230, %234 : vector<32x4xi1>, vector<32x4xf32>
    %236 = arith.truncf %235 : vector<32x4xf32> to vector<32x4xbf16>
    %c1072 = arith.constant 1072 : index
    %c0_101 = arith.constant 0 : index
    %237 = vector.load %arg2[%c1072, %c0_101] : memref<1760x100xbf16, #tpu.memory_space<vmem>>, vector<4x4xbf16>
    %cst_102 = arith.constant dense<0.000000e+00> : vector<32x4xf32>
    %238 = tpu.matmul %236, %237, %cst_102 {dimension_numbers = #tpu.dot_dimension_numbers<[1], [0], [0], [1], [0, 0, 1, 1], [], []>} : vector<32x4xbf16>, vector<4x4xbf16>, vector<32x4xf32> -> vector<32x4xf32>
    %c1080 = arith.constant 1080 : index
    %c0_103 = arith.constant 0 : index
    %239 = vector.load %arg2[%c1080, %c0_103] : memref<1760x100xbf16, #tpu.memory_space<vmem>>, vector<4x4xbf16>
    %cst_104 = arith.constant dense<0.000000e+00> : vector<32x4xf32>
    %240 = tpu.matmul %236, %239, %cst_104 {dimension_numbers = #tpu.dot_dimension_numbers<[1], [0], [0], [1], [0, 0, 1, 1], [], []>} : vector<32x4xbf16>, vector<4x4xbf16>, vector<32x4xf32> -> vector<32x4xf32>
    %241 = tpu.concatenate %238, %235, %240 in 0 : vector<32x4xf32>, vector<32x4xf32>, vector<32x4xf32> -> vector<96x4xf32>
    %242 = arith.truncf %241 : vector<96x4xf32> to vector<96x4xbf16>
    %c32 = arith.constant 32 : index
    %c0_105 = arith.constant 0 : index
    %243 = vector.load %arg2[%c32, %c0_105] : memref<1760x100xbf16, #tpu.memory_space<vmem>>, vector<32x96xbf16>
    %cst_106 = arith.constant dense<0.000000e+00> : vector<32x4xf32>
    %244 = tpu.matmul %243, %242, %cst_106 {dimension_numbers = #tpu.dot_dimension_numbers<[1], [0], [0], [1], [0, 0, 1, 1], [], []>} : vector<32x96xbf16>, vector<96x4xbf16>, vector<32x4xf32> -> vector<32x4xf32>
    %c1392 = arith.constant 1392 : index
    %c0_107 = arith.constant 0 : index
    %245 = vector.load %arg3[%c1392, %c0_107] : memref<3168x1xf32, #tpu.memory_space<vmem>>, vector<32x1xf32>
    %246 = vector.broadcast %245 : vector<32x1xf32> to vector<32x4xf32>
    %247 = arith.addf %244, %246 : vector<32x4xf32>
    %248 = arith.addf %203, %247 : vector<32x4xf32>
    %249 = vector.shape_cast %248 : vector<32x4xf32> to vector<1x32x4xf32>
    %cst_108 = arith.constant dense<0.000000e+00> : vector<1xf32>
    %250 = vector.multi_reduction <add>, %249, %cst_108 [1, 2] : vector<1x32x4xf32> to vector<1xf32>
    %251 = vector.shape_cast %250 : vector<1xf32> to vector<1x1x1xf32>
    %252 = vector.extract %251[0, 0, 0] : f32 from vector<1x1x1xf32>
    %cst_109 = arith.constant 7.812500e-03 : f32
    %253 = arith.mulf %252, %cst_109 : f32
    %254 = arith.mulf %248, %248 : vector<32x4xf32>
    %255 = vector.shape_cast %254 : vector<32x4xf32> to vector<1x32x4xf32>
    %cst_110 = arith.constant dense<0.000000e+00> : vector<1xf32>
    %256 = vector.multi_reduction <add>, %255, %cst_110 [1, 2] : vector<1x32x4xf32> to vector<1xf32>
    %257 = vector.shape_cast %256 : vector<1xf32> to vector<1x1x1xf32>
    %258 = vector.extract %257[0, 0, 0] : f32 from vector<1x1x1xf32>
    %cst_111 = arith.constant 7.812500e-03 : f32
    %259 = arith.mulf %258, %cst_111 : f32
    %260 = arith.mulf %253, %253 : f32
    %261 = arith.subf %259, %260 : f32
    %cst_112 = arith.constant 0.000000e+00 : f32
    %262 = arith.maximumf %261, %cst_112 : f32
    %263 = vector.broadcast %253 : f32 to vector<32x4xf32>
    %264 = arith.subf %248, %263 : vector<32x4xf32>
    %cst_113 = arith.constant 9.99999974E-6 : f32
    %265 = arith.addf %262, %cst_113 : f32
    %266 = math.rsqrt %265 : f32
    %c1424 = arith.constant 1424 : index
    %c0_114 = arith.constant 0 : index
    %267 = vector.load %arg3[%c1424, %c0_114] : memref<3168x1xf32, #tpu.memory_space<vmem>>, vector<32x1xf32>
    %268 = vector.broadcast %266 : f32 to vector<32x1xf32>
    %269 = arith.mulf %268, %267 : vector<32x1xf32>
    %270 = vector.broadcast %269 : vector<32x1xf32> to vector<32x4xf32>
    %271 = arith.mulf %264, %270 : vector<32x4xf32>
    %c1456 = arith.constant 1456 : index
    %c0_115 = arith.constant 0 : index
    %272 = vector.load %arg3[%c1456, %c0_115] : memref<3168x1xf32, #tpu.memory_space<vmem>>, vector<32x1xf32>
    %273 = vector.broadcast %272 : vector<32x1xf32> to vector<32x4xf32>
    %274 = arith.addf %271, %273 : vector<32x4xf32>
    %cst_116 = arith.constant 0.000000e+00 : f32
    %275 = vector.broadcast %cst_116 : f32 to vector<32x4xf32>
    %276 = arith.cmpf oge, %274, %275 : vector<32x4xf32>
    %cst_117 = arith.constant 0.00999999977 : f32
    %277 = vector.broadcast %cst_117 : f32 to vector<32x4xf32>
    %278 = arith.mulf %277, %274 : vector<32x4xf32>
    %279 = arith.select %276, %274, %278 : vector<32x4xi1>, vector<32x4xf32>
    %280 = arith.truncf %279 : vector<32x4xf32> to vector<32x4xbf16>
    %c1728 = arith.constant 1728 : index
    %c0_118 = arith.constant 0 : index
    %281 = vector.load %arg2[%c1728, %c0_118] : memref<1760x100xbf16, #tpu.memory_space<vmem>>, vector<4x1xbf16>
    %cst_119 = arith.constant dense<0.000000e+00> : vector<32x1xf32>
    %282 = tpu.matmul %280, %281, %cst_119 {dimension_numbers = #tpu.dot_dimension_numbers<[1], [0], [0], [1], [0, 0, 1, 1], [], []>} : vector<32x4xbf16>, vector<4x1xbf16>, vector<32x1xf32> -> vector<32x1xf32>
    %c1736 = arith.constant 1736 : index
    %c0_120 = arith.constant 0 : index
    %283 = vector.load %arg2[%c1736, %c0_120] : memref<1760x100xbf16, #tpu.memory_space<vmem>>, vector<4x1xbf16>
    %cst_121 = arith.constant dense<0.000000e+00> : vector<32x1xf32>
    %284 = tpu.matmul %280, %283, %cst_121 {dimension_numbers = #tpu.dot_dimension_numbers<[1], [0], [0], [1], [0, 0, 1, 1], [], []>} : vector<32x4xbf16>, vector<4x1xbf16>, vector<32x1xf32> -> vector<32x1xf32>
    %c1744 = arith.constant 1744 : index
    %c0_122 = arith.constant 0 : index
    %285 = vector.load %arg2[%c1744, %c0_122] : memref<1760x100xbf16, #tpu.memory_space<vmem>>, vector<4x1xbf16>
    %cst_123 = arith.constant dense<0.000000e+00> : vector<32x1xf32>
    %286 = tpu.matmul %280, %285, %cst_123 {dimension_numbers = #tpu.dot_dimension_numbers<[1], [0], [0], [1], [0, 0, 1, 1], [], []>} : vector<32x4xbf16>, vector<4x1xbf16>, vector<32x1xf32> -> vector<32x1xf32>
    %c1752 = arith.constant 1752 : index
    %c0_124 = arith.constant 0 : index
    %287 = vector.load %arg2[%c1752, %c0_124] : memref<1760x100xbf16, #tpu.memory_space<vmem>>, vector<4x1xbf16>
    %cst_125 = arith.constant dense<0.000000e+00> : vector<32x1xf32>
    %288 = tpu.matmul %280, %287, %cst_125 {dimension_numbers = #tpu.dot_dimension_numbers<[1], [0], [0], [1], [0, 0, 1, 1], [], []>} : vector<32x4xbf16>, vector<4x1xbf16>, vector<32x1xf32> -> vector<32x1xf32>
    %289 = tpu.concatenate %282, %284, %286, %288 in 0 : vector<32x1xf32>, vector<32x1xf32>, vector<32x1xf32>, vector<32x1xf32> -> vector<128x1xf32>
    %290 = arith.truncf %289 : vector<128x1xf32> to vector<128x1xbf16>
    %c560 = arith.constant 560 : index
    %c0_126 = arith.constant 0 : index
    %291 = vector.load %arg1[%c560, %c0_126] : memref<624x300xbf16, #tpu.memory_space<vmem>>, vector<64x128xbf16>
    %cst_127 = arith.constant dense<0.000000e+00> : vector<64x1xf32>
    %292 = tpu.matmul %291, %290, %cst_127 {dimension_numbers = #tpu.dot_dimension_numbers<[1], [0], [0], [1], [0, 0, 1, 1], [], []>} : vector<64x128xbf16>, vector<128x1xbf16>, vector<64x1xf32> -> vector<64x1xf32>
    %c1488 = arith.constant 1488 : index
    %c0_128 = arith.constant 0 : index
    %293 = vector.load %arg3[%c1488, %c0_128] : memref<3168x1xf32, #tpu.memory_space<vmem>>, vector<64x1xf32>
    %294 = arith.addf %292, %293 : vector<64x1xf32>
    %295 = vector.extract_strided_slice %294 {offsets = [0, 0], sizes = [32, 1], strides = [1, 1]} : vector<64x1xf32> to vector<32x1xf32>
    %296 = vector.extract_strided_slice %294 {offsets = [32, 0], sizes = [32, 1], strides = [1, 1]} : vector<64x1xf32> to vector<32x1xf32>
    %297 = vector.shape_cast %296 : vector<32x1xf32> to vector<1x32x1xf32>
    %cst_129 = arith.constant dense<0.000000e+00> : vector<1xf32>
    %298 = vector.multi_reduction <add>, %297, %cst_129 [1, 2] : vector<1x32x1xf32> to vector<1xf32>
    %299 = vector.shape_cast %298 : vector<1xf32> to vector<1x1x1xf32>
    %300 = vector.extract %299[0, 0, 0] : f32 from vector<1x1x1xf32>
    %cst_130 = arith.constant 3.125000e-02 : f32
    %301 = arith.mulf %300, %cst_130 : f32
    %302 = arith.mulf %296, %296 : vector<32x1xf32>
    %303 = vector.shape_cast %302 : vector<32x1xf32> to vector<1x32x1xf32>
    %cst_131 = arith.constant dense<0.000000e+00> : vector<1xf32>
    %304 = vector.multi_reduction <add>, %303, %cst_131 [1, 2] : vector<1x32x1xf32> to vector<1xf32>
    %305 = vector.shape_cast %304 : vector<1xf32> to vector<1x1x1xf32>
    %306 = vector.extract %305[0, 0, 0] : f32 from vector<1x1x1xf32>
    %cst_132 = arith.constant 3.125000e-02 : f32
    %307 = arith.mulf %306, %cst_132 : f32
    %308 = arith.mulf %301, %301 : f32
    %309 = arith.subf %307, %308 : f32
    %cst_133 = arith.constant 0.000000e+00 : f32
    %310 = arith.maximumf %309, %cst_133 : f32
    %311 = vector.broadcast %301 : f32 to vector<32x1xf32>
    %312 = arith.subf %296, %311 : vector<32x1xf32>
    %cst_134 = arith.constant 9.99999974E-6 : f32
    %313 = arith.addf %310, %cst_134 : f32
    %314 = math.rsqrt %313 : f32
    %c1552 = arith.constant 1552 : index
    %c0_135 = arith.constant 0 : index
    %315 = vector.load %arg3[%c1552, %c0_135] : memref<3168x1xf32, #tpu.memory_space<vmem>>, vector<32x1xf32>
    %316 = vector.broadcast %314 : f32 to vector<32x1xf32>
    %317 = arith.mulf %316, %315 : vector<32x1xf32>
    %318 = arith.mulf %312, %317 : vector<32x1xf32>
    %c1584 = arith.constant 1584 : index
    %c0_136 = arith.constant 0 : index
    %319 = vector.load %arg3[%c1584, %c0_136] : memref<3168x1xf32, #tpu.memory_space<vmem>>, vector<32x1xf32>
    %320 = arith.addf %318, %319 : vector<32x1xf32>
    %cst_137 = arith.constant 0.000000e+00 : f32
    %321 = vector.broadcast %cst_137 : f32 to vector<32x1xf32>
    %322 = arith.cmpf oge, %320, %321 : vector<32x1xf32>
    %cst_138 = arith.constant 0.00999999977 : f32
    %323 = vector.broadcast %cst_138 : f32 to vector<32x1xf32>
    %324 = arith.mulf %323, %320 : vector<32x1xf32>
    %325 = arith.select %322, %320, %324 : vector<32x1xi1>, vector<32x1xf32>
    %cst_139 = arith.constant 0.000000e+00 : f32
    %326 = vector.broadcast %cst_139 : f32 to vector<32x1xf32>
    %cst_140 = arith.constant 0.000000e+00 : f32
    %327 = vector.broadcast %cst_140 : f32 to vector<32x1xf32>
    %328 = tpu.concatenate %326, %325, %327 in 0 : vector<32x1xf32>, vector<32x1xf32>, vector<32x1xf32> -> vector<96x1xf32>
    %329 = arith.truncf %328 : vector<96x1xf32> to vector<96x1xbf16>
    %c64 = arith.constant 64 : index
    %c0_141 = arith.constant 0 : index
    %330 = vector.load %arg2[%c64, %c0_141] : memref<1760x100xbf16, #tpu.memory_space<vmem>>, vector<32x96xbf16>
    %cst_142 = arith.constant dense<0.000000e+00> : vector<32x1xf32>
    %331 = tpu.matmul %330, %329, %cst_142 {dimension_numbers = #tpu.dot_dimension_numbers<[1], [0], [0], [1], [0, 0, 1, 1], [], []>} : vector<32x96xbf16>, vector<96x1xbf16>, vector<32x1xf32> -> vector<32x1xf32>
    %c1616 = arith.constant 1616 : index
    %c0_143 = arith.constant 0 : index
    %332 = vector.load %arg3[%c1616, %c0_143] : memref<3168x1xf32, #tpu.memory_space<vmem>>, vector<32x1xf32>
    %333 = arith.addf %331, %332 : vector<32x1xf32>
    %334 = arith.addf %295, %333 : vector<32x1xf32>
    %335 = vector.shape_cast %334 : vector<32x1xf32> to vector<1x32x1xf32>
    %cst_144 = arith.constant dense<0.000000e+00> : vector<1xf32>
    %336 = vector.multi_reduction <add>, %335, %cst_144 [1, 2] : vector<1x32x1xf32> to vector<1xf32>
    %337 = vector.shape_cast %336 : vector<1xf32> to vector<1x1x1xf32>
    %338 = vector.extract %337[0, 0, 0] : f32 from vector<1x1x1xf32>
    %cst_145 = arith.constant 3.125000e-02 : f32
    %339 = arith.mulf %338, %cst_145 : f32
    %340 = arith.mulf %334, %334 : vector<32x1xf32>
    %341 = vector.shape_cast %340 : vector<32x1xf32> to vector<1x32x1xf32>
    %cst_146 = arith.constant dense<0.000000e+00> : vector<1xf32>
    %342 = vector.multi_reduction <add>, %341, %cst_146 [1, 2] : vector<1x32x1xf32> to vector<1xf32>
    %343 = vector.shape_cast %342 : vector<1xf32> to vector<1x1x1xf32>
    %344 = vector.extract %343[0, 0, 0] : f32 from vector<1x1x1xf32>
    %cst_147 = arith.constant 3.125000e-02 : f32
    %345 = arith.mulf %344, %cst_147 : f32
    %346 = arith.mulf %339, %339 : f32
    %347 = arith.subf %345, %346 : f32
    %cst_148 = arith.constant 0.000000e+00 : f32
    %348 = arith.maximumf %347, %cst_148 : f32
    %349 = vector.broadcast %339 : f32 to vector<32x1xf32>
    %350 = arith.subf %334, %349 : vector<32x1xf32>
    %cst_149 = arith.constant 9.99999974E-6 : f32
    %351 = arith.addf %348, %cst_149 : f32
    %352 = math.rsqrt %351 : f32
    %c1648 = arith.constant 1648 : index
    %c0_150 = arith.constant 0 : index
    %353 = vector.load %arg3[%c1648, %c0_150] : memref<3168x1xf32, #tpu.memory_space<vmem>>, vector<32x1xf32>
    %354 = vector.broadcast %352 : f32 to vector<32x1xf32>
    %355 = arith.mulf %354, %353 : vector<32x1xf32>
    %356 = arith.mulf %350, %355 : vector<32x1xf32>
    %c1680_151 = arith.constant 1680 : index
    %c0_152 = arith.constant 0 : index
    %357 = vector.load %arg3[%c1680_151, %c0_152] : memref<3168x1xf32, #tpu.memory_space<vmem>>, vector<32x1xf32>
    %358 = arith.addf %356, %357 : vector<32x1xf32>
    %cst_153 = arith.constant 0.000000e+00 : f32
    %359 = vector.broadcast %cst_153 : f32 to vector<32x1xf32>
    %360 = arith.cmpf oge, %358, %359 : vector<32x1xf32>
    %cst_154 = arith.constant 0.00999999977 : f32
    %361 = vector.broadcast %cst_154 : f32 to vector<32x1xf32>
    %362 = arith.mulf %361, %358 : vector<32x1xf32>
    %363 = arith.select %360, %358, %362 : vector<32x1xi1>, vector<32x1xf32>
    %364 = vector.shape_cast %363 : vector<32x1xf32> to vector<32x1xf32>
    %365 = vector.broadcast %364 : vector<32x1xf32> to vector<32x4xf32>
    %366 = vector.shape_cast %365 : vector<32x4xf32> to vector<1x32x4xf32>
    %cst_155 = arith.constant dense<0.000000e+00> : vector<1xf32>
    %367 = vector.multi_reduction <add>, %366, %cst_155 [1, 2] : vector<1x32x4xf32> to vector<1xf32>
    %368 = vector.shape_cast %367 : vector<1xf32> to vector<1x1x1xf32>
    %369 = vector.extract %368[0, 0, 0] : f32 from vector<1x1x1xf32>
    %cst_156 = arith.constant 7.812500e-03 : f32
    %370 = arith.mulf %369, %cst_156 : f32
    %371 = arith.mulf %365, %365 : vector<32x4xf32>
    %372 = vector.shape_cast %371 : vector<32x4xf32> to vector<1x32x4xf32>
    %cst_157 = arith.constant dense<0.000000e+00> : vector<1xf32>
    %373 = vector.multi_reduction <add>, %372, %cst_157 [1, 2] : vector<1x32x4xf32> to vector<1xf32>
    %374 = vector.shape_cast %373 : vector<1xf32> to vector<1x1x1xf32>
    %375 = vector.extract %374[0, 0, 0] : f32 from vector<1x1x1xf32>
    %cst_158 = arith.constant 7.812500e-03 : f32
    %376 = arith.mulf %375, %cst_158 : f32
    %377 = arith.mulf %370, %370 : f32
    %378 = arith.subf %376, %377 : f32
    %cst_159 = arith.constant 0.000000e+00 : f32
    %379 = arith.maximumf %378, %cst_159 : f32
    %380 = vector.broadcast %370 : f32 to vector<32x4xf32>
    %381 = arith.subf %365, %380 : vector<32x4xf32>
    %cst_160 = arith.constant 9.99999974E-6 : f32
    %382 = arith.addf %379, %cst_160 : f32
    %383 = math.rsqrt %382 : f32
    %c2416 = arith.constant 2416 : index
    %c0_161 = arith.constant 0 : index
    %384 = vector.load %arg3[%c2416, %c0_161] : memref<3168x1xf32, #tpu.memory_space<vmem>>, vector<32x1xf32>
    %385 = vector.broadcast %383 : f32 to vector<32x1xf32>
    %386 = arith.mulf %385, %384 : vector<32x1xf32>
    %387 = vector.broadcast %386 : vector<32x1xf32> to vector<32x4xf32>
    %388 = arith.mulf %381, %387 : vector<32x4xf32>
    %c2448 = arith.constant 2448 : index
    %c0_162 = arith.constant 0 : index
    %389 = vector.load %arg3[%c2448, %c0_162] : memref<3168x1xf32, #tpu.memory_space<vmem>>, vector<32x1xf32>
    %390 = vector.broadcast %389 : vector<32x1xf32> to vector<32x4xf32>
    %391 = arith.addf %388, %390 : vector<32x4xf32>
    %392 = vector.shape_cast %279 : vector<32x4xf32> to vector<1x32x4xf32>
    %cst_163 = arith.constant dense<0.000000e+00> : vector<1xf32>
    %393 = vector.multi_reduction <add>, %392, %cst_163 [1, 2] : vector<1x32x4xf32> to vector<1xf32>
    %394 = vector.shape_cast %393 : vector<1xf32> to vector<1x1x1xf32>
    %395 = vector.extract %394[0, 0, 0] : f32 from vector<1x1x1xf32>
    %cst_164 = arith.constant 7.812500e-03 : f32
    %396 = arith.mulf %395, %cst_164 : f32
    %397 = arith.mulf %279, %279 : vector<32x4xf32>
    %398 = vector.shape_cast %397 : vector<32x4xf32> to vector<1x32x4xf32>
    %cst_165 = arith.constant dense<0.000000e+00> : vector<1xf32>
    %399 = vector.multi_reduction <add>, %398, %cst_165 [1, 2] : vector<1x32x4xf32> to vector<1xf32>
    %400 = vector.shape_cast %399 : vector<1xf32> to vector<1x1x1xf32>
    %401 = vector.extract %400[0, 0, 0] : f32 from vector<1x1x1xf32>
    %cst_166 = arith.constant 7.812500e-03 : f32
    %402 = arith.mulf %401, %cst_166 : f32
    %403 = arith.mulf %396, %396 : f32
    %404 = arith.subf %402, %403 : f32
    %cst_167 = arith.constant 0.000000e+00 : f32
    %405 = arith.maximumf %404, %cst_167 : f32
    %406 = vector.broadcast %396 : f32 to vector<32x4xf32>
    %407 = arith.subf %279, %406 : vector<32x4xf32>
    %cst_168 = arith.constant 9.99999974E-6 : f32
    %408 = arith.addf %405, %cst_168 : f32
    %409 = math.rsqrt %408 : f32
    %c2480 = arith.constant 2480 : index
    %c0_169 = arith.constant 0 : index
    %410 = vector.load %arg3[%c2480, %c0_169] : memref<3168x1xf32, #tpu.memory_space<vmem>>, vector<32x1xf32>
    %411 = vector.broadcast %409 : f32 to vector<32x1xf32>
    %412 = arith.mulf %411, %410 : vector<32x1xf32>
    %413 = vector.broadcast %412 : vector<32x1xf32> to vector<32x4xf32>
    %414 = arith.mulf %407, %413 : vector<32x4xf32>
    %c2512 = arith.constant 2512 : index
    %c0_170 = arith.constant 0 : index
    %415 = vector.load %arg3[%c2512, %c0_170] : memref<3168x1xf32, #tpu.memory_space<vmem>>, vector<32x1xf32>
    %416 = vector.broadcast %415 : vector<32x1xf32> to vector<32x4xf32>
    %417 = arith.addf %414, %416 : vector<32x4xf32>
    %418 = tpu.concatenate %391, %417 in 0 : vector<32x4xf32>, vector<32x4xf32> -> vector<64x4xf32>
    %419 = arith.truncf %418 : vector<64x4xf32> to vector<64x4xbf16>
    %c384 = arith.constant 384 : index
    %c0_171 = arith.constant 0 : index
    %420 = vector.load %arg2[%c384, %c0_171] : memref<1760x100xbf16, #tpu.memory_space<vmem>>, vector<32x64xbf16>
    %cst_172 = arith.constant dense<0.000000e+00> : vector<32x4xf32>
    %421 = tpu.matmul %420, %419, %cst_172 {dimension_numbers = #tpu.dot_dimension_numbers<[1], [0], [0], [1], [0, 0, 1, 1], [], []>} : vector<32x64xbf16>, vector<64x4xbf16>, vector<32x4xf32> -> vector<32x4xf32>
    %c2384 = arith.constant 2384 : index
    %c0_173 = arith.constant 0 : index
    %422 = vector.load %arg3[%c2384, %c0_173] : memref<3168x1xf32, #tpu.memory_space<vmem>>, vector<32x1xf32>
    %423 = vector.broadcast %422 : vector<32x1xf32> to vector<32x4xf32>
    %424 = arith.addf %421, %423 : vector<32x4xf32>
    %425 = arith.truncf %424 : vector<32x4xf32> to vector<32x4xbf16>
    %c1072_174 = arith.constant 1072 : index
    %c0_175 = arith.constant 0 : index
    %426 = vector.load %arg2[%c1072_174, %c0_175] : memref<1760x100xbf16, #tpu.memory_space<vmem>>, vector<4x4xbf16>
    %cst_176 = arith.constant dense<0.000000e+00> : vector<32x4xf32>
    %427 = tpu.matmul %425, %426, %cst_176 {dimension_numbers = #tpu.dot_dimension_numbers<[1], [0], [0], [1], [0, 0, 1, 1], [], []>} : vector<32x4xbf16>, vector<4x4xbf16>, vector<32x4xf32> -> vector<32x4xf32>
    %c1080_177 = arith.constant 1080 : index
    %c0_178 = arith.constant 0 : index
    %428 = vector.load %arg2[%c1080_177, %c0_178] : memref<1760x100xbf16, #tpu.memory_space<vmem>>, vector<4x4xbf16>
    %cst_179 = arith.constant dense<0.000000e+00> : vector<32x4xf32>
    %429 = tpu.matmul %425, %428, %cst_179 {dimension_numbers = #tpu.dot_dimension_numbers<[1], [0], [0], [1], [0, 0, 1, 1], [], []>} : vector<32x4xbf16>, vector<4x4xbf16>, vector<32x4xf32> -> vector<32x4xf32>
    %430 = tpu.concatenate %427, %424, %429 in 0 : vector<32x4xf32>, vector<32x4xf32>, vector<32x4xf32> -> vector<96x4xf32>
    %431 = arith.truncf %430 : vector<96x4xf32> to vector<96x4xbf16>
    %c96 = arith.constant 96 : index
    %c0_180 = arith.constant 0 : index
    %432 = vector.load %arg2[%c96, %c0_180] : memref<1760x100xbf16, #tpu.memory_space<vmem>>, vector<64x96xbf16>
    %cst_181 = arith.constant dense<0.000000e+00> : vector<64x4xf32>
    %433 = tpu.matmul %432, %431, %cst_181 {dimension_numbers = #tpu.dot_dimension_numbers<[1], [0], [0], [1], [0, 0, 1, 1], [], []>} : vector<64x96xbf16>, vector<96x4xbf16>, vector<64x4xf32> -> vector<64x4xf32>
    %c1712 = arith.constant 1712 : index
    %c0_182 = arith.constant 0 : index
    %434 = vector.load %arg3[%c1712, %c0_182] : memref<3168x1xf32, #tpu.memory_space<vmem>>, vector<64x1xf32>
    %435 = vector.broadcast %434 : vector<64x1xf32> to vector<64x4xf32>
    %436 = arith.addf %433, %435 : vector<64x4xf32>
    %437 = vector.extract_strided_slice %436 {offsets = [0, 0], sizes = [32, 4], strides = [1, 1]} : vector<64x4xf32> to vector<32x4xf32>
    %438 = vector.extract_strided_slice %436 {offsets = [32, 0], sizes = [32, 4], strides = [1, 1]} : vector<64x4xf32> to vector<32x4xf32>
    %439 = vector.shape_cast %438 : vector<32x4xf32> to vector<1x32x4xf32>
    %cst_183 = arith.constant dense<0.000000e+00> : vector<1xf32>
    %440 = vector.multi_reduction <add>, %439, %cst_183 [1, 2] : vector<1x32x4xf32> to vector<1xf32>
    %441 = vector.shape_cast %440 : vector<1xf32> to vector<1x1x1xf32>
    %442 = vector.extract %441[0, 0, 0] : f32 from vector<1x1x1xf32>
    %cst_184 = arith.constant 7.812500e-03 : f32
    %443 = arith.mulf %442, %cst_184 : f32
    %444 = arith.mulf %438, %438 : vector<32x4xf32>
    %445 = vector.shape_cast %444 : vector<32x4xf32> to vector<1x32x4xf32>
    %cst_185 = arith.constant dense<0.000000e+00> : vector<1xf32>
    %446 = vector.multi_reduction <add>, %445, %cst_185 [1, 2] : vector<1x32x4xf32> to vector<1xf32>
    %447 = vector.shape_cast %446 : vector<1xf32> to vector<1x1x1xf32>
    %448 = vector.extract %447[0, 0, 0] : f32 from vector<1x1x1xf32>
    %cst_186 = arith.constant 7.812500e-03 : f32
    %449 = arith.mulf %448, %cst_186 : f32
    %450 = arith.mulf %443, %443 : f32
    %451 = arith.subf %449, %450 : f32
    %cst_187 = arith.constant 0.000000e+00 : f32
    %452 = arith.maximumf %451, %cst_187 : f32
    %453 = vector.broadcast %443 : f32 to vector<32x4xf32>
    %454 = arith.subf %438, %453 : vector<32x4xf32>
    %cst_188 = arith.constant 9.99999974E-6 : f32
    %455 = arith.addf %452, %cst_188 : f32
    %456 = math.rsqrt %455 : f32
    %c1776 = arith.constant 1776 : index
    %c0_189 = arith.constant 0 : index
    %457 = vector.load %arg3[%c1776, %c0_189] : memref<3168x1xf32, #tpu.memory_space<vmem>>, vector<32x1xf32>
    %458 = vector.broadcast %456 : f32 to vector<32x1xf32>
    %459 = arith.mulf %458, %457 : vector<32x1xf32>
    %460 = vector.broadcast %459 : vector<32x1xf32> to vector<32x4xf32>
    %461 = arith.mulf %454, %460 : vector<32x4xf32>
    %c1808 = arith.constant 1808 : index
    %c0_190 = arith.constant 0 : index
    %462 = vector.load %arg3[%c1808, %c0_190] : memref<3168x1xf32, #tpu.memory_space<vmem>>, vector<32x1xf32>
    %463 = vector.broadcast %462 : vector<32x1xf32> to vector<32x4xf32>
    %464 = arith.addf %461, %463 : vector<32x4xf32>
    %cst_191 = arith.constant 0.000000e+00 : f32
    %465 = vector.broadcast %cst_191 : f32 to vector<32x4xf32>
    %466 = arith.cmpf oge, %464, %465 : vector<32x4xf32>
    %cst_192 = arith.constant 0.00999999977 : f32
    %467 = vector.broadcast %cst_192 : f32 to vector<32x4xf32>
    %468 = arith.mulf %467, %464 : vector<32x4xf32>
    %469 = arith.select %466, %464, %468 : vector<32x4xi1>, vector<32x4xf32>
    %470 = arith.truncf %469 : vector<32x4xf32> to vector<32x4xbf16>
    %c1072_193 = arith.constant 1072 : index
    %c0_194 = arith.constant 0 : index
    %471 = vector.load %arg2[%c1072_193, %c0_194] : memref<1760x100xbf16, #tpu.memory_space<vmem>>, vector<4x4xbf16>
    %cst_195 = arith.constant dense<0.000000e+00> : vector<32x4xf32>
    %472 = tpu.matmul %470, %471, %cst_195 {dimension_numbers = #tpu.dot_dimension_numbers<[1], [0], [0], [1], [0, 0, 1, 1], [], []>} : vector<32x4xbf16>, vector<4x4xbf16>, vector<32x4xf32> -> vector<32x4xf32>
    %c1080_196 = arith.constant 1080 : index
    %c0_197 = arith.constant 0 : index
    %473 = vector.load %arg2[%c1080_196, %c0_197] : memref<1760x100xbf16, #tpu.memory_space<vmem>>, vector<4x4xbf16>
    %cst_198 = arith.constant dense<0.000000e+00> : vector<32x4xf32>
    %474 = tpu.matmul %470, %473, %cst_198 {dimension_numbers = #tpu.dot_dimension_numbers<[1], [0], [0], [1], [0, 0, 1, 1], [], []>} : vector<32x4xbf16>, vector<4x4xbf16>, vector<32x4xf32> -> vector<32x4xf32>
    %475 = tpu.concatenate %472, %469, %474 in 0 : vector<32x4xf32>, vector<32x4xf32>, vector<32x4xf32> -> vector<96x4xf32>
    %476 = arith.truncf %475 : vector<96x4xf32> to vector<96x4xbf16>
    %c160 = arith.constant 160 : index
    %c0_199 = arith.constant 0 : index
    %477 = vector.load %arg2[%c160, %c0_199] : memref<1760x100xbf16, #tpu.memory_space<vmem>>, vector<32x96xbf16>
    %cst_200 = arith.constant dense<0.000000e+00> : vector<32x4xf32>
    %478 = tpu.matmul %477, %476, %cst_200 {dimension_numbers = #tpu.dot_dimension_numbers<[1], [0], [0], [1], [0, 0, 1, 1], [], []>} : vector<32x96xbf16>, vector<96x4xbf16>, vector<32x4xf32> -> vector<32x4xf32>
    %c1840 = arith.constant 1840 : index
    %c0_201 = arith.constant 0 : index
    %479 = vector.load %arg3[%c1840, %c0_201] : memref<3168x1xf32, #tpu.memory_space<vmem>>, vector<32x1xf32>
    %480 = vector.broadcast %479 : vector<32x1xf32> to vector<32x4xf32>
    %481 = arith.addf %478, %480 : vector<32x4xf32>
    %482 = arith.addf %437, %481 : vector<32x4xf32>
    %483 = vector.shape_cast %482 : vector<32x4xf32> to vector<1x32x4xf32>
    %cst_202 = arith.constant dense<0.000000e+00> : vector<1xf32>
    %484 = vector.multi_reduction <add>, %483, %cst_202 [1, 2] : vector<1x32x4xf32> to vector<1xf32>
    %485 = vector.shape_cast %484 : vector<1xf32> to vector<1x1x1xf32>
    %486 = vector.extract %485[0, 0, 0] : f32 from vector<1x1x1xf32>
    %cst_203 = arith.constant 7.812500e-03 : f32
    %487 = arith.mulf %486, %cst_203 : f32
    %488 = arith.mulf %482, %482 : vector<32x4xf32>
    %489 = vector.shape_cast %488 : vector<32x4xf32> to vector<1x32x4xf32>
    %cst_204 = arith.constant dense<0.000000e+00> : vector<1xf32>
    %490 = vector.multi_reduction <add>, %489, %cst_204 [1, 2] : vector<1x32x4xf32> to vector<1xf32>
    %491 = vector.shape_cast %490 : vector<1xf32> to vector<1x1x1xf32>
    %492 = vector.extract %491[0, 0, 0] : f32 from vector<1x1x1xf32>
    %cst_205 = arith.constant 7.812500e-03 : f32
    %493 = arith.mulf %492, %cst_205 : f32
    %494 = arith.mulf %487, %487 : f32
    %495 = arith.subf %493, %494 : f32
    %cst_206 = arith.constant 0.000000e+00 : f32
    %496 = arith.maximumf %495, %cst_206 : f32
    %497 = vector.broadcast %487 : f32 to vector<32x4xf32>
    %498 = arith.subf %482, %497 : vector<32x4xf32>
    %cst_207 = arith.constant 9.99999974E-6 : f32
    %499 = arith.addf %496, %cst_207 : f32
    %500 = math.rsqrt %499 : f32
    %c1872 = arith.constant 1872 : index
    %c0_208 = arith.constant 0 : index
    %501 = vector.load %arg3[%c1872, %c0_208] : memref<3168x1xf32, #tpu.memory_space<vmem>>, vector<32x1xf32>
    %502 = vector.broadcast %500 : f32 to vector<32x1xf32>
    %503 = arith.mulf %502, %501 : vector<32x1xf32>
    %504 = vector.broadcast %503 : vector<32x1xf32> to vector<32x4xf32>
    %505 = arith.mulf %498, %504 : vector<32x4xf32>
    %c1904 = arith.constant 1904 : index
    %c0_209 = arith.constant 0 : index
    %506 = vector.load %arg3[%c1904, %c0_209] : memref<3168x1xf32, #tpu.memory_space<vmem>>, vector<32x1xf32>
    %507 = vector.broadcast %506 : vector<32x1xf32> to vector<32x4xf32>
    %508 = arith.addf %505, %507 : vector<32x4xf32>
    %cst_210 = arith.constant 0.000000e+00 : f32
    %509 = vector.broadcast %cst_210 : f32 to vector<32x4xf32>
    %510 = arith.cmpf oge, %508, %509 : vector<32x4xf32>
    %cst_211 = arith.constant 0.00999999977 : f32
    %511 = vector.broadcast %cst_211 : f32 to vector<32x4xf32>
    %512 = arith.mulf %511, %508 : vector<32x4xf32>
    %513 = arith.select %510, %508, %512 : vector<32x4xi1>, vector<32x4xf32>
    %514 = arith.truncf %513 : vector<32x4xf32> to vector<32x4xbf16>
    %c448 = arith.constant 448 : index
    %c0_212 = arith.constant 0 : index
    %515 = vector.load %arg2[%c448, %c0_212] : memref<1760x100xbf16, #tpu.memory_space<vmem>>, vector<4x20xbf16>
    %cst_213 = arith.constant dense<0.000000e+00> : vector<32x20xf32>
    %516 = tpu.matmul %514, %515, %cst_213 {dimension_numbers = #tpu.dot_dimension_numbers<[1], [0], [0], [1], [0, 0, 1, 1], [], []>} : vector<32x4xbf16>, vector<4x20xbf16>, vector<32x20xf32> -> vector<32x20xf32>
    %517 = vector.shape_cast %516 : vector<32x20xf32> to vector<1x32x20xf32>
    %cst_214 = arith.constant dense<0.000000e+00> : vector<1xf32>
    %518 = vector.multi_reduction <add>, %517, %cst_214 [1, 2] : vector<1x32x20xf32> to vector<1xf32>
    %519 = vector.shape_cast %518 : vector<1xf32> to vector<1x1x1xf32>
    %520 = vector.extract %519[0, 0, 0] : f32 from vector<1x1x1xf32>
    %cst_215 = arith.constant 1.562500e-03 : f32
    %521 = arith.mulf %520, %cst_215 : f32
    %522 = arith.mulf %516, %516 : vector<32x20xf32>
    %523 = vector.shape_cast %522 : vector<32x20xf32> to vector<1x32x20xf32>
    %cst_216 = arith.constant dense<0.000000e+00> : vector<1xf32>
    %524 = vector.multi_reduction <add>, %523, %cst_216 [1, 2] : vector<1x32x20xf32> to vector<1xf32>
    %525 = vector.shape_cast %524 : vector<1xf32> to vector<1x1x1xf32>
    %526 = vector.extract %525[0, 0, 0] : f32 from vector<1x1x1xf32>
    %cst_217 = arith.constant 1.562500e-03 : f32
    %527 = arith.mulf %526, %cst_217 : f32
    %528 = arith.mulf %521, %521 : f32
    %529 = arith.subf %527, %528 : f32
    %cst_218 = arith.constant 0.000000e+00 : f32
    %530 = arith.maximumf %529, %cst_218 : f32
    %531 = vector.broadcast %521 : f32 to vector<32x20xf32>
    %532 = arith.subf %516, %531 : vector<32x20xf32>
    %cst_219 = arith.constant 9.99999974E-6 : f32
    %533 = arith.addf %530, %cst_219 : f32
    %534 = math.rsqrt %533 : f32
    %c2576 = arith.constant 2576 : index
    %c0_220 = arith.constant 0 : index
    %535 = vector.load %arg3[%c2576, %c0_220] : memref<3168x1xf32, #tpu.memory_space<vmem>>, vector<32x1xf32>
    %536 = vector.broadcast %534 : f32 to vector<32x1xf32>
    %537 = arith.mulf %536, %535 : vector<32x1xf32>
    %538 = vector.broadcast %537 : vector<32x1xf32> to vector<32x20xf32>
    %539 = arith.mulf %532, %538 : vector<32x20xf32>
    %c2608 = arith.constant 2608 : index
    %c0_221 = arith.constant 0 : index
    %540 = vector.load %arg3[%c2608, %c0_221] : memref<3168x1xf32, #tpu.memory_space<vmem>>, vector<32x1xf32>
    %541 = vector.broadcast %540 : vector<32x1xf32> to vector<32x20xf32>
    %542 = arith.addf %539, %541 : vector<32x20xf32>
    %543 = vector.shape_cast %184 : vector<32x20xf32> to vector<1x32x20xf32>
    %cst_222 = arith.constant dense<0.000000e+00> : vector<1xf32>
    %544 = vector.multi_reduction <add>, %543, %cst_222 [1, 2] : vector<1x32x20xf32> to vector<1xf32>
    %545 = vector.shape_cast %544 : vector<1xf32> to vector<1x1x1xf32>
    %546 = vector.extract %545[0, 0, 0] : f32 from vector<1x1x1xf32>
    %cst_223 = arith.constant 1.562500e-03 : f32
    %547 = arith.mulf %546, %cst_223 : f32
    %548 = arith.mulf %184, %184 : vector<32x20xf32>
    %549 = vector.shape_cast %548 : vector<32x20xf32> to vector<1x32x20xf32>
    %cst_224 = arith.constant dense<0.000000e+00> : vector<1xf32>
    %550 = vector.multi_reduction <add>, %549, %cst_224 [1, 2] : vector<1x32x20xf32> to vector<1xf32>
    %551 = vector.shape_cast %550 : vector<1xf32> to vector<1x1x1xf32>
    %552 = vector.extract %551[0, 0, 0] : f32 from vector<1x1x1xf32>
    %cst_225 = arith.constant 1.562500e-03 : f32
    %553 = arith.mulf %552, %cst_225 : f32
    %554 = arith.mulf %547, %547 : f32
    %555 = arith.subf %553, %554 : f32
    %cst_226 = arith.constant 0.000000e+00 : f32
    %556 = arith.maximumf %555, %cst_226 : f32
    %557 = vector.broadcast %547 : f32 to vector<32x20xf32>
    %558 = arith.subf %184, %557 : vector<32x20xf32>
    %cst_227 = arith.constant 9.99999974E-6 : f32
    %559 = arith.addf %556, %cst_227 : f32
    %560 = math.rsqrt %559 : f32
    %c2640 = arith.constant 2640 : index
    %c0_228 = arith.constant 0 : index
    %561 = vector.load %arg3[%c2640, %c0_228] : memref<3168x1xf32, #tpu.memory_space<vmem>>, vector<32x1xf32>
    %562 = vector.broadcast %560 : f32 to vector<32x1xf32>
    %563 = arith.mulf %562, %561 : vector<32x1xf32>
    %564 = vector.broadcast %563 : vector<32x1xf32> to vector<32x20xf32>
    %565 = arith.mulf %558, %564 : vector<32x20xf32>
    %c2672 = arith.constant 2672 : index
    %c0_229 = arith.constant 0 : index
    %566 = vector.load %arg3[%c2672, %c0_229] : memref<3168x1xf32, #tpu.memory_space<vmem>>, vector<32x1xf32>
    %567 = vector.broadcast %566 : vector<32x1xf32> to vector<32x20xf32>
    %568 = arith.addf %565, %567 : vector<32x20xf32>
    %569 = tpu.concatenate %542, %568 in 0 : vector<32x20xf32>, vector<32x20xf32> -> vector<64x20xf32>
    %570 = arith.truncf %569 : vector<64x20xf32> to vector<64x20xbf16>
    %c416 = arith.constant 416 : index
    %c0_230 = arith.constant 0 : index
    %571 = vector.load %arg2[%c416, %c0_230] : memref<1760x100xbf16, #tpu.memory_space<vmem>>, vector<32x64xbf16>
    %cst_231 = arith.constant dense<0.000000e+00> : vector<32x20xf32>
    %572 = tpu.matmul %571, %570, %cst_231 {dimension_numbers = #tpu.dot_dimension_numbers<[1], [0], [0], [1], [0, 0, 1, 1], [], []>} : vector<32x64xbf16>, vector<64x20xbf16>, vector<32x20xf32> -> vector<32x20xf32>
    %c2544 = arith.constant 2544 : index
    %c0_232 = arith.constant 0 : index
    %573 = vector.load %arg3[%c2544, %c0_232] : memref<3168x1xf32, #tpu.memory_space<vmem>>, vector<32x1xf32>
    %574 = vector.broadcast %573 : vector<32x1xf32> to vector<32x20xf32>
    %575 = arith.addf %572, %574 : vector<32x20xf32>
    %576 = arith.truncf %575 : vector<32x20xf32> to vector<32x20xbf16>
    %c1024_233 = arith.constant 1024 : index
    %c0_234 = arith.constant 0 : index
    %577 = vector.load %arg2[%c1024_233, %c0_234] : memref<1760x100xbf16, #tpu.memory_space<vmem>>, vector<20x20xbf16>
    %cst_235 = arith.constant dense<0.000000e+00> : vector<32x20xf32>
    %578 = tpu.matmul %576, %577, %cst_235 {dimension_numbers = #tpu.dot_dimension_numbers<[1], [0], [0], [1], [0, 0, 1, 1], [], []>} : vector<32x20xbf16>, vector<20x20xbf16>, vector<32x20xf32> -> vector<32x20xf32>
    %c1048_236 = arith.constant 1048 : index
    %c0_237 = arith.constant 0 : index
    %579 = vector.load %arg2[%c1048_236, %c0_237] : memref<1760x100xbf16, #tpu.memory_space<vmem>>, vector<20x20xbf16>
    %cst_238 = arith.constant dense<0.000000e+00> : vector<32x20xf32>
    %580 = tpu.matmul %576, %579, %cst_238 {dimension_numbers = #tpu.dot_dimension_numbers<[1], [0], [0], [1], [0, 0, 1, 1], [], []>} : vector<32x20xbf16>, vector<20x20xbf16>, vector<32x20xf32> -> vector<32x20xf32>
    %581 = tpu.concatenate %578, %575, %580 in 0 : vector<32x20xf32>, vector<32x20xf32>, vector<32x20xf32> -> vector<96x20xf32>
    %582 = arith.truncf %581 : vector<96x20xf32> to vector<96x20xbf16>
    %c192 = arith.constant 192 : index
    %c0_239 = arith.constant 0 : index
    %583 = vector.load %arg2[%c192, %c0_239] : memref<1760x100xbf16, #tpu.memory_space<vmem>>, vector<64x96xbf16>
    %cst_240 = arith.constant dense<0.000000e+00> : vector<64x20xf32>
    %584 = tpu.matmul %583, %582, %cst_240 {dimension_numbers = #tpu.dot_dimension_numbers<[1], [0], [0], [1], [0, 0, 1, 1], [], []>} : vector<64x96xbf16>, vector<96x20xbf16>, vector<64x20xf32> -> vector<64x20xf32>
    %c1936 = arith.constant 1936 : index
    %c0_241 = arith.constant 0 : index
    %585 = vector.load %arg3[%c1936, %c0_241] : memref<3168x1xf32, #tpu.memory_space<vmem>>, vector<64x1xf32>
    %586 = vector.broadcast %585 : vector<64x1xf32> to vector<64x20xf32>
    %587 = arith.addf %584, %586 : vector<64x20xf32>
    %588 = vector.extract_strided_slice %587 {offsets = [0, 0], sizes = [32, 20], strides = [1, 1]} : vector<64x20xf32> to vector<32x20xf32>
    %589 = vector.extract_strided_slice %587 {offsets = [32, 0], sizes = [32, 20], strides = [1, 1]} : vector<64x20xf32> to vector<32x20xf32>
    %590 = vector.shape_cast %589 : vector<32x20xf32> to vector<1x32x20xf32>
    %cst_242 = arith.constant dense<0.000000e+00> : vector<1xf32>
    %591 = vector.multi_reduction <add>, %590, %cst_242 [1, 2] : vector<1x32x20xf32> to vector<1xf32>
    %592 = vector.shape_cast %591 : vector<1xf32> to vector<1x1x1xf32>
    %593 = vector.extract %592[0, 0, 0] : f32 from vector<1x1x1xf32>
    %cst_243 = arith.constant 1.562500e-03 : f32
    %594 = arith.mulf %593, %cst_243 : f32
    %595 = arith.mulf %589, %589 : vector<32x20xf32>
    %596 = vector.shape_cast %595 : vector<32x20xf32> to vector<1x32x20xf32>
    %cst_244 = arith.constant dense<0.000000e+00> : vector<1xf32>
    %597 = vector.multi_reduction <add>, %596, %cst_244 [1, 2] : vector<1x32x20xf32> to vector<1xf32>
    %598 = vector.shape_cast %597 : vector<1xf32> to vector<1x1x1xf32>
    %599 = vector.extract %598[0, 0, 0] : f32 from vector<1x1x1xf32>
    %cst_245 = arith.constant 1.562500e-03 : f32
    %600 = arith.mulf %599, %cst_245 : f32
    %601 = arith.mulf %594, %594 : f32
    %602 = arith.subf %600, %601 : f32
    %cst_246 = arith.constant 0.000000e+00 : f32
    %603 = arith.maximumf %602, %cst_246 : f32
    %604 = vector.broadcast %594 : f32 to vector<32x20xf32>
    %605 = arith.subf %589, %604 : vector<32x20xf32>
    %cst_247 = arith.constant 9.99999974E-6 : f32
    %606 = arith.addf %603, %cst_247 : f32
    %607 = math.rsqrt %606 : f32
    %c2000 = arith.constant 2000 : index
    %c0_248 = arith.constant 0 : index
    %608 = vector.load %arg3[%c2000, %c0_248] : memref<3168x1xf32, #tpu.memory_space<vmem>>, vector<32x1xf32>
    %609 = vector.broadcast %607 : f32 to vector<32x1xf32>
    %610 = arith.mulf %609, %608 : vector<32x1xf32>
    %611 = vector.broadcast %610 : vector<32x1xf32> to vector<32x20xf32>
    %612 = arith.mulf %605, %611 : vector<32x20xf32>
    %c2032 = arith.constant 2032 : index
    %c0_249 = arith.constant 0 : index
    %613 = vector.load %arg3[%c2032, %c0_249] : memref<3168x1xf32, #tpu.memory_space<vmem>>, vector<32x1xf32>
    %614 = vector.broadcast %613 : vector<32x1xf32> to vector<32x20xf32>
    %615 = arith.addf %612, %614 : vector<32x20xf32>
    %cst_250 = arith.constant 0.000000e+00 : f32
    %616 = vector.broadcast %cst_250 : f32 to vector<32x20xf32>
    %617 = arith.cmpf oge, %615, %616 : vector<32x20xf32>
    %cst_251 = arith.constant 0.00999999977 : f32
    %618 = vector.broadcast %cst_251 : f32 to vector<32x20xf32>
    %619 = arith.mulf %618, %615 : vector<32x20xf32>
    %620 = arith.select %617, %615, %619 : vector<32x20xi1>, vector<32x20xf32>
    %621 = arith.truncf %620 : vector<32x20xf32> to vector<32x20xbf16>
    %c1024_252 = arith.constant 1024 : index
    %c0_253 = arith.constant 0 : index
    %622 = vector.load %arg2[%c1024_252, %c0_253] : memref<1760x100xbf16, #tpu.memory_space<vmem>>, vector<20x20xbf16>
    %cst_254 = arith.constant dense<0.000000e+00> : vector<32x20xf32>
    %623 = tpu.matmul %621, %622, %cst_254 {dimension_numbers = #tpu.dot_dimension_numbers<[1], [0], [0], [1], [0, 0, 1, 1], [], []>} : vector<32x20xbf16>, vector<20x20xbf16>, vector<32x20xf32> -> vector<32x20xf32>
    %c1048_255 = arith.constant 1048 : index
    %c0_256 = arith.constant 0 : index
    %624 = vector.load %arg2[%c1048_255, %c0_256] : memref<1760x100xbf16, #tpu.memory_space<vmem>>, vector<20x20xbf16>
    %cst_257 = arith.constant dense<0.000000e+00> : vector<32x20xf32>
    %625 = tpu.matmul %621, %624, %cst_257 {dimension_numbers = #tpu.dot_dimension_numbers<[1], [0], [0], [1], [0, 0, 1, 1], [], []>} : vector<32x20xbf16>, vector<20x20xbf16>, vector<32x20xf32> -> vector<32x20xf32>
    %626 = tpu.concatenate %623, %620, %625 in 0 : vector<32x20xf32>, vector<32x20xf32>, vector<32x20xf32> -> vector<96x20xf32>
    %627 = arith.truncf %626 : vector<96x20xf32> to vector<96x20xbf16>
    %c256 = arith.constant 256 : index
    %c0_258 = arith.constant 0 : index
    %628 = vector.load %arg2[%c256, %c0_258] : memref<1760x100xbf16, #tpu.memory_space<vmem>>, vector<32x96xbf16>
    %cst_259 = arith.constant dense<0.000000e+00> : vector<32x20xf32>
    %629 = tpu.matmul %628, %627, %cst_259 {dimension_numbers = #tpu.dot_dimension_numbers<[1], [0], [0], [1], [0, 0, 1, 1], [], []>} : vector<32x96xbf16>, vector<96x20xbf16>, vector<32x20xf32> -> vector<32x20xf32>
    %c2064 = arith.constant 2064 : index
    %c0_260 = arith.constant 0 : index
    %630 = vector.load %arg3[%c2064, %c0_260] : memref<3168x1xf32, #tpu.memory_space<vmem>>, vector<32x1xf32>
    %631 = vector.broadcast %630 : vector<32x1xf32> to vector<32x20xf32>
    %632 = arith.addf %629, %631 : vector<32x20xf32>
    %633 = arith.addf %588, %632 : vector<32x20xf32>
    %634 = vector.shape_cast %633 : vector<32x20xf32> to vector<1x32x20xf32>
    %cst_261 = arith.constant dense<0.000000e+00> : vector<1xf32>
    %635 = vector.multi_reduction <add>, %634, %cst_261 [1, 2] : vector<1x32x20xf32> to vector<1xf32>
    %636 = vector.shape_cast %635 : vector<1xf32> to vector<1x1x1xf32>
    %637 = vector.extract %636[0, 0, 0] : f32 from vector<1x1x1xf32>
    %cst_262 = arith.constant 1.562500e-03 : f32
    %638 = arith.mulf %637, %cst_262 : f32
    %639 = arith.mulf %633, %633 : vector<32x20xf32>
    %640 = vector.shape_cast %639 : vector<32x20xf32> to vector<1x32x20xf32>
    %cst_263 = arith.constant dense<0.000000e+00> : vector<1xf32>
    %641 = vector.multi_reduction <add>, %640, %cst_263 [1, 2] : vector<1x32x20xf32> to vector<1xf32>
    %642 = vector.shape_cast %641 : vector<1xf32> to vector<1x1x1xf32>
    %643 = vector.extract %642[0, 0, 0] : f32 from vector<1x1x1xf32>
    %cst_264 = arith.constant 1.562500e-03 : f32
    %644 = arith.mulf %643, %cst_264 : f32
    %645 = arith.mulf %638, %638 : f32
    %646 = arith.subf %644, %645 : f32
    %cst_265 = arith.constant 0.000000e+00 : f32
    %647 = arith.maximumf %646, %cst_265 : f32
    %648 = vector.broadcast %638 : f32 to vector<32x20xf32>
    %649 = arith.subf %633, %648 : vector<32x20xf32>
    %cst_266 = arith.constant 9.99999974E-6 : f32
    %650 = arith.addf %647, %cst_266 : f32
    %651 = math.rsqrt %650 : f32
    %c2096 = arith.constant 2096 : index
    %c0_267 = arith.constant 0 : index
    %652 = vector.load %arg3[%c2096, %c0_267] : memref<3168x1xf32, #tpu.memory_space<vmem>>, vector<32x1xf32>
    %653 = vector.broadcast %651 : f32 to vector<32x1xf32>
    %654 = arith.mulf %653, %652 : vector<32x1xf32>
    %655 = vector.broadcast %654 : vector<32x1xf32> to vector<32x20xf32>
    %656 = arith.mulf %649, %655 : vector<32x20xf32>
    %c2128 = arith.constant 2128 : index
    %c0_268 = arith.constant 0 : index
    %657 = vector.load %arg3[%c2128, %c0_268] : memref<3168x1xf32, #tpu.memory_space<vmem>>, vector<32x1xf32>
    %658 = vector.broadcast %657 : vector<32x1xf32> to vector<32x20xf32>
    %659 = arith.addf %656, %658 : vector<32x20xf32>
    %cst_269 = arith.constant 0.000000e+00 : f32
    %660 = vector.broadcast %cst_269 : f32 to vector<32x20xf32>
    %661 = arith.cmpf oge, %659, %660 : vector<32x20xf32>
    %cst_270 = arith.constant 0.00999999977 : f32
    %662 = vector.broadcast %cst_270 : f32 to vector<32x20xf32>
    %663 = arith.mulf %662, %659 : vector<32x20xf32>
    %664 = arith.select %661, %659, %663 : vector<32x20xi1>, vector<32x20xf32>
    %665 = arith.truncf %664 : vector<32x20xf32> to vector<32x20xbf16>
    %c488 = arith.constant 488 : index
    %c0_271 = arith.constant 0 : index
    %666 = vector.load %arg2[%c488, %c0_271] : memref<1760x100xbf16, #tpu.memory_space<vmem>>, vector<20x100xbf16>
    %cst_272 = arith.constant dense<0.000000e+00> : vector<32x100xf32>
    %667 = tpu.matmul %665, %666, %cst_272 {dimension_numbers = #tpu.dot_dimension_numbers<[1], [0], [0], [1], [0, 0, 1, 1], [], []>} : vector<32x20xbf16>, vector<20x100xbf16>, vector<32x100xf32> -> vector<32x100xf32>
    %668 = vector.shape_cast %667 : vector<32x100xf32> to vector<1x32x100xf32>
    %cst_273 = arith.constant dense<0.000000e+00> : vector<1xf32>
    %669 = vector.multi_reduction <add>, %668, %cst_273 [1, 2] : vector<1x32x100xf32> to vector<1xf32>
    %670 = vector.shape_cast %669 : vector<1xf32> to vector<1x1x1xf32>
    %671 = vector.extract %670[0, 0, 0] : f32 from vector<1x1x1xf32>
    %cst_274 = arith.constant 3.125000e-04 : f32
    %672 = arith.mulf %671, %cst_274 : f32
    %673 = arith.mulf %667, %667 : vector<32x100xf32>
    %674 = vector.shape_cast %673 : vector<32x100xf32> to vector<1x32x100xf32>
    %cst_275 = arith.constant dense<0.000000e+00> : vector<1xf32>
    %675 = vector.multi_reduction <add>, %674, %cst_275 [1, 2] : vector<1x32x100xf32> to vector<1xf32>
    %676 = vector.shape_cast %675 : vector<1xf32> to vector<1x1x1xf32>
    %677 = vector.extract %676[0, 0, 0] : f32 from vector<1x1x1xf32>
    %cst_276 = arith.constant 3.125000e-04 : f32
    %678 = arith.mulf %677, %cst_276 : f32
    %679 = arith.mulf %672, %672 : f32
    %680 = arith.subf %678, %679 : f32
    %cst_277 = arith.constant 0.000000e+00 : f32
    %681 = arith.maximumf %680, %cst_277 : f32
    %682 = vector.broadcast %672 : f32 to vector<32x100xf32>
    %683 = arith.subf %667, %682 : vector<32x100xf32>
    %cst_278 = arith.constant 9.99999974E-6 : f32
    %684 = arith.addf %681, %cst_278 : f32
    %685 = math.rsqrt %684 : f32
    %c2736 = arith.constant 2736 : index
    %c0_279 = arith.constant 0 : index
    %686 = vector.load %arg3[%c2736, %c0_279] : memref<3168x1xf32, #tpu.memory_space<vmem>>, vector<32x1xf32>
    %687 = vector.broadcast %685 : f32 to vector<32x1xf32>
    %688 = arith.mulf %687, %686 : vector<32x1xf32>
    %689 = vector.broadcast %688 : vector<32x1xf32> to vector<32x100xf32>
    %690 = arith.mulf %683, %689 : vector<32x100xf32>
    %c2768 = arith.constant 2768 : index
    %c0_280 = arith.constant 0 : index
    %691 = vector.load %arg3[%c2768, %c0_280] : memref<3168x1xf32, #tpu.memory_space<vmem>>, vector<32x1xf32>
    %692 = vector.broadcast %691 : vector<32x1xf32> to vector<32x100xf32>
    %693 = arith.addf %690, %692 : vector<32x100xf32>
    %694 = vector.shape_cast %89 : vector<32x100xf32> to vector<1x32x100xf32>
    %cst_281 = arith.constant dense<0.000000e+00> : vector<1xf32>
    %695 = vector.multi_reduction <add>, %694, %cst_281 [1, 2] : vector<1x32x100xf32> to vector<1xf32>
    %696 = vector.shape_cast %695 : vector<1xf32> to vector<1x1x1xf32>
    %697 = vector.extract %696[0, 0, 0] : f32 from vector<1x1x1xf32>
    %cst_282 = arith.constant 3.125000e-04 : f32
    %698 = arith.mulf %697, %cst_282 : f32
    %699 = arith.mulf %89, %89 : vector<32x100xf32>
    %700 = vector.shape_cast %699 : vector<32x100xf32> to vector<1x32x100xf32>
    %cst_283 = arith.constant dense<0.000000e+00> : vector<1xf32>
    %701 = vector.multi_reduction <add>, %700, %cst_283 [1, 2] : vector<1x32x100xf32> to vector<1xf32>
    %702 = vector.shape_cast %701 : vector<1xf32> to vector<1x1x1xf32>
    %703 = vector.extract %702[0, 0, 0] : f32 from vector<1x1x1xf32>
    %cst_284 = arith.constant 3.125000e-04 : f32
    %704 = arith.mulf %703, %cst_284 : f32
    %705 = arith.mulf %698, %698 : f32
    %706 = arith.subf %704, %705 : f32
    %cst_285 = arith.constant 0.000000e+00 : f32
    %707 = arith.maximumf %706, %cst_285 : f32
    %708 = vector.broadcast %698 : f32 to vector<32x100xf32>
    %709 = arith.subf %89, %708 : vector<32x100xf32>
    %cst_286 = arith.constant 9.99999974E-6 : f32
    %710 = arith.addf %707, %cst_286 : f32
    %711 = math.rsqrt %710 : f32
    %c2800 = arith.constant 2800 : index
    %c0_287 = arith.constant 0 : index
    %712 = vector.load %arg3[%c2800, %c0_287] : memref<3168x1xf32, #tpu.memory_space<vmem>>, vector<32x1xf32>
    %713 = vector.broadcast %711 : f32 to vector<32x1xf32>
    %714 = arith.mulf %713, %712 : vector<32x1xf32>
    %715 = vector.broadcast %714 : vector<32x1xf32> to vector<32x100xf32>
    %716 = arith.mulf %709, %715 : vector<32x100xf32>
    %c2832 = arith.constant 2832 : index
    %c0_288 = arith.constant 0 : index
    %717 = vector.load %arg3[%c2832, %c0_288] : memref<3168x1xf32, #tpu.memory_space<vmem>>, vector<32x1xf32>
    %718 = vector.broadcast %717 : vector<32x1xf32> to vector<32x100xf32>
    %719 = arith.addf %716, %718 : vector<32x100xf32>
    %720 = tpu.concatenate %693, %719 in 0 : vector<32x100xf32>, vector<32x100xf32> -> vector<64x100xf32>
    %721 = arith.truncf %720 : vector<64x100xf32> to vector<64x100xbf16>
    %c456 = arith.constant 456 : index
    %c0_289 = arith.constant 0 : index
    %722 = vector.load %arg2[%c456, %c0_289] : memref<1760x100xbf16, #tpu.memory_space<vmem>>, vector<32x64xbf16>
    %cst_290 = arith.constant dense<0.000000e+00> : vector<32x100xf32>
    %723 = tpu.matmul %722, %721, %cst_290 {dimension_numbers = #tpu.dot_dimension_numbers<[1], [0], [0], [1], [0, 0, 1, 1], [], []>} : vector<32x64xbf16>, vector<64x100xbf16>, vector<32x100xf32> -> vector<32x100xf32>
    %c2704 = arith.constant 2704 : index
    %c0_291 = arith.constant 0 : index
    %724 = vector.load %arg3[%c2704, %c0_291] : memref<3168x1xf32, #tpu.memory_space<vmem>>, vector<32x1xf32>
    %725 = vector.broadcast %724 : vector<32x1xf32> to vector<32x100xf32>
    %726 = arith.addf %723, %725 : vector<32x100xf32>
    %727 = arith.truncf %726 : vector<32x100xf32> to vector<32x100xbf16>
    %c816_292 = arith.constant 816 : index
    %c0_293 = arith.constant 0 : index
    %728 = vector.load %arg2[%c816_292, %c0_293] : memref<1760x100xbf16, #tpu.memory_space<vmem>>, vector<100x100xbf16>
    %cst_294 = arith.constant dense<0.000000e+00> : vector<32x100xf32>
    %729 = tpu.matmul %727, %728, %cst_294 {dimension_numbers = #tpu.dot_dimension_numbers<[1], [0], [0], [1], [0, 0, 1, 1], [], []>} : vector<32x100xbf16>, vector<100x100xbf16>, vector<32x100xf32> -> vector<32x100xf32>
    %c920_295 = arith.constant 920 : index
    %c0_296 = arith.constant 0 : index
    %730 = vector.load %arg2[%c920_295, %c0_296] : memref<1760x100xbf16, #tpu.memory_space<vmem>>, vector<100x100xbf16>
    %cst_297 = arith.constant dense<0.000000e+00> : vector<32x100xf32>
    %731 = tpu.matmul %727, %730, %cst_297 {dimension_numbers = #tpu.dot_dimension_numbers<[1], [0], [0], [1], [0, 0, 1, 1], [], []>} : vector<32x100xbf16>, vector<100x100xbf16>, vector<32x100xf32> -> vector<32x100xf32>
    %732 = tpu.concatenate %729, %726, %731 in 0 : vector<32x100xf32>, vector<32x100xf32>, vector<32x100xf32> -> vector<96x100xf32>
    %733 = arith.truncf %732 : vector<96x100xf32> to vector<96x100xbf16>
    %c288 = arith.constant 288 : index
    %c0_298 = arith.constant 0 : index
    %734 = vector.load %arg2[%c288, %c0_298] : memref<1760x100xbf16, #tpu.memory_space<vmem>>, vector<64x96xbf16>
    %cst_299 = arith.constant dense<0.000000e+00> : vector<64x100xf32>
    %735 = tpu.matmul %734, %733, %cst_299 {dimension_numbers = #tpu.dot_dimension_numbers<[1], [0], [0], [1], [0, 0, 1, 1], [], []>} : vector<64x96xbf16>, vector<96x100xbf16>, vector<64x100xf32> -> vector<64x100xf32>
    %c2160 = arith.constant 2160 : index
    %c0_300 = arith.constant 0 : index
    %736 = vector.load %arg3[%c2160, %c0_300] : memref<3168x1xf32, #tpu.memory_space<vmem>>, vector<64x1xf32>
    %737 = vector.broadcast %736 : vector<64x1xf32> to vector<64x100xf32>
    %738 = arith.addf %735, %737 : vector<64x100xf32>
    %739 = vector.extract_strided_slice %738 {offsets = [0, 0], sizes = [32, 100], strides = [1, 1]} : vector<64x100xf32> to vector<32x100xf32>
    %740 = vector.extract_strided_slice %738 {offsets = [32, 0], sizes = [32, 100], strides = [1, 1]} : vector<64x100xf32> to vector<32x100xf32>
    %741 = vector.shape_cast %740 : vector<32x100xf32> to vector<1x32x100xf32>
    %cst_301 = arith.constant dense<0.000000e+00> : vector<1xf32>
    %742 = vector.multi_reduction <add>, %741, %cst_301 [1, 2] : vector<1x32x100xf32> to vector<1xf32>
    %743 = vector.shape_cast %742 : vector<1xf32> to vector<1x1x1xf32>
    %744 = vector.extract %743[0, 0, 0] : f32 from vector<1x1x1xf32>
    %cst_302 = arith.constant 3.125000e-04 : f32
    %745 = arith.mulf %744, %cst_302 : f32
    %746 = arith.mulf %740, %740 : vector<32x100xf32>
    %747 = vector.shape_cast %746 : vector<32x100xf32> to vector<1x32x100xf32>
    %cst_303 = arith.constant dense<0.000000e+00> : vector<1xf32>
    %748 = vector.multi_reduction <add>, %747, %cst_303 [1, 2] : vector<1x32x100xf32> to vector<1xf32>
    %749 = vector.shape_cast %748 : vector<1xf32> to vector<1x1x1xf32>
    %750 = vector.extract %749[0, 0, 0] : f32 from vector<1x1x1xf32>
    %cst_304 = arith.constant 3.125000e-04 : f32
    %751 = arith.mulf %750, %cst_304 : f32
    %752 = arith.mulf %745, %745 : f32
    %753 = arith.subf %751, %752 : f32
    %cst_305 = arith.constant 0.000000e+00 : f32
    %754 = arith.maximumf %753, %cst_305 : f32
    %755 = vector.broadcast %745 : f32 to vector<32x100xf32>
    %756 = arith.subf %740, %755 : vector<32x100xf32>
    %cst_306 = arith.constant 9.99999974E-6 : f32
    %757 = arith.addf %754, %cst_306 : f32
    %758 = math.rsqrt %757 : f32
    %c2224 = arith.constant 2224 : index
    %c0_307 = arith.constant 0 : index
    %759 = vector.load %arg3[%c2224, %c0_307] : memref<3168x1xf32, #tpu.memory_space<vmem>>, vector<32x1xf32>
    %760 = vector.broadcast %758 : f32 to vector<32x1xf32>
    %761 = arith.mulf %760, %759 : vector<32x1xf32>
    %762 = vector.broadcast %761 : vector<32x1xf32> to vector<32x100xf32>
    %763 = arith.mulf %756, %762 : vector<32x100xf32>
    %c2256 = arith.constant 2256 : index
    %c0_308 = arith.constant 0 : index
    %764 = vector.load %arg3[%c2256, %c0_308] : memref<3168x1xf32, #tpu.memory_space<vmem>>, vector<32x1xf32>
    %765 = vector.broadcast %764 : vector<32x1xf32> to vector<32x100xf32>
    %766 = arith.addf %763, %765 : vector<32x100xf32>
    %cst_309 = arith.constant 0.000000e+00 : f32
    %767 = vector.broadcast %cst_309 : f32 to vector<32x100xf32>
    %768 = arith.cmpf oge, %766, %767 : vector<32x100xf32>
    %cst_310 = arith.constant 0.00999999977 : f32
    %769 = vector.broadcast %cst_310 : f32 to vector<32x100xf32>
    %770 = arith.mulf %769, %766 : vector<32x100xf32>
    %771 = arith.select %768, %766, %770 : vector<32x100xi1>, vector<32x100xf32>
    %772 = arith.truncf %771 : vector<32x100xf32> to vector<32x100xbf16>
    %c816_311 = arith.constant 816 : index
    %c0_312 = arith.constant 0 : index
    %773 = vector.load %arg2[%c816_311, %c0_312] : memref<1760x100xbf16, #tpu.memory_space<vmem>>, vector<100x100xbf16>
    %cst_313 = arith.constant dense<0.000000e+00> : vector<32x100xf32>
    %774 = tpu.matmul %772, %773, %cst_313 {dimension_numbers = #tpu.dot_dimension_numbers<[1], [0], [0], [1], [0, 0, 1, 1], [], []>} : vector<32x100xbf16>, vector<100x100xbf16>, vector<32x100xf32> -> vector<32x100xf32>
    %c920_314 = arith.constant 920 : index
    %c0_315 = arith.constant 0 : index
    %775 = vector.load %arg2[%c920_314, %c0_315] : memref<1760x100xbf16, #tpu.memory_space<vmem>>, vector<100x100xbf16>
    %cst_316 = arith.constant dense<0.000000e+00> : vector<32x100xf32>
    %776 = tpu.matmul %772, %775, %cst_316 {dimension_numbers = #tpu.dot_dimension_numbers<[1], [0], [0], [1], [0, 0, 1, 1], [], []>} : vector<32x100xbf16>, vector<100x100xbf16>, vector<32x100xf32> -> vector<32x100xf32>
    %777 = tpu.concatenate %774, %771, %776 in 0 : vector<32x100xf32>, vector<32x100xf32>, vector<32x100xf32> -> vector<96x100xf32>
    %778 = arith.truncf %777 : vector<96x100xf32> to vector<96x100xbf16>
    %c352 = arith.constant 352 : index
    %c0_317 = arith.constant 0 : index
    %779 = vector.load %arg2[%c352, %c0_317] : memref<1760x100xbf16, #tpu.memory_space<vmem>>, vector<32x96xbf16>
    %cst_318 = arith.constant dense<0.000000e+00> : vector<32x100xf32>
    %780 = tpu.matmul %779, %778, %cst_318 {dimension_numbers = #tpu.dot_dimension_numbers<[1], [0], [0], [1], [0, 0, 1, 1], [], []>} : vector<32x96xbf16>, vector<96x100xbf16>, vector<32x100xf32> -> vector<32x100xf32>
    %c2288 = arith.constant 2288 : index
    %c0_319 = arith.constant 0 : index
    %781 = vector.load %arg3[%c2288, %c0_319] : memref<3168x1xf32, #tpu.memory_space<vmem>>, vector<32x1xf32>
    %782 = vector.broadcast %781 : vector<32x1xf32> to vector<32x100xf32>
    %783 = arith.addf %780, %782 : vector<32x100xf32>
    %784 = arith.addf %739, %783 : vector<32x100xf32>
    %785 = vector.shape_cast %784 : vector<32x100xf32> to vector<1x32x100xf32>
    %cst_320 = arith.constant dense<0.000000e+00> : vector<1xf32>
    %786 = vector.multi_reduction <add>, %785, %cst_320 [1, 2] : vector<1x32x100xf32> to vector<1xf32>
    %787 = vector.shape_cast %786 : vector<1xf32> to vector<1x1x1xf32>
    %788 = vector.extract %787[0, 0, 0] : f32 from vector<1x1x1xf32>
    %cst_321 = arith.constant 3.125000e-04 : f32
    %789 = arith.mulf %788, %cst_321 : f32
    %790 = arith.mulf %784, %784 : vector<32x100xf32>
    %791 = vector.shape_cast %790 : vector<32x100xf32> to vector<1x32x100xf32>
    %cst_322 = arith.constant dense<0.000000e+00> : vector<1xf32>
    %792 = vector.multi_reduction <add>, %791, %cst_322 [1, 2] : vector<1x32x100xf32> to vector<1xf32>
    %793 = vector.shape_cast %792 : vector<1xf32> to vector<1x1x1xf32>
    %794 = vector.extract %793[0, 0, 0] : f32 from vector<1x1x1xf32>
    %cst_323 = arith.constant 3.125000e-04 : f32
    %795 = arith.mulf %794, %cst_323 : f32
    %796 = arith.mulf %789, %789 : f32
    %797 = arith.subf %795, %796 : f32
    %cst_324 = arith.constant 0.000000e+00 : f32
    %798 = arith.maximumf %797, %cst_324 : f32
    %799 = vector.broadcast %789 : f32 to vector<32x100xf32>
    %800 = arith.subf %784, %799 : vector<32x100xf32>
    %cst_325 = arith.constant 9.99999974E-6 : f32
    %801 = arith.addf %798, %cst_325 : f32
    %802 = math.rsqrt %801 : f32
    %c2320 = arith.constant 2320 : index
    %c0_326 = arith.constant 0 : index
    %803 = vector.load %arg3[%c2320, %c0_326] : memref<3168x1xf32, #tpu.memory_space<vmem>>, vector<32x1xf32>
    %804 = vector.broadcast %802 : f32 to vector<32x1xf32>
    %805 = arith.mulf %804, %803 : vector<32x1xf32>
    %806 = vector.broadcast %805 : vector<32x1xf32> to vector<32x100xf32>
    %807 = arith.mulf %800, %806 : vector<32x100xf32>
    %c2352 = arith.constant 2352 : index
    %c0_327 = arith.constant 0 : index
    %808 = vector.load %arg3[%c2352, %c0_327] : memref<3168x1xf32, #tpu.memory_space<vmem>>, vector<32x1xf32>
    %809 = vector.broadcast %808 : vector<32x1xf32> to vector<32x100xf32>
    %810 = arith.addf %807, %809 : vector<32x100xf32>
    %cst_328 = arith.constant 0.000000e+00 : f32
    %811 = vector.broadcast %cst_328 : f32 to vector<32x100xf32>
    %812 = arith.cmpf oge, %810, %811 : vector<32x100xf32>
    %cst_329 = arith.constant 0.00999999977 : f32
    %813 = vector.broadcast %cst_329 : f32 to vector<32x100xf32>
    %814 = arith.mulf %813, %810 : vector<32x100xf32>
    %815 = arith.select %812, %810, %814 : vector<32x100xi1>, vector<32x100xf32>
    %c512 = arith.constant 512 : index
    %c0_330 = arith.constant 0 : index
    %816 = vector.load %arg2[%c512, %c0_330] : memref<1760x100xbf16, #tpu.memory_space<vmem>>, vector<300x32xbf16>
    %817 = arith.truncf %815 : vector<32x100xf32> to vector<32x100xbf16>
    %cst_331 = arith.constant dense<0.000000e+00> : vector<300x100xf32>
    %818 = tpu.matmul %816, %817, %cst_331 {dimension_numbers = #tpu.dot_dimension_numbers<[1], [0], [0], [1], [0, 0, 1, 1], [], []>} : vector<300x32xbf16>, vector<32x100xbf16>, vector<300x100xf32> -> vector<300x100xf32>
    %c2864 = arith.constant 2864 : index
    %c0_332 = arith.constant 0 : index
    %819 = vector.load %arg3[%c2864, %c0_332] : memref<3168x1xf32, #tpu.memory_space<vmem>>, vector<300x1xf32>
    %820 = vector.broadcast %819 : vector<300x1xf32> to vector<300x100xf32>
    %821 = arith.addf %818, %820 : vector<300x100xf32>
    %c0_333 = arith.constant 0 : index
    %c0_334 = arith.constant 0 : index
    %822 = vector.load %arg4[%c0_333, %c0_334] : memref<300x100xf32, #tpu.memory_space<vmem>>, vector<300x100xf32>
    tpu.vector_store %arg4[%c0_333, %c0_334], %821 {strides = array<i32>} : memref<300x100xf32, #tpu.memory_space<vmem>>, vector<300x100xf32>,
    return
  }
}

</mosaic_0001>

<llo_original>
// kernel: forward.1
$region0: #{forward.1}
  #allocation0 [shape = 'u32[]', space=smem, size = 0x4, offset = 0x4, fixed_abs, tag = 'smem constant byte address 0x4 - core index']
  #allocation1 [shape = 'u32[144,128]{1,0:T(1,128)}', space=vmem, size = 0x12000, scoped, tag = 'internal scratch']
  %s0 = inlined_call_operand.vmem [shape: f32[100,300], index: 0, kind: input, shape index: {}]
  %s1 = inlined_call_operand.vmem [shape: bf16[624,300], index: 1, kind: input, shape index: {}]
  %s2 = inlined_call_operand.vmem [shape: bf16[1760,100], index: 2, kind: input, shape index: {}]
  %s3 = inlined_call_operand.vmem [shape: f32[3168,1], index: 3, kind: input, shape index: {}]
  %s4 = inlined_call_operand.vmem [shape: f32[300,100], index: 4, kind: output, shape index: {}]
  %s5 = sld [smem:[#allocation0]]
  $region26: #{forward.1} parent=0
    _
  %s7 = ssub.s32 1, %s5
  %s8 = scalar_select 0, %s7, %s5
  // Predicated region
  $region2: #{forward.1} parent=0 // pred_check
    _
  $region3: #{forward.1} parent=0 // pred_check_branch
    %10 = sbr.rel (0) target = $region5
  $region4: #{forward.1} parent=0 // pred_region
    _
  $region5: #{forward.1} parent=0 // pred_fallthru
    _
  // Predicated region
  $region6: #{forward.1} parent=0 // pred_check
    _
  $region7: #{forward.1} parent=0 // pred_check_branch
    %12 = sbr.rel (0) target = $region9
  $region8: #{forward.1} parent=0 // pred_region
    _
  $region9: #{forward.1} parent=0 // pred_fallthru
    _
  // Predicated region
  $region10: #{forward.1} parent=0 // pred_check
    _
  $region11: #{forward.1} parent=0 // pred_check_branch
    %14 = sbr.rel (0) target = $region13
  $region12: #{forward.1} parent=0 // pred_region
    _
  $region13: #{forward.1} parent=0 // pred_fallthru
    _
  // Predicated region
  $region14: #{forward.1} parent=0 // pred_check
    _
  $region15: #{forward.1} parent=0 // pred_check_branch
    %16 = sbr.rel (0) target = $region17
  $region16: #{forward.1} parent=0 // pred_region
    _
  $region17: #{forward.1} parent=0 // pred_fallthru
    _
  %v18 = vld [vmem:[%s0] sm:$0xff]
  %v19 = vld [vmem:[%s0 + $0x8] sm:$0xff]
  %v20 = vld [vmem:[%s0 + $0x10] sm:$0xff]
  %v21 = vld [vmem:[%s0 + $0x18] sm:$0xff]
  %v22 = vld [vmem:[%s0 + $0x20] sm:$0xff]
  %v23 = vld [vmem:[%s0 + $0x28] sm:$0xff]
  %v24 = vld [vmem:[%s0 + $0x30] sm:$0xff]
  %v25 = vld [vmem:[%s0 + $0x38] sm:$0xff]
  %v26 = vld [vmem:[%s0 + $0x40] sm:$0xff]
  %v27 = vld [vmem:[%s0 + $0x48] sm:$0xff]
  %v28 = vld [vmem:[%s0 + $0x50] sm:$0xff]
  %v29 = vld [vmem:[%s0 + $0x58] sm:$0xff]
  %v30 = vld [vmem:[%s0 + $0x60] sm:$0xff]
  %v31 = vld [vmem:[%s0 + $0x68] sm:$0xff]
  %v32 = vld [vmem:[%s0 + $0x70] sm:$0xff]
  %v33 = vld [vmem:[%s0 + $0x78] sm:$0xff]
  %v34 = vld [vmem:[%s0 + $0x80] sm:$0xff]
  %v35 = vld [vmem:[%s0 + $0x88] sm:$0xff]
  %v36 = vld [vmem:[%s0 + $0x90] sm:$0xff]
  %v37 = vld [vmem:[%s0 + $0x98] sm:$0xff]
  %v38 = vld [vmem:[%s0 + $0xa0] sm:$0xff]
  %v39 = vld [vmem:[%s0 + $0xa8] sm:$0xff]
  %v40 = vld [vmem:[%s0 + $0xb0] sm:$0xff]
  %v41 = vld [vmem:[%s0 + $0xb8] sm:$0xff]
  %v42 = vld [vmem:[%s0 + $0xc0] sm:$0xff]
  %v43 = vld [vmem:[%s0 + $0xc8] sm:$0xff]
  %v44 = vld [vmem:[%s0 + $0xd0] sm:$0xff]
  %v45 = vld [vmem:[%s0 + $0xd8] sm:$0xff]
  %v46 = vld [vmem:[%s0 + $0xe0] sm:$0xff]
  %v47 = vld [vmem:[%s0 + $0xe8] sm:$0xff]
  %v48 = vld [vmem:[%s0 + $0xf0] sm:$0xff]
  %v49 = vld [vmem:[%s0 + $0xf8] sm:$0xff]
  %v50 = vld [vmem:[%s0 + $0x100] sm:$0xff]
  %v51 = vld [vmem:[%s0 + $0x108] sm:$0xff]
  %v52 = vld [vmem:[%s0 + $0x110] sm:$0xff]
  %v53 = vld [vmem:[%s0 + $0x118] sm:$0xff]
  %v54 = vld [vmem:[%s0 + $0x120] sm:$0xf]
  %v55 = vld [vmem:[%s0 + $0x128] sm:$0xf]
  %v56 = vld [vmem:[%s0 + $0x130] sm:$0xf]
  %v57 = vld [vmem:[%s1] sm:$0xff]
  %v58 = vld [vmem:[%s1 + $0x8] sm:$0xf]
  %v59 = vld [vmem:[%s1 + $0xc] sm:$0xff]
  %v60 = vld [vmem:[%s1 + $0x14] sm:$0xf]
  %v61 = vld [vmem:[%s1 + $0x18] sm:$0xff]
  %v62 = vld [vmem:[%s1 + $0x20] sm:$0xf]
  %v63 = vld [vmem:[%s1 + $0x24] sm:$0xff]
  %v64 = vld [vmem:[%s1 + $0x2c] sm:$0xf]
  %v65 = vld [vmem:[%s1 + $0x30] sm:$0xff]
  %v66 = vld [vmem:[%s1 + $0x38] sm:$0xf]
  %v67 = vld [vmem:[%s1 + $0x3c] sm:$0xff]
  %v68 = vld [vmem:[%s1 + $0x44] sm:$0xf]
  %v69 = vld [vmem:[%s1 + $0x48] sm:$0xff]
  %v70 = vld [vmem:[%s1 + $0x50] sm:$0xf]
  %v71 = vld [vmem:[%s1 + $0x54] sm:$0xff]
  %v72 = vld [vmem:[%s1 + $0x5c] sm:$0xf]
  %v73 = vld [vmem:[%s1 + $0x60] sm:$0xff]
  %v74 = vld [vmem:[%s1 + $0x68] sm:$0xf]
  %v75 = vld [vmem:[%s1 + $0x6c] sm:$0xff]
  %v76 = vld [vmem:[%s1 + $0x74] sm:$0xf]
  %v77 = vld [vmem:[%s1 + $0x78] sm:$0xff]
  %v78 = vld [vmem:[%s1 + $0x80] sm:$0xf]
  %v79 = vld [vmem:[%s1 + $0x84] sm:$0xff]
  %v80 = vld [vmem:[%s1 + $0x8c] sm:$0xf]
  %v81 = vld [vmem:[%s1 + $0x90] sm:$0xff]
  %v82 = vld [vmem:[%s1 + $0x98] sm:$0xf]
  %v83 = vld [vmem:[%s1 + $0x9c] sm:$0xff]
  %v84 = vld [vmem:[%s1 + $0xa4] sm:$0xf]
  %v85 = vld [vmem:[%s1 + $0xa8] sm:$0xff]
  %v86 = vld [vmem:[%s1 + $0xb0] sm:$0xf]
  %v87 = vld [vmem:[%s1 + $0xb4] sm:$0xff]
  %v88 = vld [vmem:[%s1 + $0xbc] sm:$0xf]
  %v89 = vld [vmem:[%s1 + $0xc0] sm:$0xff]
  %v90 = vld [vmem:[%s1 + $0xc8] sm:$0xf]
  %v91 = vld [vmem:[%s1 + $0xcc] sm:$0xff]
  %v92 = vld [vmem:[%s1 + $0xd4] sm:$0xf]
  %v93 = vld [vmem:[%s1 + $0xd8] sm:$0xff]
  %v94 = vld [vmem:[%s1 + $0xe0] sm:$0xf]
  %v95 = vld [vmem:[%s1 + $0xe4] sm:$0xff]
  %v96 = vld [vmem:[%s1 + $0xec] sm:$0xf]
  %v97 = vld [vmem:[%s1 + $0xf0] sm:$0xff]
  %v98 = vld [vmem:[%s1 + $0xf8] sm:$0xf]
  %v99 = vld [vmem:[%s1 + $0xfc] sm:$0xff]
  %v100 = vld [vmem:[%s1 + $0x104] sm:$0xf]
  %v101 = vld [vmem:[%s1 + $0x108] sm:$0xff]
  %v102 = vld [vmem:[%s1 + $0x110] sm:$0xf]
  %v103 = vld [vmem:[%s1 + $0x114] sm:$0xff]
  %v104 = vld [vmem:[%s1 + $0x11c] sm:$0xf]
  %v105 = vld [vmem:[%s1 + $0x120] sm:$0xff]
  %v106 = vld [vmem:[%s1 + $0x128] sm:$0xf]
  %v107 = vld [vmem:[%s1 + $0x12c] sm:$0xff]
  %v108 = vld [vmem:[%s1 + $0x134] sm:$0xf]
  %v109 = vld [vmem:[%s1 + $0x138] sm:$0xff]
  %v110 = vld [vmem:[%s1 + $0x140] sm:$0xf]
  %v111 = vld [vmem:[%s1 + $0x144] sm:$0xff]
  %v112 = vld [vmem:[%s1 + $0x14c] sm:$0xf]
  %v113 = vld [vmem:[%s1 + $0x150] sm:$0xff]
  %v114 = vld [vmem:[%s1 + $0x158] sm:$0xf]
  %v115 = vld [vmem:[%s1 + $0x15c] sm:$0xff]
  %v116 = vld [vmem:[%s1 + $0x164] sm:$0xf]
  %v117 = vld [vmem:[%s1 + $0x168] sm:$0xff]
  %v118 = vld [vmem:[%s1 + $0x170] sm:$0xf]
  %v119 = vld [vmem:[%s1 + $0x174] sm:$0xff]
  %v120 = vld [vmem:[%s1 + $0x17c] sm:$0xf]
  %v121 = vld [vmem:[%s1 + $0x180] sm:$0xff]
  %v122 = vld [vmem:[%s1 + $0x188] sm:$0xf]
  %v123 = vld [vmem:[%s1 + $0x18c] sm:$0xff]
  %v124 = vld [vmem:[%s1 + $0x194] sm:$0xf]
  %v125 = vld [vmem:[%s1 + $0x198] sm:$0xff]
  %v126 = vld [vmem:[%s1 + $0x1a0] sm:$0xf]
  %v127 = vld [vmem:[%s1 + $0x1a4] sm:$0xff]
  %v128 = vld [vmem:[%s1 + $0x1ac] sm:$0xf]
  %v129 = vld [vmem:[%s1 + $0x1b0] sm:$0xff]
  %v130 = vld [vmem:[%s1 + $0x1b8] sm:$0xf]
  %v131 = vld [vmem:[%s1 + $0x1bc] sm:$0xff]
  %v132 = vld [vmem:[%s1 + $0x1c4] sm:$0xf]
  %v133 = vld [vmem:[%s1 + $0x1c8] sm:$0xff]
  %v134 = vld [vmem:[%s1 + $0x1d0] sm:$0xf]
  %v135 = vld [vmem:[%s1 + $0x1d4] sm:$0xff]
  %v136 = vld [vmem:[%s1 + $0x1dc] sm:$0xf]
  %v137 = vld [vmem:[%s1 + $0x1e0] sm:$0xff]
  %v138 = vld [vmem:[%s1 + $0x1e8] sm:$0xf]
  %v139 = vld [vmem:[%s1 + $0x1ec] sm:$0x33]
  %v140 = vld [vmem:[%s1 + $0x1f4] sm:$0x3]
  %v141 = vpack.c.bf16 %v21, %v18
  %v142 = vpack.c.bf16 %v22, %v19
  %v143 = vpack.c.bf16 %v23, %v20
  %v144 = vpack.c.bf16 %v27, %v24
  %v145 = vpack.c.bf16 %v28, %v25
  %v146 = vpack.c.bf16 %v29, %v26
  %v147 = vpack.c.bf16 %v33, %v30
  %v148 = vpack.c.bf16 %v34, %v31
  %v149 = vpack.c.bf16 %v35, %v32
  %v150 = vpack.c.bf16 %v39, %v36
  %v151 = vpack.c.bf16 %v40, %v37
  %v152 = vpack.c.bf16 %v41, %v38
  %v153 = vpack.c.bf16 %v45, %v42
  %v154 = vpack.c.bf16 %v46, %v43
  %v155 = vpack.c.bf16 %v47, %v44
  %v156 = vpack.c.bf16 %v51, %v48
  %v157 = vpack.c.bf16 %v52, %v49
  %v158 = vpack.c.bf16 %v53, %v50
  %v159 = vpack.c.bf16 %v54, %v54
  %v160 = vpack.c.bf16 %v55, %v55
  %v161 = vpack.c.bf16 %v56, %v56
  %v162 = vld [vmem:[%s3] sm:$0xff]
  %v163 = vld [vmem:[%s3 + $0x8] sm:$0xff]
  %v164 = vld [vmem:[%s3 + $0x10] sm:$0xff]
  %v165 = vld [vmem:[%s3 + $0x18] sm:$0xff]
  %v166 = vld [vmem:[%s3 + $0x20] sm:$0xff]
  %v167 = vld [vmem:[%s3 + $0x28] sm:$0xff]
  %v168 = vld [vmem:[%s3 + $0x30] sm:$0xff]
  %v169 = vld [vmem:[%s3 + $0x38] sm:$0xff]
  %v170 = vld [vmem:[%s3 + $0x40] sm:$0xff]
  %v171 = vld [vmem:[%s3 + $0x48] sm:$0xff]
  %v172 = vld [vmem:[%s3 + $0x50] sm:$0xff]
  %v173 = vld [vmem:[%s3 + $0x58] sm:$0xff]
  %v174 = vld [vmem:[%s3 + $0x60] sm:$0xff]
  %v175 = vld [vmem:[%s3 + $0x68] sm:$0xff]
  %v176 = vld [vmem:[%s3 + $0x70] sm:$0xff]
  %v177 = vld [vmem:[%s3 + $0x78] sm:$0xff]
  %v178 = vld [vmem:[%s3 + $0x80] sm:$0xff]
  %v179 = vld [vmem:[%s3 + $0x88] sm:$0xff]
  %v180 = vld [vmem:[%s3 + $0x90] sm:$0xff]
  %v181 = vld [vmem:[%s3 + $0x98] sm:$0xff]
  %v182 = vld [vmem:[%s3 + $0xa0] sm:$0xff]
  %v183 = vld [vmem:[%s3 + $0xa8] sm:$0xff]
  %v184 = vld [vmem:[%s3 + $0xb0] sm:$0xff]
  %v185 = vld [vmem:[%s3 + $0xb8] sm:$0xff]
  %v186 = vld [vmem:[%s3 + $0xc0] sm:$0xff]
  %v187 = vld [vmem:[%s3 + $0xc8] sm:$0xff]
  %v188 = vld [vmem:[%s3 + $0xd0] sm:$0xff]
  %v189 = vld [vmem:[%s3 + $0xd8] sm:$0xff]
  %v190 = vld [vmem:[%s3 + $0xe0] sm:$0xff]
  %v191 = vld [vmem:[%s3 + $0xe8] sm:$0xff]
  %v192 = vld [vmem:[%s3 + $0xf0] sm:$0xff]
  %v193 = vld [vmem:[%s3 + $0xf8] sm:$0xff]
  %v194 = vld [vmem:[%s3 + $0x100] sm:$0xff]
  %v195 = vld [vmem:[%s3 + $0x108] sm:$0xff]
  %v196 = vld [vmem:[%s3 + $0x110] sm:$0xff]
  %v197 = vld [vmem:[%s3 + $0x118] sm:$0xff]
  %v198 = vld [vmem:[%s3 + $0x120] sm:$0xff]
  %v199 = vld [vmem:[%s3 + $0x128] sm:$0xff]
  %v200 = vld [vmem:[%s3 + $0x130] sm:$0xff]
  %v201 = vld [vmem:[%s3 + $0x138] sm:$0xff]
  %v202 = vld [vmem:[%s3 + $0x140] sm:$0xff]
  %v203 = vld [vmem:[%s3 + $0x148] sm:$0xf]
  %205 = vset.pattern.permute.xlu0 0
  %206 = vperm.xlu0 %205, %v162
  %v207 = vpop.permute.xlu0 %206
  %210 = vset.pattern.permute.xlu0 0
  %211 = vperm.xlu0 %210, %v163
  %v212 = vpop.permute.xlu0 %211
  %215 = vset.pattern.permute.xlu0 0
  %216 = vperm.xlu0 %215, %v164
  %v217 = vpop.permute.xlu0 %216
  %220 = vset.pattern.permute.xlu0 0
  %221 = vperm.xlu0 %220, %v165
  %v222 = vpop.permute.xlu0 %221
  %225 = vset.pattern.permute.xlu0 0
  %226 = vperm.xlu0 %225, %v166
  %v227 = vpop.permute.xlu0 %226
  %230 = vset.pattern.permute.xlu0 0
  %231 = vperm.xlu0 %230, %v167
  %v232 = vpop.permute.xlu0 %231
  %235 = vset.pattern.permute.xlu0 0
  %236 = vperm.xlu0 %235, %v168
  %v237 = vpop.permute.xlu0 %236
  %240 = vset.pattern.permute.xlu0 0
  %241 = vperm.xlu0 %240, %v169
  %v242 = vpop.permute.xlu0 %241
  %245 = vset.pattern.permute.xlu0 0
  %246 = vperm.xlu0 %245, %v170
  %v247 = vpop.permute.xlu0 %246
  %250 = vset.pattern.permute.xlu0 0
  %251 = vperm.xlu0 %250, %v171
  %v252 = vpop.permute.xlu0 %251
  %255 = vset.pattern.permute.xlu0 0
  %256 = vperm.xlu0 %255, %v172
  %v257 = vpop.permute.xlu0 %256
  %260 = vset.pattern.permute.xlu0 0
  %261 = vperm.xlu0 %260, %v173
  %v262 = vpop.permute.xlu0 %261
  %265 = vset.pattern.permute.xlu0 0
  %266 = vperm.xlu0 %265, %v174
  %v267 = vpop.permute.xlu0 %266
  %270 = vset.pattern.permute.xlu0 0
  %271 = vperm.xlu0 %270, %v175
  %v272 = vpop.permute.xlu0 %271
  %275 = vset.pattern.permute.xlu0 0
  %276 = vperm.xlu0 %275, %v176
  %v277 = vpop.permute.xlu0 %276
  %280 = vset.pattern.permute.xlu0 0
  %281 = vperm.xlu0 %280, %v177
  %v282 = vpop.permute.xlu0 %281
  %285 = vset.pattern.permute.xlu0 0
  %286 = vperm.xlu0 %285, %v178
  %v287 = vpop.permute.xlu0 %286
  %290 = vset.pattern.permute.xlu0 0
  %291 = vperm.xlu0 %290, %v179
  %v292 = vpop.permute.xlu0 %291
  %295 = vset.pattern.permute.xlu0 0
  %296 = vperm.xlu0 %295, %v180
  %v297 = vpop.permute.xlu0 %296
  %300 = vset.pattern.permute.xlu0 0
  %301 = vperm.xlu0 %300, %v181
  %v302 = vpop.permute.xlu0 %301
  %305 = vset.pattern.permute.xlu0 0
  %306 = vperm.xlu0 %305, %v182
  %v307 = vpop.permute.xlu0 %306
  %310 = vset.pattern.permute.xlu0 0
  %311 = vperm.xlu0 %310, %v183
  %v312 = vpop.permute.xlu0 %311
  %315 = vset.pattern.permute.xlu0 0
  %316 = vperm.xlu0 %315, %v184
  %v317 = vpop.permute.xlu0 %316
  %320 = vset.pattern.permute.xlu0 0
  %321 = vperm.xlu0 %320, %v185
  %v322 = vpop.permute.xlu0 %321
  %325 = vset.pattern.permute.xlu0 0
  %326 = vperm.xlu0 %325, %v186
  %v327 = vpop.permute.xlu0 %326
  %330 = vset.pattern.permute.xlu0 0
  %331 = vperm.xlu0 %330, %v187
  %v332 = vpop.permute.xlu0 %331
  %335 = vset.pattern.permute.xlu0 0
  %336 = vperm.xlu0 %335, %v188
  %v337 = vpop.permute.xlu0 %336
  %340 = vset.pattern.permute.xlu0 0
  %341 = vperm.xlu0 %340, %v189
  %v342 = vpop.permute.xlu0 %341
  %345 = vset.pattern.permute.xlu0 0
  %346 = vperm.xlu0 %345, %v190
  %v347 = vpop.permute.xlu0 %346
  %350 = vset.pattern.permute.xlu0 0
  %351 = vperm.xlu0 %350, %v191
  %v352 = vpop.permute.xlu0 %351
  %355 = vset.pattern.permute.xlu0 0
  %356 = vperm.xlu0 %355, %v192
  %v357 = vpop.permute.xlu0 %356
  %360 = vset.pattern.permute.xlu0 0
  %361 = vperm.xlu0 %360, %v193
  %v362 = vpop.permute.xlu0 %361
  %365 = vset.pattern.permute.xlu0 0
  %366 = vperm.xlu0 %365, %v194
  %v367 = vpop.permute.xlu0 %366
  %370 = vset.pattern.permute.xlu0 0
  %371 = vperm.xlu0 %370, %v195
  %v372 = vpop.permute.xlu0 %371
  %375 = vset.pattern.permute.xlu0 0
  %376 = vperm.xlu0 %375, %v196
  %v377 = vpop.permute.xlu0 %376
  %380 = vset.pattern.permute.xlu0 0
  %381 = vperm.xlu0 %380, %v197
  %v382 = vpop.permute.xlu0 %381
  %385 = vset.pattern.permute.xlu0 0
  %386 = vperm.xlu0 %385, %v198
  %v387 = vpop.permute.xlu0 %386
  %390 = vset.pattern.permute.xlu0 0
  %391 = vperm.xlu0 %390, %v199
  %v392 = vpop.permute.xlu0 %391
  %395 = vset.pattern.permute.xlu0 0
  %396 = vperm.xlu0 %395, %v200
  %v397 = vpop.permute.xlu0 %396
  %400 = vset.pattern.permute.xlu0 0
  %401 = vperm.xlu0 %400, %v201
  %v402 = vpop.permute.xlu0 %401
  %405 = vset.pattern.permute.xlu0 0
  %406 = vperm.xlu0 %405, %v202
  %v407 = vpop.permute.xlu0 %406
  %410 = vset.pattern.permute.xlu0 0
  %411 = vperm.xlu0 %410, %v203
  %v412 = vpop.permute.xlu0 %411
  %v498 = vunpack.c.l.b16 %v57
  %v499 = vunpack.c.h.b16 %v57
  %v500 = vunpack.c.l.b16 %v58
  %v501 = vunpack.c.l.b16 %v59
  %v502 = vunpack.c.h.b16 %v59
  %v503 = vunpack.c.l.b16 %v60
  %v504 = vunpack.c.l.b16 %v61
  %v505 = vunpack.c.h.b16 %v61
  %v506 = vunpack.c.l.b16 %v62
  %v507 = vunpack.c.l.b16 %v63
  %v508 = vunpack.c.h.b16 %v63
  %v509 = vunpack.c.l.b16 %v64
  %v510 = vunpack.c.l.b16 %v65
  %v511 = vunpack.c.h.b16 %v65
  %v512 = vunpack.c.l.b16 %v66
  %v513 = vunpack.c.l.b16 %v67
  %v514 = vunpack.c.h.b16 %v67
  %v515 = vunpack.c.l.b16 %v68
  %v516 = vunpack.c.l.b16 %v69
  %v517 = vunpack.c.h.b16 %v69
  %v518 = vunpack.c.l.b16 %v70
  %v519 = vunpack.c.l.b16 %v71
  %v520 = vunpack.c.h.b16 %v71
  %v521 = vunpack.c.l.b16 %v72
  %v522 = vunpack.c.l.b16 %v73
  %v523 = vunpack.c.h.b16 %v73
  %v524 = vunpack.c.l.b16 %v74
  %v525 = vunpack.c.l.b16 %v75
  %v526 = vunpack.c.h.b16 %v75
  %v527 = vunpack.c.l.b16 %v76
  %v528 = vunpack.c.l.b16 %v77
  %v529 = vunpack.c.h.b16 %v77
  %v530 = vunpack.c.l.b16 %v78
  %v531 = vunpack.c.l.b16 %v79
  %v532 = vunpack.c.h.b16 %v79
  %v533 = vunpack.c.l.b16 %v80
  %v534 = vunpack.c.l.b16 %v81
  %v535 = vunpack.c.h.b16 %v81
  %v536 = vunpack.c.l.b16 %v82
  %v537 = vunpack.c.l.b16 %v83
  %v538 = vunpack.c.h.b16 %v83
  %v539 = vunpack.c.l.b16 %v84
  %v540 = vunpack.c.l.b16 %v85
  %v541 = vunpack.c.h.b16 %v85
  %v542 = vunpack.c.l.b16 %v86
  %v543 = vunpack.c.l.b16 %v87
  %v544 = vunpack.c.h.b16 %v87
  %v545 = vunpack.c.l.b16 %v88
  %v546 = vunpack.c.l.b16 %v89
  %v547 = vunpack.c.h.b16 %v89
  %v548 = vunpack.c.l.b16 %v90
  %v549 = vunpack.c.l.b16 %v91
  %v550 = vunpack.c.h.b16 %v91
  %v551 = vunpack.c.l.b16 %v92
  %v552 = vunpack.c.l.b16 %v93
  %v553 = vunpack.c.h.b16 %v93
  %v554 = vunpack.c.l.b16 %v94
  %v555 = vunpack.c.l.b16 %v95
  %v556 = vunpack.c.h.b16 %v95
  %v557 = vunpack.c.l.b16 %v96
  %v558 = vunpack.c.l.b16 %v97
  %v559 = vunpack.c.h.b16 %v97
  %v560 = vunpack.c.l.b16 %v98
  %v561 = vunpack.c.l.b16 %v99
  %v562 = vunpack.c.h.b16 %v99
  %v563 = vunpack.c.l.b16 %v100
  %v564 = vunpack.c.l.b16 %v101
  %v565 = vunpack.c.h.b16 %v101
  %v566 = vunpack.c.l.b16 %v102
  %v567 = vunpack.c.l.b16 %v103
  %v568 = vunpack.c.h.b16 %v103
  %v569 = vunpack.c.l.b16 %v104
  %v570 = vunpack.c.l.b16 %v105
  %v571 = vunpack.c.h.b16 %v105
  %v572 = vunpack.c.l.b16 %v106
  %v573 = vunpack.c.l.b16 %v107
  %v574 = vunpack.c.h.b16 %v107
  %v575 = vunpack.c.l.b16 %v108
  %v576 = vunpack.c.l.b16 %v109
  %v577 = vunpack.c.h.b16 %v109
  %v578 = vunpack.c.l.b16 %v110
  %v579 = vunpack.c.l.b16 %v111
  %v580 = vunpack.c.h.b16 %v111
  %v581 = vunpack.c.l.b16 %v112
  %v582 = vunpack.c.l.b16 %v113
  %v583 = vunpack.c.h.b16 %v113
  %v584 = vunpack.c.l.b16 %v114
  %v585 = vunpack.c.l.b16 %v115
  %v586 = vunpack.c.h.b16 %v115
  %v587 = vunpack.c.l.b16 %v116
  %v588 = vunpack.c.l.b16 %v117
  %v589 = vunpack.c.h.b16 %v117
  %v590 = vunpack.c.l.b16 %v118
  %v591 = vunpack.c.l.b16 %v119
  %v592 = vunpack.c.h.b16 %v119
  %v593 = vunpack.c.l.b16 %v120
  %v594 = vunpack.c.l.b16 %v121
  %v595 = vunpack.c.h.b16 %v121
  %v596 = vunpack.c.l.b16 %v122
  %v597 = vunpack.c.l.b16 %v123
  %v598 = vunpack.c.h.b16 %v123
  %v599 = vunpack.c.l.b16 %v124
  %v600 = vunpack.c.l.b16 %v125
  %v601 = vunpack.c.h.b16 %v125
  %v602 = vunpack.c.l.b16 %v126
  %v603 = vunpack.c.l.b16 %v127
  %v604 = vunpack.c.h.b16 %v127
  %v605 = vunpack.c.l.b16 %v128
  %v606 = vunpack.c.l.b16 %v129
  %v607 = vunpack.c.h.b16 %v129
  %v608 = vunpack.c.l.b16 %v130
  %v609 = vunpack.c.l.b16 %v131
  %v610 = vunpack.c.h.b16 %v131
  %v611 = vunpack.c.l.b16 %v132
  %v612 = vunpack.c.l.b16 %v133
  %v613 = vunpack.c.h.b16 %v133
  %v614 = vunpack.c.l.b16 %v134
  %v615 = vunpack.c.l.b16 %v135
  %v616 = vunpack.c.h.b16 %v135
  %v617 = vunpack.c.l.b16 %v136
  %v618 = vunpack.c.l.b16 %v137
  %v619 = vunpack.c.h.b16 %v137
  %v620 = vunpack.c.l.b16 %v138
  %v621 = vunpack.c.l.b16 %v139
  %v622 = vunpack.c.h.b16 %v139
  %v623 = vunpack.c.l.b16 %v140
  %v624 = vpack.c.b16 %v501, %v498
  %v625 = vpack.c.b16 %v502, %v499
  %v626 = vpack.c.b16 %v503, %v500
  %v627 = vpack.c.b16 %v507, %v504
  %v628 = vpack.c.b16 %v508, %v505
  %v629 = vpack.c.b16 %v509, %v506
  %v630 = vpack.c.b16 %v513, %v510
  %v631 = vpack.c.b16 %v514, %v511
  %v632 = vpack.c.b16 %v515, %v512
  %v633 = vpack.c.b16 %v519, %v516
  %v634 = vpack.c.b16 %v520, %v517
  %v635 = vpack.c.b16 %v521, %v518
  %v636 = vpack.c.b16 %v525, %v522
  %v637 = vpack.c.b16 %v526, %v523
  %v638 = vpack.c.b16 %v527, %v524
  %v639 = vpack.c.b16 %v531, %v528
  %v640 = vpack.c.b16 %v532, %v529
  %v641 = vpack.c.b16 %v533, %v530
  %v642 = vpack.c.b16 %v537, %v534
  %v643 = vpack.c.b16 %v538, %v535
  %v644 = vpack.c.b16 %v539, %v536
  %v645 = vpack.c.b16 %v543, %v540
  %v646 = vpack.c.b16 %v544, %v541
  %v647 = vpack.c.b16 %v545, %v542
  %v648 = vpack.c.b16 %v549, %v546
  %v649 = vpack.c.b16 %v550, %v547
  %v650 = vpack.c.b16 %v551, %v548
  %v651 = vpack.c.b16 %v555, %v552
  %v652 = vpack.c.b16 %v556, %v553
  %v653 = vpack.c.b16 %v557, %v554
  %v654 = vpack.c.b16 %v561, %v558
  %v655 = vpack.c.b16 %v562, %v559
  %v656 = vpack.c.b16 %v563, %v560
  %v657 = vpack.c.b16 %v567, %v564
  %v658 = vpack.c.b16 %v568, %v565
  %v659 = vpack.c.b16 %v569, %v566
  %v660 = vpack.c.b16 %v573, %v570
  %v661 = vpack.c.b16 %v574, %v571
  %v662 = vpack.c.b16 %v575, %v572
  %v663 = vpack.c.b16 %v579, %v576
  %v664 = vpack.c.b16 %v580, %v577
  %v665 = vpack.c.b16 %v581, %v578
  %v666 = vpack.c.b16 %v585, %v582
  %v667 = vpack.c.b16 %v586, %v583
  %v668 = vpack.c.b16 %v587, %v584
  %v669 = vpack.c.b16 %v591, %v588
  %v670 = vpack.c.b16 %v592, %v589
  %v671 = vpack.c.b16 %v593, %v590
  %v672 = vpack.c.b16 %v597, %v594
  %v673 = vpack.c.b16 %v598, %v595
  %v674 = vpack.c.b16 %v599, %v596
  %v675 = vpack.c.b16 %v603, %v600
  %v676 = vpack.c.b16 %v604, %v601
  %v677 = vpack.c.b16 %v605, %v602
  %v678 = vpack.c.b16 %v609, %v606
  %v679 = vpack.c.b16 %v610, %v607
  %v680 = vpack.c.b16 %v611, %v608
  %v681 = vpack.c.b16 %v615, %v612
  %v682 = vpack.c.b16 %v616, %v613
  %v683 = vpack.c.b16 %v617, %v614
  %v684 = vpack.c.b16 %v621, %v618
  %v685 = vpack.c.b16 %v622, %v619
  %v686 = vpack.c.b16 %v623, %v620
  %vm729 = vcmask 359424
  %v731 = vsel %vm729, %v626, 0
  %v734 = vsel %vm729, %v629, 0
  %v737 = vsel %vm729, %v632, 0
  %v740 = vsel %vm729, %v635, 0
  %v743 = vsel %vm729, %v638, 0
  %v746 = vsel %vm729, %v641, 0
  %v749 = vsel %vm729, %v644, 0
  %v752 = vsel %vm729, %v647, 0
  %v755 = vsel %vm729, %v650, 0
  %v758 = vsel %vm729, %v653, 0
  %v761 = vsel %vm729, %v656, 0
  %v764 = vsel %vm729, %v659, 0
  %v767 = vsel %vm729, %v662, 0
  %v770 = vsel %vm729, %v665, 0
  %v773 = vsel %vm729, %v668, 0
  %v776 = vsel %vm729, %v671, 0
  %v779 = vsel %vm729, %v674, 0
  %v782 = vsel %vm729, %v677, 0
  %v785 = vsel %vm729, %v680, 0
  %v788 = vsel %vm729, %v683, 0
  %v791 = vsel %vm729, %v686, 0
  %v794 = vsel %vm729, %v143, 0
  %v797 = vsel %vm729, %v146, 0
  %v800 = vsel %vm729, %v149, 0
  %v803 = vsel %vm729, %v152, 0
  %v806 = vsel %vm729, %v155, 0
  %v809 = vsel %vm729, %v158, 0
  %v812 = vsel %vm729, %v161, 0
  %814 = vmatprep.subr.bf16.mxu0 0
  %815 = vmatpush1.bf16.xpose.msra.mxu0 0
  %816 = vmatprep.subr.bf16.mxu0 %v160
  %817 = vmatpush1.bf16.xpose.msra.mxu0 %v159
  %818 = vmatprep.subr.bf16.mxu0 %v157
  %819 = vmatpush1.bf16.xpose.msra.mxu0 %v156
  %820 = vmatprep.subr.bf16.mxu0 %v154
  %821 = vmatpush1.bf16.xpose.msra.mxu0 %v153
  %822 = vmatprep.subr.bf16.mxu0 %v151
  %823 = vmatpush1.bf16.xpose.msra.mxu0 %v150
  %824 = vmatprep.subr.bf16.mxu0 %v148
  %825 = vmatpush1.bf16.xpose.msra.mxu0 %v147
  %826 = vmatprep.subr.bf16.mxu0 %v145
  %827 = vmatpush1.bf16.xpose.msra.mxu0 %v144
  %828 = vmatprep.subr.bf16.mxu0 %v142
  %829 = vmatpush1.bf16.xpose.msra.mxu0 %v141
  %830 = vmatprep.subr.bf16.mxu0 0
  %831 = vmatpush2.bf16.xpose.msra.mxu0 0
  %832 = vmatprep.subr.bf16.mxu0 0
  %833 = vmatpush2.bf16.xpose.msra.mxu0 0
  %834 = vmatprep.subr.bf16.mxu0 0
  %835 = vmatpush2.bf16.xpose.msra.mxu0 0
  %836 = vmatprep.subr.bf16.mxu0 0
  %837 = vmatpush2.bf16.xpose.msra.mxu0 0
  %838 = vmatprep.subr.bf16.mxu0 0
  %839 = vmatpush2.bf16.xpose.msra.mxu0 0
  %840 = vmatprep.subr.bf16.mxu0 0
  %841 = vmatpush2.bf16.xpose.msra.mxu0 0
  %842 = vmatprep.subr.bf16.mxu0 0
  %843 = vmatpush2.bf16.xpose.msra.mxu0 0
  %844 = vmatprep.subr.bf16.mxu0 0
  %845 = vmatpush2.bf16.xpose.msra.mxu0 0
  %846 = vmatprep.mubr.bf16.mxu0 %v625
  %847 = vmatmul.mubr.bf16.gmra.mxu0 %v624
  %v848 = vpop.f32.mrf.mxu0
  %v849 = vadd.f32 %v207, %v848
  %v850 = vpop.f32.mrf.mxu0
  %v851 = vpop.f32.mrf.mxu0
  %v852 = vadd.f32 %v212, %v851
  %v853 = vpop.f32.mrf.mxu0
  %854 = vmatprep.mubr.bf16.mxu0 %v628
  %855 = vmatmul.mubr.bf16.gmra.mxu0 %v627
  %v856 = vpop.f32.mrf.mxu0
  %v857 = vadd.f32 %v217, %v856
  %v858 = vpop.f32.mrf.mxu0
  %v859 = vpop.f32.mrf.mxu0
  %v860 = vadd.f32 %v222, %v859
  %v861 = vpop.f32.mrf.mxu0
  %862 = vmatprep.mubr.bf16.mxu0 %v631
  %863 = vmatmul.mubr.bf16.gmra.mxu0 %v630
  %v864 = vpop.f32.mrf.mxu0
  %v865 = vadd.f32 %v227, %v864
  %v866 = vpop.f32.mrf.mxu0
  %v867 = vpop.f32.mrf.mxu0
  %v868 = vadd.f32 %v232, %v867
  %v869 = vpop.f32.mrf.mxu0
  %870 = vmatprep.mubr.bf16.mxu0 %v634
  %871 = vmatmul.mubr.bf16.gmra.mxu0 %v633
  %v872 = vpop.f32.mrf.mxu0
  %v873 = vadd.f32 %v237, %v872
  %v874 = vpop.f32.mrf.mxu0
  %v875 = vpop.f32.mrf.mxu0
  %v876 = vadd.f32 %v242, %v875
  %v877 = vpop.f32.mrf.mxu0
  %878 = vmatprep.mubr.bf16.mxu0 %v637
  %879 = vmatmul.mubr.bf16.gmra.mxu0 %v636
  %v880 = vpop.f32.mrf.mxu0
  %v881 = vadd.f32 %v247, %v880
  %v882 = vpop.f32.mrf.mxu0
  %v883 = vpop.f32.mrf.mxu0
  %v884 = vadd.f32 %v252, %v883
  %v885 = vpop.f32.mrf.mxu0
  %886 = vmatprep.mubr.bf16.mxu0 %v640
  %887 = vmatmul.mubr.bf16.gmra.mxu0 %v639
  %v888 = vpop.f32.mrf.mxu0
  %v889 = vadd.f32 %v257, %v888
  %v890 = vpop.f32.mrf.mxu0
  %v891 = vpop.f32.mrf.mxu0
  %v892 = vadd.f32 %v262, %v891
  %v893 = vpop.f32.mrf.mxu0
  %894 = vmatprep.mubr.bf16.mxu0 %v643
  %895 = vmatmul.mubr.bf16.gmra.mxu0 %v642
  %v896 = vpop.f32.mrf.mxu0
  %v897 = vadd.f32 %v267, %v896
  %v898 = vpop.f32.mrf.mxu0
  %v899 = vpop.f32.mrf.mxu0
  %v900 = vadd.f32 %v272, %v899
  %v901 = vpop.f32.mrf.mxu0
  %902 = vmatprep.mubr.bf16.mxu0 %v646
  %903 = vmatmul.mubr.bf16.gmra.mxu0 %v645
  %v904 = vpop.f32.mrf.mxu0
  %v905 = vadd.f32 %v277, %v904
  %v906 = vpop.f32.mrf.mxu0
  %v907 = vpop.f32.mrf.mxu0
  %v908 = vadd.f32 %v282, %v907
  %v909 = vpop.f32.mrf.mxu0
  %910 = vmatprep.mubr.bf16.mxu0 %v649
  %911 = vmatmul.mubr.bf16.gmra.mxu0 %v648
  %v912 = vpop.f32.mrf.mxu0
  %v913 = vadd.f32 %v287, %v912
  %v914 = vpop.f32.mrf.mxu0
  %v915 = vpop.f32.mrf.mxu0
  %v916 = vadd.f32 %v292, %v915
  %v917 = vpop.f32.mrf.mxu0
  %918 = vmatprep.mubr.bf16.mxu0 %v652
  %919 = vmatmul.mubr.bf16.gmra.mxu0 %v651
  %v920 = vpop.f32.mrf.mxu0
  %v921 = vadd.f32 %v297, %v920
  %v922 = vpop.f32.mrf.mxu0
  %v923 = vpop.f32.mrf.mxu0
  %v924 = vadd.f32 %v302, %v923
  %v925 = vpop.f32.mrf.mxu0
  %926 = vmatprep.mubr.bf16.mxu0 %v655
  %927 = vmatmul.mubr.bf16.gmra.mxu0 %v654
  %v928 = vpop.f32.mrf.mxu0
  %v929 = vadd.f32 %v307, %v928
  %v930 = vpop.f32.mrf.mxu0
  %v931 = vpop.f32.mrf.mxu0
  %v932 = vadd.f32 %v312, %v931
  %v933 = vpop.f32.mrf.mxu0
  %934 = vmatprep.mubr.bf16.mxu0 %v658
  %935 = vmatmul.mubr.bf16.gmra.mxu0 %v657
  %v936 = vpop.f32.mrf.mxu0
  %v937 = vadd.f32 %v317, %v936
  %v938 = vpop.f32.mrf.mxu0
  %v939 = vpop.f32.mrf.mxu0
  %v940 = vadd.f32 %v322, %v939
  %v941 = vpop.f32.mrf.mxu0
  %942 = vmatprep.mubr.bf16.mxu0 %v661
  %943 = vmatmul.mubr.bf16.gmra.mxu0 %v660
  %v944 = vpop.f32.mrf.mxu0
  %v945 = vadd.f32 %v327, %v944
  %v946 = vpop.f32.mrf.mxu0
  %v947 = vpop.f32.mrf.mxu0
  %v948 = vadd.f32 %v332, %v947
  %v949 = vpop.f32.mrf.mxu0
  %950 = vmatprep.mubr.bf16.mxu0 %v664
  %951 = vmatmul.mubr.bf16.gmra.mxu0 %v663
  %v952 = vpop.f32.mrf.mxu0
  %v953 = vadd.f32 %v337, %v952
  %v954 = vpop.f32.mrf.mxu0
  %v955 = vpop.f32.mrf.mxu0
  %v956 = vadd.f32 %v342, %v955
  %v957 = vpop.f32.mrf.mxu0
  %958 = vmatprep.mubr.bf16.mxu0 %v667
  %959 = vmatmul.mubr.bf16.gmra.mxu0 %v666
  %v960 = vpop.f32.mrf.mxu0
  %v961 = vadd.f32 %v347, %v960
  %v962 = vpop.f32.mrf.mxu0
  %v963 = vpop.f32.mrf.mxu0
  %v964 = vadd.f32 %v352, %v963
  %v965 = vpop.f32.mrf.mxu0
  %966 = vmatprep.mubr.bf16.mxu0 %v670
  %967 = vmatmul.mubr.bf16.gmra.mxu0 %v669
  %v968 = vpop.f32.mrf.mxu0
  %v969 = vadd.f32 %v357, %v968
  %v970 = vpop.f32.mrf.mxu0
  %v971 = vpop.f32.mrf.mxu0
  %v972 = vadd.f32 %v362, %v971
  %v973 = vpop.f32.mrf.mxu0
  %974 = vmatprep.mubr.bf16.mxu0 %v673
  %975 = vmatmul.mubr.bf16.gmra.mxu0 %v672
  %v976 = vpop.f32.mrf.mxu0
  %v977 = vadd.f32 %v367, %v976
  %v978 = vpop.f32.mrf.mxu0
  %v979 = vpop.f32.mrf.mxu0
  %v980 = vadd.f32 %v372, %v979
  %v981 = vpop.f32.mrf.mxu0
  %982 = vmatprep.mubr.bf16.mxu0 %v676
  %983 = vmatmul.mubr.bf16.gmra.mxu0 %v675
  %v984 = vpop.f32.mrf.mxu0
  %v985 = vadd.f32 %v377, %v984
  %v986 = vpop.f32.mrf.mxu0
  %v987 = vpop.f32.mrf.mxu0
  %v988 = vadd.f32 %v382, %v987
  %v989 = vpop.f32.mrf.mxu0
  %990 = vmatprep.mubr.bf16.mxu0 %v679
  %991 = vmatmul.mubr.bf16.gmra.mxu0 %v678
  %v992 = vpop.f32.mrf.mxu0
  %v993 = vadd.f32 %v387, %v992
  %v994 = vpop.f32.mrf.mxu0
  %v995 = vpop.f32.mrf.mxu0
  %v996 = vadd.f32 %v392, %v995
  %v997 = vpop.f32.mrf.mxu0
  %998 = vmatprep.mubr.bf16.mxu0 %v682
  %999 = vmatmul.mubr.bf16.gmra.mxu0 %v681
  %v1000 = vpop.f32.mrf.mxu0
  %v1001 = vadd.f32 %v397, %v1000
  %v1002 = vpop.f32.mrf.mxu0
  %v1003 = vpop.f32.mrf.mxu0
  %v1004 = vadd.f32 %v402, %v1003
  %v1005 = vpop.f32.mrf.mxu0
  %1006 = vmatprep.mubr.bf16.mxu0 %v685
  %1007 = vmatmul.mubr.bf16.gmra.mxu0 %v684
  %v1008 = vpop.f32.mrf.mxu0
  %v1009 = vadd.f32 %v407, %v1008
  %v1010 = vpop.f32.mrf.mxu0
  %v1011 = vpop.f32.mrf.mxu0
  %v1012 = vadd.f32 %v412, %v1011
  %v1013 = vpop.f32.mrf.mxu0
  %1014 = vdwg.mxu0
  %1015 = vmatprep.subr.bf16.mxu0 0
  %1016 = vmatpush1.bf16.xpose.msra.mxu0 0
  %1017 = vmatprep.subr.bf16.mxu0 0
  %1018 = vmatpush1.bf16.xpose.msra.mxu0 %v812
  %1019 = vmatprep.subr.bf16.mxu0 0
  %1020 = vmatpush1.bf16.xpose.msra.mxu0 %v809
  %1021 = vmatprep.subr.bf16.mxu0 0
  %1022 = vmatpush1.bf16.xpose.msra.mxu0 %v806
  %1023 = vmatprep.subr.bf16.mxu0 0
  %1024 = vmatpush1.bf16.xpose.msra.mxu0 %v803
  %1025 = vmatprep.subr.bf16.mxu0 0
  %1026 = vmatpush1.bf16.xpose.msra.mxu0 %v800
  %1027 = vmatprep.subr.bf16.mxu0 0
  %1028 = vmatpush1.bf16.xpose.msra.mxu0 %v797
  %1029 = vmatprep.subr.bf16.mxu0 0
  %1030 = vmatpush1.bf16.xpose.msra.mxu0 %v794
  %1031 = vmatprep.subr.bf16.mxu0 0
  %1032 = vmatpush2.bf16.xpose.msra.mxu0 0
  %1033 = vmatprep.subr.bf16.mxu0 0
  %1034 = vmatpush2.bf16.xpose.msra.mxu0 0
  %1035 = vmatprep.subr.bf16.mxu0 0
  %1036 = vmatpush2.bf16.xpose.msra.mxu0 0
  %1037 = vmatprep.subr.bf16.mxu0 0
  %1038 = vmatpush2.bf16.xpose.msra.mxu0 0
  %1039 = vmatprep.subr.bf16.mxu0 0
  %1040 = vmatpush2.bf16.xpose.msra.mxu0 0
  %1041 = vmatprep.subr.bf16.mxu0 0
  %1042 = vmatpush2.bf16.xpose.msra.mxu0 0
  %1043 = vmatprep.subr.bf16.mxu0 0
  %1044 = vmatpush2.bf16.xpose.msra.mxu0 0
  %1045 = vmatprep.subr.bf16.mxu0 0
  %1046 = vmatpush2.bf16.xpose.msra.mxu0 0
  %1047 = vmatprep.mubr.bf16.mxu0 0
  %1048 = vmatmul.mubr.bf16.gmra.mxu0 %v731
  %v1049 = vpop.f32.mrf.mxu0
  %v1050 = vadd.f32 %v849, %v1049
  %v1051 = vpop.f32.mrf.mxu0
  %v1052 = vpop.f32.mrf.mxu0
  %v1053 = vadd.f32 %v852, %v1052
  %v1054 = vpop.f32.mrf.mxu0
  %1055 = vmatprep.mubr.bf16.mxu0 0
  %1056 = vmatmul.mubr.bf16.gmra.mxu0 %v734
  %v1057 = vpop.f32.mrf.mxu0
  %v1058 = vadd.f32 %v857, %v1057
  %v1059 = vpop.f32.mrf.mxu0
  %v1060 = vpop.f32.mrf.mxu0
  %v1061 = vadd.f32 %v860, %v1060
  %v1062 = vpop.f32.mrf.mxu0
  %1063 = vmatprep.mubr.bf16.mxu0 0
  %1064 = vmatmul.mubr.bf16.gmra.mxu0 %v737
  %v1065 = vpop.f32.mrf.mxu0
  %v1066 = vadd.f32 %v865, %v1065
  %v1067 = vpop.f32.mrf.mxu0
  %v1068 = vpop.f32.mrf.mxu0
  %v1069 = vadd.f32 %v868, %v1068
  %v1070 = vpop.f32.mrf.mxu0
  %1071 = vmatprep.mubr.bf16.mxu0 0
  %1072 = vmatmul.mubr.bf16.gmra.mxu0 %v740
  %v1073 = vpop.f32.mrf.mxu0
  %v1074 = vadd.f32 %v873, %v1073
  %v1075 = vpop.f32.mrf.mxu0
  %v1076 = vpop.f32.mrf.mxu0
  %v1077 = vadd.f32 %v876, %v1076
  %v1078 = vpop.f32.mrf.mxu0
  %1079 = vmatprep.mubr.bf16.mxu0 0
  %1080 = vmatmul.mubr.bf16.gmra.mxu0 %v743
  %v1081 = vpop.f32.mrf.mxu0
  %v1082 = vadd.f32 %v881, %v1081
  %v1083 = vpop.f32.mrf.mxu0
  %v1084 = vpop.f32.mrf.mxu0
  %v1085 = vadd.f32 %v884, %v1084
  %v1086 = vpop.f32.mrf.mxu0
  %1087 = vmatprep.mubr.bf16.mxu0 0
  %1088 = vmatmul.mubr.bf16.gmra.mxu0 %v746
  %v1089 = vpop.f32.mrf.mxu0
  %v1090 = vadd.f32 %v889, %v1089
  %v1091 = vpop.f32.mrf.mxu0
  %v1092 = vpop.f32.mrf.mxu0
  %v1093 = vadd.f32 %v892, %v1092
  %v1094 = vpop.f32.mrf.mxu0
  %1095 = vmatprep.mubr.bf16.mxu0 0
  %1096 = vmatmul.mubr.bf16.gmra.mxu0 %v749
  %v1097 = vpop.f32.mrf.mxu0
  %v1098 = vadd.f32 %v897, %v1097
  %v1099 = vpop.f32.mrf.mxu0
  %v1100 = vpop.f32.mrf.mxu0
  %v1101 = vadd.f32 %v900, %v1100
  %v1102 = vpop.f32.mrf.mxu0
  %1103 = vmatprep.mubr.bf16.mxu0 0
  %1104 = vmatmul.mubr.bf16.gmra.mxu0 %v752
  %v1105 = vpop.f32.mrf.mxu0
  %v1106 = vadd.f32 %v905, %v1105
  %v1107 = vpop.f32.mrf.mxu0
  %v1108 = vpop.f32.mrf.mxu0
  %v1109 = vadd.f32 %v908, %v1108
  %v1110 = vpop.f32.mrf.mxu0
  %1111 = vmatprep.mubr.bf16.mxu0 0
  %1112 = vmatmul.mubr.bf16.gmra.mxu0 %v755
  %v1113 = vpop.f32.mrf.mxu0
  %v1114 = vadd.f32 %v913, %v1113
  %v1115 = vpop.f32.mrf.mxu0
  %v1116 = vpop.f32.mrf.mxu0
  %v1117 = vadd.f32 %v916, %v1116
  %v1118 = vpop.f32.mrf.mxu0
  %1119 = vmatprep.mubr.bf16.mxu0 0
  %1120 = vmatmul.mubr.bf16.gmra.mxu0 %v758
  %v1121 = vpop.f32.mrf.mxu0
  %v1122 = vadd.f32 %v921, %v1121
  %v1123 = vpop.f32.mrf.mxu0
  %v1124 = vpop.f32.mrf.mxu0
  %v1125 = vadd.f32 %v924, %v1124
  %v1126 = vpop.f32.mrf.mxu0
  %1127 = vmatprep.mubr.bf16.mxu0 0
  %1128 = vmatmul.mubr.bf16.gmra.mxu0 %v761
  %v1129 = vpop.f32.mrf.mxu0
  %v1130 = vadd.f32 %v929, %v1129
  %v1131 = vpop.f32.mrf.mxu0
  %v1132 = vpop.f32.mrf.mxu0
  %v1133 = vadd.f32 %v932, %v1132
  %v1134 = vpop.f32.mrf.mxu0
  %1135 = vmatprep.mubr.bf16.mxu0 0
  %1136 = vmatmul.mubr.bf16.gmra.mxu0 %v764
  %v1137 = vpop.f32.mrf.mxu0
  %v1138 = vadd.f32 %v937, %v1137
  %v1139 = vpop.f32.mrf.mxu0
  %v1140 = vpop.f32.mrf.mxu0
  %v1141 = vadd.f32 %v940, %v1140
  %v1142 = vpop.f32.mrf.mxu0
  %1143 = vmatprep.mubr.bf16.mxu0 0
  %1144 = vmatmul.mubr.bf16.gmra.mxu0 %v767
  %v1145 = vpop.f32.mrf.mxu0
  %v1146 = vadd.f32 %v945, %v1145
  %v1147 = vpop.f32.mrf.mxu0
  %v1148 = vpop.f32.mrf.mxu0
  %v1149 = vadd.f32 %v948, %v1148
  %v1150 = vpop.f32.mrf.mxu0
  %1151 = vmatprep.mubr.bf16.mxu0 0
  %1152 = vmatmul.mubr.bf16.gmra.mxu0 %v770
  %v1153 = vpop.f32.mrf.mxu0
  %v1154 = vadd.f32 %v953, %v1153
  %v1155 = vpop.f32.mrf.mxu0
  %v1156 = vpop.f32.mrf.mxu0
  %v1157 = vadd.f32 %v956, %v1156
  %v1158 = vpop.f32.mrf.mxu0
  %1159 = vmatprep.mubr.bf16.mxu0 0
  %1160 = vmatmul.mubr.bf16.gmra.mxu0 %v773
  %v1161 = vpop.f32.mrf.mxu0
  %v1162 = vadd.f32 %v961, %v1161
  %v1163 = vpop.f32.mrf.mxu0
  %v1164 = vpop.f32.mrf.mxu0
  %v1165 = vadd.f32 %v964, %v1164
  %v1166 = vpop.f32.mrf.mxu0
  %1167 = vmatprep.mubr.bf16.mxu0 0
  %1168 = vmatmul.mubr.bf16.gmra.mxu0 %v776
  %v1169 = vpop.f32.mrf.mxu0
  %v1170 = vadd.f32 %v969, %v1169
  %v1171 = vpop.f32.mrf.mxu0
  %v1172 = vpop.f32.mrf.mxu0
  %v1173 = vadd.f32 %v972, %v1172
  %v1174 = vpop.f32.mrf.mxu0
  %1175 = vmatprep.mubr.bf16.mxu0 0
  %1176 = vmatmul.mubr.bf16.gmra.mxu0 %v779
  %v1177 = vpop.f32.mrf.mxu0
  %v1178 = vadd.f32 %v977, %v1177
  %v1179 = vpop.f32.mrf.mxu0
  %v1180 = vpop.f32.mrf.mxu0
  %v1181 = vadd.f32 %v980, %v1180
  %v1182 = vpop.f32.mrf.mxu0
  %1183 = vmatprep.mubr.bf16.mxu0 0
  %1184 = vmatmul.mubr.bf16.gmra.mxu0 %v782
  %v1185 = vpop.f32.mrf.mxu0
  %v1186 = vadd.f32 %v985, %v1185
  %v1187 = vpop.f32.mrf.mxu0
  %v1188 = vpop.f32.mrf.mxu0
  %v1189 = vadd.f32 %v988, %v1188
  %v1190 = vpop.f32.mrf.mxu0
  %1191 = vmatprep.mubr.bf16.mxu0 0
  %1192 = vmatmul.mubr.bf16.gmra.mxu0 %v785
  %v1193 = vpop.f32.mrf.mxu0
  %v1194 = vadd.f32 %v993, %v1193
  %v1195 = vpop.f32.mrf.mxu0
  %v1196 = vpop.f32.mrf.mxu0
  %v1197 = vadd.f32 %v996, %v1196
  %v1198 = vpop.f32.mrf.mxu0
  %1199 = vmatprep.mubr.bf16.mxu0 0
  %1200 = vmatmul.mubr.bf16.gmra.mxu0 %v788
  %v1201 = vpop.f32.mrf.mxu0
  %v1202 = vadd.f32 %v1001, %v1201
  %v1203 = vpop.f32.mrf.mxu0
  %v1204 = vpop.f32.mrf.mxu0
  %v1205 = vadd.f32 %v1004, %v1204
  %v1206 = vpop.f32.mrf.mxu0
  %1207 = vmatprep.mubr.bf16.mxu0 0
  %1208 = vmatmul.mubr.bf16.gmra.mxu0 %v791
  %v1209 = vpop.f32.mrf.mxu0
  %v1210 = vadd.f32 %v1009, %v1209
  %v1211 = vpop.f32.mrf.mxu0
  %v1212 = vpop.f32.mrf.mxu0
  %v1213 = vadd.f32 %v1012, %v1212
  %v1214 = vpop.f32.mrf.mxu0
  %1215 = vdwg.mxu0
  %vm1216 = vcmask 818176
  %v1217 = vsel %vm1216, %v1066, 0.0
  %v1218 = vsel %vm1216, %v1069, 0.0
  %v1219 = vadd.f32 %v1217, %v1218
  %v1220 = vsel %vm1216, %v1074, 0.0
  %v1221 = vadd.f32 %v1219, %v1220
  %v1222 = vsel %vm1216, %v1077, 0.0
  %v1223 = vadd.f32 %v1221, %v1222
  %v1224 = vsel %vm1216, %v1082, 0.0
  %v1225 = vadd.f32 %v1223, %v1224
  %v1226 = vsel %vm1216, %v1085, 0.0
  %v1227 = vadd.f32 %v1225, %v1226
  %v1228 = vsel %vm1216, %v1090, 0.0
  %v1229 = vadd.f32 %v1227, %v1228
  %v1230 = vsel %vm1216, %v1093, 0.0
  %v1231 = vadd.f32 %v1229, %v1230
  %v1232 = vsel %vm1216, %v1098, 0.0
  %v1233 = vadd.f32 %v1231, %v1232
  %v1234 = vsel %vm1216, %v1101, 0.0
  %v1235 = vadd.f32 %v1233, %v1234
  %v1236 = vsel %vm1216, %v1106, 0.0
  %v1237 = vadd.f32 %v1235, %v1236
  %v1238 = vsel %vm1216, %v1109, 0.0
  %v1239 = vadd.f32 %v1237, %v1238
  %v1240 = vsel %vm1216, %v1114, 0.0
  %v1241 = vadd.f32 %v1239, %v1240
  %v1242 = vsel %vm1216, %v1117, 0.0
  %v1243 = vadd.f32 %v1241, %v1242
  %v1244 = vsel %vm1216, %v1122, 0.0
  %v1245 = vadd.f32 %v1243, %v1244
  %v1246 = vsel %vm1216, %v1125, 0.0
  %v1247 = vadd.f32 %v1245, %v1246
  %v1248 = vsel %vm1216, %v1130, 0.0
  %v1249 = vadd.f32 %v1247, %v1248
  %v1250 = vsel %vm1216, %v1133, 0.0
  %v1251 = vadd.f32 %v1249, %v1250
  %v1252 = vsel %vm1216, %v1138, 0.0
  %v1253 = vadd.f32 %v1251, %v1252
  %v1254 = vsel %vm1216, %v1141, 0.0
  %v1255 = vadd.f32 %v1253, %v1254
  %v1256 = vsel %vm1216, %v1146, 0.0
  %v1257 = vadd.f32 %v1255, %v1256
  %v1258 = vsel %vm1216, %v1149, 0.0
  %v1259 = vadd.f32 %v1257, %v1258
  %v1260 = vsel %vm1216, %v1154, 0.0
  %v1261 = vadd.f32 %v1259, %v1260
  %v1262 = vsel %vm1216, %v1157, 0.0
  %v1263 = vadd.f32 %v1261, %v1262
  %v1264 = vsel %vm1216, %v1162, 0.0
  %v1265 = vadd.f32 %v1263, %v1264
  %v1266 = vsel %vm1216, %v1165, 0.0
  %v1267 = vadd.f32 %v1265, %v1266
  %v1268 = vsel %vm1216, %v1170, 0.0
  %v1269 = vadd.f32 %v1267, %v1268
  %v1270 = vsel %vm1216, %v1173, 0.0
  %v1271 = vadd.f32 %v1269, %v1270
  %v1272 = vsel %vm1216, %v1178, 0.0
  %v1273 = vadd.f32 %v1271, %v1272
  %v1274 = vsel %vm1216, %v1181, 0.0
  %v1275 = vadd.f32 %v1273, %v1274
  %v1276 = vsel %vm1216, %v1186, 0.0
  %v1277 = vadd.f32 %v1275, %v1276
  %v1278 = vsel %vm1216, %v1189, 0.0
  %v1279 = vadd.f32 %v1277, %v1278
  %v1280 = vsel %vm1216, %v1194, 0.0
  %v1281 = vadd.f32 %v1279, %v1280
  %v1282 = vsel %vm1216, %v1197, 0.0
  %v1283 = vadd.f32 %v1281, %v1282
  %v1284 = vsel %vm1216, %v1202, 0.0
  %v1285 = vadd.f32 %v1283, %v1284
  %v1286 = vsel %vm1216, %v1205, 0.0
  %v1287 = vadd.f32 %v1285, %v1286
  %v1288 = vsel %vm1216, %v1210, 0.0
  %v1289 = vadd.f32 %v1287, %v1288
  %vm1290 = vcmask 814080
  %v1291 = vsel %vm1290, %v1213, 0.0
  %v1292 = vadd.f32 %v1289, %v1291
  %1293 = vadd.xlane.f32.xlu0 %v1292
  %v1294 = vpop.xlane.xlu0 %1293
  %v1295 = vrot.slane %v1294, 4
  %v1296 = vadd.f32 %v1294, %v1295
  %v1297 = vrot.slane %v1296, 2
  %v1298 = vadd.f32 %v1296, %v1297
  %v1299 = vrot.slane %v1298, 1
  %v1300 = vadd.f32 %v1298, %v1299
  %s1301 = vtos %v1300
  %s1302 = smul.f32 %s1301, 3.3333334e-05
  %v1303 = vmul.f32 %v1066, %v1066
  %v1304 = vmul.f32 %v1069, %v1069
  %v1305 = vmul.f32 %v1074, %v1074
  %v1306 = vmul.f32 %v1077, %v1077
  %v1307 = vmul.f32 %v1082, %v1082
  %v1308 = vmul.f32 %v1085, %v1085
  %v1309 = vmul.f32 %v1090, %v1090
  %v1310 = vmul.f32 %v1093, %v1093
  %v1311 = vmul.f32 %v1098, %v1098
  %v1312 = vmul.f32 %v1101, %v1101
  %v1313 = vmul.f32 %v1106, %v1106
  %v1314 = vmul.f32 %v1109, %v1109
  %v1315 = vmul.f32 %v1114, %v1114
  %v1316 = vmul.f32 %v1117, %v1117
  %v1317 = vmul.f32 %v1122, %v1122
  %v1318 = vmul.f32 %v1125, %v1125
  %v1319 = vmul.f32 %v1130, %v1130
  %v1320 = vmul.f32 %v1133, %v1133
  %v1321 = vmul.f32 %v1138, %v1138
  %v1322 = vmul.f32 %v1141, %v1141
  %v1323 = vmul.f32 %v1146, %v1146
  %v1324 = vmul.f32 %v1149, %v1149
  %v1325 = vmul.f32 %v1154, %v1154
  %v1326 = vmul.f32 %v1157, %v1157
  %v1327 = vmul.f32 %v1162, %v1162
  %v1328 = vmul.f32 %v1165, %v1165
  %v1329 = vmul.f32 %v1170, %v1170
  %v1330 = vmul.f32 %v1173, %v1173
  %v1331 = vmul.f32 %v1178, %v1178
  %v1332 = vmul.f32 %v1181, %v1181
  %v1333 = vmul.f32 %v1186, %v1186
  %v1334 = vmul.f32 %v1189, %v1189
  %v1335 = vmul.f32 %v1194, %v1194
  %v1336 = vmul.f32 %v1197, %v1197
  %v1337 = vmul.f32 %v1202, %v1202
  %v1338 = vmul.f32 %v1205, %v1205
  %v1339 = vmul.f32 %v1210, %v1210
  %v1340 = vmul.f32 %v1213, %v1213
  %v1341 = vsel %vm1216, %v1303, 0.0
  %v1342 = vsel %vm1216, %v1304, 0.0
  %v1343 = vadd.f32 %v1341, %v1342
  %v1344 = vsel %vm1216, %v1305, 0.0
  %v1345 = vadd.f32 %v1343, %v1344
  %v1346 = vsel %vm1216, %v1306, 0.0
  %v1347 = vadd.f32 %v1345, %v1346
  %v1348 = vsel %vm1216, %v1307, 0.0
  %v1349 = vadd.f32 %v1347, %v1348
  %v1350 = vsel %vm1216, %v1308, 0.0
  %v1351 = vadd.f32 %v1349, %v1350
  %v1352 = vsel %vm1216, %v1309, 0.0
  %v1353 = vadd.f32 %v1351, %v1352
  %v1354 = vsel %vm1216, %v1310, 0.0
  %v1355 = vadd.f32 %v1353, %v1354
  %v1356 = vsel %vm1216, %v1311, 0.0
  %v1357 = vadd.f32 %v1355, %v1356
  %v1358 = vsel %vm1216, %v1312, 0.0
  %v1359 = vadd.f32 %v1357, %v1358
  %v1360 = vsel %vm1216, %v1313, 0.0
  %v1361 = vadd.f32 %v1359, %v1360
  %v1362 = vsel %vm1216, %v1314, 0.0
  %v1363 = vadd.f32 %v1361, %v1362
  %v1364 = vsel %vm1216, %v1315, 0.0
  %v1365 = vadd.f32 %v1363, %v1364
  %v1366 = vsel %vm1216, %v1316, 0.0
  %v1367 = vadd.f32 %v1365, %v1366
  %v1368 = vsel %vm1216, %v1317, 0.0
  %v1369 = vadd.f32 %v1367, %v1368
  %v1370 = vsel %vm1216, %v1318, 0.0
  %v1371 = vadd.f32 %v1369, %v1370
  %v1372 = vsel %vm1216, %v1319, 0.0
  %v1373 = vadd.f32 %v1371, %v1372
  %v1374 = vsel %vm1216, %v1320, 0.0
  %v1375 = vadd.f32 %v1373, %v1374
  %v1376 = vsel %vm1216, %v1321, 0.0
  %v1377 = vadd.f32 %v1375, %v1376
  %v1378 = vsel %vm1216, %v1322, 0.0
  %v1379 = vadd.f32 %v1377, %v1378
  %v1380 = vsel %vm1216, %v1323, 0.0
  %v1381 = vadd.f32 %v1379, %v1380
  %v1382 = vsel %vm1216, %v1324, 0.0
  %v1383 = vadd.f32 %v1381, %v1382
  %v1384 = vsel %vm1216, %v1325, 0.0
  %v1385 = vadd.f32 %v1383, %v1384
  %v1386 = vsel %vm1216, %v1326, 0.0
  %v1387 = vadd.f32 %v1385, %v1386
  %v1388 = vsel %vm1216, %v1327, 0.0
  %v1389 = vadd.f32 %v1387, %v1388
  %v1390 = vsel %vm1216, %v1328, 0.0
  %v1391 = vadd.f32 %v1389, %v1390
  %v1392 = vsel %vm1216, %v1329, 0.0
  %v1393 = vadd.f32 %v1391, %v1392
  %v1394 = vsel %vm1216, %v1330, 0.0
  %v1395 = vadd.f32 %v1393, %v1394
  %v1396 = vsel %vm1216, %v1331, 0.0
  %v1397 = vadd.f32 %v1395, %v1396
  %v1398 = vsel %vm1216, %v1332, 0.0
  %v1399 = vadd.f32 %v1397, %v1398
  %v1400 = vsel %vm1216, %v1333, 0.0
  %v1401 = vadd.f32 %v1399, %v1400
  %v1402 = vsel %vm1216, %v1334, 0.0
  %v1403 = vadd.f32 %v1401, %v1402
  %v1404 = vsel %vm1216, %v1335, 0.0
  %v1405 = vadd.f32 %v1403, %v1404
  %v1406 = vsel %vm1216, %v1336, 0.0
  %v1407 = vadd.f32 %v1405, %v1406
  %v1408 = vsel %vm1216, %v1337, 0.0
  %v1409 = vadd.f32 %v1407, %v1408
  %v1410 = vsel %vm1216, %v1338, 0.0
  %v1411 = vadd.f32 %v1409, %v1410
  %v1412 = vsel %vm1216, %v1339, 0.0
  %v1413 = vadd.f32 %v1411, %v1412
  %v1414 = vsel %vm1290, %v1340, 0.0
  %v1415 = vadd.f32 %v1413, %v1414
  %1416 = vadd.xlane.f32.xlu0 %v1415
  %v1417 = vpop.xlane.xlu0 %1416
  %v1418 = vrot.slane %v1417, 4
  %v1419 = vadd.f32 %v1417, %v1418
  %v1420 = vrot.slane %v1419, 2
  %v1421 = vadd.f32 %v1419, %v1420
  %v1422 = vrot.slane %v1421, 1
  %v1423 = vadd.f32 %v1421, %v1422
  %s1424 = vtos %v1423
  %s1425 = smul.f32 %s1424, 3.3333334e-05
  %s1426 = smul.f32 %s1302, %s1302
  %s1427 = ssub.f32 %s1425, %s1426
  %s1428 = smax.f32 %s1427, 0.0
  %v1429 = vstv %s1302
  %v1430 = vsub.f32 %v1066, %v1429
  %v1431 = vsub.f32 %v1069, %v1429
  %v1432 = vsub.f32 %v1074, %v1429
  %v1433 = vsub.f32 %v1077, %v1429
  %v1434 = vsub.f32 %v1082, %v1429
  %v1435 = vsub.f32 %v1085, %v1429
  %v1436 = vsub.f32 %v1090, %v1429
  %v1437 = vsub.f32 %v1093, %v1429
  %v1438 = vsub.f32 %v1098, %v1429
  %v1439 = vsub.f32 %v1101, %v1429
  %v1440 = vsub.f32 %v1106, %v1429
  %v1441 = vsub.f32 %v1109, %v1429
  %v1442 = vsub.f32 %v1114, %v1429
  %v1443 = vsub.f32 %v1117, %v1429
  %v1444 = vsub.f32 %v1122, %v1429
  %v1445 = vsub.f32 %v1125, %v1429
  %v1446 = vsub.f32 %v1130, %v1429
  %v1447 = vsub.f32 %v1133, %v1429
  %v1448 = vsub.f32 %v1138, %v1429
  %v1449 = vsub.f32 %v1141, %v1429
  %v1450 = vsub.f32 %v1146, %v1429
  %v1451 = vsub.f32 %v1149, %v1429
  %v1452 = vsub.f32 %v1154, %v1429
  %v1453 = vsub.f32 %v1157, %v1429
  %v1454 = vsub.f32 %v1162, %v1429
  %v1455 = vsub.f32 %v1165, %v1429
  %v1456 = vsub.f32 %v1170, %v1429
  %v1457 = vsub.f32 %v1173, %v1429
  %v1458 = vsub.f32 %v1178, %v1429
  %v1459 = vsub.f32 %v1181, %v1429
  %v1460 = vsub.f32 %v1186, %v1429
  %v1461 = vsub.f32 %v1189, %v1429
  %v1462 = vsub.f32 %v1194, %v1429
  %v1463 = vsub.f32 %v1197, %v1429
  %v1464 = vsub.f32 %v1202, %v1429
  %v1465 = vsub.f32 %v1205, %v1429
  %v1466 = vsub.f32 %v1210, %v1429
  %v1467 = vsub.f32 %v1213, %v1429
  %s1468 = sadd.f32 %s1428, 1e-05
  %v1469 = vstv %s1468
  %v1470 = vrsqrt.pop %v1469
  %s1471 = vtos %v1470
  %v1472 = vld [vmem:[%s3 + $0x150] sm:$0xff]
  %v1473 = vld [vmem:[%s3 + $0x158] sm:$0xff]
  %v1474 = vld [vmem:[%s3 + $0x160] sm:$0xff]
  %v1475 = vld [vmem:[%s3 + $0x168] sm:$0xff]
  %v1476 = vld [vmem:[%s3 + $0x170] sm:$0xff]
  %v1477 = vld [vmem:[%s3 + $0x178] sm:$0xff]
  %v1478 = vld [vmem:[%s3 + $0x180] sm:$0xff]
  %v1479 = vld [vmem:[%s3 + $0x188] sm:$0xff]
  %v1480 = vld [vmem:[%s3 + $0x190] sm:$0xff]
  %v1481 = vld [vmem:[%s3 + $0x198] sm:$0xff]
  %v1482 = vld [vmem:[%s3 + $0x1a0] sm:$0xff]
  %v1483 = vld [vmem:[%s3 + $0x1a8] sm:$0xff]
  %v1484 = vld [vmem:[%s3 + $0x1b0] sm:$0xff]
  %v1485 = vld [vmem:[%s3 + $0x1b8] sm:$0xff]
  %v1486 = vld [vmem:[%s3 + $0x1c0] sm:$0xff]
  %v1487 = vld [vmem:[%s3 + $0x1c8] sm:$0xff]
  %v1488 = vld [vmem:[%s3 + $0x1d0] sm:$0xff]
  %v1489 = vld [vmem:[%s3 + $0x1d8] sm:$0xff]
  %v1490 = vld [vmem:[%s3 + $0x1e0] sm:$0xff]
  %v1491 = vld [vmem:[%s3 + $0x1e8] sm:$0xff]
  %v1492 = vld [vmem:[%s3 + $0x1f0] sm:$0xff]
  %v1493 = vld [vmem:[%s3 + $0x1f8] sm:$0xff]
  %v1494 = vld [vmem:[%s3 + $0x200] sm:$0xff]
  %v1495 = vld [vmem:[%s3 + $0x208] sm:$0xff]
  %v1496 = vld [vmem:[%s3 + $0x210] sm:$0xff]
  %v1497 = vld [vmem:[%s3 + $0x218] sm:$0xff]
  %v1498 = vld [vmem:[%s3 + $0x220] sm:$0xff]
  %v1499 = vld [vmem:[%s3 + $0x228] sm:$0xff]
  %v1500 = vld [vmem:[%s3 + $0x230] sm:$0xff]
  %v1501 = vld [vmem:[%s3 + $0x238] sm:$0xff]
  %v1502 = vld [vmem:[%s3 + $0x240] sm:$0xff]
  %v1503 = vld [vmem:[%s3 + $0x248] sm:$0xff]
  %v1504 = vld [vmem:[%s3 + $0x250] sm:$0xff]
  %v1505 = vld [vmem:[%s3 + $0x258] sm:$0xff]
  %v1506 = vld [vmem:[%s3 + $0x260] sm:$0xff]
  %v1507 = vld [vmem:[%s3 + $0x268] sm:$0xff]
  %v1508 = vld [vmem:[%s3 + $0x270] sm:$0xff]
  %v1509 = vld [vmem:[%s3 + $0x278] sm:$0xf]
  %v1510 = vstv %s1471
  %v1511 = vmul.f32 %v1510, %v1472
  %v1512 = vmul.f32 %v1510, %v1473
  %v1513 = vmul.f32 %v1510, %v1474
  %v1514 = vmul.f32 %v1510, %v1475
  %v1515 = vmul.f32 %v1510, %v1476
  %v1516 = vmul.f32 %v1510, %v1477
  %v1517 = vmul.f32 %v1510, %v1478
  %v1518 = vmul.f32 %v1510, %v1479
  %v1519 = vmul.f32 %v1510, %v1480
  %v1520 = vmul.f32 %v1510, %v1481
  %v1521 = vmul.f32 %v1510, %v1482
  %v1522 = vmul.f32 %v1510, %v1483
  %v1523 = vmul.f32 %v1510, %v1484
  %v1524 = vmul.f32 %v1510, %v1485
  %v1525 = vmul.f32 %v1510, %v1486
  %v1526 = vmul.f32 %v1510, %v1487
  %v1527 = vmul.f32 %v1510, %v1488
  %v1528 = vmul.f32 %v1510, %v1489
  %v1529 = vmul.f32 %v1510, %v1490
  %v1530 = vmul.f32 %v1510, %v1491
  %v1531 = vmul.f32 %v1510, %v1492
  %v1532 = vmul.f32 %v1510, %v1493
  %v1533 = vmul.f32 %v1510, %v1494
  %v1534 = vmul.f32 %v1510, %v1495
  %v1535 = vmul.f32 %v1510, %v1496
  %v1536 = vmul.f32 %v1510, %v1497
  %v1537 = vmul.f32 %v1510, %v1498
  %v1538 = vmul.f32 %v1510, %v1499
  %v1539 = vmul.f32 %v1510, %v1500
  %v1540 = vmul.f32 %v1510, %v1501
  %v1541 = vmul.f32 %v1510, %v1502
  %v1542 = vmul.f32 %v1510, %v1503
  %v1543 = vmul.f32 %v1510, %v1504
  %v1544 = vmul.f32 %v1510, %v1505
  %v1545 = vmul.f32 %v1510, %v1506
  %v1546 = vmul.f32 %v1510, %v1507
  %v1547 = vmul.f32 %v1510, %v1508
  %v1548 = vmul.f32 %v1510, %v1509
  %1550 = vset.pattern.permute.xlu0 0
  %1551 = vperm.xlu0 %1550, %v1511
  %v1552 = vpop.permute.xlu0 %1551
  %1555 = vset.pattern.permute.xlu0 0
  %1556 = vperm.xlu0 %1555, %v1512
  %v1557 = vpop.permute.xlu0 %1556
  %1560 = vset.pattern.permute.xlu0 0
  %1561 = vperm.xlu0 %1560, %v1513
  %v1562 = vpop.permute.xlu0 %1561
  %1565 = vset.pattern.permute.xlu0 0
  %1566 = vperm.xlu0 %1565, %v1514
  %v1567 = vpop.permute.xlu0 %1566
  %1570 = vset.pattern.permute.xlu0 0
  %1571 = vperm.xlu0 %1570, %v1515
  %v1572 = vpop.permute.xlu0 %1571
  %1575 = vset.pattern.permute.xlu0 0
  %1576 = vperm.xlu0 %1575, %v1516
  %v1577 = vpop.permute.xlu0 %1576
  %1580 = vset.pattern.permute.xlu0 0
  %1581 = vperm.xlu0 %1580, %v1517
  %v1582 = vpop.permute.xlu0 %1581
  %1585 = vset.pattern.permute.xlu0 0
  %1586 = vperm.xlu0 %1585, %v1518
  %v1587 = vpop.permute.xlu0 %1586
  %1590 = vset.pattern.permute.xlu0 0
  %1591 = vperm.xlu0 %1590, %v1519
  %v1592 = vpop.permute.xlu0 %1591
  %1595 = vset.pattern.permute.xlu0 0
  %1596 = vperm.xlu0 %1595, %v1520
  %v1597 = vpop.permute.xlu0 %1596
  %1600 = vset.pattern.permute.xlu0 0
  %1601 = vperm.xlu0 %1600, %v1521
  %v1602 = vpop.permute.xlu0 %1601
  %1605 = vset.pattern.permute.xlu0 0
  %1606 = vperm.xlu0 %1605, %v1522
  %v1607 = vpop.permute.xlu0 %1606
  %1610 = vset.pattern.permute.xlu0 0
  %1611 = vperm.xlu0 %1610, %v1523
  %v1612 = vpop.permute.xlu0 %1611
  %1615 = vset.pattern.permute.xlu0 0
  %1616 = vperm.xlu0 %1615, %v1524
  %v1617 = vpop.permute.xlu0 %1616
  %1620 = vset.pattern.permute.xlu0 0
  %1621 = vperm.xlu0 %1620, %v1525
  %v1622 = vpop.permute.xlu0 %1621
  %1625 = vset.pattern.permute.xlu0 0
  %1626 = vperm.xlu0 %1625, %v1526
  %v1627 = vpop.permute.xlu0 %1626
  %1630 = vset.pattern.permute.xlu0 0
  %1631 = vperm.xlu0 %1630, %v1527
  %v1632 = vpop.permute.xlu0 %1631
  %1635 = vset.pattern.permute.xlu0 0
  %1636 = vperm.xlu0 %1635, %v1528
  %v1637 = vpop.permute.xlu0 %1636
  %1640 = vset.pattern.permute.xlu0 0
  %1641 = vperm.xlu0 %1640, %v1529
  %v1642 = vpop.permute.xlu0 %1641
  %1645 = vset.pattern.permute.xlu0 0
  %1646 = vperm.xlu0 %1645, %v1530
  %v1647 = vpop.permute.xlu0 %1646
  %1650 = vset.pattern.permute.xlu0 0
  %1651 = vperm.xlu0 %1650, %v1531
  %v1652 = vpop.permute.xlu0 %1651
  %1655 = vset.pattern.permute.xlu0 0
  %1656 = vperm.xlu0 %1655, %v1532
  %v1657 = vpop.permute.xlu0 %1656
  %1660 = vset.pattern.permute.xlu0 0
  %1661 = vperm.xlu0 %1660, %v1533
  %v1662 = vpop.permute.xlu0 %1661
  %1665 = vset.pattern.permute.xlu0 0
  %1666 = vperm.xlu0 %1665, %v1534
  %v1667 = vpop.permute.xlu0 %1666
  %1670 = vset.pattern.permute.xlu0 0
  %1671 = vperm.xlu0 %1670, %v1535
  %v1672 = vpop.permute.xlu0 %1671
  %1675 = vset.pattern.permute.xlu0 0
  %1676 = vperm.xlu0 %1675, %v1536
  %v1677 = vpop.permute.xlu0 %1676
  %1680 = vset.pattern.permute.xlu0 0
  %1681 = vperm.xlu0 %1680, %v1537
  %v1682 = vpop.permute.xlu0 %1681
  %1685 = vset.pattern.permute.xlu0 0
  %1686 = vperm.xlu0 %1685, %v1538
  %v1687 = vpop.permute.xlu0 %1686
  %1690 = vset.pattern.permute.xlu0 0
  %1691 = vperm.xlu0 %1690, %v1539
  %v1692 = vpop.permute.xlu0 %1691
  %1695 = vset.pattern.permute.xlu0 0
  %1696 = vperm.xlu0 %1695, %v1540
  %v1697 = vpop.permute.xlu0 %1696
  %1700 = vset.pattern.permute.xlu0 0
  %1701 = vperm.xlu0 %1700, %v1541
  %v1702 = vpop.permute.xlu0 %1701
  %1705 = vset.pattern.permute.xlu0 0
  %1706 = vperm.xlu0 %1705, %v1542
  %v1707 = vpop.permute.xlu0 %1706
  %1710 = vset.pattern.permute.xlu0 0
  %1711 = vperm.xlu0 %1710, %v1543
  %v1712 = vpop.permute.xlu0 %1711
  %1715 = vset.pattern.permute.xlu0 0
  %1716 = vperm.xlu0 %1715, %v1544
  %v1717 = vpop.permute.xlu0 %1716
  %1720 = vset.pattern.permute.xlu0 0
  %1721 = vperm.xlu0 %1720, %v1545
  %v1722 = vpop.permute.xlu0 %1721
  %1725 = vset.pattern.permute.xlu0 0
  %1726 = vperm.xlu0 %1725, %v1546
  %v1727 = vpop.permute.xlu0 %1726
  %1730 = vset.pattern.permute.xlu0 0
  %1731 = vperm.xlu0 %1730, %v1547
  %v1732 = vpop.permute.xlu0 %1731
  %1735 = vset.pattern.permute.xlu0 0
  %1736 = vperm.xlu0 %1735, %v1548
  %v1737 = vpop.permute.xlu0 %1736
  %v1739 = vmul.f32 %v1430, %v1552
  %v1740 = vmul.f32 %v1431, %v1557
  %v1741 = vmul.f32 %v1432, %v1562
  %v1742 = vmul.f32 %v1433, %v1567
  %v1743 = vmul.f32 %v1434, %v1572
  %v1744 = vmul.f32 %v1435, %v1577
  %v1745 = vmul.f32 %v1436, %v1582
  %v1746 = vmul.f32 %v1437, %v1587
  %v1747 = vmul.f32 %v1438, %v1592
  %v1748 = vmul.f32 %v1439, %v1597
  %v1749 = vmul.f32 %v1440, %v1602
  %v1750 = vmul.f32 %v1441, %v1607
  %v1751 = vmul.f32 %v1442, %v1612
  %v1752 = vmul.f32 %v1443, %v1617
  %v1753 = vmul.f32 %v1444, %v1622
  %v1754 = vmul.f32 %v1445, %v1627
  %v1755 = vmul.f32 %v1446, %v1632
  %v1756 = vmul.f32 %v1447, %v1637
  %v1757 = vmul.f32 %v1448, %v1642
  %v1758 = vmul.f32 %v1449, %v1647
  %v1759 = vmul.f32 %v1450, %v1652
  %v1760 = vmul.f32 %v1451, %v1657
  %v1761 = vmul.f32 %v1452, %v1662
  %v1762 = vmul.f32 %v1453, %v1667
  %v1763 = vmul.f32 %v1454, %v1672
  %v1764 = vmul.f32 %v1455, %v1677
  %v1765 = vmul.f32 %v1456, %v1682
  %v1766 = vmul.f32 %v1457, %v1687
  %v1767 = vmul.f32 %v1458, %v1692
  %v1768 = vmul.f32 %v1459, %v1697
  %v1769 = vmul.f32 %v1460, %v1702
  %v1770 = vmul.f32 %v1461, %v1707
  %v1771 = vmul.f32 %v1462, %v1712
  %v1772 = vmul.f32 %v1463, %v1717
  %v1773 = vmul.f32 %v1464, %v1722
  %v1774 = vmul.f32 %v1465, %v1727
  %v1775 = vmul.f32 %v1466, %v1732
  %v1776 = vmul.f32 %v1467, %v1737
  %v1777 = vld [vmem:[%s3 + $0x280] sm:$0xff]
  %v1778 = vld [vmem:[%s3 + $0x288] sm:$0xff]
  %v1779 = vld [vmem:[%s3 + $0x290] sm:$0xff]
  %v1780 = vld [vmem:[%s3 + $0x298] sm:$0xff]
  %v1781 = vld [vmem:[%s3 + $0x2a0] sm:$0xff]
  %v1782 = vld [vmem:[%s3 + $0x2a8] sm:$0xff]
  %v1783 = vld [vmem:[%s3 + $0x2b0] sm:$0xff]
  %v1784 = vld [vmem:[%s3 + $0x2b8] sm:$0xff]
  %v1785 = vld [vmem:[%s3 + $0x2c0] sm:$0xff]
  %v1786 = vld [vmem:[%s3 + $0x2c8] sm:$0xff]
  %v1787 = vld [vmem:[%s3 + $0x2d0] sm:$0xff]
  %v1788 = vld [vmem:[%s3 + $0x2d8] sm:$0xff]
  %v1789 = vld [vmem:[%s3 + $0x2e0] sm:$0xff]
  %v1790 = vld [vmem:[%s3 + $0x2e8] sm:$0xff]
  %v1791 = vld [vmem:[%s3 + $0x2f0] sm:$0xff]
  %v1792 = vld [vmem:[%s3 + $0x2f8] sm:$0xff]
  %v1793 = vld [vmem:[%s3 + $0x300] sm:$0xff]
  %v1794 = vld [vmem:[%s3 + $0x308] sm:$0xff]
  %v1795 = vld [vmem:[%s3 + $0x310] sm:$0xff]
  %v1796 = vld [vmem:[%s3 + $0x318] sm:$0xff]
  %v1797 = vld [vmem:[%s3 + $0x320] sm:$0xff]
  %v1798 = vld [vmem:[%s3 + $0x328] sm:$0xff]
  %v1799 = vld [vmem:[%s3 + $0x330] sm:$0xff]
  %v1800 = vld [vmem:[%s3 + $0x338] sm:$0xff]
  %v1801 = vld [vmem:[%s3 + $0x340] sm:$0xff]
  %v1802 = vld [vmem:[%s3 + $0x348] sm:$0xff]
  %v1803 = vld [vmem:[%s3 + $0x350] sm:$0xff]
  %v1804 = vld [vmem:[%s3 + $0x358] sm:$0xff]
  %v1805 = vld [vmem:[%s3 + $0x360] sm:$0xff]
  %v1806 = vld [vmem:[%s3 + $0x368] sm:$0xff]
  %v1807 = vld [vmem:[%s3 + $0x370] sm:$0xff]
  %v1808 = vld [vmem:[%s3 + $0x378] sm:$0xff]
  %v1809 = vld [vmem:[%s3 + $0x380] sm:$0xff]
  %v1810 = vld [vmem:[%s3 + $0x388] sm:$0xff]
  %v1811 = vld [vmem:[%s3 + $0x390] sm:$0xff]
  %v1812 = vld [vmem:[%s3 + $0x398] sm:$0xff]
  %v1813 = vld [vmem:[%s3 + $0x3a0] sm:$0xff]
  %v1814 = vld [vmem:[%s3 + $0x3a8] sm:$0xf]
  %1816 = vset.pattern.permute.xlu0 0
  %1817 = vperm.xlu0 %1816, %v1777
  %v1818 = vpop.permute.xlu0 %1817
  %1821 = vset.pattern.permute.xlu0 0
  %1822 = vperm.xlu0 %1821, %v1778
  %v1823 = vpop.permute.xlu0 %1822
  %1826 = vset.pattern.permute.xlu0 0
  %1827 = vperm.xlu0 %1826, %v1779
  %v1828 = vpop.permute.xlu0 %1827
  %1831 = vset.pattern.permute.xlu0 0
  %1832 = vperm.xlu0 %1831, %v1780
  %v1833 = vpop.permute.xlu0 %1832
  %1836 = vset.pattern.permute.xlu0 0
  %1837 = vperm.xlu0 %1836, %v1781
  %v1838 = vpop.permute.xlu0 %1837
  %1841 = vset.pattern.permute.xlu0 0
  %1842 = vperm.xlu0 %1841, %v1782
  %v1843 = vpop.permute.xlu0 %1842
  %1846 = vset.pattern.permute.xlu0 0
  %1847 = vperm.xlu0 %1846, %v1783
  %v1848 = vpop.permute.xlu0 %1847
  %1851 = vset.pattern.permute.xlu0 0
  %1852 = vperm.xlu0 %1851, %v1784
  %v1853 = vpop.permute.xlu0 %1852
  %1856 = vset.pattern.permute.xlu0 0
  %1857 = vperm.xlu0 %1856, %v1785
  %v1858 = vpop.permute.xlu0 %1857
  %1861 = vset.pattern.permute.xlu0 0
  %1862 = vperm.xlu0 %1861, %v1786
  %v1863 = vpop.permute.xlu0 %1862
  %1866 = vset.pattern.permute.xlu0 0
  %1867 = vperm.xlu0 %1866, %v1787
  %v1868 = vpop.permute.xlu0 %1867
  %1871 = vset.pattern.permute.xlu0 0
  %1872 = vperm.xlu0 %1871, %v1788
  %v1873 = vpop.permute.xlu0 %1872
  %1876 = vset.pattern.permute.xlu0 0
  %1877 = vperm.xlu0 %1876, %v1789
  %v1878 = vpop.permute.xlu0 %1877
  %1881 = vset.pattern.permute.xlu0 0
  %1882 = vperm.xlu0 %1881, %v1790
  %v1883 = vpop.permute.xlu0 %1882
  %1886 = vset.pattern.permute.xlu0 0
  %1887 = vperm.xlu0 %1886, %v1791
  %v1888 = vpop.permute.xlu0 %1887
  %1891 = vset.pattern.permute.xlu0 0
  %1892 = vperm.xlu0 %1891, %v1792
  %v1893 = vpop.permute.xlu0 %1892
  %1896 = vset.pattern.permute.xlu0 0
  %1897 = vperm.xlu0 %1896, %v1793
  %v1898 = vpop.permute.xlu0 %1897
  %1901 = vset.pattern.permute.xlu0 0
  %1902 = vperm.xlu0 %1901, %v1794
  %v1903 = vpop.permute.xlu0 %1902
  %1906 = vset.pattern.permute.xlu0 0
  %1907 = vperm.xlu0 %1906, %v1795
  %v1908 = vpop.permute.xlu0 %1907
  %1911 = vset.pattern.permute.xlu0 0
  %1912 = vperm.xlu0 %1911, %v1796
  %v1913 = vpop.permute.xlu0 %1912
  %1916 = vset.pattern.permute.xlu0 0
  %1917 = vperm.xlu0 %1916, %v1797
  %v1918 = vpop.permute.xlu0 %1917
  %1921 = vset.pattern.permute.xlu0 0
  %1922 = vperm.xlu0 %1921, %v1798
  %v1923 = vpop.permute.xlu0 %1922
  %1926 = vset.pattern.permute.xlu0 0
  %1927 = vperm.xlu0 %1926, %v1799
  %v1928 = vpop.permute.xlu0 %1927
  %1931 = vset.pattern.permute.xlu0 0
  %1932 = vperm.xlu0 %1931, %v1800
  %v1933 = vpop.permute.xlu0 %1932
  %1936 = vset.pattern.permute.xlu0 0
  %1937 = vperm.xlu0 %1936, %v1801
  %v1938 = vpop.permute.xlu0 %1937
  %1941 = vset.pattern.permute.xlu0 0
  %1942 = vperm.xlu0 %1941, %v1802
  %v1943 = vpop.permute.xlu0 %1942
  %1946 = vset.pattern.permute.xlu0 0
  %1947 = vperm.xlu0 %1946, %v1803
  %v1948 = vpop.permute.xlu0 %1947
  %1951 = vset.pattern.permute.xlu0 0
  %1952 = vperm.xlu0 %1951, %v1804
  %v1953 = vpop.permute.xlu0 %1952
  %1956 = vset.pattern.permute.xlu0 0
  %1957 = vperm.xlu0 %1956, %v1805
  %v1958 = vpop.permute.xlu0 %1957
  %1961 = vset.pattern.permute.xlu0 0
  %1962 = vperm.xlu0 %1961, %v1806
  %v1963 = vpop.permute.xlu0 %1962
  %1966 = vset.pattern.permute.xlu0 0
  %1967 = vperm.xlu0 %1966, %v1807
  %v1968 = vpop.permute.xlu0 %1967
  %1971 = vset.pattern.permute.xlu0 0
  %1972 = vperm.xlu0 %1971, %v1808
  %v1973 = vpop.permute.xlu0 %1972
  %1976 = vset.pattern.permute.xlu0 0
  %1977 = vperm.xlu0 %1976, %v1809
  %v1978 = vpop.permute.xlu0 %1977
  %1981 = vset.pattern.permute.xlu0 0
  %1982 = vperm.xlu0 %1981, %v1810
  %v1983 = vpop.permute.xlu0 %1982
  %1986 = vset.pattern.permute.xlu0 0
  %1987 = vperm.xlu0 %1986, %v1811
  %v1988 = vpop.permute.xlu0 %1987
  %1991 = vset.pattern.permute.xlu0 0
  %1992 = vperm.xlu0 %1991, %v1812
  %v1993 = vpop.permute.xlu0 %1992
  %1996 = vset.pattern.permute.xlu0 0
  %1997 = vperm.xlu0 %1996, %v1813
  %v1998 = vpop.permute.xlu0 %1997
  %2001 = vset.pattern.permute.xlu0 0
  %2002 = vperm.xlu0 %2001, %v1814
  %v2003 = vpop.permute.xlu0 %2002
  %v2005 = vadd.f32 %v1739, %v1818
  %v2006 = vadd.f32 %v1740, %v1823
  %v2007 = vadd.f32 %v1741, %v1828
  %v2008 = vadd.f32 %v1742, %v1833
  %v2009 = vadd.f32 %v1743, %v1838
  %v2010 = vadd.f32 %v1744, %v1843
  %v2011 = vadd.f32 %v1745, %v1848
  %v2012 = vadd.f32 %v1746, %v1853
  %v2013 = vadd.f32 %v1747, %v1858
  %v2014 = vadd.f32 %v1748, %v1863
  %v2015 = vadd.f32 %v1749, %v1868
  %v2016 = vadd.f32 %v1750, %v1873
  %v2017 = vadd.f32 %v1751, %v1878
  %v2018 = vadd.f32 %v1752, %v1883
  %v2019 = vadd.f32 %v1753, %v1888
  %v2020 = vadd.f32 %v1754, %v1893
  %v2021 = vadd.f32 %v1755, %v1898
  %v2022 = vadd.f32 %v1756, %v1903
  %v2023 = vadd.f32 %v1757, %v1908
  %v2024 = vadd.f32 %v1758, %v1913
  %v2025 = vadd.f32 %v1759, %v1918
  %v2026 = vadd.f32 %v1760, %v1923
  %v2027 = vadd.f32 %v1761, %v1928
  %v2028 = vadd.f32 %v1762, %v1933
  %v2029 = vadd.f32 %v1763, %v1938
  %v2030 = vadd.f32 %v1764, %v1943
  %v2031 = vadd.f32 %v1765, %v1948
  %v2032 = vadd.f32 %v1766, %v1953
  %v2033 = vadd.f32 %v1767, %v1958
  %v2034 = vadd.f32 %v1768, %v1963
  %v2035 = vadd.f32 %v1769, %v1968
  %v2036 = vadd.f32 %v1770, %v1973
  %v2037 = vadd.f32 %v1771, %v1978
  %v2038 = vadd.f32 %v1772, %v1983
  %v2039 = vadd.f32 %v1773, %v1988
  %v2040 = vadd.f32 %v1774, %v1993
  %v2041 = vadd.f32 %v1775, %v1998
  %v2042 = vadd.f32 %v1776, %v2003
  %vm2043 = vcmp.ge.f32.partialorder %v2005, 0.0
  %vm2044 = vcmp.ge.f32.partialorder %v2006, 0.0
  %vm2045 = vcmp.ge.f32.partialorder %v2007, 0.0
  %vm2046 = vcmp.ge.f32.partialorder %v2008, 0.0
  %vm2047 = vcmp.ge.f32.partialorder %v2009, 0.0
  %vm2048 = vcmp.ge.f32.partialorder %v2010, 0.0
  %vm2049 = vcmp.ge.f32.partialorder %v2011, 0.0
  %vm2050 = vcmp.ge.f32.partialorder %v2012, 0.0
  %vm2051 = vcmp.ge.f32.partialorder %v2013, 0.0
  %vm2052 = vcmp.ge.f32.partialorder %v2014, 0.0
  %vm2053 = vcmp.ge.f32.partialorder %v2015, 0.0
  %vm2054 = vcmp.ge.f32.partialorder %v2016, 0.0
  %vm2055 = vcmp.ge.f32.partialorder %v2017, 0.0
  %vm2056 = vcmp.ge.f32.partialorder %v2018, 0.0
  %vm2057 = vcmp.ge.f32.partialorder %v2019, 0.0
  %vm2058 = vcmp.ge.f32.partialorder %v2020, 0.0
  %vm2059 = vcmp.ge.f32.partialorder %v2021, 0.0
  %vm2060 = vcmp.ge.f32.partialorder %v2022, 0.0
  %vm2061 = vcmp.ge.f32.partialorder %v2023, 0.0
  %vm2062 = vcmp.ge.f32.partialorder %v2024, 0.0
  %vm2063 = vcmp.ge.f32.partialorder %v2025, 0.0
  %vm2064 = vcmp.ge.f32.partialorder %v2026, 0.0
  %vm2065 = vcmp.ge.f32.partialorder %v2027, 0.0
  %vm2066 = vcmp.ge.f32.partialorder %v2028, 0.0
  %vm2067 = vcmp.ge.f32.partialorder %v2029, 0.0
  %vm2068 = vcmp.ge.f32.partialorder %v2030, 0.0
  %vm2069 = vcmp.ge.f32.partialorder %v2031, 0.0
  %vm2070 = vcmp.ge.f32.partialorder %v2032, 0.0
  %vm2071 = vcmp.ge.f32.partialorder %v2033, 0.0
  %vm2072 = vcmp.ge.f32.partialorder %v2034, 0.0
  %vm2073 = vcmp.ge.f32.partialorder %v2035, 0.0
  %vm2074 = vcmp.ge.f32.partialorder %v2036, 0.0
  %vm2075 = vcmp.ge.f32.partialorder %v2037, 0.0
  %vm2076 = vcmp.ge.f32.partialorder %v2038, 0.0
  %vm2077 = vcmp.ge.f32.partialorder %v2039, 0.0
  %vm2078 = vcmp.ge.f32.partialorder %v2040, 0.0
  %vm2079 = vcmp.ge.f32.partialorder %v2041, 0.0
  %vm2080 = vcmp.ge.f32.partialorder %v2042, 0.0
  %v2081 = vmul.f32 %v2005, 0.01
  %v2082 = vmul.f32 %v2006, 0.01
  %v2083 = vmul.f32 %v2007, 0.01
  %v2084 = vmul.f32 %v2008, 0.01
  %v2085 = vmul.f32 %v2009, 0.01
  %v2086 = vmul.f32 %v2010, 0.01
  %v2087 = vmul.f32 %v2011, 0.01
  %v2088 = vmul.f32 %v2012, 0.01
  %v2089 = vmul.f32 %v2013, 0.01
  %v2090 = vmul.f32 %v2014, 0.01
  %v2091 = vmul.f32 %v2015, 0.01
  %v2092 = vmul.f32 %v2016, 0.01
  %v2093 = vmul.f32 %v2017, 0.01
  %v2094 = vmul.f32 %v2018, 0.01
  %v2095 = vmul.f32 %v2019, 0.01
  %v2096 = vmul.f32 %v2020, 0.01
  %v2097 = vmul.f32 %v2021, 0.01
  %v2098 = vmul.f32 %v2022, 0.01
  %v2099 = vmul.f32 %v2023, 0.01
  %v2100 = vmul.f32 %v2024, 0.01
  %v2101 = vmul.f32 %v2025, 0.01
  %v2102 = vmul.f32 %v2026, 0.01
  %v2103 = vmul.f32 %v2027, 0.01
  %v2104 = vmul.f32 %v2028, 0.01
  %v2105 = vmul.f32 %v2029, 0.01
  %v2106 = vmul.f32 %v2030, 0.01
  %v2107 = vmul.f32 %v2031, 0.01
  %v2108 = vmul.f32 %v2032, 0.01
  %v2109 = vmul.f32 %v2033, 0.01
  %v2110 = vmul.f32 %v2034, 0.01
  %v2111 = vmul.f32 %v2035, 0.01
  %v2112 = vmul.f32 %v2036, 0.01
  %v2113 = vmul.f32 %v2037, 0.01
  %v2114 = vmul.f32 %v2038, 0.01
  %v2115 = vmul.f32 %v2039, 0.01
  %v2116 = vmul.f32 %v2040, 0.01
  %v2117 = vmul.f32 %v2041, 0.01
  %v2118 = vmul.f32 %v2042, 0.01
  %v2119 = vsel %vm2043, %v2005, %v2081
  %v2120 = vsel %vm2044, %v2006, %v2082
  %v2121 = vsel %vm2045, %v2007, %v2083
  %v2122 = vsel %vm2046, %v2008, %v2084
  %v2123 = vsel %vm2047, %v2009, %v2085
  %v2124 = vsel %vm2048, %v2010, %v2086
  %v2125 = vsel %vm2049, %v2011, %v2087
  %v2126 = vsel %vm2050, %v2012, %v2088
  %v2127 = vsel %vm2051, %v2013, %v2089
  %v2128 = vsel %vm2052, %v2014, %v2090
  %v2129 = vsel %vm2053, %v2015, %v2091
  %v2130 = vsel %vm2054, %v2016, %v2092
  %v2131 = vsel %vm2055, %v2017, %v2093
  %v2132 = vsel %vm2056, %v2018, %v2094
  %v2133 = vsel %vm2057, %v2019, %v2095
  %v2134 = vsel %vm2058, %v2020, %v2096
  %v2135 = vsel %vm2059, %v2021, %v2097
  %v2136 = vsel %vm2060, %v2022, %v2098
  %v2137 = vsel %vm2061, %v2023, %v2099
  %v2138 = vsel %vm2062, %v2024, %v2100
  %v2139 = vsel %vm2063, %v2025, %v2101
  %v2140 = vsel %vm2064, %v2026, %v2102
  %v2141 = vsel %vm2065, %v2027, %v2103
  %v2142 = vsel %vm2066, %v2028, %v2104
  %v2143 = vsel %vm2067, %v2029, %v2105
  %v2144 = vsel %vm2068, %v2030, %v2106
  %v2145 = vsel %vm2069, %v2031, %v2107
  %v2146 = vsel %vm2070, %v2032, %v2108
  %v2147 = vsel %vm2071, %v2033, %v2109
  %v2148 = vsel %vm2072, %v2034, %v2110
  %v2149 = vsel %vm2073, %v2035, %v2111
  %v2150 = vsel %vm2074, %v2036, %v2112
  %v2151 = vsel %vm2075, %v2037, %v2113
  %v2152 = vsel %vm2076, %v2038, %v2114
  %v2153 = vsel %vm2077, %v2039, %v2115
  %v2154 = vsel %vm2078, %v2040, %v2116
  %v2155 = vsel %vm2079, %v2041, %v2117
  %v2156 = vsel %vm2080, %v2042, %v2118
  %v2157 = vpack.c.bf16 %v2120, %v2119
  %v2158 = vpack.c.bf16 %v2122, %v2121
  %v2159 = vpack.c.bf16 %v2124, %v2123
  %v2160 = vpack.c.bf16 %v2126, %v2125
  %v2161 = vpack.c.bf16 %v2128, %v2127
  %v2162 = vpack.c.bf16 %v2130, %v2129
  %v2163 = vpack.c.bf16 %v2132, %v2131
  %v2164 = vpack.c.bf16 %v2134, %v2133
  %v2165 = vpack.c.bf16 %v2136, %v2135
  %v2166 = vpack.c.bf16 %v2138, %v2137
  %v2167 = vpack.c.bf16 %v2140, %v2139
  %v2168 = vpack.c.bf16 %v2142, %v2141
  %v2169 = vpack.c.bf16 %v2144, %v2143
  %v2170 = vpack.c.bf16 %v2146, %v2145
  %v2171 = vpack.c.bf16 %v2148, %v2147
  %v2172 = vpack.c.bf16 %v2150, %v2149
  %v2173 = vpack.c.bf16 %v2152, %v2151
  %v2174 = vpack.c.bf16 %v2154, %v2153
  %v2175 = vpack.c.bf16 %v2156, %v2155
  %v2176 = vld [vmem:[%s2 + $0x198] sm:$0xf]
  %v2177 = vld [vmem:[%s2 + $0x19c] sm:$0xf]
  %v2178 = vld [vmem:[%s2 + $0x1a0] sm:$0xf]
  %v2179 = vld [vmem:[%s2 + $0x1a4] sm:$0xf]
  %v2180 = vld [vmem:[%s2 + $0x1a8] sm:$0xf]
  %v2181 = vld [vmem:[%s2 + $0x1ac] sm:$0xf]
  %v2182 = vld [vmem:[%s2 + $0x1b0] sm:$0xf]
  %v2183 = vld [vmem:[%s2 + $0x1b4] sm:$0xf]
  %v2184 = vld [vmem:[%s2 + $0x1b8] sm:$0xf]
  %v2185 = vld [vmem:[%s2 + $0x1bc] sm:$0xf]
  %v2186 = vld [vmem:[%s2 + $0x1c0] sm:$0xf]
  %v2187 = vld [vmem:[%s2 + $0x1c4] sm:$0xf]
  %v2188 = vld [vmem:[%s2 + $0x1c8] sm:$0x3]
  %v2202 = vunpack.c.l.b16 %v2176
  %v2203 = vunpack.c.l.b16 %v2177
  %v2204 = vunpack.c.l.b16 %v2178
  %v2205 = vunpack.c.l.b16 %v2179
  %v2206 = vunpack.c.l.b16 %v2180
  %v2207 = vunpack.c.l.b16 %v2181
  %v2208 = vunpack.c.l.b16 %v2182
  %v2209 = vunpack.c.l.b16 %v2183
  %v2210 = vunpack.c.l.b16 %v2184
  %v2211 = vunpack.c.l.b16 %v2185
  %v2212 = vunpack.c.l.b16 %v2186
  %v2213 = vunpack.c.l.b16 %v2187
  %v2214 = vunpack.c.l.b16 %v2188
  %v2215 = vpack.c.b16 %v2203, %v2202
  %v2216 = vpack.c.b16 %v2205, %v2204
  %v2217 = vpack.c.b16 %v2207, %v2206
  %v2218 = vpack.c.b16 %v2209, %v2208
  %v2219 = vpack.c.b16 %v2211, %v2210
  %v2220 = vpack.c.b16 %v2213, %v2212
  %v2221 = vpack.c.b16 %v2214, %v2214
  %v2229 = vsel %vm1216, %v2157, 0
  %v2232 = vsel %vm1216, %v2158, 0
  %v2235 = vsel %vm1216, %v2159, 0
  %v2238 = vsel %vm1216, %v2160, 0
  %v2241 = vsel %vm1216, %v2161, 0
  %v2244 = vsel %vm1216, %v2162, 0
  %v2247 = vsel %vm1216, %v2163, 0
  %v2250 = vsel %vm1216, %v2164, 0
  %v2253 = vsel %vm1216, %v2165, 0
  %v2256 = vsel %vm1216, %v2166, 0
  %v2259 = vsel %vm1216, %v2167, 0
  %v2262 = vsel %vm1216, %v2168, 0
  %v2265 = vsel %vm1216, %v2169, 0
  %v2268 = vsel %vm1216, %v2170, 0
  %v2271 = vsel %vm1216, %v2171, 0
  %v2274 = vsel %vm1216, %v2172, 0
  %v2277 = vsel %vm1216, %v2173, 0
  %v2280 = vsel %vm1216, %v2174, 0
  %v2283 = vsel %vm1216, %v2175, 0
  %vm2285 = vcmask 1041408
  %v2287 = vsel %vm2285, %v2221, 0
  %2289 = vmatprep.subr.bf16.mxu0 0
  %2290 = vmatpush1.bf16.msra.mxu0 0
  %2291 = vmatprep.subr.bf16.mxu0 0
  %2292 = vmatpush1.bf16.msra.mxu0 %v2287
  %2293 = vmatprep.subr.bf16.mxu0 0
  %2294 = vmatpush1.bf16.msra.mxu0 %v2220
  %2295 = vmatprep.subr.bf16.mxu0 0
  %2296 = vmatpush1.bf16.msra.mxu0 %v2219
  %2297 = vmatprep.subr.bf16.mxu0 0
  %2298 = vmatpush1.bf16.msra.mxu0 %v2218
  %2299 = vmatprep.subr.bf16.mxu0 0
  %2300 = vmatpush1.bf16.msra.mxu0 %v2217
  %2301 = vmatprep.subr.bf16.mxu0 0
  %2302 = vmatpush1.bf16.msra.mxu0 %v2216
  %2303 = vmatprep.subr.bf16.mxu0 0
  %2304 = vmatpush1.bf16.msra.mxu0 %v2215
  %2305 = vmatprep.subr.bf16.mxu0 0
  %2306 = vmatpush2.bf16.msra.mxu0 0
  %2307 = vmatprep.subr.bf16.mxu0 0
  %2308 = vmatpush2.bf16.msra.mxu0 0
  %2309 = vmatprep.subr.bf16.mxu0 0
  %2310 = vmatpush2.bf16.msra.mxu0 0
  %2311 = vmatprep.subr.bf16.mxu0 0
  %2312 = vmatpush2.bf16.msra.mxu0 0
  %2313 = vmatprep.subr.bf16.mxu0 0
  %2314 = vmatpush2.bf16.msra.mxu0 0
  %2315 = vmatprep.subr.bf16.mxu0 0
  %2316 = vmatpush2.bf16.msra.mxu0 0
  %2317 = vmatprep.subr.bf16.mxu0 0
  %2318 = vmatpush2.bf16.msra.mxu0 0
  %2319 = vmatprep.subr.bf16.mxu0 0
  %2320 = vmatpush2.bf16.msra.mxu0 0
  %2321 = vmatprep.mubr.bf16.mxu0 0
  %2322 = vmatmul.mubr.bf16.gmra.mxu0 %v2229
  %v2323 = vpop.f32.mrf.mxu0
  %v2324 = vadd.f32 0.0, %v2323
  %v2325 = vpop.f32.mrf.mxu0
  %v2326 = vpop.f32.mrf.mxu0
  %v2327 = vadd.f32 0.0, %v2326
  %v2328 = vpop.f32.mrf.mxu0
  %2329 = vmatprep.mubr.bf16.mxu0 0
  %2330 = vmatmul.mubr.bf16.gmra.mxu0 %v2232
  %v2331 = vpop.f32.mrf.mxu0
  %v2332 = vadd.f32 0.0, %v2331
  %v2333 = vpop.f32.mrf.mxu0
  %v2334 = vpop.f32.mrf.mxu0
  %v2335 = vadd.f32 0.0, %v2334
  %v2336 = vpop.f32.mrf.mxu0
  %2337 = vmatprep.mubr.bf16.mxu0 0
  %2338 = vmatmul.mubr.bf16.gmra.mxu0 %v2235
  %v2339 = vpop.f32.mrf.mxu0
  %v2340 = vadd.f32 0.0, %v2339
  %v2341 = vpop.f32.mrf.mxu0
  %v2342 = vpop.f32.mrf.mxu0
  %v2343 = vadd.f32 0.0, %v2342
  %v2344 = vpop.f32.mrf.mxu0
  %2345 = vmatprep.mubr.bf16.mxu0 0
  %2346 = vmatmul.mubr.bf16.gmra.mxu0 %v2238
  %v2347 = vpop.f32.mrf.mxu0
  %v2348 = vadd.f32 0.0, %v2347
  %v2349 = vpop.f32.mrf.mxu0
  %v2350 = vpop.f32.mrf.mxu0
  %v2351 = vadd.f32 0.0, %v2350
  %v2352 = vpop.f32.mrf.mxu0
  %2353 = vmatprep.mubr.bf16.mxu0 0
  %2354 = vmatmul.mubr.bf16.gmra.mxu0 %v2241
  %v2355 = vpop.f32.mrf.mxu0
  %v2356 = vadd.f32 0.0, %v2355
  %v2357 = vpop.f32.mrf.mxu0
  %v2358 = vpop.f32.mrf.mxu0
  %v2359 = vadd.f32 0.0, %v2358
  %v2360 = vpop.f32.mrf.mxu0
  %2361 = vmatprep.mubr.bf16.mxu0 0
  %2362 = vmatmul.mubr.bf16.gmra.mxu0 %v2244
  %v2363 = vpop.f32.mrf.mxu0
  %v2364 = vadd.f32 0.0, %v2363
  %v2365 = vpop.f32.mrf.mxu0
  %v2366 = vpop.f32.mrf.mxu0
  %v2367 = vadd.f32 0.0, %v2366
  %v2368 = vpop.f32.mrf.mxu0
  %2369 = vmatprep.mubr.bf16.mxu0 0
  %2370 = vmatmul.mubr.bf16.gmra.mxu0 %v2247
  %v2371 = vpop.f32.mrf.mxu0
  %v2372 = vadd.f32 0.0, %v2371
  %v2373 = vpop.f32.mrf.mxu0
  %v2374 = vpop.f32.mrf.mxu0
  %v2375 = vadd.f32 0.0, %v2374
  %v2376 = vpop.f32.mrf.mxu0
  %2377 = vmatprep.mubr.bf16.mxu0 0
  %2378 = vmatmul.mubr.bf16.gmra.mxu0 %v2250
  %v2379 = vpop.f32.mrf.mxu0
  %v2380 = vadd.f32 0.0, %v2379
  %v2381 = vpop.f32.mrf.mxu0
  %v2382 = vpop.f32.mrf.mxu0
  %v2383 = vadd.f32 0.0, %v2382
  %v2384 = vpop.f32.mrf.mxu0
  %2385 = vmatprep.mubr.bf16.mxu0 0
  %2386 = vmatmul.mubr.bf16.gmra.mxu0 %v2253
  %v2387 = vpop.f32.mrf.mxu0
  %v2388 = vadd.f32 0.0, %v2387
  %v2389 = vpop.f32.mrf.mxu0
  %v2390 = vpop.f32.mrf.mxu0
  %v2391 = vadd.f32 0.0, %v2390
  %v2392 = vpop.f32.mrf.mxu0
  %2393 = vmatprep.mubr.bf16.mxu0 0
  %2394 = vmatmul.mubr.bf16.gmra.mxu0 %v2256
  %v2395 = vpop.f32.mrf.mxu0
  %v2396 = vadd.f32 0.0, %v2395
  %v2397 = vpop.f32.mrf.mxu0
  %v2398 = vpop.f32.mrf.mxu0
  %v2399 = vadd.f32 0.0, %v2398
  %v2400 = vpop.f32.mrf.mxu0
  %2401 = vmatprep.mubr.bf16.mxu0 0
  %2402 = vmatmul.mubr.bf16.gmra.mxu0 %v2259
  %v2403 = vpop.f32.mrf.mxu0
  %v2404 = vadd.f32 0.0, %v2403
  %v2405 = vpop.f32.mrf.mxu0
  %v2406 = vpop.f32.mrf.mxu0
  %v2407 = vadd.f32 0.0, %v2406
  %v2408 = vpop.f32.mrf.mxu0
  %2409 = vmatprep.mubr.bf16.mxu0 0
  %2410 = vmatmul.mubr.bf16.gmra.mxu0 %v2262
  %v2411 = vpop.f32.mrf.mxu0
  %v2412 = vadd.f32 0.0, %v2411
  %v2413 = vpop.f32.mrf.mxu0
  %v2414 = vpop.f32.mrf.mxu0
  %v2415 = vadd.f32 0.0, %v2414
  %v2416 = vpop.f32.mrf.mxu0
  %2417 = vmatprep.mubr.bf16.mxu0 0
  %2418 = vmatmul.mubr.bf16.gmra.mxu0 %v2265
  %v2419 = vpop.f32.mrf.mxu0
  %v2420 = vadd.f32 0.0, %v2419
  %v2421 = vpop.f32.mrf.mxu0
  %v2422 = vpop.f32.mrf.mxu0
  %v2423 = vadd.f32 0.0, %v2422
  %v2424 = vpop.f32.mrf.mxu0
  %2425 = vmatprep.mubr.bf16.mxu0 0
  %2426 = vmatmul.mubr.bf16.gmra.mxu0 %v2268
  %v2427 = vpop.f32.mrf.mxu0
  %v2428 = vadd.f32 0.0, %v2427
  %v2429 = vpop.f32.mrf.mxu0
  %v2430 = vpop.f32.mrf.mxu0
  %v2431 = vadd.f32 0.0, %v2430
  %v2432 = vpop.f32.mrf.mxu0
  %2433 = vmatprep.mubr.bf16.mxu0 0
  %2434 = vmatmul.mubr.bf16.gmra.mxu0 %v2271
  %v2435 = vpop.f32.mrf.mxu0
  %v2436 = vadd.f32 0.0, %v2435
  %v2437 = vpop.f32.mrf.mxu0
  %v2438 = vpop.f32.mrf.mxu0
  %v2439 = vadd.f32 0.0, %v2438
  %v2440 = vpop.f32.mrf.mxu0
  %2441 = vmatprep.mubr.bf16.mxu0 0
  %2442 = vmatmul.mubr.bf16.gmra.mxu0 %v2274
  %v2443 = vpop.f32.mrf.mxu0
  %v2444 = vadd.f32 0.0, %v2443
  %v2445 = vpop.f32.mrf.mxu0
  %v2446 = vpop.f32.mrf.mxu0
  %v2447 = vadd.f32 0.0, %v2446
  %v2448 = vpop.f32.mrf.mxu0
  %2449 = vmatprep.mubr.bf16.mxu0 0
  %2450 = vmatmul.mubr.bf16.gmra.mxu0 %v2277
  %v2451 = vpop.f32.mrf.mxu0
  %v2452 = vadd.f32 0.0, %v2451
  %v2453 = vpop.f32.mrf.mxu0
  %v2454 = vpop.f32.mrf.mxu0
  %v2455 = vadd.f32 0.0, %v2454
  %v2456 = vpop.f32.mrf.mxu0
  %2457 = vmatprep.mubr.bf16.mxu0 0
  %2458 = vmatmul.mubr.bf16.gmra.mxu0 %v2280
  %v2459 = vpop.f32.mrf.mxu0
  %v2460 = vadd.f32 0.0, %v2459
  %v2461 = vpop.f32.mrf.mxu0
  %v2462 = vpop.f32.mrf.mxu0
  %v2463 = vadd.f32 0.0, %v2462
  %v2464 = vpop.f32.mrf.mxu0
  %2465 = vmatprep.mubr.bf16.mxu0 0
  %2466 = vmatmul.mubr.bf16.gmra.mxu0 %v2283
  %v2467 = vpop.f32.mrf.mxu0
  %v2468 = vadd.f32 0.0, %v2467
  %v2469 = vpop.f32.mrf.mxu0
  %v2470 = vpop.f32.mrf.mxu0
  %v2471 = vadd.f32 0.0, %v2470
  %v2472 = vpop.f32.mrf.mxu0
  %2473 = vdwg.mxu0
  %v2474 = vpack.c.bf16 %v2327, %v2324
  %v2475 = vpack.c.bf16 %v2335, %v2332
  %v2476 = vpack.c.bf16 %v2343, %v2340
  %v2477 = vpack.c.bf16 %v2351, %v2348
  %v2478 = vpack.c.bf16 %v2359, %v2356
  %v2479 = vpack.c.bf16 %v2367, %v2364
  %v2480 = vpack.c.bf16 %v2375, %v2372
  %v2481 = vpack.c.bf16 %v2383, %v2380
  %v2482 = vpack.c.bf16 %v2391, %v2388
  %v2483 = vpack.c.bf16 %v2399, %v2396
  %v2484 = vpack.c.bf16 %v2407, %v2404
  %v2485 = vpack.c.bf16 %v2415, %v2412
  %v2486 = vpack.c.bf16 %v2423, %v2420
  %v2487 = vpack.c.bf16 %v2431, %v2428
  %v2488 = vpack.c.bf16 %v2439, %v2436
  %v2489 = vpack.c.bf16 %v2447, %v2444
  %v2490 = vpack.c.bf16 %v2455, %v2452
  %v2491 = vpack.c.bf16 %v2463, %v2460
  %v2492 = vpack.c.bf16 %v2471, %v2468
  %v2493 = vld [vmem:[%s2 + $0x1cc] sm:$0xf]
  %v2494 = vld [vmem:[%s2 + $0x1d0] sm:$0xf]
  %v2495 = vld [vmem:[%s2 + $0x1d4] sm:$0xf]
  %v2496 = vld [vmem:[%s2 + $0x1d8] sm:$0xf]
  %v2497 = vld [vmem:[%s2 + $0x1dc] sm:$0xf]
  %v2498 = vld [vmem:[%s2 + $0x1e0] sm:$0xf]
  %v2499 = vld [vmem:[%s2 + $0x1e4] sm:$0xf]
  %v2500 = vld [vmem:[%s2 + $0x1e8] sm:$0xf]
  %v2501 = vld [vmem:[%s2 + $0x1ec] sm:$0xf]
  %v2502 = vld [vmem:[%s2 + $0x1f0] sm:$0xf]
  %v2503 = vld [vmem:[%s2 + $0x1f4] sm:$0xf]
  %v2504 = vld [vmem:[%s2 + $0x1f8] sm:$0xf]
  %v2505 = vld [vmem:[%s2 + $0x1fc] sm:$0x3]
  %v2519 = vunpack.c.l.b16 %v2493
  %v2520 = vunpack.c.l.b16 %v2494
  %v2521 = vunpack.c.l.b16 %v2495
  %v2522 = vunpack.c.l.b16 %v2496
  %v2523 = vunpack.c.l.b16 %v2497
  %v2524 = vunpack.c.l.b16 %v2498
  %v2525 = vunpack.c.l.b16 %v2499
  %v2526 = vunpack.c.l.b16 %v2500
  %v2527 = vunpack.c.l.b16 %v2501
  %v2528 = vunpack.c.l.b16 %v2502
  %v2529 = vunpack.c.l.b16 %v2503
  %v2530 = vunpack.c.l.b16 %v2504
  %v2531 = vunpack.c.l.b16 %v2505
  %v2532 = vpack.c.b16 %v2520, %v2519
  %v2533 = vpack.c.b16 %v2522, %v2521
  %v2534 = vpack.c.b16 %v2524, %v2523
  %v2535 = vpack.c.b16 %v2526, %v2525
  %v2536 = vpack.c.b16 %v2528, %v2527
  %v2537 = vpack.c.b16 %v2530, %v2529
  %v2538 = vpack.c.b16 %v2531, %v2531
  %v2546 = vsel %vm2285, %v2538, 0
  %2548 = vmatprep.subr.bf16.mxu0 0
  %2549 = vmatpush1.bf16.msra.mxu0 0
  %2550 = vmatprep.subr.bf16.mxu0 0
  %2551 = vmatpush1.bf16.msra.mxu0 %v2546
  %2552 = vmatprep.subr.bf16.mxu0 0
  %2553 = vmatpush1.bf16.msra.mxu0 %v2537
  %2554 = vmatprep.subr.bf16.mxu0 0
  %2555 = vmatpush1.bf16.msra.mxu0 %v2536
  %2556 = vmatprep.subr.bf16.mxu0 0
  %2557 = vmatpush1.bf16.msra.mxu0 %v2535
  %2558 = vmatprep.subr.bf16.mxu0 0
  %2559 = vmatpush1.bf16.msra.mxu0 %v2534
  %2560 = vmatprep.subr.bf16.mxu0 0
  %2561 = vmatpush1.bf16.msra.mxu0 %v2533
  %2562 = vmatprep.subr.bf16.mxu0 0
  %2563 = vmatpush1.bf16.msra.mxu0 %v2532
  %2564 = vmatprep.subr.bf16.mxu0 0
  %2565 = vmatpush2.bf16.msra.mxu0 0
  %2566 = vmatprep.subr.bf16.mxu0 0
  %2567 = vmatpush2.bf16.msra.mxu0 0
  %2568 = vmatprep.subr.bf16.mxu0 0
  %2569 = vmatpush2.bf16.msra.mxu0 0
  %2570 = vmatprep.subr.bf16.mxu0 0
  %2571 = vmatpush2.bf16.msra.mxu0 0
  %2572 = vmatprep.subr.bf16.mxu0 0
  %2573 = vmatpush2.bf16.msra.mxu0 0
  %2574 = vmatprep.subr.bf16.mxu0 0
  %2575 = vmatpush2.bf16.msra.mxu0 0
  %2576 = vmatprep.subr.bf16.mxu0 0
  %2577 = vmatpush2.bf16.msra.mxu0 0
  %2578 = vmatprep.subr.bf16.mxu0 0
  %2579 = vmatpush2.bf16.msra.mxu0 0
  %2580 = vmatprep.mubr.bf16.mxu0 0
  %2581 = vmatmul.mubr.bf16.gmra.mxu0 %v2229
  %v2582 = vpop.f32.mrf.mxu0
  %v2583 = vadd.f32 0.0, %v2582
  %v2584 = vpop.f32.mrf.mxu0
  %v2585 = vpop.f32.mrf.mxu0
  %v2586 = vadd.f32 0.0, %v2585
  %v2587 = vpop.f32.mrf.mxu0
  %2588 = vmatprep.mubr.bf16.mxu0 0
  %2589 = vmatmul.mubr.bf16.gmra.mxu0 %v2232
  %v2590 = vpop.f32.mrf.mxu0
  %v2591 = vadd.f32 0.0, %v2590
  %v2592 = vpop.f32.mrf.mxu0
  %v2593 = vpop.f32.mrf.mxu0
  %v2594 = vadd.f32 0.0, %v2593
  %v2595 = vpop.f32.mrf.mxu0
  %2596 = vmatprep.mubr.bf16.mxu0 0
  %2597 = vmatmul.mubr.bf16.gmra.mxu0 %v2235
  %v2598 = vpop.f32.mrf.mxu0
  %v2599 = vadd.f32 0.0, %v2598
  %v2600 = vpop.f32.mrf.mxu0
  %v2601 = vpop.f32.mrf.mxu0
  %v2602 = vadd.f32 0.0, %v2601
  %v2603 = vpop.f32.mrf.mxu0
  %2604 = vmatprep.mubr.bf16.mxu0 0
  %2605 = vmatmul.mubr.bf16.gmra.mxu0 %v2238
  %v2606 = vpop.f32.mrf.mxu0
  %v2607 = vadd.f32 0.0, %v2606
  %v2608 = vpop.f32.mrf.mxu0
  %v2609 = vpop.f32.mrf.mxu0
  %v2610 = vadd.f32 0.0, %v2609
  %v2611 = vpop.f32.mrf.mxu0
  %2612 = vmatprep.mubr.bf16.mxu0 0
  %2613 = vmatmul.mubr.bf16.gmra.mxu0 %v2241
  %v2614 = vpop.f32.mrf.mxu0
  %v2615 = vadd.f32 0.0, %v2614
  %v2616 = vpop.f32.mrf.mxu0
  %v2617 = vpop.f32.mrf.mxu0
  %v2618 = vadd.f32 0.0, %v2617
  %v2619 = vpop.f32.mrf.mxu0
  %2620 = vmatprep.mubr.bf16.mxu0 0
  %2621 = vmatmul.mubr.bf16.gmra.mxu0 %v2244
  %v2622 = vpop.f32.mrf.mxu0
  %v2623 = vadd.f32 0.0, %v2622
  %v2624 = vpop.f32.mrf.mxu0
  %v2625 = vpop.f32.mrf.mxu0
  %v2626 = vadd.f32 0.0, %v2625
  %v2627 = vpop.f32.mrf.mxu0
  %2628 = vmatprep.mubr.bf16.mxu0 0
  %2629 = vmatmul.mubr.bf16.gmra.mxu0 %v2247
  %v2630 = vpop.f32.mrf.mxu0
  %v2631 = vadd.f32 0.0, %v2630
  %v2632 = vpop.f32.mrf.mxu0
  %v2633 = vpop.f32.mrf.mxu0
  %v2634 = vadd.f32 0.0, %v2633
  %v2635 = vpop.f32.mrf.mxu0
  %2636 = vmatprep.mubr.bf16.mxu0 0
  %2637 = vmatmul.mubr.bf16.gmra.mxu0 %v2250
  %v2638 = vpop.f32.mrf.mxu0
  %v2639 = vadd.f32 0.0, %v2638
  %v2640 = vpop.f32.mrf.mxu0
  %v2641 = vpop.f32.mrf.mxu0
  %v2642 = vadd.f32 0.0, %v2641
  %v2643 = vpop.f32.mrf.mxu0
  %2644 = vmatprep.mubr.bf16.mxu0 0
  %2645 = vmatmul.mubr.bf16.gmra.mxu0 %v2253
  %v2646 = vpop.f32.mrf.mxu0
  %v2647 = vadd.f32 0.0, %v2646
  %v2648 = vpop.f32.mrf.mxu0
  %v2649 = vpop.f32.mrf.mxu0
  %v2650 = vadd.f32 0.0, %v2649
  %v2651 = vpop.f32.mrf.mxu0
  %2652 = vmatprep.mubr.bf16.mxu0 0
  %2653 = vmatmul.mubr.bf16.gmra.mxu0 %v2256
  %v2654 = vpop.f32.mrf.mxu0
  %v2655 = vadd.f32 0.0, %v2654
  %v2656 = vpop.f32.mrf.mxu0
  %v2657 = vpop.f32.mrf.mxu0
  %v2658 = vadd.f32 0.0, %v2657
  %v2659 = vpop.f32.mrf.mxu0
  %2660 = vmatprep.mubr.bf16.mxu0 0
  %2661 = vmatmul.mubr.bf16.gmra.mxu0 %v2259
  %v2662 = vpop.f32.mrf.mxu0
  %v2663 = vadd.f32 0.0, %v2662
  %v2664 = vpop.f32.mrf.mxu0
  %v2665 = vpop.f32.mrf.mxu0
  %v2666 = vadd.f32 0.0, %v2665
  %v2667 = vpop.f32.mrf.mxu0
  %2668 = vmatprep.mubr.bf16.mxu0 0
  %2669 = vmatmul.mubr.bf16.gmra.mxu0 %v2262
  %v2670 = vpop.f32.mrf.mxu0
  %v2671 = vadd.f32 0.0, %v2670
  %v2672 = vpop.f32.mrf.mxu0
  %v2673 = vpop.f32.mrf.mxu0
  %v2674 = vadd.f32 0.0, %v2673
  %v2675 = vpop.f32.mrf.mxu0
  %2676 = vmatprep.mubr.bf16.mxu0 0
  %2677 = vmatmul.mubr.bf16.gmra.mxu0 %v2265
  %v2678 = vpop.f32.mrf.mxu0
  %v2679 = vadd.f32 0.0, %v2678
  %v2680 = vpop.f32.mrf.mxu0
  %v2681 = vpop.f32.mrf.mxu0
  %v2682 = vadd.f32 0.0, %v2681
  %v2683 = vpop.f32.mrf.mxu0
  %2684 = vmatprep.mubr.bf16.mxu0 0
  %2685 = vmatmul.mubr.bf16.gmra.mxu0 %v2268
  %v2686 = vpop.f32.mrf.mxu0
  %v2687 = vadd.f32 0.0, %v2686
  %v2688 = vpop.f32.mrf.mxu0
  %v2689 = vpop.f32.mrf.mxu0
  %v2690 = vadd.f32 0.0, %v2689
  %v2691 = vpop.f32.mrf.mxu0
  %2692 = vmatprep.mubr.bf16.mxu0 0
  %2693 = vmatmul.mubr.bf16.gmra.mxu0 %v2271
  %v2694 = vpop.f32.mrf.mxu0
  %v2695 = vadd.f32 0.0, %v2694
  %v2696 = vpop.f32.mrf.mxu0
  %v2697 = vpop.f32.mrf.mxu0
  %v2698 = vadd.f32 0.0, %v2697
  %v2699 = vpop.f32.mrf.mxu0
  %2700 = vmatprep.mubr.bf16.mxu0 0
  %2701 = vmatmul.mubr.bf16.gmra.mxu0 %v2274
  %v2702 = vpop.f32.mrf.mxu0
  %v2703 = vadd.f32 0.0, %v2702
  %v2704 = vpop.f32.mrf.mxu0
  %v2705 = vpop.f32.mrf.mxu0
  %v2706 = vadd.f32 0.0, %v2705
  %v2707 = vpop.f32.mrf.mxu0
  %2708 = vmatprep.mubr.bf16.mxu0 0
  %2709 = vmatmul.mubr.bf16.gmra.mxu0 %v2277
  %v2710 = vpop.f32.mrf.mxu0
  %v2711 = vadd.f32 0.0, %v2710
  %v2712 = vpop.f32.mrf.mxu0
  %v2713 = vpop.f32.mrf.mxu0
  %v2714 = vadd.f32 0.0, %v2713
  %v2715 = vpop.f32.mrf.mxu0
  %2716 = vmatprep.mubr.bf16.mxu0 0
  %2717 = vmatmul.mubr.bf16.gmra.mxu0 %v2280
  %v2718 = vpop.f32.mrf.mxu0
  %v2719 = vadd.f32 0.0, %v2718
  %v2720 = vpop.f32.mrf.mxu0
  %v2721 = vpop.f32.mrf.mxu0
  %v2722 = vadd.f32 0.0, %v2721
  %v2723 = vpop.f32.mrf.mxu0
  %2724 = vmatprep.mubr.bf16.mxu0 0
  %2725 = vmatmul.mubr.bf16.gmra.mxu0 %v2283
  %v2726 = vpop.f32.mrf.mxu0
  %v2727 = vadd.f32 0.0, %v2726
  %v2728 = vpop.f32.mrf.mxu0
  %v2729 = vpop.f32.mrf.mxu0
  %v2730 = vadd.f32 0.0, %v2729
  %v2731 = vpop.f32.mrf.mxu0
  %2732 = vdwg.mxu0
  %v2733 = vpack.c.bf16 %v2586, %v2583
  %v2734 = vpack.c.bf16 %v2594, %v2591
  %v2735 = vpack.c.bf16 %v2602, %v2599
  %v2736 = vpack.c.bf16 %v2610, %v2607
  %v2737 = vpack.c.bf16 %v2618, %v2615
  %v2738 = vpack.c.bf16 %v2626, %v2623
  %v2739 = vpack.c.bf16 %v2634, %v2631
  %v2740 = vpack.c.bf16 %v2642, %v2639
  %v2741 = vpack.c.bf16 %v2650, %v2647
  %v2742 = vpack.c.bf16 %v2658, %v2655
  %v2743 = vpack.c.bf16 %v2666, %v2663
  %v2744 = vpack.c.bf16 %v2674, %v2671
  %v2745 = vpack.c.bf16 %v2682, %v2679
  %v2746 = vpack.c.bf16 %v2690, %v2687
  %v2747 = vpack.c.bf16 %v2698, %v2695
  %v2748 = vpack.c.bf16 %v2706, %v2703
  %v2749 = vpack.c.bf16 %v2714, %v2711
  %v2750 = vpack.c.bf16 %v2722, %v2719
  %v2751 = vpack.c.bf16 %v2730, %v2727
  %v2752 = vld [vmem:[%s1 + $0x1f8] sm:$0xff]
  %v2753 = vld [vmem:[%s1 + $0x200] sm:$0xf]
  %v2754 = vld [vmem:[%s1 + $0x204] sm:$0xff]
  %v2755 = vld [vmem:[%s1 + $0x20c] sm:$0xf]
  %v2756 = vld [vmem:[%s1 + $0x210] sm:$0xff]
  %v2757 = vld [vmem:[%s1 + $0x218] sm:$0xf]
  %v2758 = vld [vmem:[%s1 + $0x21c] sm:$0xff]
  %v2759 = vld [vmem:[%s1 + $0x224] sm:$0xf]
  %v2760 = vld [vmem:[%s1 + $0x228] sm:$0xff]
  %v2761 = vld [vmem:[%s1 + $0x230] sm:$0xf]
  %v2762 = vld [vmem:[%s1 + $0x234] sm:$0xff]
  %v2763 = vld [vmem:[%s1 + $0x23c] sm:$0xf]
  %v2764 = vld [vmem:[%s1 + $0x240] sm:$0xff]
  %v2765 = vld [vmem:[%s1 + $0x248] sm:$0xf]
  %v2766 = vld [vmem:[%s1 + $0x24c] sm:$0xff]
  %v2767 = vld [vmem:[%s1 + $0x254] sm:$0xf]
  %v2776 = vunpack.c.l.b16 %v2760
  %v2777 = vunpack.c.h.b16 %v2760
  %v2778 = vunpack.c.l.b16 %v2761
  %v2779 = vunpack.c.l.b16 %v2762
  %v2780 = vunpack.c.h.b16 %v2762
  %v2781 = vunpack.c.l.b16 %v2763
  %v2782 = vunpack.c.l.b16 %v2764
  %v2783 = vunpack.c.h.b16 %v2764
  %v2784 = vunpack.c.l.b16 %v2765
  %v2785 = vunpack.c.l.b16 %v2766
  %v2786 = vunpack.c.h.b16 %v2766
  %v2787 = vunpack.c.l.b16 %v2767
  %v2788 = vpack.c.b16 %v2779, %v2776
  %v2789 = vpack.c.b16 %v2780, %v2777
  %v2790 = vpack.c.b16 %v2781, %v2778
  %v2791 = vpack.c.b16 %v2785, %v2782
  %v2792 = vpack.c.b16 %v2786, %v2783
  %v2793 = vpack.c.b16 %v2787, %v2784
  %v2799 = vsel %vm729, %v2790, 0
  %v2802 = vsel %vm729, %v2793, 0
  %vm2804 = vcmask 1045504
  %v2805 = vsel %vm2804, %v2175, 0
  %2807 = vmatprep.subr.bf16.mxu0 0
  %2808 = vmatpush1.bf16.msra.mxu0 %v2164
  %2809 = vmatprep.subr.bf16.mxu0 0
  %2810 = vmatpush1.bf16.msra.mxu0 %v2163
  %2811 = vmatprep.subr.bf16.mxu0 0
  %2812 = vmatpush1.bf16.msra.mxu0 %v2162
  %2813 = vmatprep.subr.bf16.mxu0 0
  %2814 = vmatpush1.bf16.msra.mxu0 %v2161
  %2815 = vmatprep.subr.bf16.mxu0 0
  %2816 = vmatpush1.bf16.msra.mxu0 %v2160
  %2817 = vmatprep.subr.bf16.mxu0 0
  %2818 = vmatpush1.bf16.msra.mxu0 %v2159
  %2819 = vmatprep.subr.bf16.mxu0 0
  %2820 = vmatpush1.bf16.msra.mxu0 %v2158
  %2821 = vmatprep.subr.bf16.mxu0 0
  %2822 = vmatpush1.bf16.msra.mxu0 %v2157
  %2823 = vmatprep.subr.bf16.mxu0 0
  %2824 = vmatpush2.bf16.msra.mxu0 %v2172
  %2825 = vmatprep.subr.bf16.mxu0 0
  %2826 = vmatpush2.bf16.msra.mxu0 %v2171
  %2827 = vmatprep.subr.bf16.mxu0 0
  %2828 = vmatpush2.bf16.msra.mxu0 %v2170
  %2829 = vmatprep.subr.bf16.mxu0 0
  %2830 = vmatpush2.bf16.msra.mxu0 %v2169
  %2831 = vmatprep.subr.bf16.mxu0 0
  %2832 = vmatpush2.bf16.msra.mxu0 %v2168
  %2833 = vmatprep.subr.bf16.mxu0 0
  %2834 = vmatpush2.bf16.msra.mxu0 %v2167
  %2835 = vmatprep.subr.bf16.mxu0 0
  %2836 = vmatpush2.bf16.msra.mxu0 %v2166
  %2837 = vmatprep.subr.bf16.mxu0 0
  %2838 = vmatpush2.bf16.msra.mxu0 %v2165
  %2839 = vmatprep.mubr.bf16.mxu0 %v2789
  %2840 = vmatmul.mubr.bf16.gmra.mxu0 %v2788
  %v2841 = vpop.f32.mrf.mxu0
  %v2842 = vadd.f32 0.0, %v2841
  %v2843 = vpop.f32.mrf.mxu0
  %v2844 = vpop.f32.mrf.mxu0
  %v2845 = vadd.f32 0.0, %v2844
  %v2846 = vpop.f32.mrf.mxu0
  %2847 = vmatprep.mubr.bf16.mxu0 %v2792
  %2848 = vmatmul.mubr.bf16.gmra.mxu0 %v2791
  %v2849 = vpop.f32.mrf.mxu0
  %v2850 = vadd.f32 0.0, %v2849
  %v2851 = vpop.f32.mrf.mxu0
  %v2852 = vpop.f32.mrf.mxu0
  %v2853 = vadd.f32 0.0, %v2852
  %v2854 = vpop.f32.mrf.mxu0
  %2855 = vdwg.mxu0
  %2856 = vmatprep.subr.bf16.mxu0 0
  %2857 = vmatpush1.bf16.msra.mxu0 0
  %2858 = vmatprep.subr.bf16.mxu0 0
  %2859 = vmatpush1.bf16.msra.mxu0 0
  %2860 = vmatprep.subr.bf16.mxu0 0
  %2861 = vmatpush1.bf16.msra.mxu0 0
  %2862 = vmatprep.subr.bf16.mxu0 0
  %2863 = vmatpush1.bf16.msra.mxu0 0
  %2864 = vmatprep.subr.bf16.mxu0 0
  %2865 = vmatpush1.bf16.msra.mxu0 0
  %2866 = vmatprep.subr.bf16.mxu0 0
  %2867 = vmatpush1.bf16.msra.mxu0 %v2805
  %2868 = vmatprep.subr.bf16.mxu0 0
  %2869 = vmatpush1.bf16.msra.mxu0 %v2174
  %2870 = vmatprep.subr.bf16.mxu0 0
  %2871 = vmatpush1.bf16.msra.mxu0 %v2173
  %2872 = vmatprep.subr.bf16.mxu0 0
  %2873 = vmatpush2.bf16.msra.mxu0 0
  %2874 = vmatprep.subr.bf16.mxu0 0
  %2875 = vmatpush2.bf16.msra.mxu0 0
  %2876 = vmatprep.subr.bf16.mxu0 0
  %2877 = vmatpush2.bf16.msra.mxu0 0
  %2878 = vmatprep.subr.bf16.mxu0 0
  %2879 = vmatpush2.bf16.msra.mxu0 0
  %2880 = vmatprep.subr.bf16.mxu0 0
  %2881 = vmatpush2.bf16.msra.mxu0 0
  %2882 = vmatprep.subr.bf16.mxu0 0
  %2883 = vmatpush2.bf16.msra.mxu0 0
  %2884 = vmatprep.subr.bf16.mxu0 0
  %2885 = vmatpush2.bf16.msra.mxu0 0
  %2886 = vmatprep.subr.bf16.mxu0 0
  %2887 = vmatpush2.bf16.msra.mxu0 0
  %2888 = vmatprep.mubr.bf16.mxu0 0
  %2889 = vmatmul.mubr.bf16.gmra.mxu0 %v2799
  %v2890 = vpop.f32.mrf.mxu0
  %v2891 = vadd.f32 %v2842, %v2890
  %v2892 = vpop.f32.mrf.mxu0
  %v2893 = vpop.f32.mrf.mxu0
  %v2894 = vadd.f32 %v2845, %v2893
  %v2895 = vpop.f32.mrf.mxu0
  %2896 = vmatprep.mubr.bf16.mxu0 0
  %2897 = vmatmul.mubr.bf16.gmra.mxu0 %v2802
  %v2898 = vpop.f32.mrf.mxu0
  %v2899 = vadd.f32 %v2850, %v2898
  %v2900 = vpop.f32.mrf.mxu0
  %v2901 = vpop.f32.mrf.mxu0
  %v2902 = vadd.f32 %v2853, %v2901
  %v2903 = vpop.f32.mrf.mxu0
  %2904 = vdwg.mxu0
  %v2913 = vunpack.c.l.b16 %v2752
  %v2914 = vunpack.c.h.b16 %v2752
  %v2915 = vunpack.c.l.b16 %v2753
  %v2916 = vunpack.c.l.b16 %v2754
  %v2917 = vunpack.c.h.b16 %v2754
  %v2918 = vunpack.c.l.b16 %v2755
  %v2919 = vunpack.c.l.b16 %v2756
  %v2920 = vunpack.c.h.b16 %v2756
  %v2921 = vunpack.c.l.b16 %v2757
  %v2922 = vunpack.c.l.b16 %v2758
  %v2923 = vunpack.c.h.b16 %v2758
  %v2924 = vunpack.c.l.b16 %v2759
  %v2925 = vpack.c.b16 %v2916, %v2913
  %v2926 = vpack.c.b16 %v2917, %v2914
  %v2927 = vpack.c.b16 %v2918, %v2915
  %v2928 = vpack.c.b16 %v2922, %v2919
  %v2929 = vpack.c.b16 %v2923, %v2920
  %v2930 = vpack.c.b16 %v2924, %v2921
  %v2936 = vsel %vm729, %v2927, 0
  %v2939 = vsel %vm729, %v2930, 0
  %v2942 = vsel %vm2804, %v2492, 0
  %2944 = vmatprep.subr.bf16.mxu0 0
  %2945 = vmatpush1.bf16.msra.mxu0 %v2481
  %2946 = vmatprep.subr.bf16.mxu0 0
  %2947 = vmatpush1.bf16.msra.mxu0 %v2480
  %2948 = vmatprep.subr.bf16.mxu0 0
  %2949 = vmatpush1.bf16.msra.mxu0 %v2479
  %2950 = vmatprep.subr.bf16.mxu0 0
  %2951 = vmatpush1.bf16.msra.mxu0 %v2478
  %2952 = vmatprep.subr.bf16.mxu0 0
  %2953 = vmatpush1.bf16.msra.mxu0 %v2477
  %2954 = vmatprep.subr.bf16.mxu0 0
  %2955 = vmatpush1.bf16.msra.mxu0 %v2476
  %2956 = vmatprep.subr.bf16.mxu0 0
  %2957 = vmatpush1.bf16.msra.mxu0 %v2475
  %2958 = vmatprep.subr.bf16.mxu0 0
  %2959 = vmatpush1.bf16.msra.mxu0 %v2474
  %2960 = vmatprep.subr.bf16.mxu0 0
  %2961 = vmatpush2.bf16.msra.mxu0 %v2489
  %2962 = vmatprep.subr.bf16.mxu0 0
  %2963 = vmatpush2.bf16.msra.mxu0 %v2488
  %2964 = vmatprep.subr.bf16.mxu0 0
  %2965 = vmatpush2.bf16.msra.mxu0 %v2487
  %2966 = vmatprep.subr.bf16.mxu0 0
  %2967 = vmatpush2.bf16.msra.mxu0 %v2486
  %2968 = vmatprep.subr.bf16.mxu0 0
  %2969 = vmatpush2.bf16.msra.mxu0 %v2485
  %2970 = vmatprep.subr.bf16.mxu0 0
  %2971 = vmatpush2.bf16.msra.mxu0 %v2484
  %2972 = vmatprep.subr.bf16.mxu0 0
  %2973 = vmatpush2.bf16.msra.mxu0 %v2483
  %2974 = vmatprep.subr.bf16.mxu0 0
  %2975 = vmatpush2.bf16.msra.mxu0 %v2482
  %2976 = vmatprep.mubr.bf16.mxu0 %v2926
  %2977 = vmatmul.mubr.bf16.gmra.mxu0 %v2925
  %v2978 = vpop.f32.mrf.mxu0
  %v2979 = vadd.f32 %v2891, %v2978
  %v2980 = vpop.f32.mrf.mxu0
  %v2981 = vpop.f32.mrf.mxu0
  %v2982 = vadd.f32 %v2894, %v2981
  %v2983 = vpop.f32.mrf.mxu0
  %2984 = vmatprep.mubr.bf16.mxu0 %v2929
  %2985 = vmatmul.mubr.bf16.gmra.mxu0 %v2928
  %v2986 = vpop.f32.mrf.mxu0
  %v2987 = vadd.f32 %v2899, %v2986
  %v2988 = vpop.f32.mrf.mxu0
  %v2989 = vpop.f32.mrf.mxu0
  %v2990 = vadd.f32 %v2902, %v2989
  %v2991 = vpop.f32.mrf.mxu0
  %2992 = vdwg.mxu0
  %2993 = vmatprep.subr.bf16.mxu0 0
  %2994 = vmatpush1.bf16.msra.mxu0 0
  %2995 = vmatprep.subr.bf16.mxu0 0
  %2996 = vmatpush1.bf16.msra.mxu0 0
  %2997 = vmatprep.subr.bf16.mxu0 0
  %2998 = vmatpush1.bf16.msra.mxu0 0
  %2999 = vmatprep.subr.bf16.mxu0 0
  %3000 = vmatpush1.bf16.msra.mxu0 0
  %3001 = vmatprep.subr.bf16.mxu0 0
  %3002 = vmatpush1.bf16.msra.mxu0 0
  %3003 = vmatprep.subr.bf16.mxu0 0
  %3004 = vmatpush1.bf16.msra.mxu0 %v2942
  %3005 = vmatprep.subr.bf16.mxu0 0
  %3006 = vmatpush1.bf16.msra.mxu0 %v2491
  %3007 = vmatprep.subr.bf16.mxu0 0
  %3008 = vmatpush1.bf16.msra.mxu0 %v2490
  %3009 = vmatprep.subr.bf16.mxu0 0
  %3010 = vmatpush2.bf16.msra.mxu0 0
  %3011 = vmatprep.subr.bf16.mxu0 0
  %3012 = vmatpush2.bf16.msra.mxu0 0
  %3013 = vmatprep.subr.bf16.mxu0 0
  %3014 = vmatpush2.bf16.msra.mxu0 0
  %3015 = vmatprep.subr.bf16.mxu0 0
  %3016 = vmatpush2.bf16.msra.mxu0 0
  %3017 = vmatprep.subr.bf16.mxu0 0
  %3018 = vmatpush2.bf16.msra.mxu0 0
  %3019 = vmatprep.subr.bf16.mxu0 0
  %3020 = vmatpush2.bf16.msra.mxu0 0
  %3021 = vmatprep.subr.bf16.mxu0 0
  %3022 = vmatpush2.bf16.msra.mxu0 0
  %3023 = vmatprep.subr.bf16.mxu0 0
  %3024 = vmatpush2.bf16.msra.mxu0 0
  %3025 = vmatprep.mubr.bf16.mxu0 0
  %3026 = vmatmul.mubr.bf16.gmra.mxu0 %v2936
  %v3027 = vpop.f32.mrf.mxu0
  %v3028 = vadd.f32 %v2979, %v3027
  %v3029 = vpop.f32.mrf.mxu0
  %v3030 = vpop.f32.mrf.mxu0
  %v3031 = vadd.f32 %v2982, %v3030
  %v3032 = vpop.f32.mrf.mxu0
  %3033 = vmatprep.mubr.bf16.mxu0 0
  %3034 = vmatmul.mubr.bf16.gmra.mxu0 %v2939
  %v3035 = vpop.f32.mrf.mxu0
  %v3036 = vadd.f32 %v2987, %v3035
  %v3037 = vpop.f32.mrf.mxu0
  %v3038 = vpop.f32.mrf.mxu0
  %v3039 = vadd.f32 %v2990, %v3038
  %v3040 = vpop.f32.mrf.mxu0
  %3041 = vdwg.mxu0
  %v3042 = vld [vmem:[%s1 + $0x258] sm:$0xff]
  %v3043 = vld [vmem:[%s1 + $0x260] sm:$0xf]
  %v3044 = vld [vmem:[%s1 + $0x264] sm:$0xff]
  %v3045 = vld [vmem:[%s1 + $0x26c] sm:$0xf]
  %v3046 = vld [vmem:[%s1 + $0x270] sm:$0xff]
  %v3047 = vld [vmem:[%s1 + $0x278] sm:$0xf]
  %v3048 = vld [vmem:[%s1 + $0x27c] sm:$0xff]
  %v3049 = vld [vmem:[%s1 + $0x284] sm:$0xf]
  %v3058 = vunpack.c.l.b16 %v3042
  %v3059 = vunpack.c.h.b16 %v3042
  %v3060 = vunpack.c.l.b16 %v3043
  %v3061 = vunpack.c.l.b16 %v3044
  %v3062 = vunpack.c.h.b16 %v3044
  %v3063 = vunpack.c.l.b16 %v3045
  %v3064 = vunpack.c.l.b16 %v3046
  %v3065 = vunpack.c.h.b16 %v3046
  %v3066 = vunpack.c.l.b16 %v3047
  %v3067 = vunpack.c.l.b16 %v3048
  %v3068 = vunpack.c.h.b16 %v3048
  %v3069 = vunpack.c.l.b16 %v3049
  %v3070 = vpack.c.b16 %v3061, %v3058
  %v3071 = vpack.c.b16 %v3062, %v3059
  %v3072 = vpack.c.b16 %v3063, %v3060
  %v3073 = vpack.c.b16 %v3067, %v3064
  %v3074 = vpack.c.b16 %v3068, %v3065
  %v3075 = vpack.c.b16 %v3069, %v3066
  %v3081 = vsel %vm729, %v3072, 0
  %v3084 = vsel %vm729, %v3075, 0
  %v3087 = vsel %vm2804, %v2751, 0
  %3089 = vmatprep.subr.bf16.mxu0 0
  %3090 = vmatpush1.bf16.msra.mxu0 %v2740
  %3091 = vmatprep.subr.bf16.mxu0 0
  %3092 = vmatpush1.bf16.msra.mxu0 %v2739
  %3093 = vmatprep.subr.bf16.mxu0 0
  %3094 = vmatpush1.bf16.msra.mxu0 %v2738
  %3095 = vmatprep.subr.bf16.mxu0 0
  %3096 = vmatpush1.bf16.msra.mxu0 %v2737
  %3097 = vmatprep.subr.bf16.mxu0 0
  %3098 = vmatpush1.bf16.msra.mxu0 %v2736
  %3099 = vmatprep.subr.bf16.mxu0 0
  %3100 = vmatpush1.bf16.msra.mxu0 %v2735
  %3101 = vmatprep.subr.bf16.mxu0 0
  %3102 = vmatpush1.bf16.msra.mxu0 %v2734
  %3103 = vmatprep.subr.bf16.mxu0 0
  %3104 = vmatpush1.bf16.msra.mxu0 %v2733
  %3105 = vmatprep.subr.bf16.mxu0 0
  %3106 = vmatpush2.bf16.msra.mxu0 %v2748
  %3107 = vmatprep.subr.bf16.mxu0 0
  %3108 = vmatpush2.bf16.msra.mxu0 %v2747
  %3109 = vmatprep.subr.bf16.mxu0 0
  %3110 = vmatpush2.bf16.msra.mxu0 %v2746
  %3111 = vmatprep.subr.bf16.mxu0 0
  %3112 = vmatpush2.bf16.msra.mxu0 %v2745
  %3113 = vmatprep.subr.bf16.mxu0 0
  %3114 = vmatpush2.bf16.msra.mxu0 %v2744
  %3115 = vmatprep.subr.bf16.mxu0 0
  %3116 = vmatpush2.bf16.msra.mxu0 %v2743
  %3117 = vmatprep.subr.bf16.mxu0 0
  %3118 = vmatpush2.bf16.msra.mxu0 %v2742
  %3119 = vmatprep.subr.bf16.mxu0 0
  %3120 = vmatpush2.bf16.msra.mxu0 %v2741
  %3121 = vmatprep.mubr.bf16.mxu0 %v3071
  %3122 = vmatmul.mubr.bf16.gmra.mxu0 %v3070
  %v3123 = vpop.f32.mrf.mxu0
  %v3124 = vadd.f32 0.0, %v3123
  %v3125 = vpop.f32.mrf.mxu0
  %v3126 = vpop.f32.mrf.mxu0
  %v3127 = vadd.f32 0.0, %v3126
  %v3128 = vpop.f32.mrf.mxu0
  %3129 = vmatprep.mubr.bf16.mxu0 %v3074
  %3130 = vmatmul.mubr.bf16.gmra.mxu0 %v3073
  %v3131 = vpop.f32.mrf.mxu0
  %v3132 = vadd.f32 0.0, %v3131
  %v3133 = vpop.f32.mrf.mxu0
  %v3134 = vpop.f32.mrf.mxu0
  %v3135 = vadd.f32 0.0, %v3134
  %v3136 = vpop.f32.mrf.mxu0
  %3137 = vdwg.mxu0
  %3138 = vmatprep.subr.bf16.mxu0 0
  %3139 = vmatpush1.bf16.msra.mxu0 0
  %3140 = vmatprep.subr.bf16.mxu0 0
  %3141 = vmatpush1.bf16.msra.mxu0 0
  %3142 = vmatprep.subr.bf16.mxu0 0
  %3143 = vmatpush1.bf16.msra.mxu0 0
  %3144 = vmatprep.subr.bf16.mxu0 0
  %3145 = vmatpush1.bf16.msra.mxu0 0
  %3146 = vmatprep.subr.bf16.mxu0 0
  %3147 = vmatpush1.bf16.msra.mxu0 0
  %3148 = vmatprep.subr.bf16.mxu0 0
  %3149 = vmatpush1.bf16.msra.mxu0 %v3087
  %3150 = vmatprep.subr.bf16.mxu0 0
  %3151 = vmatpush1.bf16.msra.mxu0 %v2750
  %3152 = vmatprep.subr.bf16.mxu0 0
  %3153 = vmatpush1.bf16.msra.mxu0 %v2749
  %3154 = vmatprep.subr.bf16.mxu0 0
  %3155 = vmatpush2.bf16.msra.mxu0 0
  %3156 = vmatprep.subr.bf16.mxu0 0
  %3157 = vmatpush2.bf16.msra.mxu0 0
  %3158 = vmatprep.subr.bf16.mxu0 0
  %3159 = vmatpush2.bf16.msra.mxu0 0
  %3160 = vmatprep.subr.bf16.mxu0 0
  %3161 = vmatpush2.bf16.msra.mxu0 0
  %3162 = vmatprep.subr.bf16.mxu0 0
  %3163 = vmatpush2.bf16.msra.mxu0 0
  %3164 = vmatprep.subr.bf16.mxu0 0
  %3165 = vmatpush2.bf16.msra.mxu0 0
  %3166 = vmatprep.subr.bf16.mxu0 0
  %3167 = vmatpush2.bf16.msra.mxu0 0
  %3168 = vmatprep.subr.bf16.mxu0 0
  %3169 = vmatpush2.bf16.msra.mxu0 0
  %3170 = vmatprep.mubr.bf16.mxu0 0
  %3171 = vmatmul.mubr.bf16.gmra.mxu0 %v3081
  %v3172 = vpop.f32.mrf.mxu0
  %v3173 = vadd.f32 %v3124, %v3172
  %v3174 = vpop.f32.mrf.mxu0
  %v3175 = vpop.f32.mrf.mxu0
  %v3176 = vadd.f32 %v3127, %v3175
  %v3177 = vpop.f32.mrf.mxu0
  %3178 = vmatprep.mubr.bf16.mxu0 0
  %3179 = vmatmul.mubr.bf16.gmra.mxu0 %v3084
  %v3180 = vpop.f32.mrf.mxu0
  %v3181 = vadd.f32 %v3132, %v3180
  %v3182 = vpop.f32.mrf.mxu0
  %v3183 = vpop.f32.mrf.mxu0
  %v3184 = vadd.f32 %v3135, %v3183
  %v3185 = vpop.f32.mrf.mxu0
  %3186 = vdwg.mxu0
  %v3187 = vadd.f32 %v3028, %v3173
  %v3188 = vadd.f32 %v3031, %v3176
  %v3189 = vadd.f32 %v3036, %v3181
  %v3190 = vadd.f32 %v3039, %v3184
  %v3191 = vld [vmem:[%s3 + $0x3b0] sm:$0xff]
  %v3192 = vld [vmem:[%s3 + $0x3b8] sm:$0xff]
  %v3193 = vld [vmem:[%s3 + $0x3c0] sm:$0xff]
  %v3194 = vld [vmem:[%s3 + $0x3c8] sm:$0xff]
  %3196 = vset.pattern.permute.xlu0 0
  %3197 = vperm.xlu0 %3196, %v3191
  %v3198 = vpop.permute.xlu0 %3197
  %3201 = vset.pattern.permute.xlu0 0
  %3202 = vperm.xlu0 %3201, %v3192
  %v3203 = vpop.permute.xlu0 %3202
  %3206 = vset.pattern.permute.xlu0 0
  %3207 = vperm.xlu0 %3206, %v3193
  %v3208 = vpop.permute.xlu0 %3207
  %3211 = vset.pattern.permute.xlu0 0
  %3212 = vperm.xlu0 %3211, %v3194
  %v3213 = vpop.permute.xlu0 %3212
  %v3215 = vadd.f32 %v3187, %v3198
  %v3216 = vadd.f32 %v3188, %v3203
  %v3217 = vadd.f32 %v3189, %v3208
  %v3218 = vadd.f32 %v3190, %v3213
  %v3219 = vadd.f32 %v1050, %v3215
  %v3220 = vadd.f32 %v1053, %v3216
  %v3221 = vadd.f32 %v1058, %v3217
  %v3222 = vadd.f32 %v1061, %v3218
  %v3223 = vsel %vm1216, %v3219, 0.0
  %v3224 = vsel %vm1216, %v3220, 0.0
  %v3225 = vadd.f32 %v3223, %v3224
  %v3226 = vsel %vm1216, %v3221, 0.0
  %v3227 = vadd.f32 %v3225, %v3226
  %v3228 = vsel %vm1216, %v3222, 0.0
  %v3229 = vadd.f32 %v3227, %v3228
  %3230 = vadd.xlane.f32.xlu0 %v3229
  %v3231 = vpop.xlane.xlu0 %3230
  %v3232 = vrot.slane %v3231, 4
  %v3233 = vadd.f32 %v3231, %v3232
  %v3234 = vrot.slane %v3233, 2
  %v3235 = vadd.f32 %v3233, %v3234
  %v3236 = vrot.slane %v3235, 1
  %v3237 = vadd.f32 %v3235, %v3236
  %s3238 = vtos %v3237
  %s3239 = smul.f32 %s3238, 0.0003125
  %v3240 = vmul.f32 %v3219, %v3219
  %v3241 = vmul.f32 %v3220, %v3220
  %v3242 = vmul.f32 %v3221, %v3221
  %v3243 = vmul.f32 %v3222, %v3222
  %v3244 = vsel %vm1216, %v3240, 0.0
  %v3245 = vsel %vm1216, %v3241, 0.0
  %v3246 = vadd.f32 %v3244, %v3245
  %v3247 = vsel %vm1216, %v3242, 0.0
  %v3248 = vadd.f32 %v3246, %v3247
  %v3249 = vsel %vm1216, %v3243, 0.0
  %v3250 = vadd.f32 %v3248, %v3249
  %3251 = vadd.xlane.f32.xlu0 %v3250
  %v3252 = vpop.xlane.xlu0 %3251
  %v3253 = vrot.slane %v3252, 4
  %v3254 = vadd.f32 %v3252, %v3253
  %v3255 = vrot.slane %v3254, 2
  %v3256 = vadd.f32 %v3254, %v3255
  %v3257 = vrot.slane %v3256, 1
  %v3258 = vadd.f32 %v3256, %v3257
  %s3259 = vtos %v3258
  %s3260 = smul.f32 %s3259, 0.0003125
  %s3261 = smul.f32 %s3239, %s3239
  %s3262 = ssub.f32 %s3260, %s3261
  %s3263 = smax.f32 %s3262, 0.0
  %v3264 = vstv %s3239
  %v3265 = vsub.f32 %v3219, %v3264
  %v3266 = vsub.f32 %v3220, %v3264
  %v3267 = vsub.f32 %v3221, %v3264
  %v3268 = vsub.f32 %v3222, %v3264
  %s3269 = sadd.f32 %s3263, 1e-05
  %v3270 = vstv %s3269
  %v3271 = vrsqrt.pop %v3270
  %s3272 = vtos %v3271
  %v3273 = vld [vmem:[%s3 + $0x3d0] sm:$0xff]
  %v3274 = vld [vmem:[%s3 + $0x3d8] sm:$0xff]
  %v3275 = vld [vmem:[%s3 + $0x3e0] sm:$0xff]
  %v3276 = vld [vmem:[%s3 + $0x3e8] sm:$0xff]
  %v3277 = vstv %s3272
  %v3278 = vmul.f32 %v3277, %v3273
  %v3279 = vmul.f32 %v3277, %v3274
  %v3280 = vmul.f32 %v3277, %v3275
  %v3281 = vmul.f32 %v3277, %v3276
  %3283 = vset.pattern.permute.xlu0 0
  %3284 = vperm.xlu0 %3283, %v3278
  %v3285 = vpop.permute.xlu0 %3284
  %3288 = vset.pattern.permute.xlu0 0
  %3289 = vperm.xlu0 %3288, %v3279
  %v3290 = vpop.permute.xlu0 %3289
  %3293 = vset.pattern.permute.xlu0 0
  %3294 = vperm.xlu0 %3293, %v3280
  %v3295 = vpop.permute.xlu0 %3294
  %3298 = vset.pattern.permute.xlu0 0
  %3299 = vperm.xlu0 %3298, %v3281
  %v3300 = vpop.permute.xlu0 %3299
  %v3302 = vmul.f32 %v3265, %v3285
  %v3303 = vmul.f32 %v3266, %v3290
  %v3304 = vmul.f32 %v3267, %v3295
  %v3305 = vmul.f32 %v3268, %v3300
  %v3306 = vld [vmem:[%s3 + $0x3f0] sm:$0xff]
  %v3307 = vld [vmem:[%s3 + $0x3f8] sm:$0xff]
  %v3308 = vld [vmem:[%s3 + $0x400] sm:$0xff]
  %v3309 = vld [vmem:[%s3 + $0x408] sm:$0xff]
  %3311 = vset.pattern.permute.xlu0 0
  %3312 = vperm.xlu0 %3311, %v3306
  %v3313 = vpop.permute.xlu0 %3312
  %3316 = vset.pattern.permute.xlu0 0
  %3317 = vperm.xlu0 %3316, %v3307
  %v3318 = vpop.permute.xlu0 %3317
  %3321 = vset.pattern.permute.xlu0 0
  %3322 = vperm.xlu0 %3321, %v3308
  %v3323 = vpop.permute.xlu0 %3322
  %3326 = vset.pattern.permute.xlu0 0
  %3327 = vperm.xlu0 %3326, %v3309
  %v3328 = vpop.permute.xlu0 %3327
  %v3330 = vadd.f32 %v3302, %v3313
  %v3331 = vadd.f32 %v3303, %v3318
  %v3332 = vadd.f32 %v3304, %v3323
  %v3333 = vadd.f32 %v3305, %v3328
  %vm3334 = vcmp.ge.f32.partialorder %v3330, 0.0
  %vm3335 = vcmp.ge.f32.partialorder %v3331, 0.0
  %vm3336 = vcmp.ge.f32.partialorder %v3332, 0.0
  %vm3337 = vcmp.ge.f32.partialorder %v3333, 0.0
  %v3338 = vmul.f32 %v3330, 0.01
  %v3339 = vmul.f32 %v3331, 0.01
  %v3340 = vmul.f32 %v3332, 0.01
  %v3341 = vmul.f32 %v3333, 0.01
  %v3342 = vsel %vm3334, %v3330, %v3338
  %v3343 = vsel %vm3335, %v3331, %v3339
  %v3344 = vsel %vm3336, %v3332, %v3340
  %v3345 = vsel %vm3337, %v3333, %v3341
  %v3346 = vpack.c.bf16 %v3343, %v3342
  %v3347 = vpack.c.bf16 %v3345, %v3344
  %v3348 = vld [vmem:[%s2 + $0x220] sm:$0xf]
  %v3349 = vld [vmem:[%s2 + $0x224] sm:$0xf]
  %v3350 = vld [vmem:[%s2 + $0x228] sm:$0xf]
  %v3351 = vld [vmem:[%s2 + $0x22c] sm:$0xf]
  %v3352 = vld [vmem:[%s2 + $0x230] sm:$0xf]
  %v3353 = vld [vmem:[%s2 + $0x234] sm:$0xf]
  %v3354 = vld [vmem:[%s2 + $0x238] sm:$0xf]
  %v3355 = vld [vmem:[%s2 + $0x23c] sm:$0xf]
  %v3356 = vld [vmem:[%s2 + $0x240] sm:$0xf]
  %v3357 = vld [vmem:[%s2 + $0x244] sm:$0xf]
  %v3358 = vld [vmem:[%s2 + $0x248] sm:$0xf]
  %v3359 = vld [vmem:[%s2 + $0x24c] sm:$0xf]
  %v3360 = vld [vmem:[%s2 + $0x250] sm:$0x3]
  %v3374 = vunpack.c.l.b16 %v3348
  %v3375 = vunpack.c.l.b16 %v3349
  %v3376 = vunpack.c.l.b16 %v3350
  %v3377 = vunpack.c.l.b16 %v3351
  %v3378 = vunpack.c.l.b16 %v3352
  %v3379 = vunpack.c.l.b16 %v3353
  %v3380 = vunpack.c.l.b16 %v3354
  %v3381 = vunpack.c.l.b16 %v3355
  %v3382 = vunpack.c.l.b16 %v3356
  %v3383 = vunpack.c.l.b16 %v3357
  %v3384 = vunpack.c.l.b16 %v3358
  %v3385 = vunpack.c.l.b16 %v3359
  %v3386 = vunpack.c.l.b16 %v3360
  %v3387 = vpack.c.b16 %v3375, %v3374
  %v3388 = vpack.c.b16 %v3377, %v3376
  %v3389 = vpack.c.b16 %v3379, %v3378
  %v3390 = vpack.c.b16 %v3381, %v3380
  %v3391 = vpack.c.b16 %v3383, %v3382
  %v3392 = vpack.c.b16 %v3385, %v3384
  %v3393 = vpack.c.b16 %v3386, %v3386
  %v3401 = vsel %vm1216, %v3346, 0
  %v3404 = vsel %vm1216, %v3347, 0
  %v3407 = vsel %vm2285, %v3393, 0
  %3409 = vmatprep.subr.bf16.mxu0 0
  %3410 = vmatpush1.bf16.msra.mxu0 0
  %3411 = vmatprep.subr.bf16.mxu0 0
  %3412 = vmatpush1.bf16.msra.mxu0 %v3407
  %3413 = vmatprep.subr.bf16.mxu0 0
  %3414 = vmatpush1.bf16.msra.mxu0 %v3392
  %3415 = vmatprep.subr.bf16.mxu0 0
  %3416 = vmatpush1.bf16.msra.mxu0 %v3391
  %3417 = vmatprep.subr.bf16.mxu0 0
  %3418 = vmatpush1.bf16.msra.mxu0 %v3390
  %3419 = vmatprep.subr.bf16.mxu0 0
  %3420 = vmatpush1.bf16.msra.mxu0 %v3389
  %3421 = vmatprep.subr.bf16.mxu0 0
  %3422 = vmatpush1.bf16.msra.mxu0 %v3388
  %3423 = vmatprep.subr.bf16.mxu0 0
  %3424 = vmatpush1.bf16.msra.mxu0 %v3387
  %3425 = vmatprep.subr.bf16.mxu0 0
  %3426 = vmatpush2.bf16.msra.mxu0 0
  %3427 = vmatprep.subr.bf16.mxu0 0
  %3428 = vmatpush2.bf16.msra.mxu0 0
  %3429 = vmatprep.subr.bf16.mxu0 0
  %3430 = vmatpush2.bf16.msra.mxu0 0
  %3431 = vmatprep.subr.bf16.mxu0 0
  %3432 = vmatpush2.bf16.msra.mxu0 0
  %3433 = vmatprep.subr.bf16.mxu0 0
  %3434 = vmatpush2.bf16.msra.mxu0 0
  %3435 = vmatprep.subr.bf16.mxu0 0
  %3436 = vmatpush2.bf16.msra.mxu0 0
  %3437 = vmatprep.subr.bf16.mxu0 0
  %3438 = vmatpush2.bf16.msra.mxu0 0
  %3439 = vmatprep.subr.bf16.mxu0 0
  %3440 = vmatpush2.bf16.msra.mxu0 0
  %3441 = vmatprep.mubr.bf16.mxu0 0
  %3442 = vmatmul.mubr.bf16.gmra.mxu0 %v3401
  %v3443 = vpop.f32.mrf.mxu0
  %v3444 = vadd.f32 0.0, %v3443
  %v3445 = vpop.f32.mrf.mxu0
  %v3446 = vpop.f32.mrf.mxu0
  %v3447 = vadd.f32 0.0, %v3446
  %v3448 = vpop.f32.mrf.mxu0
  %3449 = vmatprep.mubr.bf16.mxu0 0
  %3450 = vmatmul.mubr.bf16.gmra.mxu0 %v3404
  %v3451 = vpop.f32.mrf.mxu0
  %v3452 = vadd.f32 0.0, %v3451
  %v3453 = vpop.f32.mrf.mxu0
  %v3454 = vpop.f32.mrf.mxu0
  %v3455 = vadd.f32 0.0, %v3454
  %v3456 = vpop.f32.mrf.mxu0
  %3457 = vdwg.mxu0
  %v3458 = vld [vmem:[%s2 + $0x254] sm:$0xf]
  %v3459 = vld [vmem:[%s2 + $0x258] sm:$0xf]
  %v3460 = vld [vmem:[%s2 + $0x25c] sm:$0xf]
  %v3461 = vld [vmem:[%s2 + $0x260] sm:$0xf]
  %v3462 = vld [vmem:[%s2 + $0x264] sm:$0xf]
  %v3463 = vld [vmem:[%s2 + $0x268] sm:$0xf]
  %v3464 = vld [vmem:[%s2 + $0x26c] sm:$0xf]
  %v3465 = vld [vmem:[%s2 + $0x270] sm:$0xf]
  %v3466 = vld [vmem:[%s2 + $0x274] sm:$0xf]
  %v3467 = vld [vmem:[%s2 + $0x278] sm:$0xf]
  %v3468 = vld [vmem:[%s2 + $0x27c] sm:$0xf]
  %v3469 = vld [vmem:[%s2 + $0x280] sm:$0xf]
  %v3470 = vld [vmem:[%s2 + $0x284] sm:$0x3]
  %v3484 = vunpack.c.l.b16 %v3458
  %v3485 = vunpack.c.l.b16 %v3459
  %v3486 = vunpack.c.l.b16 %v3460
  %v3487 = vunpack.c.l.b16 %v3461
  %v3488 = vunpack.c.l.b16 %v3462
  %v3489 = vunpack.c.l.b16 %v3463
  %v3490 = vunpack.c.l.b16 %v3464
  %v3491 = vunpack.c.l.b16 %v3465
  %v3492 = vunpack.c.l.b16 %v3466
  %v3493 = vunpack.c.l.b16 %v3467
  %v3494 = vunpack.c.l.b16 %v3468
  %v3495 = vunpack.c.l.b16 %v3469
  %v3496 = vunpack.c.l.b16 %v3470
  %v3497 = vpack.c.b16 %v3485, %v3484
  %v3498 = vpack.c.b16 %v3487, %v3486
  %v3499 = vpack.c.b16 %v3489, %v3488
  %v3500 = vpack.c.b16 %v3491, %v3490
  %v3501 = vpack.c.b16 %v3493, %v3492
  %v3502 = vpack.c.b16 %v3495, %v3494
  %v3503 = vpack.c.b16 %v3496, %v3496
  %v3511 = vsel %vm2285, %v3503, 0
  %3513 = vmatprep.subr.bf16.mxu0 0
  %3514 = vmatpush1.bf16.msra.mxu0 0
  %3515 = vmatprep.subr.bf16.mxu0 0
  %3516 = vmatpush1.bf16.msra.mxu0 %v3511
  %3517 = vmatprep.subr.bf16.mxu0 0
  %3518 = vmatpush1.bf16.msra.mxu0 %v3502
  %3519 = vmatprep.subr.bf16.mxu0 0
  %3520 = vmatpush1.bf16.msra.mxu0 %v3501
  %3521 = vmatprep.subr.bf16.mxu0 0
  %3522 = vmatpush1.bf16.msra.mxu0 %v3500
  %3523 = vmatprep.subr.bf16.mxu0 0
  %3524 = vmatpush1.bf16.msra.mxu0 %v3499
  %3525 = vmatprep.subr.bf16.mxu0 0
  %3526 = vmatpush1.bf16.msra.mxu0 %v3498
  %3527 = vmatprep.subr.bf16.mxu0 0
  %3528 = vmatpush1.bf16.msra.mxu0 %v3497
  %3529 = vmatprep.subr.bf16.mxu0 0
  %3530 = vmatpush2.bf16.msra.mxu0 0
  %3531 = vmatprep.subr.bf16.mxu0 0
  %3532 = vmatpush2.bf16.msra.mxu0 0
  %3533 = vmatprep.subr.bf16.mxu0 0
  %3534 = vmatpush2.bf16.msra.mxu0 0
  %3535 = vmatprep.subr.bf16.mxu0 0
  %3536 = vmatpush2.bf16.msra.mxu0 0
  %3537 = vmatprep.subr.bf16.mxu0 0
  %3538 = vmatpush2.bf16.msra.mxu0 0
  %3539 = vmatprep.subr.bf16.mxu0 0
  %3540 = vmatpush2.bf16.msra.mxu0 0
  %3541 = vmatprep.subr.bf16.mxu0 0
  %3542 = vmatpush2.bf16.msra.mxu0 0
  %3543 = vmatprep.subr.bf16.mxu0 0
  %3544 = vmatpush2.bf16.msra.mxu0 0
  %3545 = vmatprep.mubr.bf16.mxu0 0
  %3546 = vmatmul.mubr.bf16.gmra.mxu0 %v3401
  %v3547 = vpop.f32.mrf.mxu0
  %v3548 = vadd.f32 0.0, %v3547
  %v3549 = vpop.f32.mrf.mxu0
  %v3550 = vpop.f32.mrf.mxu0
  %v3551 = vadd.f32 0.0, %v3550
  %v3552 = vpop.f32.mrf.mxu0
  %3553 = vmatprep.mubr.bf16.mxu0 0
  %3554 = vmatmul.mubr.bf16.gmra.mxu0 %v3404
  %v3555 = vpop.f32.mrf.mxu0
  %v3556 = vadd.f32 0.0, %v3555
  %v3557 = vpop.f32.mrf.mxu0
  %v3558 = vpop.f32.mrf.mxu0
  %v3559 = vadd.f32 0.0, %v3558
  %v3560 = vpop.f32.mrf.mxu0
  %3561 = vdwg.mxu0
  %v3562 = vld [vmem:[%s2 + $0x288] sm:$0xf]
  %v3563 = vld [vmem:[%s2 + $0x28c] sm:$0xf]
  %v3564 = vld [vmem:[%s2 + $0x290] sm:$0xf]
  %v3565 = vld [vmem:[%s2 + $0x294] sm:$0xf]
  %v3566 = vld [vmem:[%s2 + $0x298] sm:$0xf]
  %v3567 = vld [vmem:[%s2 + $0x29c] sm:$0xf]
  %v3568 = vld [vmem:[%s2 + $0x2a0] sm:$0xf]
  %v3569 = vld [vmem:[%s2 + $0x2a4] sm:$0xf]
  %v3570 = vld [vmem:[%s2 + $0x2a8] sm:$0xf]
  %v3571 = vld [vmem:[%s2 + $0x2ac] sm:$0xf]
  %v3572 = vld [vmem:[%s2 + $0x2b0] sm:$0xf]
  %v3573 = vld [vmem:[%s2 + $0x2b4] sm:$0xf]
  %v3574 = vld [vmem:[%s2 + $0x2b8] sm:$0x3]
  %v3588 = vunpack.c.l.b16 %v3562
  %v3589 = vunpack.c.l.b16 %v3563
  %v3590 = vunpack.c.l.b16 %v3564
  %v3591 = vunpack.c.l.b16 %v3565
  %v3592 = vunpack.c.l.b16 %v3566
  %v3593 = vunpack.c.l.b16 %v3567
  %v3594 = vunpack.c.l.b16 %v3568
  %v3595 = vunpack.c.l.b16 %v3569
  %v3596 = vunpack.c.l.b16 %v3570
  %v3597 = vunpack.c.l.b16 %v3571
  %v3598 = vunpack.c.l.b16 %v3572
  %v3599 = vunpack.c.l.b16 %v3573
  %v3600 = vunpack.c.l.b16 %v3574
  %v3601 = vpack.c.b16 %v3589, %v3588
  %v3602 = vpack.c.b16 %v3591, %v3590
  %v3603 = vpack.c.b16 %v3593, %v3592
  %v3604 = vpack.c.b16 %v3595, %v3594
  %v3605 = vpack.c.b16 %v3597, %v3596
  %v3606 = vpack.c.b16 %v3599, %v3598
  %v3607 = vpack.c.b16 %v3600, %v3600
  %v3615 = vsel %vm2285, %v3607, 0
  %3617 = vmatprep.subr.bf16.mxu0 0
  %3618 = vmatpush1.bf16.msra.mxu0 0
  %3619 = vmatprep.subr.bf16.mxu0 0
  %3620 = vmatpush1.bf16.msra.mxu0 %v3615
  %3621 = vmatprep.subr.bf16.mxu0 0
  %3622 = vmatpush1.bf16.msra.mxu0 %v3606
  %3623 = vmatprep.subr.bf16.mxu0 0
  %3624 = vmatpush1.bf16.msra.mxu0 %v3605
  %3625 = vmatprep.subr.bf16.mxu0 0
  %3626 = vmatpush1.bf16.msra.mxu0 %v3604
  %3627 = vmatprep.subr.bf16.mxu0 0
  %3628 = vmatpush1.bf16.msra.mxu0 %v3603
  %3629 = vmatprep.subr.bf16.mxu0 0
  %3630 = vmatpush1.bf16.msra.mxu0 %v3602
  %3631 = vmatprep.subr.bf16.mxu0 0
  %3632 = vmatpush1.bf16.msra.mxu0 %v3601
  %3633 = vmatprep.subr.bf16.mxu0 0
  %3634 = vmatpush2.bf16.msra.mxu0 0
  %3635 = vmatprep.subr.bf16.mxu0 0
  %3636 = vmatpush2.bf16.msra.mxu0 0
  %3637 = vmatprep.subr.bf16.mxu0 0
  %3638 = vmatpush2.bf16.msra.mxu0 0
  %3639 = vmatprep.subr.bf16.mxu0 0
  %3640 = vmatpush2.bf16.msra.mxu0 0
  %3641 = vmatprep.subr.bf16.mxu0 0
  %3642 = vmatpush2.bf16.msra.mxu0 0
  %3643 = vmatprep.subr.bf16.mxu0 0
  %3644 = vmatpush2.bf16.msra.mxu0 0
  %3645 = vmatprep.subr.bf16.mxu0 0
  %3646 = vmatpush2.bf16.msra.mxu0 0
  %3647 = vmatprep.subr.bf16.mxu0 0
  %3648 = vmatpush2.bf16.msra.mxu0 0
  %3649 = vmatprep.mubr.bf16.mxu0 0
  %3650 = vmatmul.mubr.bf16.gmra.mxu0 %v3401
  %v3651 = vpop.f32.mrf.mxu0
  %v3652 = vadd.f32 0.0, %v3651
  %v3653 = vpop.f32.mrf.mxu0
  %v3654 = vpop.f32.mrf.mxu0
  %v3655 = vadd.f32 0.0, %v3654
  %v3656 = vpop.f32.mrf.mxu0
  %3657 = vmatprep.mubr.bf16.mxu0 0
  %3658 = vmatmul.mubr.bf16.gmra.mxu0 %v3404
  %v3659 = vpop.f32.mrf.mxu0
  %v3660 = vadd.f32 0.0, %v3659
  %v3661 = vpop.f32.mrf.mxu0
  %v3662 = vpop.f32.mrf.mxu0
  %v3663 = vadd.f32 0.0, %v3662
  %v3664 = vpop.f32.mrf.mxu0
  %3665 = vdwg.mxu0
  %v3666 = vld [vmem:[%s2 + $0x2bc] sm:$0xf]
  %v3667 = vld [vmem:[%s2 + $0x2c0] sm:$0xf]
  %v3668 = vld [vmem:[%s2 + $0x2c4] sm:$0xf]
  %v3669 = vld [vmem:[%s2 + $0x2c8] sm:$0xf]
  %v3670 = vld [vmem:[%s2 + $0x2cc] sm:$0xf]
  %v3671 = vld [vmem:[%s2 + $0x2d0] sm:$0xf]
  %v3672 = vld [vmem:[%s2 + $0x2d4] sm:$0xf]
  %v3673 = vld [vmem:[%s2 + $0x2d8] sm:$0xf]
  %v3674 = vld [vmem:[%s2 + $0x2dc] sm:$0xf]
  %v3675 = vld [vmem:[%s2 + $0x2e0] sm:$0xf]
  %v3676 = vld [vmem:[%s2 + $0x2e4] sm:$0xf]
  %v3677 = vld [vmem:[%s2 + $0x2e8] sm:$0xf]
  %v3678 = vld [vmem:[%s2 + $0x2ec] sm:$0x3]
  %v3692 = vunpack.c.l.b16 %v3666
  %v3693 = vunpack.c.l.b16 %v3667
  %v3694 = vunpack.c.l.b16 %v3668
  %v3695 = vunpack.c.l.b16 %v3669
  %v3696 = vunpack.c.l.b16 %v3670
  %v3697 = vunpack.c.l.b16 %v3671
  %v3698 = vunpack.c.l.b16 %v3672
  %v3699 = vunpack.c.l.b16 %v3673
  %v3700 = vunpack.c.l.b16 %v3674
  %v3701 = vunpack.c.l.b16 %v3675
  %v3702 = vunpack.c.l.b16 %v3676
  %v3703 = vunpack.c.l.b16 %v3677
  %v3704 = vunpack.c.l.b16 %v3678
  %v3705 = vpack.c.b16 %v3693, %v3692
  %v3706 = vpack.c.b16 %v3695, %v3694
  %v3707 = vpack.c.b16 %v3697, %v3696
  %v3708 = vpack.c.b16 %v3699, %v3698
  %v3709 = vpack.c.b16 %v3701, %v3700
  %v3710 = vpack.c.b16 %v3703, %v3702
  %v3711 = vpack.c.b16 %v3704, %v3704
  %v3719 = vsel %vm2285, %v3711, 0
  %3721 = vmatprep.subr.bf16.mxu0 0
  %3722 = vmatpush1.bf16.msra.mxu0 0
  %3723 = vmatprep.subr.bf16.mxu0 0
  %3724 = vmatpush1.bf16.msra.mxu0 %v3719
  %3725 = vmatprep.subr.bf16.mxu0 0
  %3726 = vmatpush1.bf16.msra.mxu0 %v3710
  %3727 = vmatprep.subr.bf16.mxu0 0
  %3728 = vmatpush1.bf16.msra.mxu0 %v3709
  %3729 = vmatprep.subr.bf16.mxu0 0
  %3730 = vmatpush1.bf16.msra.mxu0 %v3708
  %3731 = vmatprep.subr.bf16.mxu0 0
  %3732 = vmatpush1.bf16.msra.mxu0 %v3707
  %3733 = vmatprep.subr.bf16.mxu0 0
  %3734 = vmatpush1.bf16.msra.mxu0 %v3706
  %3735 = vmatprep.subr.bf16.mxu0 0
  %3736 = vmatpush1.bf16.msra.mxu0 %v3705
  %3737 = vmatprep.subr.bf16.mxu0 0
  %3738 = vmatpush2.bf16.msra.mxu0 0
  %3739 = vmatprep.subr.bf16.mxu0 0
  %3740 = vmatpush2.bf16.msra.mxu0 0
  %3741 = vmatprep.subr.bf16.mxu0 0
  %3742 = vmatpush2.bf16.msra.mxu0 0
  %3743 = vmatprep.subr.bf16.mxu0 0
  %3744 = vmatpush2.bf16.msra.mxu0 0
  %3745 = vmatprep.subr.bf16.mxu0 0
  %3746 = vmatpush2.bf16.msra.mxu0 0
  %3747 = vmatprep.subr.bf16.mxu0 0
  %3748 = vmatpush2.bf16.msra.mxu0 0
  %3749 = vmatprep.subr.bf16.mxu0 0
  %3750 = vmatpush2.bf16.msra.mxu0 0
  %3751 = vmatprep.subr.bf16.mxu0 0
  %3752 = vmatpush2.bf16.msra.mxu0 0
  %3753 = vmatprep.mubr.bf16.mxu0 0
  %3754 = vmatmul.mubr.bf16.gmra.mxu0 %v3401
  %v3755 = vpop.f32.mrf.mxu0
  %v3756 = vadd.f32 0.0, %v3755
  %v3757 = vpop.f32.mrf.mxu0
  %v3758 = vpop.f32.mrf.mxu0
  %v3759 = vadd.f32 0.0, %v3758
  %v3760 = vpop.f32.mrf.mxu0
  %3761 = vmatprep.mubr.bf16.mxu0 0
  %3762 = vmatmul.mubr.bf16.gmra.mxu0 %v3404
  %v3763 = vpop.f32.mrf.mxu0
  %v3764 = vadd.f32 0.0, %v3763
  %v3765 = vpop.f32.mrf.mxu0
  %v3766 = vpop.f32.mrf.mxu0
  %v3767 = vadd.f32 0.0, %v3766
  %v3768 = vpop.f32.mrf.mxu0
  %3769 = vdwg.mxu0
  %v3770 = vld [vmem:[%s2 + $0x2f0] sm:$0xf]
  %v3771 = vld [vmem:[%s2 + $0x2f4] sm:$0xf]
  %v3772 = vld [vmem:[%s2 + $0x2f8] sm:$0xf]
  %v3773 = vld [vmem:[%s2 + $0x2fc] sm:$0xf]
  %v3774 = vld [vmem:[%s2 + $0x300] sm:$0xf]
  %v3775 = vld [vmem:[%s2 + $0x304] sm:$0xf]
  %v3776 = vld [vmem:[%s2 + $0x308] sm:$0xf]
  %v3777 = vld [vmem:[%s2 + $0x30c] sm:$0xf]
  %v3778 = vld [vmem:[%s2 + $0x310] sm:$0xf]
  %v3779 = vld [vmem:[%s2 + $0x314] sm:$0xf]
  %v3780 = vld [vmem:[%s2 + $0x318] sm:$0xf]
  %v3781 = vld [vmem:[%s2 + $0x31c] sm:$0xf]
  %v3782 = vld [vmem:[%s2 + $0x320] sm:$0x3]
  %v3796 = vunpack.c.l.b16 %v3770
  %v3797 = vunpack.c.l.b16 %v3771
  %v3798 = vunpack.c.l.b16 %v3772
  %v3799 = vunpack.c.l.b16 %v3773
  %v3800 = vunpack.c.l.b16 %v3774
  %v3801 = vunpack.c.l.b16 %v3775
  %v3802 = vunpack.c.l.b16 %v3776
  %v3803 = vunpack.c.l.b16 %v3777
  %v3804 = vunpack.c.l.b16 %v3778
  %v3805 = vunpack.c.l.b16 %v3779
  %v3806 = vunpack.c.l.b16 %v3780
  %v3807 = vunpack.c.l.b16 %v3781
  %v3808 = vunpack.c.l.b16 %v3782
  %v3809 = vpack.c.b16 %v3797, %v3796
  %v3810 = vpack.c.b16 %v3799, %v3798
  %v3811 = vpack.c.b16 %v3801, %v3800
  %v3812 = vpack.c.b16 %v3803, %v3802
  %v3813 = vpack.c.b16 %v3805, %v3804
  %v3814 = vpack.c.b16 %v3807, %v3806
  %v3815 = vpack.c.b16 %v3808, %v3808
  %v3823 = vsel %vm2285, %v3815, 0
  %3825 = vmatprep.subr.bf16.mxu0 0
  %3826 = vmatpush1.bf16.msra.mxu0 0
  %3827 = vmatprep.subr.bf16.mxu0 0
  %3828 = vmatpush1.bf16.msra.mxu0 %v3823
  %3829 = vmatprep.subr.bf16.mxu0 0
  %3830 = vmatpush1.bf16.msra.mxu0 %v3814
  %3831 = vmatprep.subr.bf16.mxu0 0
  %3832 = vmatpush1.bf16.msra.mxu0 %v3813
  %3833 = vmatprep.subr.bf16.mxu0 0
  %3834 = vmatpush1.bf16.msra.mxu0 %v3812
  %3835 = vmatprep.subr.bf16.mxu0 0
  %3836 = vmatpush1.bf16.msra.mxu0 %v3811
  %3837 = vmatprep.subr.bf16.mxu0 0
  %3838 = vmatpush1.bf16.msra.mxu0 %v3810
  %3839 = vmatprep.subr.bf16.mxu0 0
  %3840 = vmatpush1.bf16.msra.mxu0 %v3809
  %3841 = vmatprep.subr.bf16.mxu0 0
  %3842 = vmatpush2.bf16.msra.mxu0 0
  %3843 = vmatprep.subr.bf16.mxu0 0
  %3844 = vmatpush2.bf16.msra.mxu0 0
  %3845 = vmatprep.subr.bf16.mxu0 0
  %3846 = vmatpush2.bf16.msra.mxu0 0
  %3847 = vmatprep.subr.bf16.mxu0 0
  %3848 = vmatpush2.bf16.msra.mxu0 0
  %3849 = vmatprep.subr.bf16.mxu0 0
  %3850 = vmatpush2.bf16.msra.mxu0 0
  %3851 = vmatprep.subr.bf16.mxu0 0
  %3852 = vmatpush2.bf16.msra.mxu0 0
  %3853 = vmatprep.subr.bf16.mxu0 0
  %3854 = vmatpush2.bf16.msra.mxu0 0
  %3855 = vmatprep.subr.bf16.mxu0 0
  %3856 = vmatpush2.bf16.msra.mxu0 0
  %3857 = vmatprep.mubr.bf16.mxu0 0
  %3858 = vmatmul.mubr.bf16.gmra.mxu0 %v3401
  %v3859 = vpop.f32.mrf.mxu0
  %v3860 = vadd.f32 0.0, %v3859
  %v3861 = vpop.f32.mrf.mxu0
  %v3862 = vpop.f32.mrf.mxu0
  %v3863 = vadd.f32 0.0, %v3862
  %v3864 = vpop.f32.mrf.mxu0
  %3865 = vmatprep.mubr.bf16.mxu0 0
  %3866 = vmatmul.mubr.bf16.gmra.mxu0 %v3404
  %v3867 = vpop.f32.mrf.mxu0
  %v3868 = vadd.f32 0.0, %v3867
  %v3869 = vpop.f32.mrf.mxu0
  %v3870 = vpop.f32.mrf.mxu0
  %v3871 = vadd.f32 0.0, %v3870
  %v3872 = vpop.f32.mrf.mxu0
  %3873 = vdwg.mxu0
  %v3874 = vpack.c.bf16 %v3447, %v3444
  %v3875 = vpack.c.bf16 %v3455, %v3452
  %v3876 = vpack.c.bf16 %v3551, %v3548
  %v3877 = vpack.c.bf16 %v3559, %v3556
  %v3878 = vpack.c.bf16 %v3655, %v3652
  %v3879 = vpack.c.bf16 %v3663, %v3660
  %v3880 = vpack.c.bf16 %v3759, %v3756
  %v3881 = vpack.c.bf16 %v3767, %v3764
  %v3882 = vpack.c.bf16 %v3863, %v3860
  %v3883 = vpack.c.bf16 %v3871, %v3868
  %v3884 = vld [vmem:[%s1 + $0x288] sm:$0xff]
  %v3885 = vld [vmem:[%s1 + $0x294] sm:$0xff]
  %v3886 = vld [vmem:[%s1 + $0x2a0] sm:$0xff]
  %v3887 = vld [vmem:[%s1 + $0x2ac] sm:$0xff]
  %v3888 = vld [vmem:[%s1 + $0x2b8] sm:$0xff]
  %v3889 = vld [vmem:[%s1 + $0x2c4] sm:$0xff]
  %v3890 = vld [vmem:[%s1 + $0x2d0] sm:$0xff]
  %v3891 = vld [vmem:[%s1 + $0x2dc] sm:$0xff]
  %v3892 = vld [vmem:[%s3 + $0x410] sm:$0xff]
  %v3893 = vld [vmem:[%s3 + $0x418] sm:$0xff]
  %v3894 = vld [vmem:[%s3 + $0x420] sm:$0xff]
  %v3895 = vld [vmem:[%s3 + $0x428] sm:$0xff]
  %v3896 = vld [vmem:[%s3 + $0x430] sm:$0xff]
  %v3897 = vld [vmem:[%s3 + $0x438] sm:$0xff]
  %v3898 = vld [vmem:[%s3 + $0x440] sm:$0xff]
  %v3899 = vld [vmem:[%s3 + $0x448] sm:$0xff]
  %3901 = vset.pattern.permute.xlu0 0
  %3902 = vperm.xlu0 %3901, %v3892
  %v3903 = vpop.permute.xlu0 %3902
  %3906 = vset.pattern.permute.xlu0 0
  %3907 = vperm.xlu0 %3906, %v3893
  %v3908 = vpop.permute.xlu0 %3907
  %3911 = vset.pattern.permute.xlu0 0
  %3912 = vperm.xlu0 %3911, %v3894
  %v3913 = vpop.permute.xlu0 %3912
  %3916 = vset.pattern.permute.xlu0 0
  %3917 = vperm.xlu0 %3916, %v3895
  %v3918 = vpop.permute.xlu0 %3917
  %3921 = vset.pattern.permute.xlu0 0
  %3922 = vperm.xlu0 %3921, %v3896
  %v3923 = vpop.permute.xlu0 %3922
  %3926 = vset.pattern.permute.xlu0 0
  %3927 = vperm.xlu0 %3926, %v3897
  %v3928 = vpop.permute.xlu0 %3927
  %3931 = vset.pattern.permute.xlu0 0
  %3932 = vperm.xlu0 %3931, %v3898
  %v3933 = vpop.permute.xlu0 %3932
  %3936 = vset.pattern.permute.xlu0 0
  %3937 = vperm.xlu0 %3936, %v3899
  %v3938 = vpop.permute.xlu0 %3937
  %v3948 = vunpack.c.l.b16 %v3884
  %v3949 = vunpack.c.h.b16 %v3884
  %v3950 = vunpack.c.l.b16 %v3885
  %v3951 = vunpack.c.h.b16 %v3885
  %v3952 = vunpack.c.l.b16 %v3886
  %v3953 = vunpack.c.h.b16 %v3886
  %v3954 = vunpack.c.l.b16 %v3887
  %v3955 = vunpack.c.h.b16 %v3887
  %v3956 = vunpack.c.l.b16 %v3888
  %v3957 = vunpack.c.h.b16 %v3888
  %v3958 = vunpack.c.l.b16 %v3889
  %v3959 = vunpack.c.h.b16 %v3889
  %v3960 = vunpack.c.l.b16 %v3890
  %v3961 = vunpack.c.h.b16 %v3890
  %v3962 = vunpack.c.l.b16 %v3891
  %v3963 = vunpack.c.h.b16 %v3891
  %v3964 = vpack.c.b16 %v3950, %v3948
  %v3965 = vpack.c.b16 %v3951, %v3949
  %v3966 = vpack.c.b16 %v3954, %v3952
  %v3967 = vpack.c.b16 %v3955, %v3953
  %v3968 = vpack.c.b16 %v3958, %v3956
  %v3969 = vpack.c.b16 %v3959, %v3957
  %v3970 = vpack.c.b16 %v3962, %v3960
  %v3971 = vpack.c.b16 %v3963, %v3961
  %vm3976 = vcmask 261120
  %v3978 = vsel %vm3976, %v3965, 0
  %v3981 = vsel %vm3976, %v3967, 0
  %v3984 = vsel %vm3976, %v3969, 0
  %v3987 = vsel %vm3976, %v3971, 0
  %3989 = vmatprep.subr.bf16.mxu0 0
  %3990 = vmatpush1.bf16.msra.mxu0 %v3881
  %3991 = vmatprep.subr.bf16.mxu0 0
  %3992 = vmatpush1.bf16.msra.mxu0 %v3880
  %3993 = vmatprep.subr.bf16.mxu0 0
  %3994 = vmatpush1.bf16.msra.mxu0 %v3879
  %3995 = vmatprep.subr.bf16.mxu0 0
  %3996 = vmatpush1.bf16.msra.mxu0 %v3878
  %3997 = vmatprep.subr.bf16.mxu0 0
  %3998 = vmatpush1.bf16.msra.mxu0 %v3877
  %3999 = vmatprep.subr.bf16.mxu0 0
  %4000 = vmatpush1.bf16.msra.mxu0 %v3876
  %4001 = vmatprep.subr.bf16.mxu0 0
  %4002 = vmatpush1.bf16.msra.mxu0 %v3875
  %4003 = vmatprep.subr.bf16.mxu0 0
  %4004 = vmatpush1.bf16.msra.mxu0 %v3874
  %4005 = vmatprep.subr.bf16.mxu0 0
  %4006 = vmatpush2.bf16.msra.mxu0 0
  %4007 = vmatprep.subr.bf16.mxu0 0
  %4008 = vmatpush2.bf16.msra.mxu0 0
  %4009 = vmatprep.subr.bf16.mxu0 0
  %4010 = vmatpush2.bf16.msra.mxu0 0
  %4011 = vmatprep.subr.bf16.mxu0 0
  %4012 = vmatpush2.bf16.msra.mxu0 0
  %4013 = vmatprep.subr.bf16.mxu0 0
  %4014 = vmatpush2.bf16.msra.mxu0 0
  %4015 = vmatprep.subr.bf16.mxu0 0
  %4016 = vmatpush2.bf16.msra.mxu0 0
  %4017 = vmatprep.subr.bf16.mxu0 0
  %4018 = vmatpush2.bf16.msra.mxu0 %v3883
  %4019 = vmatprep.subr.bf16.mxu0 0
  %4020 = vmatpush2.bf16.msra.mxu0 %v3882
  %4021 = vmatprep.mubr.bf16.mxu0 %v3978
  %4022 = vmatmul.mubr.bf16.gmra.mxu0 %v3964
  %v4023 = vpop.f32.mrf.mxu0
  %v4024 = vadd.f32 %v3903, %v4023
  %v4025 = vpop.f32.mrf.mxu0
  %v4026 = vpop.f32.mrf.mxu0
  %v4027 = vadd.f32 %v3908, %v4026
  %v4028 = vpop.f32.mrf.mxu0
  %4029 = vmatprep.mubr.bf16.mxu0 %v3981
  %4030 = vmatmul.mubr.bf16.gmra.mxu0 %v3966
  %v4031 = vpop.f32.mrf.mxu0
  %v4032 = vadd.f32 %v3913, %v4031
  %v4033 = vpop.f32.mrf.mxu0
  %v4034 = vpop.f32.mrf.mxu0
  %v4035 = vadd.f32 %v3918, %v4034
  %v4036 = vpop.f32.mrf.mxu0
  %4037 = vmatprep.mubr.bf16.mxu0 %v3984
  %4038 = vmatmul.mubr.bf16.gmra.mxu0 %v3968
  %v4039 = vpop.f32.mrf.mxu0
  %v4040 = vadd.f32 %v3923, %v4039
  %v4041 = vpop.f32.mrf.mxu0
  %v4042 = vpop.f32.mrf.mxu0
  %v4043 = vadd.f32 %v3928, %v4042
  %v4044 = vpop.f32.mrf.mxu0
  %4045 = vmatprep.mubr.bf16.mxu0 %v3987
  %4046 = vmatmul.mubr.bf16.gmra.mxu0 %v3970
  %v4047 = vpop.f32.mrf.mxu0
  %v4048 = vadd.f32 %v3933, %v4047
  %v4049 = vpop.f32.mrf.mxu0
  %v4050 = vpop.f32.mrf.mxu0
  %v4051 = vadd.f32 %v3938, %v4050
  %v4052 = vpop.f32.mrf.mxu0
  %4053 = vdwg.mxu0
  %vm4054 = vcmask 162816
  %v4055 = vsel %vm4054, %v4040, 0.0
  %v4056 = vsel %vm4054, %v4043, 0.0
  %v4057 = vadd.f32 %v4055, %v4056
  %v4058 = vsel %vm4054, %v4048, 0.0
  %v4059 = vadd.f32 %v4057, %v4058
  %v4060 = vsel %vm4054, %v4051, 0.0
  %v4061 = vadd.f32 %v4059, %v4060
  %4062 = vadd.xlane.f32.xlu0 %v4061
  %v4063 = vpop.xlane.xlu0 %4062
  %v4064 = vrot.slane %v4063, 4
  %v4065 = vadd.f32 %v4063, %v4064
  %v4066 = vrot.slane %v4065, 2
  %v4067 = vadd.f32 %v4065, %v4066
  %v4068 = vrot.slane %v4067, 1
  %v4069 = vadd.f32 %v4067, %v4068
  %s4070 = vtos %v4069
  %s4071 = smul.f32 %s4070, 0.0015625
  %v4072 = vmul.f32 %v4040, %v4040
  %v4073 = vmul.f32 %v4043, %v4043
  %v4074 = vmul.f32 %v4048, %v4048
  %v4075 = vmul.f32 %v4051, %v4051
  %v4076 = vsel %vm4054, %v4072, 0.0
  %v4077 = vsel %vm4054, %v4073, 0.0
  %v4078 = vadd.f32 %v4076, %v4077
  %v4079 = vsel %vm4054, %v4074, 0.0
  %v4080 = vadd.f32 %v4078, %v4079
  %v4081 = vsel %vm4054, %v4075, 0.0
  %v4082 = vadd.f32 %v4080, %v4081
  %4083 = vadd.xlane.f32.xlu0 %v4082
  %v4084 = vpop.xlane.xlu0 %4083
  %v4085 = vrot.slane %v4084, 4
  %v4086 = vadd.f32 %v4084, %v4085
  %v4087 = vrot.slane %v4086, 2
  %v4088 = vadd.f32 %v4086, %v4087
  %v4089 = vrot.slane %v4088, 1
  %v4090 = vadd.f32 %v4088, %v4089
  %s4091 = vtos %v4090
  %s4092 = smul.f32 %s4091, 0.0015625
  %s4093 = smul.f32 %s4071, %s4071
  %s4094 = ssub.f32 %s4092, %s4093
  %s4095 = smax.f32 %s4094, 0.0
  %v4096 = vstv %s4071
  %v4097 = vsub.f32 %v4040, %v4096
  %v4098 = vsub.f32 %v4043, %v4096
  %v4099 = vsub.f32 %v4048, %v4096
  %v4100 = vsub.f32 %v4051, %v4096
  %s4101 = sadd.f32 %s4095, 1e-05
  %v4102 = vstv %s4101
  %v4103 = vrsqrt.pop %v4102
  %s4104 = vtos %v4103
  %v4105 = vld [vmem:[%s3 + $0x450] sm:$0xff]
  %v4106 = vld [vmem:[%s3 + $0x458] sm:$0xff]
  %v4107 = vld [vmem:[%s3 + $0x460] sm:$0xff]
  %v4108 = vld [vmem:[%s3 + $0x468] sm:$0xff]
  %v4109 = vstv %s4104
  %v4110 = vmul.f32 %v4109, %v4105
  %v4111 = vmul.f32 %v4109, %v4106
  %v4112 = vmul.f32 %v4109, %v4107
  %v4113 = vmul.f32 %v4109, %v4108
  %4115 = vset.pattern.permute.xlu0 0
  %4116 = vperm.xlu0 %4115, %v4110
  %v4117 = vpop.permute.xlu0 %4116
  %4120 = vset.pattern.permute.xlu0 0
  %4121 = vperm.xlu0 %4120, %v4111
  %v4122 = vpop.permute.xlu0 %4121
  %4125 = vset.pattern.permute.xlu0 0
  %4126 = vperm.xlu0 %4125, %v4112
  %v4127 = vpop.permute.xlu0 %4126
  %4130 = vset.pattern.permute.xlu0 0
  %4131 = vperm.xlu0 %4130, %v4113
  %v4132 = vpop.permute.xlu0 %4131
  %v4134 = vmul.f32 %v4097, %v4117
  %v4135 = vmul.f32 %v4098, %v4122
  %v4136 = vmul.f32 %v4099, %v4127
  %v4137 = vmul.f32 %v4100, %v4132
  %v4138 = vld [vmem:[%s3 + $0x470] sm:$0xff]
  %v4139 = vld [vmem:[%s3 + $0x478] sm:$0xff]
  %v4140 = vld [vmem:[%s3 + $0x480] sm:$0xff]
  %v4141 = vld [vmem:[%s3 + $0x488] sm:$0xff]
  %4143 = vset.pattern.permute.xlu0 0
  %4144 = vperm.xlu0 %4143, %v4138
  %v4145 = vpop.permute.xlu0 %4144
  %4148 = vset.pattern.permute.xlu0 0
  %4149 = vperm.xlu0 %4148, %v4139
  %v4150 = vpop.permute.xlu0 %4149
  %4153 = vset.pattern.permute.xlu0 0
  %4154 = vperm.xlu0 %4153, %v4140
  %v4155 = vpop.permute.xlu0 %4154
  %4158 = vset.pattern.permute.xlu0 0
  %4159 = vperm.xlu0 %4158, %v4141
  %v4160 = vpop.permute.xlu0 %4159
  %v4162 = vadd.f32 %v4134, %v4145
  %v4163 = vadd.f32 %v4135, %v4150
  %v4164 = vadd.f32 %v4136, %v4155
  %v4165 = vadd.f32 %v4137, %v4160
  %vm4166 = vcmp.ge.f32.partialorder %v4162, 0.0
  %vm4167 = vcmp.ge.f32.partialorder %v4163, 0.0
  %vm4168 = vcmp.ge.f32.partialorder %v4164, 0.0
  %vm4169 = vcmp.ge.f32.partialorder %v4165, 0.0
  %v4170 = vmul.f32 %v4162, 0.01
  %v4171 = vmul.f32 %v4163, 0.01
  %v4172 = vmul.f32 %v4164, 0.01
  %v4173 = vmul.f32 %v4165, 0.01
  %v4174 = vsel %vm4166, %v4162, %v4170
  %v4175 = vsel %vm4167, %v4163, %v4171
  %v4176 = vsel %vm4168, %v4164, %v4172
  %v4177 = vsel %vm4169, %v4165, %v4173
  %v4178 = vpack.c.bf16 %v4175, %v4174
  %v4179 = vpack.c.bf16 %v4177, %v4176
  %v4180 = vld [vmem:[%s2 + $0x200] sm:$0xf]
  %v4181 = vld [vmem:[%s2 + $0x204] sm:$0xf]
  %v4182 = vld [vmem:[%s2 + $0x208] sm:$0x3]
  %v4186 = vunpack.c.l.b16 %v4180
  %v4187 = vunpack.c.l.b16 %v4181
  %v4188 = vunpack.c.l.b16 %v4182
  %v4189 = vpack.c.b16 %v4187, %v4186
  %v4190 = vpack.c.b16 %v4188, %v4188
  %v4193 = vsel %vm4054, %v4178, 0
  %v4196 = vsel %vm4054, %v4179, 0
  %v4199 = vsel %vm2285, %v4190, 0
  %4201 = vmatprep.subr.bf16.mxu0 0
  %4202 = vmatpush1.bf16.msra.mxu0 0
  %4203 = vmatprep.subr.bf16.mxu0 0
  %4204 = vmatpush1.bf16.msra.mxu0 0
  %4205 = vmatprep.subr.bf16.mxu0 0
  %4206 = vmatpush1.bf16.msra.mxu0 0
  %4207 = vmatprep.subr.bf16.mxu0 0
  %4208 = vmatpush1.bf16.msra.mxu0 0
  %4209 = vmatprep.subr.bf16.mxu0 0
  %4210 = vmatpush1.bf16.msra.mxu0 0
  %4211 = vmatprep.subr.bf16.mxu0 0
  %4212 = vmatpush1.bf16.msra.mxu0 0
  %4213 = vmatprep.subr.bf16.mxu0 0
  %4214 = vmatpush1.bf16.msra.mxu0 %v4199
  %4215 = vmatprep.subr.bf16.mxu0 0
  %4216 = vmatpush1.bf16.msra.mxu0 %v4189
  %4217 = vmatprep.subr.bf16.mxu0 0
  %4218 = vmatpush2.bf16.msra.mxu0 0
  %4219 = vmatprep.subr.bf16.mxu0 0
  %4220 = vmatpush2.bf16.msra.mxu0 0
  %4221 = vmatprep.subr.bf16.mxu0 0
  %4222 = vmatpush2.bf16.msra.mxu0 0
  %4223 = vmatprep.subr.bf16.mxu0 0
  %4224 = vmatpush2.bf16.msra.mxu0 0
  %4225 = vmatprep.subr.bf16.mxu0 0
  %4226 = vmatpush2.bf16.msra.mxu0 0
  %4227 = vmatprep.subr.bf16.mxu0 0
  %4228 = vmatpush2.bf16.msra.mxu0 0
  %4229 = vmatprep.subr.bf16.mxu0 0
  %4230 = vmatpush2.bf16.msra.mxu0 0
  %4231 = vmatprep.subr.bf16.mxu0 0
  %4232 = vmatpush2.bf16.msra.mxu0 0
  %4233 = vmatprep.mubr.bf16.mxu0 0
  %4234 = vmatmul.mubr.bf16.gmra.mxu0 %v4193
  %v4235 = vpop.f32.mrf.mxu0
  %v4236 = vadd.f32 0.0, %v4235
  %v4237 = vpop.f32.mrf.mxu0
  %v4238 = vpop.f32.mrf.mxu0
  %v4239 = vadd.f32 0.0, %v4238
  %v4240 = vpop.f32.mrf.mxu0
  %4241 = vmatprep.mubr.bf16.mxu0 0
  %4242 = vmatmul.mubr.bf16.gmra.mxu0 %v4196
  %v4243 = vpop.f32.mrf.mxu0
  %v4244 = vadd.f32 0.0, %v4243
  %v4245 = vpop.f32.mrf.mxu0
  %v4246 = vpop.f32.mrf.mxu0
  %v4247 = vadd.f32 0.0, %v4246
  %v4248 = vpop.f32.mrf.mxu0
  %4249 = vdwg.mxu0
  %v4250 = vld [vmem:[%s2 + $0x20c] sm:$0xf]
  %v4251 = vld [vmem:[%s2 + $0x210] sm:$0xf]
  %v4252 = vld [vmem:[%s2 + $0x214] sm:$0x3]
  %v4256 = vunpack.c.l.b16 %v4250
  %v4257 = vunpack.c.l.b16 %v4251
  %v4258 = vunpack.c.l.b16 %v4252
  %v4259 = vpack.c.b16 %v4257, %v4256
  %v4260 = vpack.c.b16 %v4258, %v4258
  %v4263 = vsel %vm2285, %v4260, 0
  %4265 = vmatprep.subr.bf16.mxu0 0
  %4266 = vmatpush1.bf16.msra.mxu0 0
  %4267 = vmatprep.subr.bf16.mxu0 0
  %4268 = vmatpush1.bf16.msra.mxu0 0
  %4269 = vmatprep.subr.bf16.mxu0 0
  %4270 = vmatpush1.bf16.msra.mxu0 0
  %4271 = vmatprep.subr.bf16.mxu0 0
  %4272 = vmatpush1.bf16.msra.mxu0 0
  %4273 = vmatprep.subr.bf16.mxu0 0
  %4274 = vmatpush1.bf16.msra.mxu0 0
  %4275 = vmatprep.subr.bf16.mxu0 0
  %4276 = vmatpush1.bf16.msra.mxu0 0
  %4277 = vmatprep.subr.bf16.mxu0 0
  %4278 = vmatpush1.bf16.msra.mxu0 %v4263
  %4279 = vmatprep.subr.bf16.mxu0 0
  %4280 = vmatpush1.bf16.msra.mxu0 %v4259
  %4281 = vmatprep.subr.bf16.mxu0 0
  %4282 = vmatpush2.bf16.msra.mxu0 0
  %4283 = vmatprep.subr.bf16.mxu0 0
  %4284 = vmatpush2.bf16.msra.mxu0 0
  %4285 = vmatprep.subr.bf16.mxu0 0
  %4286 = vmatpush2.bf16.msra.mxu0 0
  %4287 = vmatprep.subr.bf16.mxu0 0
  %4288 = vmatpush2.bf16.msra.mxu0 0
  %4289 = vmatprep.subr.bf16.mxu0 0
  %4290 = vmatpush2.bf16.msra.mxu0 0
  %4291 = vmatprep.subr.bf16.mxu0 0
  %4292 = vmatpush2.bf16.msra.mxu0 0
  %4293 = vmatprep.subr.bf16.mxu0 0
  %4294 = vmatpush2.bf16.msra.mxu0 0
  %4295 = vmatprep.subr.bf16.mxu0 0
  %4296 = vmatpush2.bf16.msra.mxu0 0
  %4297 = vmatprep.mubr.bf16.mxu0 0
  %4298 = vmatmul.mubr.bf16.gmra.mxu0 %v4193
  %v4299 = vpop.f32.mrf.mxu0
  %v4300 = vadd.f32 0.0, %v4299
  %v4301 = vpop.f32.mrf.mxu0
  %v4302 = vpop.f32.mrf.mxu0
  %v4303 = vadd.f32 0.0, %v4302
  %v4304 = vpop.f32.mrf.mxu0
  %4305 = vmatprep.mubr.bf16.mxu0 0
  %4306 = vmatmul.mubr.bf16.gmra.mxu0 %v4196
  %v4307 = vpop.f32.mrf.mxu0
  %v4308 = vadd.f32 0.0, %v4307
  %v4309 = vpop.f32.mrf.mxu0
  %v4310 = vpop.f32.mrf.mxu0
  %v4311 = vadd.f32 0.0, %v4310
  %v4312 = vpop.f32.mrf.mxu0
  %4313 = vdwg.mxu0
  %v4314 = vpack.c.bf16 %v4239, %v4236
  %v4315 = vpack.c.bf16 %v4247, %v4244
  %v4316 = vpack.c.bf16 %v4303, %v4300
  %v4317 = vpack.c.bf16 %v4311, %v4308
  %v4318 = vld [vmem:[%s2] sm:$0xf]
  %v4319 = vld [vmem:[%s2 + $0x4] sm:$0xf]
  %v4320 = vld [vmem:[%s2 + $0x8] sm:$0xf]
  %v4321 = vld [vmem:[%s2 + $0xc] sm:$0xf]
  %v4322 = vld [vmem:[%s3 + $0x490] sm:$0xff]
  %v4323 = vld [vmem:[%s3 + $0x498] sm:$0xff]
  %v4324 = vld [vmem:[%s3 + $0x4a0] sm:$0xff]
  %v4325 = vld [vmem:[%s3 + $0x4a8] sm:$0xff]
  %4327 = vset.pattern.permute.xlu0 0
  %4328 = vperm.xlu0 %4327, %v4322
  %v4329 = vpop.permute.xlu0 %4328
  %4332 = vset.pattern.permute.xlu0 0
  %4333 = vperm.xlu0 %4332, %v4323
  %v4334 = vpop.permute.xlu0 %4333
  %4337 = vset.pattern.permute.xlu0 0
  %4338 = vperm.xlu0 %4337, %v4324
  %v4339 = vpop.permute.xlu0 %4338
  %4342 = vset.pattern.permute.xlu0 0
  %4343 = vperm.xlu0 %4342, %v4325
  %v4344 = vpop.permute.xlu0 %4343
  %v4350 = vunpack.c.l.b16 %v4318
  %v4351 = vunpack.c.l.b16 %v4319
  %v4352 = vunpack.c.l.b16 %v4320
  %v4353 = vunpack.c.l.b16 %v4321
  %v4354 = vpack.c.b16 %v4351, %v4350
  %v4355 = vpack.c.b16 %v4353, %v4352
  %vm4356 = vcmask 785408
  %v4358 = vsel %vm4356, %v4354, 0
  %v4361 = vsel %vm4356, %v4355, 0
  %4363 = vmatprep.subr.bf16.mxu0 0
  %4364 = vmatpush1.bf16.msra.mxu0 0
  %4365 = vmatprep.subr.bf16.mxu0 0
  %4366 = vmatpush1.bf16.msra.mxu0 0
  %4367 = vmatprep.subr.bf16.mxu0 0
  %4368 = vmatpush1.bf16.msra.mxu0 %v4317
  %4369 = vmatprep.subr.bf16.mxu0 0
  %4370 = vmatpush1.bf16.msra.mxu0 %v4316
  %4371 = vmatprep.subr.bf16.mxu0 0
  %4372 = vmatpush1.bf16.msra.mxu0 %v4179
  %4373 = vmatprep.subr.bf16.mxu0 0
  %4374 = vmatpush1.bf16.msra.mxu0 %v4178
  %4375 = vmatprep.subr.bf16.mxu0 0
  %4376 = vmatpush1.bf16.msra.mxu0 %v4315
  %4377 = vmatprep.subr.bf16.mxu0 0
  %4378 = vmatpush1.bf16.msra.mxu0 %v4314
  %4379 = vmatprep.subr.bf16.mxu0 0
  %4380 = vmatpush2.bf16.msra.mxu0 0
  %4381 = vmatprep.subr.bf16.mxu0 0
  %4382 = vmatpush2.bf16.msra.mxu0 0
  %4383 = vmatprep.subr.bf16.mxu0 0
  %4384 = vmatpush2.bf16.msra.mxu0 0
  %4385 = vmatprep.subr.bf16.mxu0 0
  %4386 = vmatpush2.bf16.msra.mxu0 0
  %4387 = vmatprep.subr.bf16.mxu0 0
  %4388 = vmatpush2.bf16.msra.mxu0 0
  %4389 = vmatprep.subr.bf16.mxu0 0
  %4390 = vmatpush2.bf16.msra.mxu0 0
  %4391 = vmatprep.subr.bf16.mxu0 0
  %4392 = vmatpush2.bf16.msra.mxu0 0
  %4393 = vmatprep.subr.bf16.mxu0 0
  %4394 = vmatpush2.bf16.msra.mxu0 0
  %4395 = vmatprep.mubr.bf16.mxu0 0
  %4396 = vmatmul.mubr.bf16.gmra.mxu0 %v4358
  %v4397 = vpop.f32.mrf.mxu0
  %v4398 = vadd.f32 %v4329, %v4397
  %v4399 = vpop.f32.mrf.mxu0
  %v4400 = vpop.f32.mrf.mxu0
  %v4401 = vadd.f32 %v4334, %v4400
  %v4402 = vpop.f32.mrf.mxu0
  %4403 = vmatprep.mubr.bf16.mxu0 0
  %4404 = vmatmul.mubr.bf16.gmra.mxu0 %v4361
  %v4405 = vpop.f32.mrf.mxu0
  %v4406 = vadd.f32 %v4339, %v4405
  %v4407 = vpop.f32.mrf.mxu0
  %v4408 = vpop.f32.mrf.mxu0
  %v4409 = vadd.f32 %v4344, %v4408
  %v4410 = vpop.f32.mrf.mxu0
  %4411 = vdwg.mxu0
  %v4412 = vadd.f32 %v4024, %v4398
  %v4413 = vadd.f32 %v4027, %v4401
  %v4414 = vadd.f32 %v4032, %v4406
  %v4415 = vadd.f32 %v4035, %v4409
  %v4416 = vsel %vm4054, %v4412, 0.0
  %v4417 = vsel %vm4054, %v4413, 0.0
  %v4418 = vadd.f32 %v4416, %v4417
  %v4419 = vsel %vm4054, %v4414, 0.0
  %v4420 = vadd.f32 %v4418, %v4419
  %v4421 = vsel %vm4054, %v4415, 0.0
  %v4422 = vadd.f32 %v4420, %v4421
  %4423 = vadd.xlane.f32.xlu0 %v4422
  %v4424 = vpop.xlane.xlu0 %4423
  %v4425 = vrot.slane %v4424, 4
  %v4426 = vadd.f32 %v4424, %v4425
  %v4427 = vrot.slane %v4426, 2
  %v4428 = vadd.f32 %v4426, %v4427
  %v4429 = vrot.slane %v4428, 1
  %v4430 = vadd.f32 %v4428, %v4429
  %s4431 = vtos %v4430
  %s4432 = smul.f32 %s4431, 0.0015625
  %v4433 = vmul.f32 %v4412, %v4412
  %v4434 = vmul.f32 %v4413, %v4413
  %v4435 = vmul.f32 %v4414, %v4414
  %v4436 = vmul.f32 %v4415, %v4415
  %v4437 = vsel %vm4054, %v4433, 0.0
  %v4438 = vsel %vm4054, %v4434, 0.0
  %v4439 = vadd.f32 %v4437, %v4438
  %v4440 = vsel %vm4054, %v4435, 0.0
  %v4441 = vadd.f32 %v4439, %v4440
  %v4442 = vsel %vm4054, %v4436, 0.0
  %v4443 = vadd.f32 %v4441, %v4442
  %4444 = vadd.xlane.f32.xlu0 %v4443
  %v4445 = vpop.xlane.xlu0 %4444
  %v4446 = vrot.slane %v4445, 4
  %v4447 = vadd.f32 %v4445, %v4446
  %v4448 = vrot.slane %v4447, 2
  %v4449 = vadd.f32 %v4447, %v4448
  %v4450 = vrot.slane %v4449, 1
  %v4451 = vadd.f32 %v4449, %v4450
  %s4452 = vtos %v4451
  %s4453 = smul.f32 %s4452, 0.0015625
  %s4454 = smul.f32 %s4432, %s4432
  %s4455 = ssub.f32 %s4453, %s4454
  %s4456 = smax.f32 %s4455, 0.0
  %v4457 = vstv %s4432
  %v4458 = vsub.f32 %v4412, %v4457
  %v4459 = vsub.f32 %v4413, %v4457
  %v4460 = vsub.f32 %v4414, %v4457
  %v4461 = vsub.f32 %v4415, %v4457
  %s4462 = sadd.f32 %s4456, 1e-05
  %v4463 = vstv %s4462
  %v4464 = vrsqrt.pop %v4463
  %s4465 = vtos %v4464
  %v4466 = vld [vmem:[%s3 + $0x4b0] sm:$0xff]
  %v4467 = vld [vmem:[%s3 + $0x4b8] sm:$0xff]
  %v4468 = vld [vmem:[%s3 + $0x4c0] sm:$0xff]
  %v4469 = vld [vmem:[%s3 + $0x4c8] sm:$0xff]
  %v4470 = vstv %s4465
  %v4471 = vmul.f32 %v4470, %v4466
  %v4472 = vmul.f32 %v4470, %v4467
  %v4473 = vmul.f32 %v4470, %v4468
  %v4474 = vmul.f32 %v4470, %v4469
  %4476 = vset.pattern.permute.xlu0 0
  %4477 = vperm.xlu0 %4476, %v4471
  %v4478 = vpop.permute.xlu0 %4477
  %4481 = vset.pattern.permute.xlu0 0
  %4482 = vperm.xlu0 %4481, %v4472
  %v4483 = vpop.permute.xlu0 %4482
  %4486 = vset.pattern.permute.xlu0 0
  %4487 = vperm.xlu0 %4486, %v4473
  %v4488 = vpop.permute.xlu0 %4487
  %4491 = vset.pattern.permute.xlu0 0
  %4492 = vperm.xlu0 %4491, %v4474
  %v4493 = vpop.permute.xlu0 %4492
  %v4495 = vmul.f32 %v4458, %v4478
  %v4496 = vmul.f32 %v4459, %v4483
  %v4497 = vmul.f32 %v4460, %v4488
  %v4498 = vmul.f32 %v4461, %v4493
  %v4499 = vld [vmem:[%s3 + $0x4d0] sm:$0xff]
  %v4500 = vld [vmem:[%s3 + $0x4d8] sm:$0xff]
  %v4501 = vld [vmem:[%s3 + $0x4e0] sm:$0xff]
  %v4502 = vld [vmem:[%s3 + $0x4e8] sm:$0xff]
  %4504 = vset.pattern.permute.xlu0 0
  %4505 = vperm.xlu0 %4504, %v4499
  %v4506 = vpop.permute.xlu0 %4505
  %4509 = vset.pattern.permute.xlu0 0
  %4510 = vperm.xlu0 %4509, %v4500
  %v4511 = vpop.permute.xlu0 %4510
  %4514 = vset.pattern.permute.xlu0 0
  %4515 = vperm.xlu0 %4514, %v4501
  %v4516 = vpop.permute.xlu0 %4515
  %4519 = vset.pattern.permute.xlu0 0
  %4520 = vperm.xlu0 %4519, %v4502
  %v4521 = vpop.permute.xlu0 %4520
  %v4523 = vadd.f32 %v4495, %v4506
  %v4524 = vadd.f32 %v4496, %v4511
  %v4525 = vadd.f32 %v4497, %v4516
  %v4526 = vadd.f32 %v4498, %v4521
  %vm4527 = vcmp.ge.f32.partialorder %v4523, 0.0
  %vm4528 = vcmp.ge.f32.partialorder %v4524, 0.0
  %vm4529 = vcmp.ge.f32.partialorder %v4525, 0.0
  %vm4530 = vcmp.ge.f32.partialorder %v4526, 0.0
  %v4531 = vmul.f32 %v4523, 0.01
  %v4532 = vmul.f32 %v4524, 0.01
  %v4533 = vmul.f32 %v4525, 0.01
  %v4534 = vmul.f32 %v4526, 0.01
  %v4535 = vsel %vm4527, %v4523, %v4531
  %v4536 = vsel %vm4528, %v4524, %v4532
  %v4537 = vsel %vm4529, %v4525, %v4533
  %v4538 = vsel %vm4530, %v4526, %v4534
  %v4539 = vpack.c.bf16 %v4536, %v4535
  %v4540 = vpack.c.bf16 %v4538, %v4537
  %v4541 = vld [vmem:[%s2 + $0x324] sm:$0xf]
  %v4542 = vld [vmem:[%s2 + $0x328] sm:$0xf]
  %v4543 = vld [vmem:[%s2 + $0x32c] sm:$0x3]
  %v4547 = vunpack.c.l.b16 %v4541
  %v4548 = vunpack.c.l.b16 %v4542
  %v4549 = vunpack.c.l.b16 %v4543
  %v4550 = vpack.c.b16 %v4548, %v4547
  %v4551 = vpack.c.b16 %v4549, %v4549
  %v4554 = vsel %vm4054, %v4539, 0
  %v4557 = vsel %vm4054, %v4540, 0
  %v4560 = vsel %vm2285, %v4551, 0
  %4562 = vmatprep.subr.bf16.mxu0 0
  %4563 = vmatpush1.bf16.msra.mxu0 0
  %4564 = vmatprep.subr.bf16.mxu0 0
  %4565 = vmatpush1.bf16.msra.mxu0 0
  %4566 = vmatprep.subr.bf16.mxu0 0
  %4567 = vmatpush1.bf16.msra.mxu0 0
  %4568 = vmatprep.subr.bf16.mxu0 0
  %4569 = vmatpush1.bf16.msra.mxu0 0
  %4570 = vmatprep.subr.bf16.mxu0 0
  %4571 = vmatpush1.bf16.msra.mxu0 0
  %4572 = vmatprep.subr.bf16.mxu0 0
  %4573 = vmatpush1.bf16.msra.mxu0 0
  %4574 = vmatprep.subr.bf16.mxu0 0
  %4575 = vmatpush1.bf16.msra.mxu0 %v4560
  %4576 = vmatprep.subr.bf16.mxu0 0
  %4577 = vmatpush1.bf16.msra.mxu0 %v4550
  %4578 = vmatprep.subr.bf16.mxu0 0
  %4579 = vmatpush2.bf16.msra.mxu0 0
  %4580 = vmatprep.subr.bf16.mxu0 0
  %4581 = vmatpush2.bf16.msra.mxu0 0
  %4582 = vmatprep.subr.bf16.mxu0 0
  %4583 = vmatpush2.bf16.msra.mxu0 0
  %4584 = vmatprep.subr.bf16.mxu0 0
  %4585 = vmatpush2.bf16.msra.mxu0 0
  %4586 = vmatprep.subr.bf16.mxu0 0
  %4587 = vmatpush2.bf16.msra.mxu0 0
  %4588 = vmatprep.subr.bf16.mxu0 0
  %4589 = vmatpush2.bf16.msra.mxu0 0
  %4590 = vmatprep.subr.bf16.mxu0 0
  %4591 = vmatpush2.bf16.msra.mxu0 0
  %4592 = vmatprep.subr.bf16.mxu0 0
  %4593 = vmatpush2.bf16.msra.mxu0 0
  %4594 = vmatprep.mubr.bf16.mxu0 0
  %4595 = vmatmul.mubr.bf16.gmra.mxu0 %v4554
  %v4596 = vpop.f32.mrf.mxu0
  %v4597 = vadd.f32 0.0, %v4596
  %v4598 = vpop.f32.mrf.mxu0
  %v4599 = vpop.f32.mrf.mxu0
  %v4600 = vadd.f32 0.0, %v4599
  %v4601 = vpop.f32.mrf.mxu0
  %4602 = vmatprep.mubr.bf16.mxu0 0
  %4603 = vmatmul.mubr.bf16.gmra.mxu0 %v4557
  %v4604 = vpop.f32.mrf.mxu0
  %v4605 = vadd.f32 0.0, %v4604
  %v4606 = vpop.f32.mrf.mxu0
  %v4607 = vpop.f32.mrf.mxu0
  %v4608 = vadd.f32 0.0, %v4607
  %v4609 = vpop.f32.mrf.mxu0
  %4610 = vdwg.mxu0
  %v4611 = vld [vmem:[%s2 + $0x330] sm:$0xf]
  %v4612 = vld [vmem:[%s2 + $0x334] sm:$0xf]
  %v4613 = vld [vmem:[%s2 + $0x338] sm:$0x3]
  %v4617 = vunpack.c.l.b16 %v4611
  %v4618 = vunpack.c.l.b16 %v4612
  %v4619 = vunpack.c.l.b16 %v4613
  %v4620 = vpack.c.b16 %v4618, %v4617
  %v4621 = vpack.c.b16 %v4619, %v4619
  %v4624 = vsel %vm2285, %v4621, 0
  %4626 = vmatprep.subr.bf16.mxu0 0
  %4627 = vmatpush1.bf16.msra.mxu0 0
  %4628 = vmatprep.subr.bf16.mxu0 0
  %4629 = vmatpush1.bf16.msra.mxu0 0
  %4630 = vmatprep.subr.bf16.mxu0 0
  %4631 = vmatpush1.bf16.msra.mxu0 0
  %4632 = vmatprep.subr.bf16.mxu0 0
  %4633 = vmatpush1.bf16.msra.mxu0 0
  %4634 = vmatprep.subr.bf16.mxu0 0
  %4635 = vmatpush1.bf16.msra.mxu0 0
  %4636 = vmatprep.subr.bf16.mxu0 0
  %4637 = vmatpush1.bf16.msra.mxu0 0
  %4638 = vmatprep.subr.bf16.mxu0 0
  %4639 = vmatpush1.bf16.msra.mxu0 %v4624
  %4640 = vmatprep.subr.bf16.mxu0 0
  %4641 = vmatpush1.bf16.msra.mxu0 %v4620
  %4642 = vmatprep.subr.bf16.mxu0 0
  %4643 = vmatpush2.bf16.msra.mxu0 0
  %4644 = vmatprep.subr.bf16.mxu0 0
  %4645 = vmatpush2.bf16.msra.mxu0 0
  %4646 = vmatprep.subr.bf16.mxu0 0
  %4647 = vmatpush2.bf16.msra.mxu0 0
  %4648 = vmatprep.subr.bf16.mxu0 0
  %4649 = vmatpush2.bf16.msra.mxu0 0
  %4650 = vmatprep.subr.bf16.mxu0 0
  %4651 = vmatpush2.bf16.msra.mxu0 0
  %4652 = vmatprep.subr.bf16.mxu0 0
  %4653 = vmatpush2.bf16.msra.mxu0 0
  %4654 = vmatprep.subr.bf16.mxu0 0
  %4655 = vmatpush2.bf16.msra.mxu0 0
  %4656 = vmatprep.subr.bf16.mxu0 0
  %4657 = vmatpush2.bf16.msra.mxu0 0
  %4658 = vmatprep.mubr.bf16.mxu0 0
  %4659 = vmatmul.mubr.bf16.gmra.mxu0 %v4554
  %v4660 = vpop.f32.mrf.mxu0
  %v4661 = vadd.f32 0.0, %v4660
  %v4662 = vpop.f32.mrf.mxu0
  %v4663 = vpop.f32.mrf.mxu0
  %v4664 = vadd.f32 0.0, %v4663
  %v4665 = vpop.f32.mrf.mxu0
  %4666 = vmatprep.mubr.bf16.mxu0 0
  %4667 = vmatmul.mubr.bf16.gmra.mxu0 %v4557
  %v4668 = vpop.f32.mrf.mxu0
  %v4669 = vadd.f32 0.0, %v4668
  %v4670 = vpop.f32.mrf.mxu0
  %v4671 = vpop.f32.mrf.mxu0
  %v4672 = vadd.f32 0.0, %v4671
  %v4673 = vpop.f32.mrf.mxu0
  %4674 = vdwg.mxu0
  %v4675 = vld [vmem:[%s2 + $0x33c] sm:$0xf]
  %v4676 = vld [vmem:[%s2 + $0x340] sm:$0xf]
  %v4677 = vld [vmem:[%s2 + $0x344] sm:$0x3]
  %v4681 = vunpack.c.l.b16 %v4675
  %v4682 = vunpack.c.l.b16 %v4676
  %v4683 = vunpack.c.l.b16 %v4677
  %v4684 = vpack.c.b16 %v4682, %v4681
  %v4685 = vpack.c.b16 %v4683, %v4683
  %v4688 = vsel %vm2285, %v4685, 0
  %4690 = vmatprep.subr.bf16.mxu0 0
  %4691 = vmatpush1.bf16.msra.mxu0 0
  %4692 = vmatprep.subr.bf16.mxu0 0
  %4693 = vmatpush1.bf16.msra.mxu0 0
  %4694 = vmatprep.subr.bf16.mxu0 0
  %4695 = vmatpush1.bf16.msra.mxu0 0
  %4696 = vmatprep.subr.bf16.mxu0 0
  %4697 = vmatpush1.bf16.msra.mxu0 0
  %4698 = vmatprep.subr.bf16.mxu0 0
  %4699 = vmatpush1.bf16.msra.mxu0 0
  %4700 = vmatprep.subr.bf16.mxu0 0
  %4701 = vmatpush1.bf16.msra.mxu0 0
  %4702 = vmatprep.subr.bf16.mxu0 0
  %4703 = vmatpush1.bf16.msra.mxu0 %v4688
  %4704 = vmatprep.subr.bf16.mxu0 0
  %4705 = vmatpush1.bf16.msra.mxu0 %v4684
  %4706 = vmatprep.subr.bf16.mxu0 0
  %4707 = vmatpush2.bf16.msra.mxu0 0
  %4708 = vmatprep.subr.bf16.mxu0 0
  %4709 = vmatpush2.bf16.msra.mxu0 0
  %4710 = vmatprep.subr.bf16.mxu0 0
  %4711 = vmatpush2.bf16.msra.mxu0 0
  %4712 = vmatprep.subr.bf16.mxu0 0
  %4713 = vmatpush2.bf16.msra.mxu0 0
  %4714 = vmatprep.subr.bf16.mxu0 0
  %4715 = vmatpush2.bf16.msra.mxu0 0
  %4716 = vmatprep.subr.bf16.mxu0 0
  %4717 = vmatpush2.bf16.msra.mxu0 0
  %4718 = vmatprep.subr.bf16.mxu0 0
  %4719 = vmatpush2.bf16.msra.mxu0 0
  %4720 = vmatprep.subr.bf16.mxu0 0
  %4721 = vmatpush2.bf16.msra.mxu0 0
  %4722 = vmatprep.mubr.bf16.mxu0 0
  %4723 = vmatmul.mubr.bf16.gmra.mxu0 %v4554
  %v4724 = vpop.f32.mrf.mxu0
  %v4725 = vadd.f32 0.0, %v4724
  %v4726 = vpop.f32.mrf.mxu0
  %v4727 = vpop.f32.mrf.mxu0
  %v4728 = vadd.f32 0.0, %v4727
  %v4729 = vpop.f32.mrf.mxu0
  %4730 = vmatprep.mubr.bf16.mxu0 0
  %4731 = vmatmul.mubr.bf16.gmra.mxu0 %v4557
  %v4732 = vpop.f32.mrf.mxu0
  %v4733 = vadd.f32 0.0, %v4732
  %v4734 = vpop.f32.mrf.mxu0
  %v4735 = vpop.f32.mrf.mxu0
  %v4736 = vadd.f32 0.0, %v4735
  %v4737 = vpop.f32.mrf.mxu0
  %4738 = vdwg.mxu0
  %v4739 = vld [vmem:[%s2 + $0x348] sm:$0xf]
  %v4740 = vld [vmem:[%s2 + $0x34c] sm:$0xf]
  %v4741 = vld [vmem:[%s2 + $0x350] sm:$0x3]
  %v4745 = vunpack.c.l.b16 %v4739
  %v4746 = vunpack.c.l.b16 %v4740
  %v4747 = vunpack.c.l.b16 %v4741
  %v4748 = vpack.c.b16 %v4746, %v4745
  %v4749 = vpack.c.b16 %v4747, %v4747
  %v4752 = vsel %vm2285, %v4749, 0
  %4754 = vmatprep.subr.bf16.mxu0 0
  %4755 = vmatpush1.bf16.msra.mxu0 0
  %4756 = vmatprep.subr.bf16.mxu0 0
  %4757 = vmatpush1.bf16.msra.mxu0 0
  %4758 = vmatprep.subr.bf16.mxu0 0
  %4759 = vmatpush1.bf16.msra.mxu0 0
  %4760 = vmatprep.subr.bf16.mxu0 0
  %4761 = vmatpush1.bf16.msra.mxu0 0
  %4762 = vmatprep.subr.bf16.mxu0 0
  %4763 = vmatpush1.bf16.msra.mxu0 0
  %4764 = vmatprep.subr.bf16.mxu0 0
  %4765 = vmatpush1.bf16.msra.mxu0 0
  %4766 = vmatprep.subr.bf16.mxu0 0
  %4767 = vmatpush1.bf16.msra.mxu0 %v4752
  %4768 = vmatprep.subr.bf16.mxu0 0
  %4769 = vmatpush1.bf16.msra.mxu0 %v4748
  %4770 = vmatprep.subr.bf16.mxu0 0
  %4771 = vmatpush2.bf16.msra.mxu0 0
  %4772 = vmatprep.subr.bf16.mxu0 0
  %4773 = vmatpush2.bf16.msra.mxu0 0
  %4774 = vmatprep.subr.bf16.mxu0 0
  %4775 = vmatpush2.bf16.msra.mxu0 0
  %4776 = vmatprep.subr.bf16.mxu0 0
  %4777 = vmatpush2.bf16.msra.mxu0 0
  %4778 = vmatprep.subr.bf16.mxu0 0
  %4779 = vmatpush2.bf16.msra.mxu0 0
  %4780 = vmatprep.subr.bf16.mxu0 0
  %4781 = vmatpush2.bf16.msra.mxu0 0
  %4782 = vmatprep.subr.bf16.mxu0 0
  %4783 = vmatpush2.bf16.msra.mxu0 0
  %4784 = vmatprep.subr.bf16.mxu0 0
  %4785 = vmatpush2.bf16.msra.mxu0 0
  %4786 = vmatprep.mubr.bf16.mxu0 0
  %4787 = vmatmul.mubr.bf16.gmra.mxu0 %v4554
  %v4788 = vpop.f32.mrf.mxu0
  %v4789 = vadd.f32 0.0, %v4788
  %v4790 = vpop.f32.mrf.mxu0
  %v4791 = vpop.f32.mrf.mxu0
  %v4792 = vadd.f32 0.0, %v4791
  %v4793 = vpop.f32.mrf.mxu0
  %4794 = vmatprep.mubr.bf16.mxu0 0
  %4795 = vmatmul.mubr.bf16.gmra.mxu0 %v4557
  %v4796 = vpop.f32.mrf.mxu0
  %v4797 = vadd.f32 0.0, %v4796
  %v4798 = vpop.f32.mrf.mxu0
  %v4799 = vpop.f32.mrf.mxu0
  %v4800 = vadd.f32 0.0, %v4799
  %v4801 = vpop.f32.mrf.mxu0
  %4802 = vdwg.mxu0
  %v4803 = vld [vmem:[%s2 + $0x354] sm:$0xf]
  %v4804 = vld [vmem:[%s2 + $0x358] sm:$0xf]
  %v4805 = vld [vmem:[%s2 + $0x35c] sm:$0x3]
  %v4809 = vunpack.c.l.b16 %v4803
  %v4810 = vunpack.c.l.b16 %v4804
  %v4811 = vunpack.c.l.b16 %v4805
  %v4812 = vpack.c.b16 %v4810, %v4809
  %v4813 = vpack.c.b16 %v4811, %v4811
  %v4816 = vsel %vm2285, %v4813, 0
  %4818 = vmatprep.subr.bf16.mxu0 0
  %4819 = vmatpush1.bf16.msra.mxu0 0
  %4820 = vmatprep.subr.bf16.mxu0 0
  %4821 = vmatpush1.bf16.msra.mxu0 0
  %4822 = vmatprep.subr.bf16.mxu0 0
  %4823 = vmatpush1.bf16.msra.mxu0 0
  %4824 = vmatprep.subr.bf16.mxu0 0
  %4825 = vmatpush1.bf16.msra.mxu0 0
  %4826 = vmatprep.subr.bf16.mxu0 0
  %4827 = vmatpush1.bf16.msra.mxu0 0
  %4828 = vmatprep.subr.bf16.mxu0 0
  %4829 = vmatpush1.bf16.msra.mxu0 0
  %4830 = vmatprep.subr.bf16.mxu0 0
  %4831 = vmatpush1.bf16.msra.mxu0 %v4816
  %4832 = vmatprep.subr.bf16.mxu0 0
  %4833 = vmatpush1.bf16.msra.mxu0 %v4812
  %4834 = vmatprep.subr.bf16.mxu0 0
  %4835 = vmatpush2.bf16.msra.mxu0 0
  %4836 = vmatprep.subr.bf16.mxu0 0
  %4837 = vmatpush2.bf16.msra.mxu0 0
  %4838 = vmatprep.subr.bf16.mxu0 0
  %4839 = vmatpush2.bf16.msra.mxu0 0
  %4840 = vmatprep.subr.bf16.mxu0 0
  %4841 = vmatpush2.bf16.msra.mxu0 0
  %4842 = vmatprep.subr.bf16.mxu0 0
  %4843 = vmatpush2.bf16.msra.mxu0 0
  %4844 = vmatprep.subr.bf16.mxu0 0
  %4845 = vmatpush2.bf16.msra.mxu0 0
  %4846 = vmatprep.subr.bf16.mxu0 0
  %4847 = vmatpush2.bf16.msra.mxu0 0
  %4848 = vmatprep.subr.bf16.mxu0 0
  %4849 = vmatpush2.bf16.msra.mxu0 0
  %4850 = vmatprep.mubr.bf16.mxu0 0
  %4851 = vmatmul.mubr.bf16.gmra.mxu0 %v4554
  %v4852 = vpop.f32.mrf.mxu0
  %v4853 = vadd.f32 0.0, %v4852
  %v4854 = vpop.f32.mrf.mxu0
  %v4855 = vpop.f32.mrf.mxu0
  %v4856 = vadd.f32 0.0, %v4855
  %v4857 = vpop.f32.mrf.mxu0
  %4858 = vmatprep.mubr.bf16.mxu0 0
  %4859 = vmatmul.mubr.bf16.gmra.mxu0 %v4557
  %v4860 = vpop.f32.mrf.mxu0
  %v4861 = vadd.f32 0.0, %v4860
  %v4862 = vpop.f32.mrf.mxu0
  %v4863 = vpop.f32.mrf.mxu0
  %v4864 = vadd.f32 0.0, %v4863
  %v4865 = vpop.f32.mrf.mxu0
  %4866 = vdwg.mxu0
  %v4867 = vpack.c.bf16 %v4600, %v4597
  %v4868 = vpack.c.bf16 %v4608, %v4605
  %v4869 = vpack.c.bf16 %v4664, %v4661
  %v4870 = vpack.c.bf16 %v4672, %v4669
  %v4871 = vpack.c.bf16 %v4728, %v4725
  %v4872 = vpack.c.bf16 %v4736, %v4733
  %v4873 = vpack.c.bf16 %v4792, %v4789
  %v4874 = vpack.c.bf16 %v4800, %v4797
  %v4875 = vpack.c.bf16 %v4856, %v4853
  %v4876 = vpack.c.bf16 %v4864, %v4861
  %v4877 = vld [vmem:[%s1 + $0x2e8] sm:$0xff]
  %v4878 = vld [vmem:[%s1 + $0x2f4] sm:$0xff]
  %v4879 = vld [vmem:[%s1 + $0x300] sm:$0xff]
  %v4880 = vld [vmem:[%s1 + $0x30c] sm:$0xff]
  %v4881 = vld [vmem:[%s1 + $0x318] sm:$0xff]
  %v4882 = vld [vmem:[%s1 + $0x324] sm:$0xff]
  %v4883 = vld [vmem:[%s1 + $0x330] sm:$0xff]
  %v4884 = vld [vmem:[%s1 + $0x33c] sm:$0xff]
  %v4885 = vld [vmem:[%s3 + $0x4f0] sm:$0xff]
  %v4886 = vld [vmem:[%s3 + $0x4f8] sm:$0xff]
  %v4887 = vld [vmem:[%s3 + $0x500] sm:$0xff]
  %v4888 = vld [vmem:[%s3 + $0x508] sm:$0xff]
  %v4889 = vld [vmem:[%s3 + $0x510] sm:$0xff]
  %v4890 = vld [vmem:[%s3 + $0x518] sm:$0xff]
  %v4891 = vld [vmem:[%s3 + $0x520] sm:$0xff]
  %v4892 = vld [vmem:[%s3 + $0x528] sm:$0xff]
  %4894 = vset.pattern.permute.xlu0 0
  %4895 = vperm.xlu0 %4894, %v4885
  %v4896 = vpop.permute.xlu0 %4895
  %4899 = vset.pattern.permute.xlu0 0
  %4900 = vperm.xlu0 %4899, %v4886
  %v4901 = vpop.permute.xlu0 %4900
  %4904 = vset.pattern.permute.xlu0 0
  %4905 = vperm.xlu0 %4904, %v4887
  %v4906 = vpop.permute.xlu0 %4905
  %4909 = vset.pattern.permute.xlu0 0
  %4910 = vperm.xlu0 %4909, %v4888
  %v4911 = vpop.permute.xlu0 %4910
  %4914 = vset.pattern.permute.xlu0 0
  %4915 = vperm.xlu0 %4914, %v4889
  %v4916 = vpop.permute.xlu0 %4915
  %4919 = vset.pattern.permute.xlu0 0
  %4920 = vperm.xlu0 %4919, %v4890
  %v4921 = vpop.permute.xlu0 %4920
  %4924 = vset.pattern.permute.xlu0 0
  %4925 = vperm.xlu0 %4924, %v4891
  %v4926 = vpop.permute.xlu0 %4925
  %4929 = vset.pattern.permute.xlu0 0
  %4930 = vperm.xlu0 %4929, %v4892
  %v4931 = vpop.permute.xlu0 %4930
  %v4941 = vunpack.c.l.b16 %v4877
  %v4942 = vunpack.c.h.b16 %v4877
  %v4943 = vunpack.c.l.b16 %v4878
  %v4944 = vunpack.c.h.b16 %v4878
  %v4945 = vunpack.c.l.b16 %v4879
  %v4946 = vunpack.c.h.b16 %v4879
  %v4947 = vunpack.c.l.b16 %v4880
  %v4948 = vunpack.c.h.b16 %v4880
  %v4949 = vunpack.c.l.b16 %v4881
  %v4950 = vunpack.c.h.b16 %v4881
  %v4951 = vunpack.c.l.b16 %v4882
  %v4952 = vunpack.c.h.b16 %v4882
  %v4953 = vunpack.c.l.b16 %v4883
  %v4954 = vunpack.c.h.b16 %v4883
  %v4955 = vunpack.c.l.b16 %v4884
  %v4956 = vunpack.c.h.b16 %v4884
  %v4957 = vpack.c.b16 %v4943, %v4941
  %v4958 = vpack.c.b16 %v4944, %v4942
  %v4959 = vpack.c.b16 %v4947, %v4945
  %v4960 = vpack.c.b16 %v4948, %v4946
  %v4961 = vpack.c.b16 %v4951, %v4949
  %v4962 = vpack.c.b16 %v4952, %v4950
  %v4963 = vpack.c.b16 %v4955, %v4953
  %v4964 = vpack.c.b16 %v4956, %v4954
  %v4970 = vsel %vm3976, %v4958, 0
  %v4973 = vsel %vm3976, %v4960, 0
  %v4976 = vsel %vm3976, %v4962, 0
  %v4979 = vsel %vm3976, %v4964, 0
  %4981 = vmatprep.subr.bf16.mxu0 0
  %4982 = vmatpush1.bf16.msra.mxu0 %v4874
  %4983 = vmatprep.subr.bf16.mxu0 0
  %4984 = vmatpush1.bf16.msra.mxu0 %v4873
  %4985 = vmatprep.subr.bf16.mxu0 0
  %4986 = vmatpush1.bf16.msra.mxu0 %v4872
  %4987 = vmatprep.subr.bf16.mxu0 0
  %4988 = vmatpush1.bf16.msra.mxu0 %v4871
  %4989 = vmatprep.subr.bf16.mxu0 0
  %4990 = vmatpush1.bf16.msra.mxu0 %v4870
  %4991 = vmatprep.subr.bf16.mxu0 0
  %4992 = vmatpush1.bf16.msra.mxu0 %v4869
  %4993 = vmatprep.subr.bf16.mxu0 0
  %4994 = vmatpush1.bf16.msra.mxu0 %v4868
  %4995 = vmatprep.subr.bf16.mxu0 0
  %4996 = vmatpush1.bf16.msra.mxu0 %v4867
  %4997 = vmatprep.subr.bf16.mxu0 0
  %4998 = vmatpush2.bf16.msra.mxu0 0
  %4999 = vmatprep.subr.bf16.mxu0 0
  %5000 = vmatpush2.bf16.msra.mxu0 0
  %5001 = vmatprep.subr.bf16.mxu0 0
  %5002 = vmatpush2.bf16.msra.mxu0 0
  %5003 = vmatprep.subr.bf16.mxu0 0
  %5004 = vmatpush2.bf16.msra.mxu0 0
  %5005 = vmatprep.subr.bf16.mxu0 0
  %5006 = vmatpush2.bf16.msra.mxu0 0
  %5007 = vmatprep.subr.bf16.mxu0 0
  %5008 = vmatpush2.bf16.msra.mxu0 0
  %5009 = vmatprep.subr.bf16.mxu0 0
  %5010 = vmatpush2.bf16.msra.mxu0 %v4876
  %5011 = vmatprep.subr.bf16.mxu0 0
  %5012 = vmatpush2.bf16.msra.mxu0 %v4875
  %5013 = vmatprep.mubr.bf16.mxu0 %v4970
  %5014 = vmatmul.mubr.bf16.gmra.mxu0 %v4957
  %v5015 = vpop.f32.mrf.mxu0
  %v5016 = vadd.f32 %v4896, %v5015
  %v5017 = vpop.f32.mrf.mxu0
  %v5018 = vpop.f32.mrf.mxu0
  %v5019 = vadd.f32 %v4901, %v5018
  %v5020 = vpop.f32.mrf.mxu0
  %5021 = vmatprep.mubr.bf16.mxu0 %v4973
  %5022 = vmatmul.mubr.bf16.gmra.mxu0 %v4959
  %v5023 = vpop.f32.mrf.mxu0
  %v5024 = vadd.f32 %v4906, %v5023
  %v5025 = vpop.f32.mrf.mxu0
  %v5026 = vpop.f32.mrf.mxu0
  %v5027 = vadd.f32 %v4911, %v5026
  %v5028 = vpop.f32.mrf.mxu0
  %5029 = vmatprep.mubr.bf16.mxu0 %v4976
  %5030 = vmatmul.mubr.bf16.gmra.mxu0 %v4961
  %v5031 = vpop.f32.mrf.mxu0
  %v5032 = vadd.f32 %v4916, %v5031
  %v5033 = vpop.f32.mrf.mxu0
  %v5034 = vpop.f32.mrf.mxu0
  %v5035 = vadd.f32 %v4921, %v5034
  %v5036 = vpop.f32.mrf.mxu0
  %5037 = vmatprep.mubr.bf16.mxu0 %v4979
  %5038 = vmatmul.mubr.bf16.gmra.mxu0 %v4963
  %v5039 = vpop.f32.mrf.mxu0
  %v5040 = vadd.f32 %v4926, %v5039
  %v5041 = vpop.f32.mrf.mxu0
  %v5042 = vpop.f32.mrf.mxu0
  %v5043 = vadd.f32 %v4931, %v5042
  %v5044 = vpop.f32.mrf.mxu0
  %5045 = vdwg.mxu0
  %vm5046 = vcmask 31744
  %v5047 = vsel %vm5046, %v5032, 0.0
  %v5048 = vsel %vm5046, %v5035, 0.0
  %v5049 = vadd.f32 %v5047, %v5048
  %v5050 = vsel %vm5046, %v5040, 0.0
  %v5051 = vadd.f32 %v5049, %v5050
  %v5052 = vsel %vm5046, %v5043, 0.0
  %v5053 = vadd.f32 %v5051, %v5052
  %5054 = vadd.xlane.f32.xlu0 %v5053
  %v5055 = vpop.xlane.xlu0 %5054
  %v5056 = vrot.slane %v5055, 4
  %v5057 = vadd.f32 %v5055, %v5056
  %v5058 = vrot.slane %v5057, 2
  %v5059 = vadd.f32 %v5057, %v5058
  %v5060 = vrot.slane %v5059, 1
  %v5061 = vadd.f32 %v5059, %v5060
  %s5062 = vtos %v5061
  %s5063 = smul.f32 %s5062, 0.0078125
  %v5064 = vmul.f32 %v5032, %v5032
  %v5065 = vmul.f32 %v5035, %v5035
  %v5066 = vmul.f32 %v5040, %v5040
  %v5067 = vmul.f32 %v5043, %v5043
  %v5068 = vsel %vm5046, %v5064, 0.0
  %v5069 = vsel %vm5046, %v5065, 0.0
  %v5070 = vadd.f32 %v5068, %v5069
  %v5071 = vsel %vm5046, %v5066, 0.0
  %v5072 = vadd.f32 %v5070, %v5071
  %v5073 = vsel %vm5046, %v5067, 0.0
  %v5074 = vadd.f32 %v5072, %v5073
  %5075 = vadd.xlane.f32.xlu0 %v5074
  %v5076 = vpop.xlane.xlu0 %5075
  %v5077 = vrot.slane %v5076, 4
  %v5078 = vadd.f32 %v5076, %v5077
  %v5079 = vrot.slane %v5078, 2
  %v5080 = vadd.f32 %v5078, %v5079
  %v5081 = vrot.slane %v5080, 1
  %v5082 = vadd.f32 %v5080, %v5081
  %s5083 = vtos %v5082
  %s5084 = smul.f32 %s5083, 0.0078125
  %s5085 = smul.f32 %s5063, %s5063
  %s5086 = ssub.f32 %s5084, %s5085
  %s5087 = smax.f32 %s5086, 0.0
  %v5088 = vstv %s5063
  %v5089 = vsub.f32 %v5032, %v5088
  %v5090 = vsub.f32 %v5035, %v5088
  %v5091 = vsub.f32 %v5040, %v5088
  %v5092 = vsub.f32 %v5043, %v5088
  %s5093 = sadd.f32 %s5087, 1e-05
  %v5094 = vstv %s5093
  %v5095 = vrsqrt.pop %v5094
  %s5096 = vtos %v5095
  %v5097 = vld [vmem:[%s3 + $0x530] sm:$0xff]
  %v5098 = vld [vmem:[%s3 + $0x538] sm:$0xff]
  %v5099 = vld [vmem:[%s3 + $0x540] sm:$0xff]
  %v5100 = vld [vmem:[%s3 + $0x548] sm:$0xff]
  %v5101 = vstv %s5096
  %v5102 = vmul.f32 %v5101, %v5097
  %v5103 = vmul.f32 %v5101, %v5098
  %v5104 = vmul.f32 %v5101, %v5099
  %v5105 = vmul.f32 %v5101, %v5100
  %5107 = vset.pattern.permute.xlu0 0
  %5108 = vperm.xlu0 %5107, %v5102
  %v5109 = vpop.permute.xlu0 %5108
  %5112 = vset.pattern.permute.xlu0 0
  %5113 = vperm.xlu0 %5112, %v5103
  %v5114 = vpop.permute.xlu0 %5113
  %5117 = vset.pattern.permute.xlu0 0
  %5118 = vperm.xlu0 %5117, %v5104
  %v5119 = vpop.permute.xlu0 %5118
  %5122 = vset.pattern.permute.xlu0 0
  %5123 = vperm.xlu0 %5122, %v5105
  %v5124 = vpop.permute.xlu0 %5123
  %v5126 = vmul.f32 %v5089, %v5109
  %v5127 = vmul.f32 %v5090, %v5114
  %v5128 = vmul.f32 %v5091, %v5119
  %v5129 = vmul.f32 %v5092, %v5124
  %v5130 = vld [vmem:[%s3 + $0x550] sm:$0xff]
  %v5131 = vld [vmem:[%s3 + $0x558] sm:$0xff]
  %v5132 = vld [vmem:[%s3 + $0x560] sm:$0xff]
  %v5133 = vld [vmem:[%s3 + $0x568] sm:$0xff]
  %5135 = vset.pattern.permute.xlu0 0
  %5136 = vperm.xlu0 %5135, %v5130
  %v5137 = vpop.permute.xlu0 %5136
  %5140 = vset.pattern.permute.xlu0 0
  %5141 = vperm.xlu0 %5140, %v5131
  %v5142 = vpop.permute.xlu0 %5141
  %5145 = vset.pattern.permute.xlu0 0
  %5146 = vperm.xlu0 %5145, %v5132
  %v5147 = vpop.permute.xlu0 %5146
  %5150 = vset.pattern.permute.xlu0 0
  %5151 = vperm.xlu0 %5150, %v5133
  %v5152 = vpop.permute.xlu0 %5151
  %v5154 = vadd.f32 %v5126, %v5137
  %v5155 = vadd.f32 %v5127, %v5142
  %v5156 = vadd.f32 %v5128, %v5147
  %v5157 = vadd.f32 %v5129, %v5152
  %vm5158 = vcmp.ge.f32.partialorder %v5154, 0.0
  %vm5159 = vcmp.ge.f32.partialorder %v5155, 0.0
  %vm5160 = vcmp.ge.f32.partialorder %v5156, 0.0
  %vm5161 = vcmp.ge.f32.partialorder %v5157, 0.0
  %v5162 = vmul.f32 %v5154, 0.01
  %v5163 = vmul.f32 %v5155, 0.01
  %v5164 = vmul.f32 %v5156, 0.01
  %v5165 = vmul.f32 %v5157, 0.01
  %v5166 = vsel %vm5158, %v5154, %v5162
  %v5167 = vsel %vm5159, %v5155, %v5163
  %v5168 = vsel %vm5160, %v5156, %v5164
  %v5169 = vsel %vm5161, %v5157, %v5165
  %v5170 = vpack.c.bf16 %v5167, %v5166
  %v5171 = vpack.c.bf16 %v5169, %v5168
  %v5172 = vld [vmem:[%s2 + $0x218] sm:$0x3]
  %v5174 = vsel %vm5046, %v5170, 0
  %v5177 = vsel %vm5046, %v5171, 0
  %v5180 = vsel %vm2285, %v5172, 0
  %5182 = vmatprep.subr.bf16.mxu0 0
  %5183 = vmatpush1.bf16.msra.mxu0 0
  %5184 = vmatprep.subr.bf16.mxu0 0
  %5185 = vmatpush1.bf16.msra.mxu0 0
  %5186 = vmatprep.subr.bf16.mxu0 0
  %5187 = vmatpush1.bf16.msra.mxu0 0
  %5188 = vmatprep.subr.bf16.mxu0 0
  %5189 = vmatpush1.bf16.msra.mxu0 0
  %5190 = vmatprep.subr.bf16.mxu0 0
  %5191 = vmatpush1.bf16.msra.mxu0 0
  %5192 = vmatprep.subr.bf16.mxu0 0
  %5193 = vmatpush1.bf16.msra.mxu0 0
  %5194 = vmatprep.subr.bf16.mxu0 0
  %5195 = vmatpush1.bf16.msra.mxu0 0
  %5196 = vmatprep.subr.bf16.mxu0 0
  %5197 = vmatpush1.bf16.msra.mxu0 %v5180
  %5198 = vmatprep.subr.bf16.mxu0 0
  %5199 = vmatpush2.bf16.msra.mxu0 0
  %5200 = vmatprep.subr.bf16.mxu0 0
  %5201 = vmatpush2.bf16.msra.mxu0 0
  %5202 = vmatprep.subr.bf16.mxu0 0
  %5203 = vmatpush2.bf16.msra.mxu0 0
  %5204 = vmatprep.subr.bf16.mxu0 0
  %5205 = vmatpush2.bf16.msra.mxu0 0
  %5206 = vmatprep.subr.bf16.mxu0 0
  %5207 = vmatpush2.bf16.msra.mxu0 0
  %5208 = vmatprep.subr.bf16.mxu0 0
  %5209 = vmatpush2.bf16.msra.mxu0 0
  %5210 = vmatprep.subr.bf16.mxu0 0
  %5211 = vmatpush2.bf16.msra.mxu0 0
  %5212 = vmatprep.subr.bf16.mxu0 0
  %5213 = vmatpush2.bf16.msra.mxu0 0
  %5214 = vmatprep.mubr.bf16.mxu0 0
  %5215 = vmatmul.mubr.bf16.gmra.mxu0 %v5174
  %v5216 = vpop.f32.mrf.mxu0
  %v5217 = vadd.f32 0.0, %v5216
  %v5218 = vpop.f32.mrf.mxu0
  %v5219 = vpop.f32.mrf.mxu0
  %v5220 = vadd.f32 0.0, %v5219
  %v5221 = vpop.f32.mrf.mxu0
  %5222 = vmatprep.mubr.bf16.mxu0 0
  %5223 = vmatmul.mubr.bf16.gmra.mxu0 %v5177
  %v5224 = vpop.f32.mrf.mxu0
  %v5225 = vadd.f32 0.0, %v5224
  %v5226 = vpop.f32.mrf.mxu0
  %v5227 = vpop.f32.mrf.mxu0
  %v5228 = vadd.f32 0.0, %v5227
  %v5229 = vpop.f32.mrf.mxu0
  %5230 = vdwg.mxu0
  %v5231 = vld [vmem:[%s2 + $0x21c] sm:$0x3]
  %v5233 = vsel %vm2285, %v5231, 0
  %5235 = vmatprep.subr.bf16.mxu0 0
  %5236 = vmatpush1.bf16.msra.mxu0 0
  %5237 = vmatprep.subr.bf16.mxu0 0
  %5238 = vmatpush1.bf16.msra.mxu0 0
  %5239 = vmatprep.subr.bf16.mxu0 0
  %5240 = vmatpush1.bf16.msra.mxu0 0
  %5241 = vmatprep.subr.bf16.mxu0 0
  %5242 = vmatpush1.bf16.msra.mxu0 0
  %5243 = vmatprep.subr.bf16.mxu0 0
  %5244 = vmatpush1.bf16.msra.mxu0 0
  %5245 = vmatprep.subr.bf16.mxu0 0
  %5246 = vmatpush1.bf16.msra.mxu0 0
  %5247 = vmatprep.subr.bf16.mxu0 0
  %5248 = vmatpush1.bf16.msra.mxu0 0
  %5249 = vmatprep.subr.bf16.mxu0 0
  %5250 = vmatpush1.bf16.msra.mxu0 %v5233
  %5251 = vmatprep.subr.bf16.mxu0 0
  %5252 = vmatpush2.bf16.msra.mxu0 0
  %5253 = vmatprep.subr.bf16.mxu0 0
  %5254 = vmatpush2.bf16.msra.mxu0 0
  %5255 = vmatprep.subr.bf16.mxu0 0
  %5256 = vmatpush2.bf16.msra.mxu0 0
  %5257 = vmatprep.subr.bf16.mxu0 0
  %5258 = vmatpush2.bf16.msra.mxu0 0
  %5259 = vmatprep.subr.bf16.mxu0 0
  %5260 = vmatpush2.bf16.msra.mxu0 0
  %5261 = vmatprep.subr.bf16.mxu0 0
  %5262 = vmatpush2.bf16.msra.mxu0 0
  %5263 = vmatprep.subr.bf16.mxu0 0
  %5264 = vmatpush2.bf16.msra.mxu0 0
  %5265 = vmatprep.subr.bf16.mxu0 0
  %5266 = vmatpush2.bf16.msra.mxu0 0
  %5267 = vmatprep.mubr.bf16.mxu0 0
  %5268 = vmatmul.mubr.bf16.gmra.mxu0 %v5174
  %v5269 = vpop.f32.mrf.mxu0
  %v5270 = vadd.f32 0.0, %v5269
  %v5271 = vpop.f32.mrf.mxu0
  %v5272 = vpop.f32.mrf.mxu0
  %v5273 = vadd.f32 0.0, %v5272
  %v5274 = vpop.f32.mrf.mxu0
  %5275 = vmatprep.mubr.bf16.mxu0 0
  %5276 = vmatmul.mubr.bf16.gmra.mxu0 %v5177
  %v5277 = vpop.f32.mrf.mxu0
  %v5278 = vadd.f32 0.0, %v5277
  %v5279 = vpop.f32.mrf.mxu0
  %v5280 = vpop.f32.mrf.mxu0
  %v5281 = vadd.f32 0.0, %v5280
  %v5282 = vpop.f32.mrf.mxu0
  %5283 = vdwg.mxu0
  %v5284 = vpack.c.bf16 %v5220, %v5217
  %v5285 = vpack.c.bf16 %v5228, %v5225
  %v5286 = vpack.c.bf16 %v5273, %v5270
  %v5287 = vpack.c.bf16 %v5281, %v5278
  %v5288 = vld [vmem:[%s2 + $0x10] sm:$0xf]
  %v5289 = vld [vmem:[%s2 + $0x14] sm:$0xf]
  %v5290 = vld [vmem:[%s2 + $0x18] sm:$0xf]
  %v5291 = vld [vmem:[%s2 + $0x1c] sm:$0xf]
  %v5292 = vld [vmem:[%s3 + $0x570] sm:$0xff]
  %v5293 = vld [vmem:[%s3 + $0x578] sm:$0xff]
  %v5294 = vld [vmem:[%s3 + $0x580] sm:$0xff]
  %v5295 = vld [vmem:[%s3 + $0x588] sm:$0xff]
  %5297 = vset.pattern.permute.xlu0 0
  %5298 = vperm.xlu0 %5297, %v5292
  %v5299 = vpop.permute.xlu0 %5298
  %5302 = vset.pattern.permute.xlu0 0
  %5303 = vperm.xlu0 %5302, %v5293
  %v5304 = vpop.permute.xlu0 %5303
  %5307 = vset.pattern.permute.xlu0 0
  %5308 = vperm.xlu0 %5307, %v5294
  %v5309 = vpop.permute.xlu0 %5308
  %5312 = vset.pattern.permute.xlu0 0
  %5313 = vperm.xlu0 %5312, %v5295
  %v5314 = vpop.permute.xlu0 %5313
  %v5320 = vunpack.c.l.b16 %v5288
  %v5321 = vunpack.c.l.b16 %v5289
  %v5322 = vunpack.c.l.b16 %v5290
  %v5323 = vunpack.c.l.b16 %v5291
  %v5324 = vpack.c.b16 %v5321, %v5320
  %v5325 = vpack.c.b16 %v5323, %v5322
  %v5327 = vsel %vm4356, %v5324, 0
  %v5330 = vsel %vm4356, %v5325, 0
  %5332 = vmatprep.subr.bf16.mxu0 0
  %5333 = vmatpush1.bf16.msra.mxu0 0
  %5334 = vmatprep.subr.bf16.mxu0 0
  %5335 = vmatpush1.bf16.msra.mxu0 0
  %5336 = vmatprep.subr.bf16.mxu0 0
  %5337 = vmatpush1.bf16.msra.mxu0 %v5287
  %5338 = vmatprep.subr.bf16.mxu0 0
  %5339 = vmatpush1.bf16.msra.mxu0 %v5286
  %5340 = vmatprep.subr.bf16.mxu0 0
  %5341 = vmatpush1.bf16.msra.mxu0 %v5171
  %5342 = vmatprep.subr.bf16.mxu0 0
  %5343 = vmatpush1.bf16.msra.mxu0 %v5170
  %5344 = vmatprep.subr.bf16.mxu0 0
  %5345 = vmatpush1.bf16.msra.mxu0 %v5285
  %5346 = vmatprep.subr.bf16.mxu0 0
  %5347 = vmatpush1.bf16.msra.mxu0 %v5284
  %5348 = vmatprep.subr.bf16.mxu0 0
  %5349 = vmatpush2.bf16.msra.mxu0 0
  %5350 = vmatprep.subr.bf16.mxu0 0
  %5351 = vmatpush2.bf16.msra.mxu0 0
  %5352 = vmatprep.subr.bf16.mxu0 0
  %5353 = vmatpush2.bf16.msra.mxu0 0
  %5354 = vmatprep.subr.bf16.mxu0 0
  %5355 = vmatpush2.bf16.msra.mxu0 0
  %5356 = vmatprep.subr.bf16.mxu0 0
  %5357 = vmatpush2.bf16.msra.mxu0 0
  %5358 = vmatprep.subr.bf16.mxu0 0
  %5359 = vmatpush2.bf16.msra.mxu0 0
  %5360 = vmatprep.subr.bf16.mxu0 0
  %5361 = vmatpush2.bf16.msra.mxu0 0
  %5362 = vmatprep.subr.bf16.mxu0 0
  %5363 = vmatpush2.bf16.msra.mxu0 0
  %5364 = vmatprep.mubr.bf16.mxu0 0
  %5365 = vmatmul.mubr.bf16.gmra.mxu0 %v5327
  %v5366 = vpop.f32.mrf.mxu0
  %v5367 = vadd.f32 %v5299, %v5366
  %v5368 = vpop.f32.mrf.mxu0
  %v5369 = vpop.f32.mrf.mxu0
  %v5370 = vadd.f32 %v5304, %v5369
  %v5371 = vpop.f32.mrf.mxu0
  %5372 = vmatprep.mubr.bf16.mxu0 0
  %5373 = vmatmul.mubr.bf16.gmra.mxu0 %v5330
  %v5374 = vpop.f32.mrf.mxu0
  %v5375 = vadd.f32 %v5309, %v5374
  %v5376 = vpop.f32.mrf.mxu0
  %v5377 = vpop.f32.mrf.mxu0
  %v5378 = vadd.f32 %v5314, %v5377
  %v5379 = vpop.f32.mrf.mxu0
  %5380 = vdwg.mxu0
  %v5381 = vadd.f32 %v5016, %v5367
  %v5382 = vadd.f32 %v5019, %v5370
  %v5383 = vadd.f32 %v5024, %v5375
  %v5384 = vadd.f32 %v5027, %v5378
  %v5385 = vsel %vm5046, %v5381, 0.0
  %v5386 = vsel %vm5046, %v5382, 0.0
  %v5387 = vadd.f32 %v5385, %v5386
  %v5388 = vsel %vm5046, %v5383, 0.0
  %v5389 = vadd.f32 %v5387, %v5388
  %v5390 = vsel %vm5046, %v5384, 0.0
  %v5391 = vadd.f32 %v5389, %v5390
  %5392 = vadd.xlane.f32.xlu0 %v5391
  %v5393 = vpop.xlane.xlu0 %5392
  %v5394 = vrot.slane %v5393, 4
  %v5395 = vadd.f32 %v5393, %v5394
  %v5396 = vrot.slane %v5395, 2
  %v5397 = vadd.f32 %v5395, %v5396
  %v5398 = vrot.slane %v5397, 1
  %v5399 = vadd.f32 %v5397, %v5398
  %s5400 = vtos %v5399
  %s5401 = smul.f32 %s5400, 0.0078125
  %v5402 = vmul.f32 %v5381, %v5381
  %v5403 = vmul.f32 %v5382, %v5382
  %v5404 = vmul.f32 %v5383, %v5383
  %v5405 = vmul.f32 %v5384, %v5384
  %v5406 = vsel %vm5046, %v5402, 0.0
  %v5407 = vsel %vm5046, %v5403, 0.0
  %v5408 = vadd.f32 %v5406, %v5407
  %v5409 = vsel %vm5046, %v5404, 0.0
  %v5410 = vadd.f32 %v5408, %v5409
  %v5411 = vsel %vm5046, %v5405, 0.0
  %v5412 = vadd.f32 %v5410, %v5411
  %5413 = vadd.xlane.f32.xlu0 %v5412
  %v5414 = vpop.xlane.xlu0 %5413
  %v5415 = vrot.slane %v5414, 4
  %v5416 = vadd.f32 %v5414, %v5415
  %v5417 = vrot.slane %v5416, 2
  %v5418 = vadd.f32 %v5416, %v5417
  %v5419 = vrot.slane %v5418, 1
  %v5420 = vadd.f32 %v5418, %v5419
  %s5421 = vtos %v5420
  %s5422 = smul.f32 %s5421, 0.0078125
  %s5423 = smul.f32 %s5401, %s5401
  %s5424 = ssub.f32 %s5422, %s5423
  %s5425 = smax.f32 %s5424, 0.0
  %v5426 = vstv %s5401
  %v5427 = vsub.f32 %v5381, %v5426
  %v5428 = vsub.f32 %v5382, %v5426
  %v5429 = vsub.f32 %v5383, %v5426
  %v5430 = vsub.f32 %v5384, %v5426
  %s5431 = sadd.f32 %s5425, 1e-05
  %v5432 = vstv %s5431
  %v5433 = vrsqrt.pop %v5432
  %s5434 = vtos %v5433
  %v5435 = vld [vmem:[%s3 + $0x590] sm:$0xff]
  %v5436 = vld [vmem:[%s3 + $0x598] sm:$0xff]
  %v5437 = vld [vmem:[%s3 + $0x5a0] sm:$0xff]
  %v5438 = vld [vmem:[%s3 + $0x5a8] sm:$0xff]
  %v5439 = vstv %s5434
  %v5440 = vmul.f32 %v5439, %v5435
  %v5441 = vmul.f32 %v5439, %v5436
  %v5442 = vmul.f32 %v5439, %v5437
  %v5443 = vmul.f32 %v5439, %v5438
  %5445 = vset.pattern.permute.xlu0 0
  %5446 = vperm.xlu0 %5445, %v5440
  %v5447 = vpop.permute.xlu0 %5446
  %5450 = vset.pattern.permute.xlu0 0
  %5451 = vperm.xlu0 %5450, %v5441
  %v5452 = vpop.permute.xlu0 %5451
  %5455 = vset.pattern.permute.xlu0 0
  %5456 = vperm.xlu0 %5455, %v5442
  %v5457 = vpop.permute.xlu0 %5456
  %5460 = vset.pattern.permute.xlu0 0
  %5461 = vperm.xlu0 %5460, %v5443
  %v5462 = vpop.permute.xlu0 %5461
  %v5464 = vmul.f32 %v5427, %v5447
  %v5465 = vmul.f32 %v5428, %v5452
  %v5466 = vmul.f32 %v5429, %v5457
  %v5467 = vmul.f32 %v5430, %v5462
  %v5468 = vld [vmem:[%s3 + $0x5b0] sm:$0xff]
  %v5469 = vld [vmem:[%s3 + $0x5b8] sm:$0xff]
  %v5470 = vld [vmem:[%s3 + $0x5c0] sm:$0xff]
  %v5471 = vld [vmem:[%s3 + $0x5c8] sm:$0xff]
  %5473 = vset.pattern.permute.xlu0 0
  %5474 = vperm.xlu0 %5473, %v5468
  %v5475 = vpop.permute.xlu0 %5474
  %5478 = vset.pattern.permute.xlu0 0
  %5479 = vperm.xlu0 %5478, %v5469
  %v5480 = vpop.permute.xlu0 %5479
  %5483 = vset.pattern.permute.xlu0 0
  %5484 = vperm.xlu0 %5483, %v5470
  %v5485 = vpop.permute.xlu0 %5484
  %5488 = vset.pattern.permute.xlu0 0
  %5489 = vperm.xlu0 %5488, %v5471
  %v5490 = vpop.permute.xlu0 %5489
  %v5492 = vadd.f32 %v5464, %v5475
  %v5493 = vadd.f32 %v5465, %v5480
  %v5494 = vadd.f32 %v5466, %v5485
  %v5495 = vadd.f32 %v5467, %v5490
  %vm5496 = vcmp.ge.f32.partialorder %v5492, 0.0
  %vm5497 = vcmp.ge.f32.partialorder %v5493, 0.0
  %vm5498 = vcmp.ge.f32.partialorder %v5494, 0.0
  %vm5499 = vcmp.ge.f32.partialorder %v5495, 0.0
  %v5500 = vmul.f32 %v5492, 0.01
  %v5501 = vmul.f32 %v5493, 0.01
  %v5502 = vmul.f32 %v5494, 0.01
  %v5503 = vmul.f32 %v5495, 0.01
  %v5504 = vsel %vm5496, %v5492, %v5500
  %v5505 = vsel %vm5497, %v5493, %v5501
  %v5506 = vsel %vm5498, %v5494, %v5502
  %v5507 = vsel %vm5499, %v5495, %v5503
  %v5508 = vpack.c.bf16 %v5505, %v5504
  %v5509 = vpack.c.bf16 %v5507, %v5506
  %v5510 = vld [vmem:[%s2 + $0x360] sm:$0x3]
  %v5512 = vsel %vm5046, %v5508, 0
  %v5515 = vsel %vm5046, %v5509, 0
  %v5518 = vsel %vm2285, %v5510, 0
  %5520 = vmatprep.subr.bf16.mxu0 0
  %5521 = vmatpush1.bf16.msra.mxu0 0
  %5522 = vmatprep.subr.bf16.mxu0 0
  %5523 = vmatpush1.bf16.msra.mxu0 0
  %5524 = vmatprep.subr.bf16.mxu0 0
  %5525 = vmatpush1.bf16.msra.mxu0 0
  %5526 = vmatprep.subr.bf16.mxu0 0
  %5527 = vmatpush1.bf16.msra.mxu0 0
  %5528 = vmatprep.subr.bf16.mxu0 0
  %5529 = vmatpush1.bf16.msra.mxu0 0
  %5530 = vmatprep.subr.bf16.mxu0 0
  %5531 = vmatpush1.bf16.msra.mxu0 0
  %5532 = vmatprep.subr.bf16.mxu0 0
  %5533 = vmatpush1.bf16.msra.mxu0 0
  %5534 = vmatprep.subr.bf16.mxu0 0
  %5535 = vmatpush1.bf16.msra.mxu0 %v5518
  %5536 = vmatprep.subr.bf16.mxu0 0
  %5537 = vmatpush2.bf16.msra.mxu0 0
  %5538 = vmatprep.subr.bf16.mxu0 0
  %5539 = vmatpush2.bf16.msra.mxu0 0
  %5540 = vmatprep.subr.bf16.mxu0 0
  %5541 = vmatpush2.bf16.msra.mxu0 0
  %5542 = vmatprep.subr.bf16.mxu0 0
  %5543 = vmatpush2.bf16.msra.mxu0 0
  %5544 = vmatprep.subr.bf16.mxu0 0
  %5545 = vmatpush2.bf16.msra.mxu0 0
  %5546 = vmatprep.subr.bf16.mxu0 0
  %5547 = vmatpush2.bf16.msra.mxu0 0
  %5548 = vmatprep.subr.bf16.mxu0 0
  %5549 = vmatpush2.bf16.msra.mxu0 0
  %5550 = vmatprep.subr.bf16.mxu0 0
  %5551 = vmatpush2.bf16.msra.mxu0 0
  %5552 = vmatprep.mubr.bf16.mxu0 0
  %5553 = vmatmul.mubr.bf16.gmra.mxu0 %v5512
  %v5554 = vpop.f32.mrf.mxu0
  %v5555 = vadd.f32 0.0, %v5554
  %v5556 = vpop.f32.mrf.mxu0
  %v5557 = vpop.f32.mrf.mxu0
  %v5558 = vadd.f32 0.0, %v5557
  %v5559 = vpop.f32.mrf.mxu0
  %5560 = vmatprep.mubr.bf16.mxu0 0
  %5561 = vmatmul.mubr.bf16.gmra.mxu0 %v5515
  %v5562 = vpop.f32.mrf.mxu0
  %v5563 = vadd.f32 0.0, %v5562
  %v5564 = vpop.f32.mrf.mxu0
  %v5565 = vpop.f32.mrf.mxu0
  %v5566 = vadd.f32 0.0, %v5565
  %v5567 = vpop.f32.mrf.mxu0
  %5568 = vdwg.mxu0
  %v5569 = vld [vmem:[%s2 + $0x364] sm:$0x3]
  %v5571 = vsel %vm2285, %v5569, 0
  %5573 = vmatprep.subr.bf16.mxu0 0
  %5574 = vmatpush1.bf16.msra.mxu0 0
  %5575 = vmatprep.subr.bf16.mxu0 0
  %5576 = vmatpush1.bf16.msra.mxu0 0
  %5577 = vmatprep.subr.bf16.mxu0 0
  %5578 = vmatpush1.bf16.msra.mxu0 0
  %5579 = vmatprep.subr.bf16.mxu0 0
  %5580 = vmatpush1.bf16.msra.mxu0 0
  %5581 = vmatprep.subr.bf16.mxu0 0
  %5582 = vmatpush1.bf16.msra.mxu0 0
  %5583 = vmatprep.subr.bf16.mxu0 0
  %5584 = vmatpush1.bf16.msra.mxu0 0
  %5585 = vmatprep.subr.bf16.mxu0 0
  %5586 = vmatpush1.bf16.msra.mxu0 0
  %5587 = vmatprep.subr.bf16.mxu0 0
  %5588 = vmatpush1.bf16.msra.mxu0 %v5571
  %5589 = vmatprep.subr.bf16.mxu0 0
  %5590 = vmatpush2.bf16.msra.mxu0 0
  %5591 = vmatprep.subr.bf16.mxu0 0
  %5592 = vmatpush2.bf16.msra.mxu0 0
  %5593 = vmatprep.subr.bf16.mxu0 0
  %5594 = vmatpush2.bf16.msra.mxu0 0
  %5595 = vmatprep.subr.bf16.mxu0 0
  %5596 = vmatpush2.bf16.msra.mxu0 0
  %5597 = vmatprep.subr.bf16.mxu0 0
  %5598 = vmatpush2.bf16.msra.mxu0 0
  %5599 = vmatprep.subr.bf16.mxu0 0
  %5600 = vmatpush2.bf16.msra.mxu0 0
  %5601 = vmatprep.subr.bf16.mxu0 0
  %5602 = vmatpush2.bf16.msra.mxu0 0
  %5603 = vmatprep.subr.bf16.mxu0 0
  %5604 = vmatpush2.bf16.msra.mxu0 0
  %5605 = vmatprep.mubr.bf16.mxu0 0
  %5606 = vmatmul.mubr.bf16.gmra.mxu0 %v5512
  %v5607 = vpop.f32.mrf.mxu0
  %v5608 = vadd.f32 0.0, %v5607
  %v5609 = vpop.f32.mrf.mxu0
  %v5610 = vpop.f32.mrf.mxu0
  %v5611 = vadd.f32 0.0, %v5610
  %v5612 = vpop.f32.mrf.mxu0
  %5613 = vmatprep.mubr.bf16.mxu0 0
  %5614 = vmatmul.mubr.bf16.gmra.mxu0 %v5515
  %v5615 = vpop.f32.mrf.mxu0
  %v5616 = vadd.f32 0.0, %v5615
  %v5617 = vpop.f32.mrf.mxu0
  %v5618 = vpop.f32.mrf.mxu0
  %v5619 = vadd.f32 0.0, %v5618
  %v5620 = vpop.f32.mrf.mxu0
  %5621 = vdwg.mxu0
  %v5622 = vld [vmem:[%s2 + $0x368] sm:$0x3]
  %v5624 = vsel %vm2285, %v5622, 0
  %5626 = vmatprep.subr.bf16.mxu0 0
  %5627 = vmatpush1.bf16.msra.mxu0 0
  %5628 = vmatprep.subr.bf16.mxu0 0
  %5629 = vmatpush1.bf16.msra.mxu0 0
  %5630 = vmatprep.subr.bf16.mxu0 0
  %5631 = vmatpush1.bf16.msra.mxu0 0
  %5632 = vmatprep.subr.bf16.mxu0 0
  %5633 = vmatpush1.bf16.msra.mxu0 0
  %5634 = vmatprep.subr.bf16.mxu0 0
  %5635 = vmatpush1.bf16.msra.mxu0 0
  %5636 = vmatprep.subr.bf16.mxu0 0
  %5637 = vmatpush1.bf16.msra.mxu0 0
  %5638 = vmatprep.subr.bf16.mxu0 0
  %5639 = vmatpush1.bf16.msra.mxu0 0
  %5640 = vmatprep.subr.bf16.mxu0 0
  %5641 = vmatpush1.bf16.msra.mxu0 %v5624
  %5642 = vmatprep.subr.bf16.mxu0 0
  %5643 = vmatpush2.bf16.msra.mxu0 0
  %5644 = vmatprep.subr.bf16.mxu0 0
  %5645 = vmatpush2.bf16.msra.mxu0 0
  %5646 = vmatprep.subr.bf16.mxu0 0
  %5647 = vmatpush2.bf16.msra.mxu0 0
  %5648 = vmatprep.subr.bf16.mxu0 0
  %5649 = vmatpush2.bf16.msra.mxu0 0
  %5650 = vmatprep.subr.bf16.mxu0 0
  %5651 = vmatpush2.bf16.msra.mxu0 0
  %5652 = vmatprep.subr.bf16.mxu0 0
  %5653 = vmatpush2.bf16.msra.mxu0 0
  %5654 = vmatprep.subr.bf16.mxu0 0
  %5655 = vmatpush2.bf16.msra.mxu0 0
  %5656 = vmatprep.subr.bf16.mxu0 0
  %5657 = vmatpush2.bf16.msra.mxu0 0
  %5658 = vmatprep.mubr.bf16.mxu0 0
  %5659 = vmatmul.mubr.bf16.gmra.mxu0 %v5512
  %v5660 = vpop.f32.mrf.mxu0
  %v5661 = vadd.f32 0.0, %v5660
  %v5662 = vpop.f32.mrf.mxu0
  %v5663 = vpop.f32.mrf.mxu0
  %v5664 = vadd.f32 0.0, %v5663
  %v5665 = vpop.f32.mrf.mxu0
  %5666 = vmatprep.mubr.bf16.mxu0 0
  %5667 = vmatmul.mubr.bf16.gmra.mxu0 %v5515
  %v5668 = vpop.f32.mrf.mxu0
  %v5669 = vadd.f32 0.0, %v5668
  %v5670 = vpop.f32.mrf.mxu0
  %v5671 = vpop.f32.mrf.mxu0
  %v5672 = vadd.f32 0.0, %v5671
  %v5673 = vpop.f32.mrf.mxu0
  %5674 = vdwg.mxu0
  %v5675 = vld [vmem:[%s2 + $0x36c] sm:$0x3]
  %v5677 = vsel %vm2285, %v5675, 0
  %5679 = vmatprep.subr.bf16.mxu0 0
  %5680 = vmatpush1.bf16.msra.mxu0 0
  %5681 = vmatprep.subr.bf16.mxu0 0
  %5682 = vmatpush1.bf16.msra.mxu0 0
  %5683 = vmatprep.subr.bf16.mxu0 0
  %5684 = vmatpush1.bf16.msra.mxu0 0
  %5685 = vmatprep.subr.bf16.mxu0 0
  %5686 = vmatpush1.bf16.msra.mxu0 0
  %5687 = vmatprep.subr.bf16.mxu0 0
  %5688 = vmatpush1.bf16.msra.mxu0 0
  %5689 = vmatprep.subr.bf16.mxu0 0
  %5690 = vmatpush1.bf16.msra.mxu0 0
  %5691 = vmatprep.subr.bf16.mxu0 0
  %5692 = vmatpush1.bf16.msra.mxu0 0
  %5693 = vmatprep.subr.bf16.mxu0 0
  %5694 = vmatpush1.bf16.msra.mxu0 %v5677
  %5695 = vmatprep.subr.bf16.mxu0 0
  %5696 = vmatpush2.bf16.msra.mxu0 0
  %5697 = vmatprep.subr.bf16.mxu0 0
  %5698 = vmatpush2.bf16.msra.mxu0 0
  %5699 = vmatprep.subr.bf16.mxu0 0
  %5700 = vmatpush2.bf16.msra.mxu0 0
  %5701 = vmatprep.subr.bf16.mxu0 0
  %5702 = vmatpush2.bf16.msra.mxu0 0
  %5703 = vmatprep.subr.bf16.mxu0 0
  %5704 = vmatpush2.bf16.msra.mxu0 0
  %5705 = vmatprep.subr.bf16.mxu0 0
  %5706 = vmatpush2.bf16.msra.mxu0 0
  %5707 = vmatprep.subr.bf16.mxu0 0
  %5708 = vmatpush2.bf16.msra.mxu0 0
  %5709 = vmatprep.subr.bf16.mxu0 0
  %5710 = vmatpush2.bf16.msra.mxu0 0
  %5711 = vmatprep.mubr.bf16.mxu0 0
  %5712 = vmatmul.mubr.bf16.gmra.mxu0 %v5512
  %v5713 = vpop.f32.mrf.mxu0
  %v5714 = vadd.f32 0.0, %v5713
  %v5715 = vpop.f32.mrf.mxu0
  %v5716 = vpop.f32.mrf.mxu0
  %v5717 = vadd.f32 0.0, %v5716
  %v5718 = vpop.f32.mrf.mxu0
  %5719 = vmatprep.mubr.bf16.mxu0 0
  %5720 = vmatmul.mubr.bf16.gmra.mxu0 %v5515
  %v5721 = vpop.f32.mrf.mxu0
  %v5722 = vadd.f32 0.0, %v5721
  %v5723 = vpop.f32.mrf.mxu0
  %v5724 = vpop.f32.mrf.mxu0
  %v5725 = vadd.f32 0.0, %v5724
  %v5726 = vpop.f32.mrf.mxu0
  %5727 = vdwg.mxu0
  %v5728 = vpack.c.bf16 %v5558, %v5555
  %v5729 = vpack.c.bf16 %v5566, %v5563
  %v5730 = vpack.c.bf16 %v5611, %v5608
  %v5731 = vpack.c.bf16 %v5619, %v5616
  %v5732 = vpack.c.bf16 %v5664, %v5661
  %v5733 = vpack.c.bf16 %v5672, %v5669
  %v5734 = vpack.c.bf16 %v5717, %v5714
  %v5735 = vpack.c.bf16 %v5725, %v5722
  %v5736 = vld [vmem:[%s1 + $0x348] sm:$0xf]
  %v5737 = vld [vmem:[%s1 + $0x354] sm:$0xf]
  %v5738 = vld [vmem:[%s1 + $0x360] sm:$0xf]
  %v5739 = vld [vmem:[%s1 + $0x36c] sm:$0xf]
  %v5740 = vld [vmem:[%s1 + $0x378] sm:$0xf]
  %v5741 = vld [vmem:[%s1 + $0x384] sm:$0xf]
  %v5742 = vld [vmem:[%s1 + $0x390] sm:$0xf]
  %v5743 = vld [vmem:[%s1 + $0x39c] sm:$0xf]
  %v5744 = vld [vmem:[%s3 + $0x5d0] sm:$0xff]
  %v5745 = vld [vmem:[%s3 + $0x5d8] sm:$0xff]
  %v5746 = vld [vmem:[%s3 + $0x5e0] sm:$0xff]
  %v5747 = vld [vmem:[%s3 + $0x5e8] sm:$0xff]
  %v5748 = vld [vmem:[%s3 + $0x5f0] sm:$0xff]
  %v5749 = vld [vmem:[%s3 + $0x5f8] sm:$0xff]
  %v5750 = vld [vmem:[%s3 + $0x600] sm:$0xff]
  %v5751 = vld [vmem:[%s3 + $0x608] sm:$0xff]
  %v5760 = vunpack.c.l.b16 %v5736
  %v5761 = vunpack.c.l.b16 %v5737
  %v5762 = vunpack.c.l.b16 %v5738
  %v5763 = vunpack.c.l.b16 %v5739
  %v5764 = vunpack.c.l.b16 %v5740
  %v5765 = vunpack.c.l.b16 %v5741
  %v5766 = vunpack.c.l.b16 %v5742
  %v5767 = vunpack.c.l.b16 %v5743
  %v5768 = vpack.c.b16 %v5761, %v5760
  %v5769 = vpack.c.b16 %v5763, %v5762
  %v5770 = vpack.c.b16 %v5765, %v5764
  %v5771 = vpack.c.b16 %v5767, %v5766
  %5776 = vmatprep.subr.bf16.mxu0 0
  %5777 = vmatpush1.bf16.msra.mxu0 %v5735
  %5778 = vmatprep.subr.bf16.mxu0 0
  %5779 = vmatpush1.bf16.msra.mxu0 %v5734
  %5780 = vmatprep.subr.bf16.mxu0 0
  %5781 = vmatpush1.bf16.msra.mxu0 %v5733
  %5782 = vmatprep.subr.bf16.mxu0 0
  %5783 = vmatpush1.bf16.msra.mxu0 %v5732
  %5784 = vmatprep.subr.bf16.mxu0 0
  %5785 = vmatpush1.bf16.msra.mxu0 %v5731
  %5786 = vmatprep.subr.bf16.mxu0 0
  %5787 = vmatpush1.bf16.msra.mxu0 %v5730
  %5788 = vmatprep.subr.bf16.mxu0 0
  %5789 = vmatpush1.bf16.msra.mxu0 %v5729
  %5790 = vmatprep.subr.bf16.mxu0 0
  %5791 = vmatpush1.bf16.msra.mxu0 %v5728
  %5792 = vmatprep.subr.bf16.mxu0 0
  %5793 = vmatpush2.bf16.msra.mxu0 0
  %5794 = vmatprep.subr.bf16.mxu0 0
  %5795 = vmatpush2.bf16.msra.mxu0 0
  %5796 = vmatprep.subr.bf16.mxu0 0
  %5797 = vmatpush2.bf16.msra.mxu0 0
  %5798 = vmatprep.subr.bf16.mxu0 0
  %5799 = vmatpush2.bf16.msra.mxu0 0
  %5800 = vmatprep.subr.bf16.mxu0 0
  %5801 = vmatpush2.bf16.msra.mxu0 0
  %5802 = vmatprep.subr.bf16.mxu0 0
  %5803 = vmatpush2.bf16.msra.mxu0 0
  %5804 = vmatprep.subr.bf16.mxu0 0
  %5805 = vmatpush2.bf16.msra.mxu0 0
  %5806 = vmatprep.subr.bf16.mxu0 0
  %5807 = vmatpush2.bf16.msra.mxu0 0
  %5808 = vmatprep.mubr.bf16.mxu0 0
  %5809 = vmatmul.mubr.bf16.gmra.mxu0 %v5768
  %v5810 = vpop.f32.mrf.mxu0
  %v5811 = vadd.f32 %v5744, %v5810
  %v5812 = vpop.f32.mrf.mxu0
  %v5813 = vpop.f32.mrf.mxu0
  %v5814 = vadd.f32 %v5745, %v5813
  %v5815 = vpop.f32.mrf.mxu0
  %5816 = vmatprep.mubr.bf16.mxu0 0
  %5817 = vmatmul.mubr.bf16.gmra.mxu0 %v5769
  %v5818 = vpop.f32.mrf.mxu0
  %v5819 = vadd.f32 %v5746, %v5818
  %v5820 = vpop.f32.mrf.mxu0
  %v5821 = vpop.f32.mrf.mxu0
  %v5822 = vadd.f32 %v5747, %v5821
  %v5823 = vpop.f32.mrf.mxu0
  %5824 = vmatprep.mubr.bf16.mxu0 0
  %5825 = vmatmul.mubr.bf16.gmra.mxu0 %v5770
  %v5826 = vpop.f32.mrf.mxu0
  %v5827 = vadd.f32 %v5748, %v5826
  %v5828 = vpop.f32.mrf.mxu0
  %v5829 = vpop.f32.mrf.mxu0
  %v5830 = vadd.f32 %v5749, %v5829
  %v5831 = vpop.f32.mrf.mxu0
  %5832 = vmatprep.mubr.bf16.mxu0 0
  %5833 = vmatmul.mubr.bf16.gmra.mxu0 %v5771
  %v5834 = vpop.f32.mrf.mxu0
  %v5835 = vadd.f32 %v5750, %v5834
  %v5836 = vpop.f32.mrf.mxu0
  %v5837 = vpop.f32.mrf.mxu0
  %v5838 = vadd.f32 %v5751, %v5837
  %v5839 = vpop.f32.mrf.mxu0
  %5840 = vdwg.mxu0
  %vm5841 = vcmask 7168
  %v5842 = vsel %vm5841, %v5827, 0.0
  %v5843 = vsel %vm5841, %v5830, 0.0
  %v5844 = vadd.f32 %v5842, %v5843
  %v5845 = vsel %vm5841, %v5835, 0.0
  %v5846 = vadd.f32 %v5844, %v5845
  %v5847 = vsel %vm5841, %v5838, 0.0
  %v5848 = vadd.f32 %v5846, %v5847
  %5849 = vadd.xlane.f32.xlu0 %v5848
  %v5850 = vpop.xlane.xlu0 %5849
  %v5851 = vrot.slane %v5850, 4
  %v5852 = vadd.f32 %v5850, %v5851
  %v5853 = vrot.slane %v5852, 2
  %v5854 = vadd.f32 %v5852, %v5853
  %v5855 = vrot.slane %v5854, 1
  %v5856 = vadd.f32 %v5854, %v5855
  %s5857 = vtos %v5856
  %s5858 = smul.f32 %s5857, 0.03125
  %v5859 = vmul.f32 %v5827, %v5827
  %v5860 = vmul.f32 %v5830, %v5830
  %v5861 = vmul.f32 %v5835, %v5835
  %v5862 = vmul.f32 %v5838, %v5838
  %v5863 = vsel %vm5841, %v5859, 0.0
  %v5864 = vsel %vm5841, %v5860, 0.0
  %v5865 = vadd.f32 %v5863, %v5864
  %v5866 = vsel %vm5841, %v5861, 0.0
  %v5867 = vadd.f32 %v5865, %v5866
  %v5868 = vsel %vm5841, %v5862, 0.0
  %v5869 = vadd.f32 %v5867, %v5868
  %5870 = vadd.xlane.f32.xlu0 %v5869
  %v5871 = vpop.xlane.xlu0 %5870
  %v5872 = vrot.slane %v5871, 4
  %v5873 = vadd.f32 %v5871, %v5872
  %v5874 = vrot.slane %v5873, 2
  %v5875 = vadd.f32 %v5873, %v5874
  %v5876 = vrot.slane %v5875, 1
  %v5877 = vadd.f32 %v5875, %v5876
  %s5878 = vtos %v5877
  %s5879 = smul.f32 %s5878, 0.03125
  %s5880 = smul.f32 %s5858, %s5858
  %s5881 = ssub.f32 %s5879, %s5880
  %s5882 = smax.f32 %s5881, 0.0
  %v5883 = vstv %s5858
  %v5884 = vsub.f32 %v5827, %v5883
  %v5885 = vsub.f32 %v5830, %v5883
  %v5886 = vsub.f32 %v5835, %v5883
  %v5887 = vsub.f32 %v5838, %v5883
  %s5888 = sadd.f32 %s5882, 1e-05
  %v5889 = vstv %s5888
  %v5890 = vrsqrt.pop %v5889
  %s5891 = vtos %v5890
  %v5892 = vld [vmem:[%s3 + $0x610] sm:$0xff]
  %v5893 = vld [vmem:[%s3 + $0x618] sm:$0xff]
  %v5894 = vld [vmem:[%s3 + $0x620] sm:$0xff]
  %v5895 = vld [vmem:[%s3 + $0x628] sm:$0xff]
  %v5896 = vstv %s5891
  %v5897 = vmul.f32 %v5896, %v5892
  %v5898 = vmul.f32 %v5896, %v5893
  %v5899 = vmul.f32 %v5896, %v5894
  %v5900 = vmul.f32 %v5896, %v5895
  %v5901 = vmul.f32 %v5884, %v5897
  %v5902 = vmul.f32 %v5885, %v5898
  %v5903 = vmul.f32 %v5886, %v5899
  %v5904 = vmul.f32 %v5887, %v5900
  %v5905 = vld [vmem:[%s3 + $0x630] sm:$0xff]
  %v5906 = vld [vmem:[%s3 + $0x638] sm:$0xff]
  %v5907 = vld [vmem:[%s3 + $0x640] sm:$0xff]
  %v5908 = vld [vmem:[%s3 + $0x648] sm:$0xff]
  %v5909 = vadd.f32 %v5901, %v5905
  %v5910 = vadd.f32 %v5902, %v5906
  %v5911 = vadd.f32 %v5903, %v5907
  %v5912 = vadd.f32 %v5904, %v5908
  %vm5913 = vcmp.ge.f32.partialorder %v5909, 0.0
  %vm5914 = vcmp.ge.f32.partialorder %v5910, 0.0
  %vm5915 = vcmp.ge.f32.partialorder %v5911, 0.0
  %vm5916 = vcmp.ge.f32.partialorder %v5912, 0.0
  %v5917 = vmul.f32 %v5909, 0.01
  %v5918 = vmul.f32 %v5910, 0.01
  %v5919 = vmul.f32 %v5911, 0.01
  %v5920 = vmul.f32 %v5912, 0.01
  %v5921 = vsel %vm5913, %v5909, %v5917
  %v5922 = vsel %vm5914, %v5910, %v5918
  %v5923 = vsel %vm5915, %v5911, %v5919
  %v5924 = vsel %vm5916, %v5912, %v5920
  %v5925 = vpack.c.bf16 0.0, 0.0
  %v5926 = vpack.c.bf16 %v5922, %v5921
  %v5927 = vpack.c.bf16 %v5924, %v5923
  %v5928 = vld [vmem:[%s2 + $0x20] sm:$0xf]
  %v5929 = vld [vmem:[%s2 + $0x24] sm:$0xf]
  %v5930 = vld [vmem:[%s2 + $0x28] sm:$0xf]
  %v5931 = vld [vmem:[%s2 + $0x2c] sm:$0xf]
  %v5932 = vld [vmem:[%s3 + $0x650] sm:$0xff]
  %v5933 = vld [vmem:[%s3 + $0x658] sm:$0xff]
  %v5934 = vld [vmem:[%s3 + $0x660] sm:$0xff]
  %v5935 = vld [vmem:[%s3 + $0x668] sm:$0xff]
  %v5940 = vunpack.c.l.b16 %v5928
  %v5941 = vunpack.c.l.b16 %v5929
  %v5942 = vunpack.c.l.b16 %v5930
  %v5943 = vunpack.c.l.b16 %v5931
  %v5944 = vpack.c.b16 %v5941, %v5940
  %v5945 = vpack.c.b16 %v5943, %v5942
  %v5947 = vsel %vm4356, %v5944, 0
  %v5950 = vsel %vm4356, %v5945, 0
  %5952 = vmatprep.subr.bf16.mxu0 0
  %5953 = vmatpush1.bf16.msra.mxu0 0
  %5954 = vmatprep.subr.bf16.mxu0 0
  %5955 = vmatpush1.bf16.msra.mxu0 0
  %5956 = vmatprep.subr.bf16.mxu0 0
  %5957 = vmatpush1.bf16.msra.mxu0 %v5925
  %5958 = vmatprep.subr.bf16.mxu0 0
  %5959 = vmatpush1.bf16.msra.mxu0 %v5925
  %5960 = vmatprep.subr.bf16.mxu0 0
  %5961 = vmatpush1.bf16.msra.mxu0 %v5927
  %5962 = vmatprep.subr.bf16.mxu0 0
  %5963 = vmatpush1.bf16.msra.mxu0 %v5926
  %5964 = vmatprep.subr.bf16.mxu0 0
  %5965 = vmatpush1.bf16.msra.mxu0 %v5925
  %5966 = vmatprep.subr.bf16.mxu0 0
  %5967 = vmatpush1.bf16.msra.mxu0 %v5925
  %5968 = vmatprep.subr.bf16.mxu0 0
  %5969 = vmatpush2.bf16.msra.mxu0 0
  %5970 = vmatprep.subr.bf16.mxu0 0
  %5971 = vmatpush2.bf16.msra.mxu0 0
  %5972 = vmatprep.subr.bf16.mxu0 0
  %5973 = vmatpush2.bf16.msra.mxu0 0
  %5974 = vmatprep.subr.bf16.mxu0 0
  %5975 = vmatpush2.bf16.msra.mxu0 0
  %5976 = vmatprep.subr.bf16.mxu0 0
  %5977 = vmatpush2.bf16.msra.mxu0 0
  %5978 = vmatprep.subr.bf16.mxu0 0
  %5979 = vmatpush2.bf16.msra.mxu0 0
  %5980 = vmatprep.subr.bf16.mxu0 0
  %5981 = vmatpush2.bf16.msra.mxu0 0
  %5982 = vmatprep.subr.bf16.mxu0 0
  %5983 = vmatpush2.bf16.msra.mxu0 0
  %5984 = vmatprep.mubr.bf16.mxu0 0
  %5985 = vmatmul.mubr.bf16.gmra.mxu0 %v5947
  %v5986 = vpop.f32.mrf.mxu0
  %v5987 = vadd.f32 %v5932, %v5986
  %v5988 = vpop.f32.mrf.mxu0
  %v5989 = vpop.f32.mrf.mxu0
  %v5990 = vadd.f32 %v5933, %v5989
  %v5991 = vpop.f32.mrf.mxu0
  %5992 = vmatprep.mubr.bf16.mxu0 0
  %5993 = vmatmul.mubr.bf16.gmra.mxu0 %v5950
  %v5994 = vpop.f32.mrf.mxu0
  %v5995 = vadd.f32 %v5934, %v5994
  %v5996 = vpop.f32.mrf.mxu0
  %v5997 = vpop.f32.mrf.mxu0
  %v5998 = vadd.f32 %v5935, %v5997
  %v5999 = vpop.f32.mrf.mxu0
  %6000 = vdwg.mxu0
  %v6001 = vadd.f32 %v5811, %v5987
  %v6002 = vadd.f32 %v5814, %v5990
  %v6003 = vadd.f32 %v5819, %v5995
  %v6004 = vadd.f32 %v5822, %v5998
  %v6005 = vsel %vm5841, %v6001, 0.0
  %v6006 = vsel %vm5841, %v6002, 0.0
  %v6007 = vadd.f32 %v6005, %v6006
  %v6008 = vsel %vm5841, %v6003, 0.0
  %v6009 = vadd.f32 %v6007, %v6008
  %v6010 = vsel %vm5841, %v6004, 0.0
  %v6011 = vadd.f32 %v6009, %v6010
  %6012 = vadd.xlane.f32.xlu0 %v6011
  %v6013 = vpop.xlane.xlu0 %6012
  %v6014 = vrot.slane %v6013, 4
  %v6015 = vadd.f32 %v6013, %v6014
  %v6016 = vrot.slane %v6015, 2
  %v6017 = vadd.f32 %v6015, %v6016
  %v6018 = vrot.slane %v6017, 1
  %v6019 = vadd.f32 %v6017, %v6018
  %s6020 = vtos %v6019
  %s6021 = smul.f32 %s6020, 0.03125
  %v6022 = vmul.f32 %v6001, %v6001
  %v6023 = vmul.f32 %v6002, %v6002
  %v6024 = vmul.f32 %v6003, %v6003
  %v6025 = vmul.f32 %v6004, %v6004
  %v6026 = vsel %vm5841, %v6022, 0.0
  %v6027 = vsel %vm5841, %v6023, 0.0
  %v6028 = vadd.f32 %v6026, %v6027
  %v6029 = vsel %vm5841, %v6024, 0.0
  %v6030 = vadd.f32 %v6028, %v6029
  %v6031 = vsel %vm5841, %v6025, 0.0
  %v6032 = vadd.f32 %v6030, %v6031
  %6033 = vadd.xlane.f32.xlu0 %v6032
  %v6034 = vpop.xlane.xlu0 %6033
  %v6035 = vrot.slane %v6034, 4
  %v6036 = vadd.f32 %v6034, %v6035
  %v6037 = vrot.slane %v6036, 2
  %v6038 = vadd.f32 %v6036, %v6037
  %v6039 = vrot.slane %v6038, 1
  %v6040 = vadd.f32 %v6038, %v6039
  %s6041 = vtos %v6040
  %s6042 = smul.f32 %s6041, 0.03125
  %s6043 = smul.f32 %s6021, %s6021
  %s6044 = ssub.f32 %s6042, %s6043
  %s6045 = smax.f32 %s6044, 0.0
  %v6046 = vstv %s6021
  %v6047 = vsub.f32 %v6001, %v6046
  %v6048 = vsub.f32 %v6002, %v6046
  %v6049 = vsub.f32 %v6003, %v6046
  %v6050 = vsub.f32 %v6004, %v6046
  %s6051 = sadd.f32 %s6045, 1e-05
  %v6052 = vstv %s6051
  %v6053 = vrsqrt.pop %v6052
  %s6054 = vtos %v6053
  %v6055 = vld [vmem:[%s3 + $0x670] sm:$0xff]
  %v6056 = vld [vmem:[%s3 + $0x678] sm:$0xff]
  %v6057 = vld [vmem:[%s3 + $0x680] sm:$0xff]
  %v6058 = vld [vmem:[%s3 + $0x688] sm:$0xff]
  %v6059 = vstv %s6054
  %v6060 = vmul.f32 %v6059, %v6055
  %v6061 = vmul.f32 %v6059, %v6056
  %v6062 = vmul.f32 %v6059, %v6057
  %v6063 = vmul.f32 %v6059, %v6058
  %v6064 = vmul.f32 %v6047, %v6060
  %v6065 = vmul.f32 %v6048, %v6061
  %v6066 = vmul.f32 %v6049, %v6062
  %v6067 = vmul.f32 %v6050, %v6063
  %v6068 = vld [vmem:[%s3 + $0x690] sm:$0xff]
  %v6069 = vld [vmem:[%s3 + $0x698] sm:$0xff]
  %v6070 = vld [vmem:[%s3 + $0x6a0] sm:$0xff]
  %v6071 = vld [vmem:[%s3 + $0x6a8] sm:$0xff]
  %v6072 = vadd.f32 %v6064, %v6068
  %v6073 = vadd.f32 %v6065, %v6069
  %v6074 = vadd.f32 %v6066, %v6070
  %v6075 = vadd.f32 %v6067, %v6071
  %vm6076 = vcmp.ge.f32.partialorder %v6072, 0.0
  %vm6077 = vcmp.ge.f32.partialorder %v6073, 0.0
  %vm6078 = vcmp.ge.f32.partialorder %v6074, 0.0
  %vm6079 = vcmp.ge.f32.partialorder %v6075, 0.0
  %v6080 = vmul.f32 %v6072, 0.01
  %v6081 = vmul.f32 %v6073, 0.01
  %v6082 = vmul.f32 %v6074, 0.01
  %v6083 = vmul.f32 %v6075, 0.01
  %v6084 = vsel %vm6076, %v6072, %v6080
  %v6085 = vsel %vm6077, %v6073, %v6081
  %v6086 = vsel %vm6078, %v6074, %v6082
  %v6087 = vsel %vm6079, %v6075, %v6083
  %6089 = vset.pattern.permute.xlu0 0
  %6090 = vperm.xlu0 %6089, %v6084
  %v6091 = vpop.permute.xlu0 %6090
  %6094 = vset.pattern.permute.xlu0 0
  %6095 = vperm.xlu0 %6094, %v6085
  %v6096 = vpop.permute.xlu0 %6095
  %6099 = vset.pattern.permute.xlu0 0
  %6100 = vperm.xlu0 %6099, %v6086
  %v6101 = vpop.permute.xlu0 %6100
  %6104 = vset.pattern.permute.xlu0 0
  %6105 = vperm.xlu0 %6104, %v6087
  %v6106 = vpop.permute.xlu0 %6105
  %v6108 = vsel %vm5046, %v6091, 0.0
  %v6109 = vsel %vm5046, %v6096, 0.0
  %v6110 = vadd.f32 %v6108, %v6109
  %v6111 = vsel %vm5046, %v6101, 0.0
  %v6112 = vadd.f32 %v6110, %v6111
  %v6113 = vsel %vm5046, %v6106, 0.0
  %v6114 = vadd.f32 %v6112, %v6113
  %6115 = vadd.xlane.f32.xlu0 %v6114
  %v6116 = vpop.xlane.xlu0 %6115
  %v6117 = vrot.slane %v6116, 4
  %v6118 = vadd.f32 %v6116, %v6117
  %v6119 = vrot.slane %v6118, 2
  %v6120 = vadd.f32 %v6118, %v6119
  %v6121 = vrot.slane %v6120, 1
  %v6122 = vadd.f32 %v6120, %v6121
  %s6123 = vtos %v6122
  %s6124 = smul.f32 %s6123, 0.0078125
  %v6125 = vmul.f32 %v6091, %v6091
  %v6126 = vmul.f32 %v6096, %v6096
  %v6127 = vmul.f32 %v6101, %v6101
  %v6128 = vmul.f32 %v6106, %v6106
  %v6129 = vsel %vm5046, %v6125, 0.0
  %v6130 = vsel %vm5046, %v6126, 0.0
  %v6131 = vadd.f32 %v6129, %v6130
  %v6132 = vsel %vm5046, %v6127, 0.0
  %v6133 = vadd.f32 %v6131, %v6132
  %v6134 = vsel %vm5046, %v6128, 0.0
  %v6135 = vadd.f32 %v6133, %v6134
  %6136 = vadd.xlane.f32.xlu0 %v6135
  %v6137 = vpop.xlane.xlu0 %6136
  %v6138 = vrot.slane %v6137, 4
  %v6139 = vadd.f32 %v6137, %v6138
  %v6140 = vrot.slane %v6139, 2
  %v6141 = vadd.f32 %v6139, %v6140
  %v6142 = vrot.slane %v6141, 1
  %v6143 = vadd.f32 %v6141, %v6142
  %s6144 = vtos %v6143
  %s6145 = smul.f32 %s6144, 0.0078125
  %s6146 = smul.f32 %s6124, %s6124
  %s6147 = ssub.f32 %s6145, %s6146
  %s6148 = smax.f32 %s6147, 0.0
  %v6149 = vstv %s6124
  %v6150 = vsub.f32 %v6091, %v6149
  %v6151 = vsub.f32 %v6096, %v6149
  %v6152 = vsub.f32 %v6101, %v6149
  %v6153 = vsub.f32 %v6106, %v6149
  %s6154 = sadd.f32 %s6148, 1e-05
  %v6155 = vstv %s6154
  %v6156 = vrsqrt.pop %v6155
  %s6157 = vtos %v6156
  %v6158 = vld [vmem:[%s3 + $0x970] sm:$0xff]
  %v6159 = vld [vmem:[%s3 + $0x978] sm:$0xff]
  %v6160 = vld [vmem:[%s3 + $0x980] sm:$0xff]
  %v6161 = vld [vmem:[%s3 + $0x988] sm:$0xff]
  %v6162 = vstv %s6157
  %v6163 = vmul.f32 %v6162, %v6158
  %v6164 = vmul.f32 %v6162, %v6159
  %v6165 = vmul.f32 %v6162, %v6160
  %v6166 = vmul.f32 %v6162, %v6161
  %6168 = vset.pattern.permute.xlu0 0
  %6169 = vperm.xlu0 %6168, %v6163
  %v6170 = vpop.permute.xlu0 %6169
  %6173 = vset.pattern.permute.xlu0 0
  %6174 = vperm.xlu0 %6173, %v6164
  %v6175 = vpop.permute.xlu0 %6174
  %6178 = vset.pattern.permute.xlu0 0
  %6179 = vperm.xlu0 %6178, %v6165
  %v6180 = vpop.permute.xlu0 %6179
  %6183 = vset.pattern.permute.xlu0 0
  %6184 = vperm.xlu0 %6183, %v6166
  %v6185 = vpop.permute.xlu0 %6184
  %v6187 = vmul.f32 %v6150, %v6170
  %v6188 = vmul.f32 %v6151, %v6175
  %v6189 = vmul.f32 %v6152, %v6180
  %v6190 = vmul.f32 %v6153, %v6185
  %v6191 = vld [vmem:[%s3 + $0x990] sm:$0xff]
  %v6192 = vld [vmem:[%s3 + $0x998] sm:$0xff]
  %v6193 = vld [vmem:[%s3 + $0x9a0] sm:$0xff]
  %v6194 = vld [vmem:[%s3 + $0x9a8] sm:$0xff]
  %6196 = vset.pattern.permute.xlu0 0
  %6197 = vperm.xlu0 %6196, %v6191
  %v6198 = vpop.permute.xlu0 %6197
  %6201 = vset.pattern.permute.xlu0 0
  %6202 = vperm.xlu0 %6201, %v6192
  %v6203 = vpop.permute.xlu0 %6202
  %6206 = vset.pattern.permute.xlu0 0
  %6207 = vperm.xlu0 %6206, %v6193
  %v6208 = vpop.permute.xlu0 %6207
  %6211 = vset.pattern.permute.xlu0 0
  %6212 = vperm.xlu0 %6211, %v6194
  %v6213 = vpop.permute.xlu0 %6212
  %v6215 = vadd.f32 %v6187, %v6198
  %v6216 = vadd.f32 %v6188, %v6203
  %v6217 = vadd.f32 %v6189, %v6208
  %v6218 = vadd.f32 %v6190, %v6213
  %v6219 = vsel %vm5046, %v5504, 0.0
  %v6220 = vsel %vm5046, %v5505, 0.0
  %v6221 = vadd.f32 %v6219, %v6220
  %v6222 = vsel %vm5046, %v5506, 0.0
  %v6223 = vadd.f32 %v6221, %v6222
  %v6224 = vsel %vm5046, %v5507, 0.0
  %v6225 = vadd.f32 %v6223, %v6224
  %6226 = vadd.xlane.f32.xlu0 %v6225
  %v6227 = vpop.xlane.xlu0 %6226
  %v6228 = vrot.slane %v6227, 4
  %v6229 = vadd.f32 %v6227, %v6228
  %v6230 = vrot.slane %v6229, 2
  %v6231 = vadd.f32 %v6229, %v6230
  %v6232 = vrot.slane %v6231, 1
  %v6233 = vadd.f32 %v6231, %v6232
  %s6234 = vtos %v6233
  %s6235 = smul.f32 %s6234, 0.0078125
  %v6236 = vmul.f32 %v5504, %v5504
  %v6237 = vmul.f32 %v5505, %v5505
  %v6238 = vmul.f32 %v5506, %v5506
  %v6239 = vmul.f32 %v5507, %v5507
  %v6240 = vsel %vm5046, %v6236, 0.0
  %v6241 = vsel %vm5046, %v6237, 0.0
  %v6242 = vadd.f32 %v6240, %v6241
  %v6243 = vsel %vm5046, %v6238, 0.0
  %v6244 = vadd.f32 %v6242, %v6243
  %v6245 = vsel %vm5046, %v6239, 0.0
  %v6246 = vadd.f32 %v6244, %v6245
  %6247 = vadd.xlane.f32.xlu0 %v6246
  %v6248 = vpop.xlane.xlu0 %6247
  %v6249 = vrot.slane %v6248, 4
  %v6250 = vadd.f32 %v6248, %v6249
  %v6251 = vrot.slane %v6250, 2
  %v6252 = vadd.f32 %v6250, %v6251
  %v6253 = vrot.slane %v6252, 1
  %v6254 = vadd.f32 %v6252, %v6253
  %s6255 = vtos %v6254
  %s6256 = smul.f32 %s6255, 0.0078125
  %s6257 = smul.f32 %s6235, %s6235
  %s6258 = ssub.f32 %s6256, %s6257
  %s6259 = smax.f32 %s6258, 0.0
  %v6260 = vstv %s6235
  %v6261 = vsub.f32 %v5504, %v6260
  %v6262 = vsub.f32 %v5505, %v6260
  %v6263 = vsub.f32 %v5506, %v6260
  %v6264 = vsub.f32 %v5507, %v6260
  %s6265 = sadd.f32 %s6259, 1e-05
  %v6266 = vstv %s6265
  %v6267 = vrsqrt.pop %v6266
  %s6268 = vtos %v6267
  %v6269 = vld [vmem:[%s3 + $0x9b0] sm:$0xff]
  %v6270 = vld [vmem:[%s3 + $0x9b8] sm:$0xff]
  %v6271 = vld [vmem:[%s3 + $0x9c0] sm:$0xff]
  %v6272 = vld [vmem:[%s3 + $0x9c8] sm:$0xff]
  %v6273 = vstv %s6268
  %v6274 = vmul.f32 %v6273, %v6269
  %v6275 = vmul.f32 %v6273, %v6270
  %v6276 = vmul.f32 %v6273, %v6271
  %v6277 = vmul.f32 %v6273, %v6272
  %6279 = vset.pattern.permute.xlu0 0
  %6280 = vperm.xlu0 %6279, %v6274
  %v6281 = vpop.permute.xlu0 %6280
  %6284 = vset.pattern.permute.xlu0 0
  %6285 = vperm.xlu0 %6284, %v6275
  %v6286 = vpop.permute.xlu0 %6285
  %6289 = vset.pattern.permute.xlu0 0
  %6290 = vperm.xlu0 %6289, %v6276
  %v6291 = vpop.permute.xlu0 %6290
  %6294 = vset.pattern.permute.xlu0 0
  %6295 = vperm.xlu0 %6294, %v6277
  %v6296 = vpop.permute.xlu0 %6295
  %v6298 = vmul.f32 %v6261, %v6281
  %v6299 = vmul.f32 %v6262, %v6286
  %v6300 = vmul.f32 %v6263, %v6291
  %v6301 = vmul.f32 %v6264, %v6296
  %v6302 = vld [vmem:[%s3 + $0x9d0] sm:$0xff]
  %v6303 = vld [vmem:[%s3 + $0x9d8] sm:$0xff]
  %v6304 = vld [vmem:[%s3 + $0x9e0] sm:$0xff]
  %v6305 = vld [vmem:[%s3 + $0x9e8] sm:$0xff]
  %6307 = vset.pattern.permute.xlu0 0
  %6308 = vperm.xlu0 %6307, %v6302
  %v6309 = vpop.permute.xlu0 %6308
  %6312 = vset.pattern.permute.xlu0 0
  %6313 = vperm.xlu0 %6312, %v6303
  %v6314 = vpop.permute.xlu0 %6313
  %6317 = vset.pattern.permute.xlu0 0
  %6318 = vperm.xlu0 %6317, %v6304
  %v6319 = vpop.permute.xlu0 %6318
  %6322 = vset.pattern.permute.xlu0 0
  %6323 = vperm.xlu0 %6322, %v6305
  %v6324 = vpop.permute.xlu0 %6323
  %v6326 = vadd.f32 %v6298, %v6309
  %v6327 = vadd.f32 %v6299, %v6314
  %v6328 = vadd.f32 %v6300, %v6319
  %v6329 = vadd.f32 %v6301, %v6324
  %v6330 = vpack.c.bf16 %v6216, %v6215
  %v6331 = vpack.c.bf16 %v6218, %v6217
  %v6332 = vpack.c.bf16 %v6327, %v6326
  %v6333 = vpack.c.bf16 %v6329, %v6328
  %v6334 = vld [vmem:[%s2 + $0xc0] sm:$0xf]
  %v6335 = vld [vmem:[%s2 + $0xc4] sm:$0xf]
  %v6336 = vld [vmem:[%s2 + $0xc8] sm:$0xf]
  %v6337 = vld [vmem:[%s2 + $0xcc] sm:$0xf]
  %v6338 = vld [vmem:[%s3 + $0x950] sm:$0xff]
  %v6339 = vld [vmem:[%s3 + $0x958] sm:$0xff]
  %v6340 = vld [vmem:[%s3 + $0x960] sm:$0xff]
  %v6341 = vld [vmem:[%s3 + $0x968] sm:$0xff]
  %6343 = vset.pattern.permute.xlu0 0
  %6344 = vperm.xlu0 %6343, %v6338
  %v6345 = vpop.permute.xlu0 %6344
  %6348 = vset.pattern.permute.xlu0 0
  %6349 = vperm.xlu0 %6348, %v6339
  %v6350 = vpop.permute.xlu0 %6349
  %6353 = vset.pattern.permute.xlu0 0
  %6354 = vperm.xlu0 %6353, %v6340
  %v6355 = vpop.permute.xlu0 %6354
  %6358 = vset.pattern.permute.xlu0 0
  %6359 = vperm.xlu0 %6358, %v6341
  %v6360 = vpop.permute.xlu0 %6359
  %v6366 = vunpack.c.l.b16 %v6334
  %v6367 = vunpack.c.l.b16 %v6335
  %v6368 = vunpack.c.l.b16 %v6336
  %v6369 = vunpack.c.l.b16 %v6337
  %v6370 = vpack.c.b16 %v6367, %v6366
  %v6371 = vpack.c.b16 %v6369, %v6368
  %vm6372 = vcmask 523264
  %v6374 = vsel %vm6372, %v6370, 0
  %v6377 = vsel %vm6372, %v6371, 0
  %6379 = vmatprep.subr.bf16.mxu0 0
  %6380 = vmatpush1.bf16.msra.mxu0 0
  %6381 = vmatprep.subr.bf16.mxu0 0
  %6382 = vmatpush1.bf16.msra.mxu0 0
  %6383 = vmatprep.subr.bf16.mxu0 0
  %6384 = vmatpush1.bf16.msra.mxu0 0
  %6385 = vmatprep.subr.bf16.mxu0 0
  %6386 = vmatpush1.bf16.msra.mxu0 0
  %6387 = vmatprep.subr.bf16.mxu0 0
  %6388 = vmatpush1.bf16.msra.mxu0 %v6333
  %6389 = vmatprep.subr.bf16.mxu0 0
  %6390 = vmatpush1.bf16.msra.mxu0 %v6332
  %6391 = vmatprep.subr.bf16.mxu0 0
  %6392 = vmatpush1.bf16.msra.mxu0 %v6331
  %6393 = vmatprep.subr.bf16.mxu0 0
  %6394 = vmatpush1.bf16.msra.mxu0 %v6330
  %6395 = vmatprep.subr.bf16.mxu0 0
  %6396 = vmatpush2.bf16.msra.mxu0 0
  %6397 = vmatprep.subr.bf16.mxu0 0
  %6398 = vmatpush2.bf16.msra.mxu0 0
  %6399 = vmatprep.subr.bf16.mxu0 0
  %6400 = vmatpush2.bf16.msra.mxu0 0
  %6401 = vmatprep.subr.bf16.mxu0 0
  %6402 = vmatpush2.bf16.msra.mxu0 0
  %6403 = vmatprep.subr.bf16.mxu0 0
  %6404 = vmatpush2.bf16.msra.mxu0 0
  %6405 = vmatprep.subr.bf16.mxu0 0
  %6406 = vmatpush2.bf16.msra.mxu0 0
  %6407 = vmatprep.subr.bf16.mxu0 0
  %6408 = vmatpush2.bf16.msra.mxu0 0
  %6409 = vmatprep.subr.bf16.mxu0 0
  %6410 = vmatpush2.bf16.msra.mxu0 0
  %6411 = vmatprep.mubr.bf16.mxu0 0
  %6412 = vmatmul.mubr.bf16.gmra.mxu0 %v6374
  %v6413 = vpop.f32.mrf.mxu0
  %v6414 = vadd.f32 %v6345, %v6413
  %v6415 = vpop.f32.mrf.mxu0
  %v6416 = vpop.f32.mrf.mxu0
  %v6417 = vadd.f32 %v6350, %v6416
  %v6418 = vpop.f32.mrf.mxu0
  %6419 = vmatprep.mubr.bf16.mxu0 0
  %6420 = vmatmul.mubr.bf16.gmra.mxu0 %v6377
  %v6421 = vpop.f32.mrf.mxu0
  %v6422 = vadd.f32 %v6355, %v6421
  %v6423 = vpop.f32.mrf.mxu0
  %v6424 = vpop.f32.mrf.mxu0
  %v6425 = vadd.f32 %v6360, %v6424
  %v6426 = vpop.f32.mrf.mxu0
  %6427 = vdwg.mxu0
  %v6428 = vpack.c.bf16 %v6417, %v6414
  %v6429 = vpack.c.bf16 %v6425, %v6422
  %v6431 = vsel %vm5046, %v6428, 0
  %v6434 = vsel %vm5046, %v6429, 0
  %6436 = vmatprep.subr.bf16.mxu0 0
  %6437 = vmatpush1.bf16.msra.mxu0 0
  %6438 = vmatprep.subr.bf16.mxu0 0
  %6439 = vmatpush1.bf16.msra.mxu0 0
  %6440 = vmatprep.subr.bf16.mxu0 0
  %6441 = vmatpush1.bf16.msra.mxu0 0
  %6442 = vmatprep.subr.bf16.mxu0 0
  %6443 = vmatpush1.bf16.msra.mxu0 0
  %6444 = vmatprep.subr.bf16.mxu0 0
  %6445 = vmatpush1.bf16.msra.mxu0 0
  %6446 = vmatprep.subr.bf16.mxu0 0
  %6447 = vmatpush1.bf16.msra.mxu0 0
  %6448 = vmatprep.subr.bf16.mxu0 0
  %6449 = vmatpush1.bf16.msra.mxu0 0
  %6450 = vmatprep.subr.bf16.mxu0 0
  %6451 = vmatpush1.bf16.msra.mxu0 %v5180
  %6452 = vmatprep.subr.bf16.mxu0 0
  %6453 = vmatpush2.bf16.msra.mxu0 0
  %6454 = vmatprep.subr.bf16.mxu0 0
  %6455 = vmatpush2.bf16.msra.mxu0 0
  %6456 = vmatprep.subr.bf16.mxu0 0
  %6457 = vmatpush2.bf16.msra.mxu0 0
  %6458 = vmatprep.subr.bf16.mxu0 0
  %6459 = vmatpush2.bf16.msra.mxu0 0
  %6460 = vmatprep.subr.bf16.mxu0 0
  %6461 = vmatpush2.bf16.msra.mxu0 0
  %6462 = vmatprep.subr.bf16.mxu0 0
  %6463 = vmatpush2.bf16.msra.mxu0 0
  %6464 = vmatprep.subr.bf16.mxu0 0
  %6465 = vmatpush2.bf16.msra.mxu0 0
  %6466 = vmatprep.subr.bf16.mxu0 0
  %6467 = vmatpush2.bf16.msra.mxu0 0
  %6468 = vmatprep.mubr.bf16.mxu0 0
  %6469 = vmatmul.mubr.bf16.gmra.mxu0 %v6431
  %v6470 = vpop.f32.mrf.mxu0
  %v6471 = vadd.f32 0.0, %v6470
  %v6472 = vpop.f32.mrf.mxu0
  %v6473 = vpop.f32.mrf.mxu0
  %v6474 = vadd.f32 0.0, %v6473
  %v6475 = vpop.f32.mrf.mxu0
  %6476 = vmatprep.mubr.bf16.mxu0 0
  %6477 = vmatmul.mubr.bf16.gmra.mxu0 %v6434
  %v6478 = vpop.f32.mrf.mxu0
  %v6479 = vadd.f32 0.0, %v6478
  %v6480 = vpop.f32.mrf.mxu0
  %v6481 = vpop.f32.mrf.mxu0
  %v6482 = vadd.f32 0.0, %v6481
  %v6483 = vpop.f32.mrf.mxu0
  %6484 = vdwg.mxu0
  %6485 = vmatprep.subr.bf16.mxu0 0
  %6486 = vmatpush1.bf16.msra.mxu0 0
  %6487 = vmatprep.subr.bf16.mxu0 0
  %6488 = vmatpush1.bf16.msra.mxu0 0
  %6489 = vmatprep.subr.bf16.mxu0 0
  %6490 = vmatpush1.bf16.msra.mxu0 0
  %6491 = vmatprep.subr.bf16.mxu0 0
  %6492 = vmatpush1.bf16.msra.mxu0 0
  %6493 = vmatprep.subr.bf16.mxu0 0
  %6494 = vmatpush1.bf16.msra.mxu0 0
  %6495 = vmatprep.subr.bf16.mxu0 0
  %6496 = vmatpush1.bf16.msra.mxu0 0
  %6497 = vmatprep.subr.bf16.mxu0 0
  %6498 = vmatpush1.bf16.msra.mxu0 0
  %6499 = vmatprep.subr.bf16.mxu0 0
  %6500 = vmatpush1.bf16.msra.mxu0 %v5233
  %6501 = vmatprep.subr.bf16.mxu0 0
  %6502 = vmatpush2.bf16.msra.mxu0 0
  %6503 = vmatprep.subr.bf16.mxu0 0
  %6504 = vmatpush2.bf16.msra.mxu0 0
  %6505 = vmatprep.subr.bf16.mxu0 0
  %6506 = vmatpush2.bf16.msra.mxu0 0
  %6507 = vmatprep.subr.bf16.mxu0 0
  %6508 = vmatpush2.bf16.msra.mxu0 0
  %6509 = vmatprep.subr.bf16.mxu0 0
  %6510 = vmatpush2.bf16.msra.mxu0 0
  %6511 = vmatprep.subr.bf16.mxu0 0
  %6512 = vmatpush2.bf16.msra.mxu0 0
  %6513 = vmatprep.subr.bf16.mxu0 0
  %6514 = vmatpush2.bf16.msra.mxu0 0
  %6515 = vmatprep.subr.bf16.mxu0 0
  %6516 = vmatpush2.bf16.msra.mxu0 0
  %6517 = vmatprep.mubr.bf16.mxu0 0
  %6518 = vmatmul.mubr.bf16.gmra.mxu0 %v6431
  %v6519 = vpop.f32.mrf.mxu0
  %v6520 = vadd.f32 0.0, %v6519
  %v6521 = vpop.f32.mrf.mxu0
  %v6522 = vpop.f32.mrf.mxu0
  %v6523 = vadd.f32 0.0, %v6522
  %v6524 = vpop.f32.mrf.mxu0
  %6525 = vmatprep.mubr.bf16.mxu0 0
  %6526 = vmatmul.mubr.bf16.gmra.mxu0 %v6434
  %v6527 = vpop.f32.mrf.mxu0
  %v6528 = vadd.f32 0.0, %v6527
  %v6529 = vpop.f32.mrf.mxu0
  %v6530 = vpop.f32.mrf.mxu0
  %v6531 = vadd.f32 0.0, %v6530
  %v6532 = vpop.f32.mrf.mxu0
  %6533 = vdwg.mxu0
  %v6534 = vpack.c.bf16 %v6474, %v6471
  %v6535 = vpack.c.bf16 %v6482, %v6479
  %v6536 = vpack.c.bf16 %v6523, %v6520
  %v6537 = vpack.c.bf16 %v6531, %v6528
  %v6538 = vld [vmem:[%s2 + $0x30] sm:$0xf]
  %v6539 = vld [vmem:[%s2 + $0x34] sm:$0xf]
  %v6540 = vld [vmem:[%s2 + $0x38] sm:$0xf]
  %v6541 = vld [vmem:[%s2 + $0x3c] sm:$0xf]
  %v6542 = vld [vmem:[%s2 + $0x40] sm:$0xf]
  %v6543 = vld [vmem:[%s2 + $0x44] sm:$0xf]
  %v6544 = vld [vmem:[%s2 + $0x48] sm:$0xf]
  %v6545 = vld [vmem:[%s2 + $0x4c] sm:$0xf]
  %v6546 = vld [vmem:[%s3 + $0x6b0] sm:$0xff]
  %v6547 = vld [vmem:[%s3 + $0x6b8] sm:$0xff]
  %v6548 = vld [vmem:[%s3 + $0x6c0] sm:$0xff]
  %v6549 = vld [vmem:[%s3 + $0x6c8] sm:$0xff]
  %v6550 = vld [vmem:[%s3 + $0x6d0] sm:$0xff]
  %v6551 = vld [vmem:[%s3 + $0x6d8] sm:$0xff]
  %v6552 = vld [vmem:[%s3 + $0x6e0] sm:$0xff]
  %v6553 = vld [vmem:[%s3 + $0x6e8] sm:$0xff]
  %6555 = vset.pattern.permute.xlu0 0
  %6556 = vperm.xlu0 %6555, %v6546
  %v6557 = vpop.permute.xlu0 %6556
  %6560 = vset.pattern.permute.xlu0 0
  %6561 = vperm.xlu0 %6560, %v6547
  %v6562 = vpop.permute.xlu0 %6561
  %6565 = vset.pattern.permute.xlu0 0
  %6566 = vperm.xlu0 %6565, %v6548
  %v6567 = vpop.permute.xlu0 %6566
  %6570 = vset.pattern.permute.xlu0 0
  %6571 = vperm.xlu0 %6570, %v6549
  %v6572 = vpop.permute.xlu0 %6571
  %6575 = vset.pattern.permute.xlu0 0
  %6576 = vperm.xlu0 %6575, %v6550
  %v6577 = vpop.permute.xlu0 %6576
  %6580 = vset.pattern.permute.xlu0 0
  %6581 = vperm.xlu0 %6580, %v6551
  %v6582 = vpop.permute.xlu0 %6581
  %6585 = vset.pattern.permute.xlu0 0
  %6586 = vperm.xlu0 %6585, %v6552
  %v6587 = vpop.permute.xlu0 %6586
  %6590 = vset.pattern.permute.xlu0 0
  %6591 = vperm.xlu0 %6590, %v6553
  %v6592 = vpop.permute.xlu0 %6591
  %v6602 = vunpack.c.l.b16 %v6538
  %v6603 = vunpack.c.l.b16 %v6539
  %v6604 = vunpack.c.l.b16 %v6540
  %v6605 = vunpack.c.l.b16 %v6541
  %v6606 = vunpack.c.l.b16 %v6542
  %v6607 = vunpack.c.l.b16 %v6543
  %v6608 = vunpack.c.l.b16 %v6544
  %v6609 = vunpack.c.l.b16 %v6545
  %v6610 = vpack.c.b16 %v6603, %v6602
  %v6611 = vpack.c.b16 %v6605, %v6604
  %v6612 = vpack.c.b16 %v6607, %v6606
  %v6613 = vpack.c.b16 %v6609, %v6608
  %v6615 = vsel %vm4356, %v6610, 0
  %v6618 = vsel %vm4356, %v6611, 0
  %v6621 = vsel %vm4356, %v6612, 0
  %v6624 = vsel %vm4356, %v6613, 0
  %6626 = vmatprep.subr.bf16.mxu0 0
  %6627 = vmatpush1.bf16.msra.mxu0 0
  %6628 = vmatprep.subr.bf16.mxu0 0
  %6629 = vmatpush1.bf16.msra.mxu0 0
  %6630 = vmatprep.subr.bf16.mxu0 0
  %6631 = vmatpush1.bf16.msra.mxu0 %v6537
  %6632 = vmatprep.subr.bf16.mxu0 0
  %6633 = vmatpush1.bf16.msra.mxu0 %v6536
  %6634 = vmatprep.subr.bf16.mxu0 0
  %6635 = vmatpush1.bf16.msra.mxu0 %v6429
  %6636 = vmatprep.subr.bf16.mxu0 0
  %6637 = vmatpush1.bf16.msra.mxu0 %v6428
  %6638 = vmatprep.subr.bf16.mxu0 0
  %6639 = vmatpush1.bf16.msra.mxu0 %v6535
  %6640 = vmatprep.subr.bf16.mxu0 0
  %6641 = vmatpush1.bf16.msra.mxu0 %v6534
  %6642 = vmatprep.subr.bf16.mxu0 0
  %6643 = vmatpush2.bf16.msra.mxu0 0
  %6644 = vmatprep.subr.bf16.mxu0 0
  %6645 = vmatpush2.bf16.msra.mxu0 0
  %6646 = vmatprep.subr.bf16.mxu0 0
  %6647 = vmatpush2.bf16.msra.mxu0 0
  %6648 = vmatprep.subr.bf16.mxu0 0
  %6649 = vmatpush2.bf16.msra.mxu0 0
  %6650 = vmatprep.subr.bf16.mxu0 0
  %6651 = vmatpush2.bf16.msra.mxu0 0
  %6652 = vmatprep.subr.bf16.mxu0 0
  %6653 = vmatpush2.bf16.msra.mxu0 0
  %6654 = vmatprep.subr.bf16.mxu0 0
  %6655 = vmatpush2.bf16.msra.mxu0 0
  %6656 = vmatprep.subr.bf16.mxu0 0
  %6657 = vmatpush2.bf16.msra.mxu0 0
  %6658 = vmatprep.mubr.bf16.mxu0 0
  %6659 = vmatmul.mubr.bf16.gmra.mxu0 %v6615
  %v6660 = vpop.f32.mrf.mxu0
  %v6661 = vadd.f32 %v6557, %v6660
  %v6662 = vpop.f32.mrf.mxu0
  %v6663 = vpop.f32.mrf.mxu0
  %v6664 = vadd.f32 %v6562, %v6663
  %v6665 = vpop.f32.mrf.mxu0
  %6666 = vmatprep.mubr.bf16.mxu0 0
  %6667 = vmatmul.mubr.bf16.gmra.mxu0 %v6618
  %v6668 = vpop.f32.mrf.mxu0
  %v6669 = vadd.f32 %v6567, %v6668
  %v6670 = vpop.f32.mrf.mxu0
  %v6671 = vpop.f32.mrf.mxu0
  %v6672 = vadd.f32 %v6572, %v6671
  %v6673 = vpop.f32.mrf.mxu0
  %6674 = vmatprep.mubr.bf16.mxu0 0
  %6675 = vmatmul.mubr.bf16.gmra.mxu0 %v6621
  %v6676 = vpop.f32.mrf.mxu0
  %v6677 = vadd.f32 %v6577, %v6676
  %v6678 = vpop.f32.mrf.mxu0
  %v6679 = vpop.f32.mrf.mxu0
  %v6680 = vadd.f32 %v6582, %v6679
  %v6681 = vpop.f32.mrf.mxu0
  %6682 = vmatprep.mubr.bf16.mxu0 0
  %6683 = vmatmul.mubr.bf16.gmra.mxu0 %v6624
  %v6684 = vpop.f32.mrf.mxu0
  %v6685 = vadd.f32 %v6587, %v6684
  %v6686 = vpop.f32.mrf.mxu0
  %v6687 = vpop.f32.mrf.mxu0
  %v6688 = vadd.f32 %v6592, %v6687
  %v6689 = vpop.f32.mrf.mxu0
  %6690 = vdwg.mxu0
  %v6691 = vsel %vm5046, %v6677, 0.0
  %v6692 = vsel %vm5046, %v6680, 0.0
  %v6693 = vadd.f32 %v6691, %v6692
  %v6694 = vsel %vm5046, %v6685, 0.0
  %v6695 = vadd.f32 %v6693, %v6694
  %v6696 = vsel %vm5046, %v6688, 0.0
  %v6697 = vadd.f32 %v6695, %v6696
  %6698 = vadd.xlane.f32.xlu0 %v6697
  %v6699 = vpop.xlane.xlu0 %6698
  %v6700 = vrot.slane %v6699, 4
  %v6701 = vadd.f32 %v6699, %v6700
  %v6702 = vrot.slane %v6701, 2
  %v6703 = vadd.f32 %v6701, %v6702
  %v6704 = vrot.slane %v6703, 1
  %v6705 = vadd.f32 %v6703, %v6704
  %s6706 = vtos %v6705
  %s6707 = smul.f32 %s6706, 0.0078125
  %v6708 = vmul.f32 %v6677, %v6677
  %v6709 = vmul.f32 %v6680, %v6680
  %v6710 = vmul.f32 %v6685, %v6685
  %v6711 = vmul.f32 %v6688, %v6688
  %v6712 = vsel %vm5046, %v6708, 0.0
  %v6713 = vsel %vm5046, %v6709, 0.0
  %v6714 = vadd.f32 %v6712, %v6713
  %v6715 = vsel %vm5046, %v6710, 0.0
  %v6716 = vadd.f32 %v6714, %v6715
  %v6717 = vsel %vm5046, %v6711, 0.0
  %v6718 = vadd.f32 %v6716, %v6717
  %6719 = vadd.xlane.f32.xlu0 %v6718
  %v6720 = vpop.xlane.xlu0 %6719
  %v6721 = vrot.slane %v6720, 4
  %v6722 = vadd.f32 %v6720, %v6721
  %v6723 = vrot.slane %v6722, 2
  %v6724 = vadd.f32 %v6722, %v6723
  %v6725 = vrot.slane %v6724, 1
  %v6726 = vadd.f32 %v6724, %v6725
  %s6727 = vtos %v6726
  %s6728 = smul.f32 %s6727, 0.0078125
  %s6729 = smul.f32 %s6707, %s6707
  %s6730 = ssub.f32 %s6728, %s6729
  %s6731 = smax.f32 %s6730, 0.0
  %v6732 = vstv %s6707
  %v6733 = vsub.f32 %v6677, %v6732
  %v6734 = vsub.f32 %v6680, %v6732
  %v6735 = vsub.f32 %v6685, %v6732
  %v6736 = vsub.f32 %v6688, %v6732
  %s6737 = sadd.f32 %s6731, 1e-05
  %v6738 = vstv %s6737
  %v6739 = vrsqrt.pop %v6738
  %s6740 = vtos %v6739
  %v6741 = vld [vmem:[%s3 + $0x6f0] sm:$0xff]
  %v6742 = vld [vmem:[%s3 + $0x6f8] sm:$0xff]
  %v6743 = vld [vmem:[%s3 + $0x700] sm:$0xff]
  %v6744 = vld [vmem:[%s3 + $0x708] sm:$0xff]
  %v6745 = vstv %s6740
  %v6746 = vmul.f32 %v6745, %v6741
  %v6747 = vmul.f32 %v6745, %v6742
  %v6748 = vmul.f32 %v6745, %v6743
  %v6749 = vmul.f32 %v6745, %v6744
  %6751 = vset.pattern.permute.xlu0 0
  %6752 = vperm.xlu0 %6751, %v6746
  %v6753 = vpop.permute.xlu0 %6752
  %6756 = vset.pattern.permute.xlu0 0
  %6757 = vperm.xlu0 %6756, %v6747
  %v6758 = vpop.permute.xlu0 %6757
  %6761 = vset.pattern.permute.xlu0 0
  %6762 = vperm.xlu0 %6761, %v6748
  %v6763 = vpop.permute.xlu0 %6762
  %6766 = vset.pattern.permute.xlu0 0
  %6767 = vperm.xlu0 %6766, %v6749
  %v6768 = vpop.permute.xlu0 %6767
  %v6770 = vmul.f32 %v6733, %v6753
  %v6771 = vmul.f32 %v6734, %v6758
  %v6772 = vmul.f32 %v6735, %v6763
  %v6773 = vmul.f32 %v6736, %v6768
  %v6774 = vld [vmem:[%s3 + $0x710] sm:$0xff]
  %v6775 = vld [vmem:[%s3 + $0x718] sm:$0xff]
  %v6776 = vld [vmem:[%s3 + $0x720] sm:$0xff]
  %v6777 = vld [vmem:[%s3 + $0x728] sm:$0xff]
  %6779 = vset.pattern.permute.xlu0 0
  %6780 = vperm.xlu0 %6779, %v6774
  %v6781 = vpop.permute.xlu0 %6780
  %6784 = vset.pattern.permute.xlu0 0
  %6785 = vperm.xlu0 %6784, %v6775
  %v6786 = vpop.permute.xlu0 %6785
  %6789 = vset.pattern.permute.xlu0 0
  %6790 = vperm.xlu0 %6789, %v6776
  %v6791 = vpop.permute.xlu0 %6790
  %6794 = vset.pattern.permute.xlu0 0
  %6795 = vperm.xlu0 %6794, %v6777
  %v6796 = vpop.permute.xlu0 %6795
  %v6798 = vadd.f32 %v6770, %v6781
  %v6799 = vadd.f32 %v6771, %v6786
  %v6800 = vadd.f32 %v6772, %v6791
  %v6801 = vadd.f32 %v6773, %v6796
  %vm6802 = vcmp.ge.f32.partialorder %v6798, 0.0
  %vm6803 = vcmp.ge.f32.partialorder %v6799, 0.0
  %vm6804 = vcmp.ge.f32.partialorder %v6800, 0.0
  %vm6805 = vcmp.ge.f32.partialorder %v6801, 0.0
  %v6806 = vmul.f32 %v6798, 0.01
  %v6807 = vmul.f32 %v6799, 0.01
  %v6808 = vmul.f32 %v6800, 0.01
  %v6809 = vmul.f32 %v6801, 0.01
  %v6810 = vsel %vm6802, %v6798, %v6806
  %v6811 = vsel %vm6803, %v6799, %v6807
  %v6812 = vsel %vm6804, %v6800, %v6808
  %v6813 = vsel %vm6805, %v6801, %v6809
  %v6814 = vpack.c.bf16 %v6811, %v6810
  %v6815 = vpack.c.bf16 %v6813, %v6812
  %v6817 = vsel %vm5046, %v6814, 0
  %v6820 = vsel %vm5046, %v6815, 0
  %6822 = vmatprep.subr.bf16.mxu0 0
  %6823 = vmatpush1.bf16.msra.mxu0 0
  %6824 = vmatprep.subr.bf16.mxu0 0
  %6825 = vmatpush1.bf16.msra.mxu0 0
  %6826 = vmatprep.subr.bf16.mxu0 0
  %6827 = vmatpush1.bf16.msra.mxu0 0
  %6828 = vmatprep.subr.bf16.mxu0 0
  %6829 = vmatpush1.bf16.msra.mxu0 0
  %6830 = vmatprep.subr.bf16.mxu0 0
  %6831 = vmatpush1.bf16.msra.mxu0 0
  %6832 = vmatprep.subr.bf16.mxu0 0
  %6833 = vmatpush1.bf16.msra.mxu0 0
  %6834 = vmatprep.subr.bf16.mxu0 0
  %6835 = vmatpush1.bf16.msra.mxu0 0
  %6836 = vmatprep.subr.bf16.mxu0 0
  %6837 = vmatpush1.bf16.msra.mxu0 %v5180
  %6838 = vmatprep.subr.bf16.mxu0 0
  %6839 = vmatpush2.bf16.msra.mxu0 0
  %6840 = vmatprep.subr.bf16.mxu0 0
  %6841 = vmatpush2.bf16.msra.mxu0 0
  %6842 = vmatprep.subr.bf16.mxu0 0
  %6843 = vmatpush2.bf16.msra.mxu0 0
  %6844 = vmatprep.subr.bf16.mxu0 0
  %6845 = vmatpush2.bf16.msra.mxu0 0
  %6846 = vmatprep.subr.bf16.mxu0 0
  %6847 = vmatpush2.bf16.msra.mxu0 0
  %6848 = vmatprep.subr.bf16.mxu0 0
  %6849 = vmatpush2.bf16.msra.mxu0 0
  %6850 = vmatprep.subr.bf16.mxu0 0
  %6851 = vmatpush2.bf16.msra.mxu0 0
  %6852 = vmatprep.subr.bf16.mxu0 0
  %6853 = vmatpush2.bf16.msra.mxu0 0
  %6854 = vmatprep.mubr.bf16.mxu0 0
  %6855 = vmatmul.mubr.bf16.gmra.mxu0 %v6817
  %v6856 = vpop.f32.mrf.mxu0
  %v6857 = vadd.f32 0.0, %v6856
  %v6858 = vpop.f32.mrf.mxu0
  %v6859 = vpop.f32.mrf.mxu0
  %v6860 = vadd.f32 0.0, %v6859
  %v6861 = vpop.f32.mrf.mxu0
  %6862 = vmatprep.mubr.bf16.mxu0 0
  %6863 = vmatmul.mubr.bf16.gmra.mxu0 %v6820
  %v6864 = vpop.f32.mrf.mxu0
  %v6865 = vadd.f32 0.0, %v6864
  %v6866 = vpop.f32.mrf.mxu0
  %v6867 = vpop.f32.mrf.mxu0
  %v6868 = vadd.f32 0.0, %v6867
  %v6869 = vpop.f32.mrf.mxu0
  %6870 = vdwg.mxu0
  %6871 = vmatprep.subr.bf16.mxu0 0
  %6872 = vmatpush1.bf16.msra.mxu0 0
  %6873 = vmatprep.subr.bf16.mxu0 0
  %6874 = vmatpush1.bf16.msra.mxu0 0
  %6875 = vmatprep.subr.bf16.mxu0 0
  %6876 = vmatpush1.bf16.msra.mxu0 0
  %6877 = vmatprep.subr.bf16.mxu0 0
  %6878 = vmatpush1.bf16.msra.mxu0 0
  %6879 = vmatprep.subr.bf16.mxu0 0
  %6880 = vmatpush1.bf16.msra.mxu0 0
  %6881 = vmatprep.subr.bf16.mxu0 0
  %6882 = vmatpush1.bf16.msra.mxu0 0
  %6883 = vmatprep.subr.bf16.mxu0 0
  %6884 = vmatpush1.bf16.msra.mxu0 0
  %6885 = vmatprep.subr.bf16.mxu0 0
  %6886 = vmatpush1.bf16.msra.mxu0 %v5233
  %6887 = vmatprep.subr.bf16.mxu0 0
  %6888 = vmatpush2.bf16.msra.mxu0 0
  %6889 = vmatprep.subr.bf16.mxu0 0
  %6890 = vmatpush2.bf16.msra.mxu0 0
  %6891 = vmatprep.subr.bf16.mxu0 0
  %6892 = vmatpush2.bf16.msra.mxu0 0
  %6893 = vmatprep.subr.bf16.mxu0 0
  %6894 = vmatpush2.bf16.msra.mxu0 0
  %6895 = vmatprep.subr.bf16.mxu0 0
  %6896 = vmatpush2.bf16.msra.mxu0 0
  %6897 = vmatprep.subr.bf16.mxu0 0
  %6898 = vmatpush2.bf16.msra.mxu0 0
  %6899 = vmatprep.subr.bf16.mxu0 0
  %6900 = vmatpush2.bf16.msra.mxu0 0
  %6901 = vmatprep.subr.bf16.mxu0 0
  %6902 = vmatpush2.bf16.msra.mxu0 0
  %6903 = vmatprep.mubr.bf16.mxu0 0
  %6904 = vmatmul.mubr.bf16.gmra.mxu0 %v6817
  %v6905 = vpop.f32.mrf.mxu0
  %v6906 = vadd.f32 0.0, %v6905
  %v6907 = vpop.f32.mrf.mxu0
  %v6908 = vpop.f32.mrf.mxu0
  %v6909 = vadd.f32 0.0, %v6908
  %v6910 = vpop.f32.mrf.mxu0
  %6911 = vmatprep.mubr.bf16.mxu0 0
  %6912 = vmatmul.mubr.bf16.gmra.mxu0 %v6820
  %v6913 = vpop.f32.mrf.mxu0
  %v6914 = vadd.f32 0.0, %v6913
  %v6915 = vpop.f32.mrf.mxu0
  %v6916 = vpop.f32.mrf.mxu0
  %v6917 = vadd.f32 0.0, %v6916
  %v6918 = vpop.f32.mrf.mxu0
  %6919 = vdwg.mxu0
  %v6920 = vpack.c.bf16 %v6860, %v6857
  %v6921 = vpack.c.bf16 %v6868, %v6865
  %v6922 = vpack.c.bf16 %v6909, %v6906
  %v6923 = vpack.c.bf16 %v6917, %v6914
  %v6924 = vld [vmem:[%s2 + $0x50] sm:$0xf]
  %v6925 = vld [vmem:[%s2 + $0x54] sm:$0xf]
  %v6926 = vld [vmem:[%s2 + $0x58] sm:$0xf]
  %v6927 = vld [vmem:[%s2 + $0x5c] sm:$0xf]
  %v6928 = vld [vmem:[%s3 + $0x730] sm:$0xff]
  %v6929 = vld [vmem:[%s3 + $0x738] sm:$0xff]
  %v6930 = vld [vmem:[%s3 + $0x740] sm:$0xff]
  %v6931 = vld [vmem:[%s3 + $0x748] sm:$0xff]
  %6933 = vset.pattern.permute.xlu0 0
  %6934 = vperm.xlu0 %6933, %v6928
  %v6935 = vpop.permute.xlu0 %6934
  %6938 = vset.pattern.permute.xlu0 0
  %6939 = vperm.xlu0 %6938, %v6929
  %v6940 = vpop.permute.xlu0 %6939
  %6943 = vset.pattern.permute.xlu0 0
  %6944 = vperm.xlu0 %6943, %v6930
  %v6945 = vpop.permute.xlu0 %6944
  %6948 = vset.pattern.permute.xlu0 0
  %6949 = vperm.xlu0 %6948, %v6931
  %v6950 = vpop.permute.xlu0 %6949
  %v6956 = vunpack.c.l.b16 %v6924
  %v6957 = vunpack.c.l.b16 %v6925
  %v6958 = vunpack.c.l.b16 %v6926
  %v6959 = vunpack.c.l.b16 %v6927
  %v6960 = vpack.c.b16 %v6957, %v6956
  %v6961 = vpack.c.b16 %v6959, %v6958
  %v6963 = vsel %vm4356, %v6960, 0
  %v6966 = vsel %vm4356, %v6961, 0
  %6968 = vmatprep.subr.bf16.mxu0 0
  %6969 = vmatpush1.bf16.msra.mxu0 0
  %6970 = vmatprep.subr.bf16.mxu0 0
  %6971 = vmatpush1.bf16.msra.mxu0 0
  %6972 = vmatprep.subr.bf16.mxu0 0
  %6973 = vmatpush1.bf16.msra.mxu0 %v6923
  %6974 = vmatprep.subr.bf16.mxu0 0
  %6975 = vmatpush1.bf16.msra.mxu0 %v6922
  %6976 = vmatprep.subr.bf16.mxu0 0
  %6977 = vmatpush1.bf16.msra.mxu0 %v6815
  %6978 = vmatprep.subr.bf16.mxu0 0
  %6979 = vmatpush1.bf16.msra.mxu0 %v6814
  %6980 = vmatprep.subr.bf16.mxu0 0
  %6981 = vmatpush1.bf16.msra.mxu0 %v6921
  %6982 = vmatprep.subr.bf16.mxu0 0
  %6983 = vmatpush1.bf16.msra.mxu0 %v6920
  %6984 = vmatprep.subr.bf16.mxu0 0
  %6985 = vmatpush2.bf16.msra.mxu0 0
  %6986 = vmatprep.subr.bf16.mxu0 0
  %6987 = vmatpush2.bf16.msra.mxu0 0
  %6988 = vmatprep.subr.bf16.mxu0 0
  %6989 = vmatpush2.bf16.msra.mxu0 0
  %6990 = vmatprep.subr.bf16.mxu0 0
  %6991 = vmatpush2.bf16.msra.mxu0 0
  %6992 = vmatprep.subr.bf16.mxu0 0
  %6993 = vmatpush2.bf16.msra.mxu0 0
  %6994 = vmatprep.subr.bf16.mxu0 0
  %6995 = vmatpush2.bf16.msra.mxu0 0
  %6996 = vmatprep.subr.bf16.mxu0 0
  %6997 = vmatpush2.bf16.msra.mxu0 0
  %6998 = vmatprep.subr.bf16.mxu0 0
  %6999 = vmatpush2.bf16.msra.mxu0 0
  %7000 = vmatprep.mubr.bf16.mxu0 0
  %7001 = vmatmul.mubr.bf16.gmra.mxu0 %v6963
  %v7002 = vpop.f32.mrf.mxu0
  %v7003 = vadd.f32 %v6935, %v7002
  %v7004 = vpop.f32.mrf.mxu0
  %v7005 = vpop.f32.mrf.mxu0
  %v7006 = vadd.f32 %v6940, %v7005
  %v7007 = vpop.f32.mrf.mxu0
  %7008 = vmatprep.mubr.bf16.mxu0 0
  %7009 = vmatmul.mubr.bf16.gmra.mxu0 %v6966
  %v7010 = vpop.f32.mrf.mxu0
  %v7011 = vadd.f32 %v6945, %v7010
  %v7012 = vpop.f32.mrf.mxu0
  %v7013 = vpop.f32.mrf.mxu0
  %v7014 = vadd.f32 %v6950, %v7013
  %v7015 = vpop.f32.mrf.mxu0
  %7016 = vdwg.mxu0
  %v7017 = vadd.f32 %v6661, %v7003
  %v7018 = vadd.f32 %v6664, %v7006
  %v7019 = vadd.f32 %v6669, %v7011
  %v7020 = vadd.f32 %v6672, %v7014
  %v7021 = vsel %vm5046, %v7017, 0.0
  %v7022 = vsel %vm5046, %v7018, 0.0
  %v7023 = vadd.f32 %v7021, %v7022
  %v7024 = vsel %vm5046, %v7019, 0.0
  %v7025 = vadd.f32 %v7023, %v7024
  %v7026 = vsel %vm5046, %v7020, 0.0
  %v7027 = vadd.f32 %v7025, %v7026
  %7028 = vadd.xlane.f32.xlu0 %v7027
  %v7029 = vpop.xlane.xlu0 %7028
  %v7030 = vrot.slane %v7029, 4
  %v7031 = vadd.f32 %v7029, %v7030
  %v7032 = vrot.slane %v7031, 2
  %v7033 = vadd.f32 %v7031, %v7032
  %v7034 = vrot.slane %v7033, 1
  %v7035 = vadd.f32 %v7033, %v7034
  %s7036 = vtos %v7035
  %s7037 = smul.f32 %s7036, 0.0078125
  %v7038 = vmul.f32 %v7017, %v7017
  %v7039 = vmul.f32 %v7018, %v7018
  %v7040 = vmul.f32 %v7019, %v7019
  %v7041 = vmul.f32 %v7020, %v7020
  %v7042 = vsel %vm5046, %v7038, 0.0
  %v7043 = vsel %vm5046, %v7039, 0.0
  %v7044 = vadd.f32 %v7042, %v7043
  %v7045 = vsel %vm5046, %v7040, 0.0
  %v7046 = vadd.f32 %v7044, %v7045
  %v7047 = vsel %vm5046, %v7041, 0.0
  %v7048 = vadd.f32 %v7046, %v7047
  %7049 = vadd.xlane.f32.xlu0 %v7048
  %v7050 = vpop.xlane.xlu0 %7049
  %v7051 = vrot.slane %v7050, 4
  %v7052 = vadd.f32 %v7050, %v7051
  %v7053 = vrot.slane %v7052, 2
  %v7054 = vadd.f32 %v7052, %v7053
  %v7055 = vrot.slane %v7054, 1
  %v7056 = vadd.f32 %v7054, %v7055
  %s7057 = vtos %v7056
  %s7058 = smul.f32 %s7057, 0.0078125
  %s7059 = smul.f32 %s7037, %s7037
  %s7060 = ssub.f32 %s7058, %s7059
  %s7061 = smax.f32 %s7060, 0.0
  %v7062 = vstv %s7037
  %v7063 = vsub.f32 %v7017, %v7062
  %v7064 = vsub.f32 %v7018, %v7062
  %v7065 = vsub.f32 %v7019, %v7062
  %v7066 = vsub.f32 %v7020, %v7062
  %s7067 = sadd.f32 %s7061, 1e-05
  %v7068 = vstv %s7067
  %v7069 = vrsqrt.pop %v7068
  %s7070 = vtos %v7069
  %v7071 = vld [vmem:[%s3 + $0x750] sm:$0xff]
  %v7072 = vld [vmem:[%s3 + $0x758] sm:$0xff]
  %v7073 = vld [vmem:[%s3 + $0x760] sm:$0xff]
  %v7074 = vld [vmem:[%s3 + $0x768] sm:$0xff]
  %v7075 = vstv %s7070
  %v7076 = vmul.f32 %v7075, %v7071
  %v7077 = vmul.f32 %v7075, %v7072
  %v7078 = vmul.f32 %v7075, %v7073
  %v7079 = vmul.f32 %v7075, %v7074
  %7081 = vset.pattern.permute.xlu0 0
  %7082 = vperm.xlu0 %7081, %v7076
  %v7083 = vpop.permute.xlu0 %7082
  %7086 = vset.pattern.permute.xlu0 0
  %7087 = vperm.xlu0 %7086, %v7077
  %v7088 = vpop.permute.xlu0 %7087
  %7091 = vset.pattern.permute.xlu0 0
  %7092 = vperm.xlu0 %7091, %v7078
  %v7093 = vpop.permute.xlu0 %7092
  %7096 = vset.pattern.permute.xlu0 0
  %7097 = vperm.xlu0 %7096, %v7079
  %v7098 = vpop.permute.xlu0 %7097
  %v7100 = vmul.f32 %v7063, %v7083
  %v7101 = vmul.f32 %v7064, %v7088
  %v7102 = vmul.f32 %v7065, %v7093
  %v7103 = vmul.f32 %v7066, %v7098
  %v7104 = vld [vmem:[%s3 + $0x770] sm:$0xff]
  %v7105 = vld [vmem:[%s3 + $0x778] sm:$0xff]
  %v7106 = vld [vmem:[%s3 + $0x780] sm:$0xff]
  %v7107 = vld [vmem:[%s3 + $0x788] sm:$0xff]
  %7109 = vset.pattern.permute.xlu0 0
  %7110 = vperm.xlu0 %7109, %v7104
  %v7111 = vpop.permute.xlu0 %7110
  %7114 = vset.pattern.permute.xlu0 0
  %7115 = vperm.xlu0 %7114, %v7105
  %v7116 = vpop.permute.xlu0 %7115
  %7119 = vset.pattern.permute.xlu0 0
  %7120 = vperm.xlu0 %7119, %v7106
  %v7121 = vpop.permute.xlu0 %7120
  %7124 = vset.pattern.permute.xlu0 0
  %7125 = vperm.xlu0 %7124, %v7107
  %v7126 = vpop.permute.xlu0 %7125
  %v7128 = vadd.f32 %v7100, %v7111
  %v7129 = vadd.f32 %v7101, %v7116
  %v7130 = vadd.f32 %v7102, %v7121
  %v7131 = vadd.f32 %v7103, %v7126
  %vm7132 = vcmp.ge.f32.partialorder %v7128, 0.0
  %vm7133 = vcmp.ge.f32.partialorder %v7129, 0.0
  %vm7134 = vcmp.ge.f32.partialorder %v7130, 0.0
  %vm7135 = vcmp.ge.f32.partialorder %v7131, 0.0
  %v7136 = vmul.f32 %v7128, 0.01
  %v7137 = vmul.f32 %v7129, 0.01
  %v7138 = vmul.f32 %v7130, 0.01
  %v7139 = vmul.f32 %v7131, 0.01
  %v7140 = vsel %vm7132, %v7128, %v7136
  %v7141 = vsel %vm7133, %v7129, %v7137
  %v7142 = vsel %vm7134, %v7130, %v7138
  %v7143 = vsel %vm7135, %v7131, %v7139
  %v7144 = vpack.c.bf16 %v7141, %v7140
  %v7145 = vpack.c.bf16 %v7143, %v7142
  %v7146 = vld [vmem:[%s2 + $0xe0] sm:$0x3]
  %v7148 = vsel %vm5046, %v7144, 0
  %v7151 = vsel %vm5046, %v7145, 0
  %v7154 = vsel %vm2285, %v7146, 0
  %7156 = vmatprep.subr.bf16.mxu0 0
  %7157 = vmatpush1.bf16.msra.mxu0 0
  %7158 = vmatprep.subr.bf16.mxu0 0
  %7159 = vmatpush1.bf16.msra.mxu0 0
  %7160 = vmatprep.subr.bf16.mxu0 0
  %7161 = vmatpush1.bf16.msra.mxu0 0
  %7162 = vmatprep.subr.bf16.mxu0 0
  %7163 = vmatpush1.bf16.msra.mxu0 0
  %7164 = vmatprep.subr.bf16.mxu0 0
  %7165 = vmatpush1.bf16.msra.mxu0 0
  %7166 = vmatprep.subr.bf16.mxu0 0
  %7167 = vmatpush1.bf16.msra.mxu0 0
  %7168 = vmatprep.subr.bf16.mxu0 0
  %7169 = vmatpush1.bf16.msra.mxu0 0
  %7170 = vmatprep.subr.bf16.mxu0 0
  %7171 = vmatpush1.bf16.msra.mxu0 %v7154
  %7172 = vmatprep.subr.bf16.mxu0 0
  %7173 = vmatpush2.bf16.msra.mxu0 0
  %7174 = vmatprep.subr.bf16.mxu0 0
  %7175 = vmatpush2.bf16.msra.mxu0 0
  %7176 = vmatprep.subr.bf16.mxu0 0
  %7177 = vmatpush2.bf16.msra.mxu0 0
  %7178 = vmatprep.subr.bf16.mxu0 0
  %7179 = vmatpush2.bf16.msra.mxu0 0
  %7180 = vmatprep.subr.bf16.mxu0 0
  %7181 = vmatpush2.bf16.msra.mxu0 0
  %7182 = vmatprep.subr.bf16.mxu0 0
  %7183 = vmatpush2.bf16.msra.mxu0 0
  %7184 = vmatprep.subr.bf16.mxu0 0
  %7185 = vmatpush2.bf16.msra.mxu0 0
  %7186 = vmatprep.subr.bf16.mxu0 0
  %7187 = vmatpush2.bf16.msra.mxu0 0
  %7188 = vmatprep.mubr.bf16.mxu0 0
  %7189 = vmatmul.mubr.bf16.gmra.mxu0 %v7148
  %v7190 = vpop.f32.mrf.mxu0
  %v7191 = vadd.f32 0.0, %v7190
  %v7192 = vpop.f32.mrf.mxu0
  %v7193 = vpop.f32.mrf.mxu0
  %v7194 = vadd.f32 0.0, %v7193
  %v7195 = vpop.f32.mrf.mxu0
  %7196 = vmatprep.mubr.bf16.mxu0 0
  %7197 = vmatmul.mubr.bf16.gmra.mxu0 %v7151
  %v7198 = vpop.f32.mrf.mxu0
  %v7199 = vadd.f32 0.0, %v7198
  %v7200 = vpop.f32.mrf.mxu0
  %v7201 = vpop.f32.mrf.mxu0
  %v7202 = vadd.f32 0.0, %v7201
  %v7203 = vpop.f32.mrf.mxu0
  %7204 = vdwg.mxu0
  %v7205 = vsel %vm4054, %v7191, 0.0
  %v7206 = vsel %vm4054, %v7194, 0.0
  %v7207 = vadd.f32 %v7205, %v7206
  %v7208 = vsel %vm4054, %v7199, 0.0
  %v7209 = vadd.f32 %v7207, %v7208
  %v7210 = vsel %vm4054, %v7202, 0.0
  %v7211 = vadd.f32 %v7209, %v7210
  %7212 = vadd.xlane.f32.xlu0 %v7211
  %v7213 = vpop.xlane.xlu0 %7212
  %v7214 = vrot.slane %v7213, 4
  %v7215 = vadd.f32 %v7213, %v7214
  %v7216 = vrot.slane %v7215, 2
  %v7217 = vadd.f32 %v7215, %v7216
  %v7218 = vrot.slane %v7217, 1
  %v7219 = vadd.f32 %v7217, %v7218
  %s7220 = vtos %v7219
  %s7221 = smul.f32 %s7220, 0.0015625
  %v7222 = vmul.f32 %v7191, %v7191
  %v7223 = vmul.f32 %v7194, %v7194
  %v7224 = vmul.f32 %v7199, %v7199
  %v7225 = vmul.f32 %v7202, %v7202
  %v7226 = vsel %vm4054, %v7222, 0.0
  %v7227 = vsel %vm4054, %v7223, 0.0
  %v7228 = vadd.f32 %v7226, %v7227
  %v7229 = vsel %vm4054, %v7224, 0.0
  %v7230 = vadd.f32 %v7228, %v7229
  %v7231 = vsel %vm4054, %v7225, 0.0
  %v7232 = vadd.f32 %v7230, %v7231
  %7233 = vadd.xlane.f32.xlu0 %v7232
  %v7234 = vpop.xlane.xlu0 %7233
  %v7235 = vrot.slane %v7234, 4
  %v7236 = vadd.f32 %v7234, %v7235
  %v7237 = vrot.slane %v7236, 2
  %v7238 = vadd.f32 %v7236, %v7237
  %v7239 = vrot.slane %v7238, 1
  %v7240 = vadd.f32 %v7238, %v7239
  %s7241 = vtos %v7240
  %s7242 = smul.f32 %s7241, 0.0015625
  %s7243 = smul.f32 %s7221, %s7221
  %s7244 = ssub.f32 %s7242, %s7243
  %s7245 = smax.f32 %s7244, 0.0
  %v7246 = vstv %s7221
  %v7247 = vsub.f32 %v7191, %v7246
  %v7248 = vsub.f32 %v7194, %v7246
  %v7249 = vsub.f32 %v7199, %v7246
  %v7250 = vsub.f32 %v7202, %v7246
  %s7251 = sadd.f32 %s7245, 1e-05
  %v7252 = vstv %s7251
  %v7253 = vrsqrt.pop %v7252
  %s7254 = vtos %v7253
  %v7255 = vld [vmem:[%s3 + $0xa10] sm:$0xff]
  %v7256 = vld [vmem:[%s3 + $0xa18] sm:$0xff]
  %v7257 = vld [vmem:[%s3 + $0xa20] sm:$0xff]
  %v7258 = vld [vmem:[%s3 + $0xa28] sm:$0xff]
  %v7259 = vstv %s7254
  %v7260 = vmul.f32 %v7259, %v7255
  %v7261 = vmul.f32 %v7259, %v7256
  %v7262 = vmul.f32 %v7259, %v7257
  %v7263 = vmul.f32 %v7259, %v7258
  %7265 = vset.pattern.permute.xlu0 0
  %7266 = vperm.xlu0 %7265, %v7260
  %v7267 = vpop.permute.xlu0 %7266
  %7270 = vset.pattern.permute.xlu0 0
  %7271 = vperm.xlu0 %7270, %v7261
  %v7272 = vpop.permute.xlu0 %7271
  %7275 = vset.pattern.permute.xlu0 0
  %7276 = vperm.xlu0 %7275, %v7262
  %v7277 = vpop.permute.xlu0 %7276
  %7280 = vset.pattern.permute.xlu0 0
  %7281 = vperm.xlu0 %7280, %v7263
  %v7282 = vpop.permute.xlu0 %7281
  %v7284 = vmul.f32 %v7247, %v7267
  %v7285 = vmul.f32 %v7248, %v7272
  %v7286 = vmul.f32 %v7249, %v7277
  %v7287 = vmul.f32 %v7250, %v7282
  %v7288 = vld [vmem:[%s3 + $0xa30] sm:$0xff]
  %v7289 = vld [vmem:[%s3 + $0xa38] sm:$0xff]
  %v7290 = vld [vmem:[%s3 + $0xa40] sm:$0xff]
  %v7291 = vld [vmem:[%s3 + $0xa48] sm:$0xff]
  %7293 = vset.pattern.permute.xlu0 0
  %7294 = vperm.xlu0 %7293, %v7288
  %v7295 = vpop.permute.xlu0 %7294
  %7298 = vset.pattern.permute.xlu0 0
  %7299 = vperm.xlu0 %7298, %v7289
  %v7300 = vpop.permute.xlu0 %7299
  %7303 = vset.pattern.permute.xlu0 0
  %7304 = vperm.xlu0 %7303, %v7290
  %v7305 = vpop.permute.xlu0 %7304
  %7308 = vset.pattern.permute.xlu0 0
  %7309 = vperm.xlu0 %7308, %v7291
  %v7310 = vpop.permute.xlu0 %7309
  %v7312 = vadd.f32 %v7284, %v7295
  %v7313 = vadd.f32 %v7285, %v7300
  %v7314 = vadd.f32 %v7286, %v7305
  %v7315 = vadd.f32 %v7287, %v7310
  %v7316 = vsel %vm4054, %v4535, 0.0
  %v7317 = vsel %vm4054, %v4536, 0.0
  %v7318 = vadd.f32 %v7316, %v7317
  %v7319 = vsel %vm4054, %v4537, 0.0
  %v7320 = vadd.f32 %v7318, %v7319
  %v7321 = vsel %vm4054, %v4538, 0.0
  %v7322 = vadd.f32 %v7320, %v7321
  %7323 = vadd.xlane.f32.xlu0 %v7322
  %v7324 = vpop.xlane.xlu0 %7323
  %v7325 = vrot.slane %v7324, 4
  %v7326 = vadd.f32 %v7324, %v7325
  %v7327 = vrot.slane %v7326, 2
  %v7328 = vadd.f32 %v7326, %v7327
  %v7329 = vrot.slane %v7328, 1
  %v7330 = vadd.f32 %v7328, %v7329
  %s7331 = vtos %v7330
  %s7332 = smul.f32 %s7331, 0.0015625
  %v7333 = vmul.f32 %v4535, %v4535
  %v7334 = vmul.f32 %v4536, %v4536
  %v7335 = vmul.f32 %v4537, %v4537
  %v7336 = vmul.f32 %v4538, %v4538
  %v7337 = vsel %vm4054, %v7333, 0.0
  %v7338 = vsel %vm4054, %v7334, 0.0
  %v7339 = vadd.f32 %v7337, %v7338
  %v7340 = vsel %vm4054, %v7335, 0.0
  %v7341 = vadd.f32 %v7339, %v7340
  %v7342 = vsel %vm4054, %v7336, 0.0
  %v7343 = vadd.f32 %v7341, %v7342
  %7344 = vadd.xlane.f32.xlu0 %v7343
  %v7345 = vpop.xlane.xlu0 %7344
  %v7346 = vrot.slane %v7345, 4
  %v7347 = vadd.f32 %v7345, %v7346
  %v7348 = vrot.slane %v7347, 2
  %v7349 = vadd.f32 %v7347, %v7348
  %v7350 = vrot.slane %v7349, 1
  %v7351 = vadd.f32 %v7349, %v7350
  %s7352 = vtos %v7351
  %s7353 = smul.f32 %s7352, 0.0015625
  %s7354 = smul.f32 %s7332, %s7332
  %s7355 = ssub.f32 %s7353, %s7354
  %s7356 = smax.f32 %s7355, 0.0
  %v7357 = vstv %s7332
  %v7358 = vsub.f32 %v4535, %v7357
  %v7359 = vsub.f32 %v4536, %v7357
  %v7360 = vsub.f32 %v4537, %v7357
  %v7361 = vsub.f32 %v4538, %v7357
  %s7362 = sadd.f32 %s7356, 1e-05
  %v7363 = vstv %s7362
  %v7364 = vrsqrt.pop %v7363
  %s7365 = vtos %v7364
  %v7366 = vld [vmem:[%s3 + $0xa50] sm:$0xff]
  %v7367 = vld [vmem:[%s3 + $0xa58] sm:$0xff]
  %v7368 = vld [vmem:[%s3 + $0xa60] sm:$0xff]
  %v7369 = vld [vmem:[%s3 + $0xa68] sm:$0xff]
  %v7370 = vstv %s7365
  %v7371 = vmul.f32 %v7370, %v7366
  %v7372 = vmul.f32 %v7370, %v7367
  %v7373 = vmul.f32 %v7370, %v7368
  %v7374 = vmul.f32 %v7370, %v7369
  %7376 = vset.pattern.permute.xlu0 0
  %7377 = vperm.xlu0 %7376, %v7371
  %v7378 = vpop.permute.xlu0 %7377
  %7381 = vset.pattern.permute.xlu0 0
  %7382 = vperm.xlu0 %7381, %v7372
  %v7383 = vpop.permute.xlu0 %7382
  %7386 = vset.pattern.permute.xlu0 0
  %7387 = vperm.xlu0 %7386, %v7373
  %v7388 = vpop.permute.xlu0 %7387
  %7391 = vset.pattern.permute.xlu0 0
  %7392 = vperm.xlu0 %7391, %v7374
  %v7393 = vpop.permute.xlu0 %7392
  %v7395 = vmul.f32 %v7358, %v7378
  %v7396 = vmul.f32 %v7359, %v7383
  %v7397 = vmul.f32 %v7360, %v7388
  %v7398 = vmul.f32 %v7361, %v7393
  %v7399 = vld [vmem:[%s3 + $0xa70] sm:$0xff]
  %v7400 = vld [vmem:[%s3 + $0xa78] sm:$0xff]
  %v7401 = vld [vmem:[%s3 + $0xa80] sm:$0xff]
  %v7402 = vld [vmem:[%s3 + $0xa88] sm:$0xff]
  %7404 = vset.pattern.permute.xlu0 0
  %7405 = vperm.xlu0 %7404, %v7399
  %v7406 = vpop.permute.xlu0 %7405
  %7409 = vset.pattern.permute.xlu0 0
  %7410 = vperm.xlu0 %7409, %v7400
  %v7411 = vpop.permute.xlu0 %7410
  %7414 = vset.pattern.permute.xlu0 0
  %7415 = vperm.xlu0 %7414, %v7401
  %v7416 = vpop.permute.xlu0 %7415
  %7419 = vset.pattern.permute.xlu0 0
  %7420 = vperm.xlu0 %7419, %v7402
  %v7421 = vpop.permute.xlu0 %7420
  %v7423 = vadd.f32 %v7395, %v7406
  %v7424 = vadd.f32 %v7396, %v7411
  %v7425 = vadd.f32 %v7397, %v7416
  %v7426 = vadd.f32 %v7398, %v7421
  %v7427 = vpack.c.bf16 %v7313, %v7312
  %v7428 = vpack.c.bf16 %v7315, %v7314
  %v7429 = vpack.c.bf16 %v7424, %v7423
  %v7430 = vpack.c.bf16 %v7426, %v7425
  %v7431 = vld [vmem:[%s2 + $0xd0] sm:$0xf]
  %v7432 = vld [vmem:[%s2 + $0xd4] sm:$0xf]
  %v7433 = vld [vmem:[%s2 + $0xd8] sm:$0xf]
  %v7434 = vld [vmem:[%s2 + $0xdc] sm:$0xf]
  %v7435 = vld [vmem:[%s3 + $0x9f0] sm:$0xff]
  %v7436 = vld [vmem:[%s3 + $0x9f8] sm:$0xff]
  %v7437 = vld [vmem:[%s3 + $0xa00] sm:$0xff]
  %v7438 = vld [vmem:[%s3 + $0xa08] sm:$0xff]
  %7440 = vset.pattern.permute.xlu0 0
  %7441 = vperm.xlu0 %7440, %v7435
  %v7442 = vpop.permute.xlu0 %7441
  %7445 = vset.pattern.permute.xlu0 0
  %7446 = vperm.xlu0 %7445, %v7436
  %v7447 = vpop.permute.xlu0 %7446
  %7450 = vset.pattern.permute.xlu0 0
  %7451 = vperm.xlu0 %7450, %v7437
  %v7452 = vpop.permute.xlu0 %7451
  %7455 = vset.pattern.permute.xlu0 0
  %7456 = vperm.xlu0 %7455, %v7438
  %v7457 = vpop.permute.xlu0 %7456
  %v7463 = vunpack.c.l.b16 %v7431
  %v7464 = vunpack.c.l.b16 %v7432
  %v7465 = vunpack.c.l.b16 %v7433
  %v7466 = vunpack.c.l.b16 %v7434
  %v7467 = vpack.c.b16 %v7464, %v7463
  %v7468 = vpack.c.b16 %v7466, %v7465
  %v7470 = vsel %vm6372, %v7467, 0
  %v7473 = vsel %vm6372, %v7468, 0
  %7475 = vmatprep.subr.bf16.mxu0 0
  %7476 = vmatpush1.bf16.msra.mxu0 0
  %7477 = vmatprep.subr.bf16.mxu0 0
  %7478 = vmatpush1.bf16.msra.mxu0 0
  %7479 = vmatprep.subr.bf16.mxu0 0
  %7480 = vmatpush1.bf16.msra.mxu0 0
  %7481 = vmatprep.subr.bf16.mxu0 0
  %7482 = vmatpush1.bf16.msra.mxu0 0
  %7483 = vmatprep.subr.bf16.mxu0 0
  %7484 = vmatpush1.bf16.msra.mxu0 %v7430
  %7485 = vmatprep.subr.bf16.mxu0 0
  %7486 = vmatpush1.bf16.msra.mxu0 %v7429
  %7487 = vmatprep.subr.bf16.mxu0 0
  %7488 = vmatpush1.bf16.msra.mxu0 %v7428
  %7489 = vmatprep.subr.bf16.mxu0 0
  %7490 = vmatpush1.bf16.msra.mxu0 %v7427
  %7491 = vmatprep.subr.bf16.mxu0 0
  %7492 = vmatpush2.bf16.msra.mxu0 0
  %7493 = vmatprep.subr.bf16.mxu0 0
  %7494 = vmatpush2.bf16.msra.mxu0 0
  %7495 = vmatprep.subr.bf16.mxu0 0
  %7496 = vmatpush2.bf16.msra.mxu0 0
  %7497 = vmatprep.subr.bf16.mxu0 0
  %7498 = vmatpush2.bf16.msra.mxu0 0
  %7499 = vmatprep.subr.bf16.mxu0 0
  %7500 = vmatpush2.bf16.msra.mxu0 0
  %7501 = vmatprep.subr.bf16.mxu0 0
  %7502 = vmatpush2.bf16.msra.mxu0 0
  %7503 = vmatprep.subr.bf16.mxu0 0
  %7504 = vmatpush2.bf16.msra.mxu0 0
  %7505 = vmatprep.subr.bf16.mxu0 0
  %7506 = vmatpush2.bf16.msra.mxu0 0
  %7507 = vmatprep.mubr.bf16.mxu0 0
  %7508 = vmatmul.mubr.bf16.gmra.mxu0 %v7470
  %v7509 = vpop.f32.mrf.mxu0
  %v7510 = vadd.f32 %v7442, %v7509
  %v7511 = vpop.f32.mrf.mxu0
  %v7512 = vpop.f32.mrf.mxu0
  %v7513 = vadd.f32 %v7447, %v7512
  %v7514 = vpop.f32.mrf.mxu0
  %7515 = vmatprep.mubr.bf16.mxu0 0
  %7516 = vmatmul.mubr.bf16.gmra.mxu0 %v7473
  %v7517 = vpop.f32.mrf.mxu0
  %v7518 = vadd.f32 %v7452, %v7517
  %v7519 = vpop.f32.mrf.mxu0
  %v7520 = vpop.f32.mrf.mxu0
  %v7521 = vadd.f32 %v7457, %v7520
  %v7522 = vpop.f32.mrf.mxu0
  %7523 = vdwg.mxu0
  %v7524 = vpack.c.bf16 %v7513, %v7510
  %v7525 = vpack.c.bf16 %v7521, %v7518
  %v7527 = vsel %vm4054, %v7524, 0
  %v7530 = vsel %vm4054, %v7525, 0
  %7532 = vmatprep.subr.bf16.mxu0 0
  %7533 = vmatpush1.bf16.msra.mxu0 0
  %7534 = vmatprep.subr.bf16.mxu0 0
  %7535 = vmatpush1.bf16.msra.mxu0 0
  %7536 = vmatprep.subr.bf16.mxu0 0
  %7537 = vmatpush1.bf16.msra.mxu0 0
  %7538 = vmatprep.subr.bf16.mxu0 0
  %7539 = vmatpush1.bf16.msra.mxu0 0
  %7540 = vmatprep.subr.bf16.mxu0 0
  %7541 = vmatpush1.bf16.msra.mxu0 0
  %7542 = vmatprep.subr.bf16.mxu0 0
  %7543 = vmatpush1.bf16.msra.mxu0 0
  %7544 = vmatprep.subr.bf16.mxu0 0
  %7545 = vmatpush1.bf16.msra.mxu0 %v4199
  %7546 = vmatprep.subr.bf16.mxu0 0
  %7547 = vmatpush1.bf16.msra.mxu0 %v4189
  %7548 = vmatprep.subr.bf16.mxu0 0
  %7549 = vmatpush2.bf16.msra.mxu0 0
  %7550 = vmatprep.subr.bf16.mxu0 0
  %7551 = vmatpush2.bf16.msra.mxu0 0
  %7552 = vmatprep.subr.bf16.mxu0 0
  %7553 = vmatpush2.bf16.msra.mxu0 0
  %7554 = vmatprep.subr.bf16.mxu0 0
  %7555 = vmatpush2.bf16.msra.mxu0 0
  %7556 = vmatprep.subr.bf16.mxu0 0
  %7557 = vmatpush2.bf16.msra.mxu0 0
  %7558 = vmatprep.subr.bf16.mxu0 0
  %7559 = vmatpush2.bf16.msra.mxu0 0
  %7560 = vmatprep.subr.bf16.mxu0 0
  %7561 = vmatpush2.bf16.msra.mxu0 0
  %7562 = vmatprep.subr.bf16.mxu0 0
  %7563 = vmatpush2.bf16.msra.mxu0 0
  %7564 = vmatprep.mubr.bf16.mxu0 0
  %7565 = vmatmul.mubr.bf16.gmra.mxu0 %v7527
  %v7566 = vpop.f32.mrf.mxu0
  %v7567 = vadd.f32 0.0, %v7566
  %v7568 = vpop.f32.mrf.mxu0
  %v7569 = vpop.f32.mrf.mxu0
  %v7570 = vadd.f32 0.0, %v7569
  %v7571 = vpop.f32.mrf.mxu0
  %7572 = vmatprep.mubr.bf16.mxu0 0
  %7573 = vmatmul.mubr.bf16.gmra.mxu0 %v7530
  %v7574 = vpop.f32.mrf.mxu0
  %v7575 = vadd.f32 0.0, %v7574
  %v7576 = vpop.f32.mrf.mxu0
  %v7577 = vpop.f32.mrf.mxu0
  %v7578 = vadd.f32 0.0, %v7577
  %v7579 = vpop.f32.mrf.mxu0
  %7580 = vdwg.mxu0
  %7581 = vmatprep.subr.bf16.mxu0 0
  %7582 = vmatpush1.bf16.msra.mxu0 0
  %7583 = vmatprep.subr.bf16.mxu0 0
  %7584 = vmatpush1.bf16.msra.mxu0 0
  %7585 = vmatprep.subr.bf16.mxu0 0
  %7586 = vmatpush1.bf16.msra.mxu0 0
  %7587 = vmatprep.subr.bf16.mxu0 0
  %7588 = vmatpush1.bf16.msra.mxu0 0
  %7589 = vmatprep.subr.bf16.mxu0 0
  %7590 = vmatpush1.bf16.msra.mxu0 0
  %7591 = vmatprep.subr.bf16.mxu0 0
  %7592 = vmatpush1.bf16.msra.mxu0 0
  %7593 = vmatprep.subr.bf16.mxu0 0
  %7594 = vmatpush1.bf16.msra.mxu0 %v4263
  %7595 = vmatprep.subr.bf16.mxu0 0
  %7596 = vmatpush1.bf16.msra.mxu0 %v4259
  %7597 = vmatprep.subr.bf16.mxu0 0
  %7598 = vmatpush2.bf16.msra.mxu0 0
  %7599 = vmatprep.subr.bf16.mxu0 0
  %7600 = vmatpush2.bf16.msra.mxu0 0
  %7601 = vmatprep.subr.bf16.mxu0 0
  %7602 = vmatpush2.bf16.msra.mxu0 0
  %7603 = vmatprep.subr.bf16.mxu0 0
  %7604 = vmatpush2.bf16.msra.mxu0 0
  %7605 = vmatprep.subr.bf16.mxu0 0
  %7606 = vmatpush2.bf16.msra.mxu0 0
  %7607 = vmatprep.subr.bf16.mxu0 0
  %7608 = vmatpush2.bf16.msra.mxu0 0
  %7609 = vmatprep.subr.bf16.mxu0 0
  %7610 = vmatpush2.bf16.msra.mxu0 0
  %7611 = vmatprep.subr.bf16.mxu0 0
  %7612 = vmatpush2.bf16.msra.mxu0 0
  %7613 = vmatprep.mubr.bf16.mxu0 0
  %7614 = vmatmul.mubr.bf16.gmra.mxu0 %v7527
  %v7615 = vpop.f32.mrf.mxu0
  %v7616 = vadd.f32 0.0, %v7615
  %v7617 = vpop.f32.mrf.mxu0
  %v7618 = vpop.f32.mrf.mxu0
  %v7619 = vadd.f32 0.0, %v7618
  %v7620 = vpop.f32.mrf.mxu0
  %7621 = vmatprep.mubr.bf16.mxu0 0
  %7622 = vmatmul.mubr.bf16.gmra.mxu0 %v7530
  %v7623 = vpop.f32.mrf.mxu0
  %v7624 = vadd.f32 0.0, %v7623
  %v7625 = vpop.f32.mrf.mxu0
  %v7626 = vpop.f32.mrf.mxu0
  %v7627 = vadd.f32 0.0, %v7626
  %v7628 = vpop.f32.mrf.mxu0
  %7629 = vdwg.mxu0
  %v7630 = vpack.c.bf16 %v7570, %v7567
  %v7631 = vpack.c.bf16 %v7578, %v7575
  %v7632 = vpack.c.bf16 %v7619, %v7616
  %v7633 = vpack.c.bf16 %v7627, %v7624
  %v7634 = vld [vmem:[%s2 + $0x60] sm:$0xf]
  %v7635 = vld [vmem:[%s2 + $0x64] sm:$0xf]
  %v7636 = vld [vmem:[%s2 + $0x68] sm:$0xf]
  %v7637 = vld [vmem:[%s2 + $0x6c] sm:$0xf]
  %v7638 = vld [vmem:[%s2 + $0x70] sm:$0xf]
  %v7639 = vld [vmem:[%s2 + $0x74] sm:$0xf]
  %v7640 = vld [vmem:[%s2 + $0x78] sm:$0xf]
  %v7641 = vld [vmem:[%s2 + $0x7c] sm:$0xf]
  %v7642 = vld [vmem:[%s3 + $0x790] sm:$0xff]
  %v7643 = vld [vmem:[%s3 + $0x798] sm:$0xff]
  %v7644 = vld [vmem:[%s3 + $0x7a0] sm:$0xff]
  %v7645 = vld [vmem:[%s3 + $0x7a8] sm:$0xff]
  %v7646 = vld [vmem:[%s3 + $0x7b0] sm:$0xff]
  %v7647 = vld [vmem:[%s3 + $0x7b8] sm:$0xff]
  %v7648 = vld [vmem:[%s3 + $0x7c0] sm:$0xff]
  %v7649 = vld [vmem:[%s3 + $0x7c8] sm:$0xff]
  %7651 = vset.pattern.permute.xlu0 0
  %7652 = vperm.xlu0 %7651, %v7642
  %v7653 = vpop.permute.xlu0 %7652
  %7656 = vset.pattern.permute.xlu0 0
  %7657 = vperm.xlu0 %7656, %v7643
  %v7658 = vpop.permute.xlu0 %7657
  %7661 = vset.pattern.permute.xlu0 0
  %7662 = vperm.xlu0 %7661, %v7644
  %v7663 = vpop.permute.xlu0 %7662
  %7666 = vset.pattern.permute.xlu0 0
  %7667 = vperm.xlu0 %7666, %v7645
  %v7668 = vpop.permute.xlu0 %7667
  %7671 = vset.pattern.permute.xlu0 0
  %7672 = vperm.xlu0 %7671, %v7646
  %v7673 = vpop.permute.xlu0 %7672
  %7676 = vset.pattern.permute.xlu0 0
  %7677 = vperm.xlu0 %7676, %v7647
  %v7678 = vpop.permute.xlu0 %7677
  %7681 = vset.pattern.permute.xlu0 0
  %7682 = vperm.xlu0 %7681, %v7648
  %v7683 = vpop.permute.xlu0 %7682
  %7686 = vset.pattern.permute.xlu0 0
  %7687 = vperm.xlu0 %7686, %v7649
  %v7688 = vpop.permute.xlu0 %7687
  %v7698 = vunpack.c.l.b16 %v7634
  %v7699 = vunpack.c.l.b16 %v7635
  %v7700 = vunpack.c.l.b16 %v7636
  %v7701 = vunpack.c.l.b16 %v7637
  %v7702 = vunpack.c.l.b16 %v7638
  %v7703 = vunpack.c.l.b16 %v7639
  %v7704 = vunpack.c.l.b16 %v7640
  %v7705 = vunpack.c.l.b16 %v7641
  %v7706 = vpack.c.b16 %v7699, %v7698
  %v7707 = vpack.c.b16 %v7701, %v7700
  %v7708 = vpack.c.b16 %v7703, %v7702
  %v7709 = vpack.c.b16 %v7705, %v7704
  %v7711 = vsel %vm4356, %v7706, 0
  %v7714 = vsel %vm4356, %v7707, 0
  %v7717 = vsel %vm4356, %v7708, 0
  %v7720 = vsel %vm4356, %v7709, 0
  %7722 = vmatprep.subr.bf16.mxu0 0
  %7723 = vmatpush1.bf16.msra.mxu0 0
  %7724 = vmatprep.subr.bf16.mxu0 0
  %7725 = vmatpush1.bf16.msra.mxu0 0
  %7726 = vmatprep.subr.bf16.mxu0 0
  %7727 = vmatpush1.bf16.msra.mxu0 %v7633
  %7728 = vmatprep.subr.bf16.mxu0 0
  %7729 = vmatpush1.bf16.msra.mxu0 %v7632
  %7730 = vmatprep.subr.bf16.mxu0 0
  %7731 = vmatpush1.bf16.msra.mxu0 %v7525
  %7732 = vmatprep.subr.bf16.mxu0 0
  %7733 = vmatpush1.bf16.msra.mxu0 %v7524
  %7734 = vmatprep.subr.bf16.mxu0 0
  %7735 = vmatpush1.bf16.msra.mxu0 %v7631
  %7736 = vmatprep.subr.bf16.mxu0 0
  %7737 = vmatpush1.bf16.msra.mxu0 %v7630
  %7738 = vmatprep.subr.bf16.mxu0 0
  %7739 = vmatpush2.bf16.msra.mxu0 0
  %7740 = vmatprep.subr.bf16.mxu0 0
  %7741 = vmatpush2.bf16.msra.mxu0 0
  %7742 = vmatprep.subr.bf16.mxu0 0
  %7743 = vmatpush2.bf16.msra.mxu0 0
  %7744 = vmatprep.subr.bf16.mxu0 0
  %7745 = vmatpush2.bf16.msra.mxu0 0
  %7746 = vmatprep.subr.bf16.mxu0 0
  %7747 = vmatpush2.bf16.msra.mxu0 0
  %7748 = vmatprep.subr.bf16.mxu0 0
  %7749 = vmatpush2.bf16.msra.mxu0 0
  %7750 = vmatprep.subr.bf16.mxu0 0
  %7751 = vmatpush2.bf16.msra.mxu0 0
  %7752 = vmatprep.subr.bf16.mxu0 0
  %7753 = vmatpush2.bf16.msra.mxu0 0
  %7754 = vmatprep.mubr.bf16.mxu0 0
  %7755 = vmatmul.mubr.bf16.gmra.mxu0 %v7711
  %v7756 = vpop.f32.mrf.mxu0
  %v7757 = vadd.f32 %v7653, %v7756
  %v7758 = vpop.f32.mrf.mxu0
  %v7759 = vpop.f32.mrf.mxu0
  %v7760 = vadd.f32 %v7658, %v7759
  %v7761 = vpop.f32.mrf.mxu0
  %7762 = vmatprep.mubr.bf16.mxu0 0
  %7763 = vmatmul.mubr.bf16.gmra.mxu0 %v7714
  %v7764 = vpop.f32.mrf.mxu0
  %v7765 = vadd.f32 %v7663, %v7764
  %v7766 = vpop.f32.mrf.mxu0
  %v7767 = vpop.f32.mrf.mxu0
  %v7768 = vadd.f32 %v7668, %v7767
  %v7769 = vpop.f32.mrf.mxu0
  %7770 = vmatprep.mubr.bf16.mxu0 0
  %7771 = vmatmul.mubr.bf16.gmra.mxu0 %v7717
  %v7772 = vpop.f32.mrf.mxu0
  %v7773 = vadd.f32 %v7673, %v7772
  %v7774 = vpop.f32.mrf.mxu0
  %v7775 = vpop.f32.mrf.mxu0
  %v7776 = vadd.f32 %v7678, %v7775
  %v7777 = vpop.f32.mrf.mxu0
  %7778 = vmatprep.mubr.bf16.mxu0 0
  %7779 = vmatmul.mubr.bf16.gmra.mxu0 %v7720
  %v7780 = vpop.f32.mrf.mxu0
  %v7781 = vadd.f32 %v7683, %v7780
  %v7782 = vpop.f32.mrf.mxu0
  %v7783 = vpop.f32.mrf.mxu0
  %v7784 = vadd.f32 %v7688, %v7783
  %v7785 = vpop.f32.mrf.mxu0
  %7786 = vdwg.mxu0
  %v7787 = vsel %vm4054, %v7773, 0.0
  %v7788 = vsel %vm4054, %v7776, 0.0
  %v7789 = vadd.f32 %v7787, %v7788
  %v7790 = vsel %vm4054, %v7781, 0.0
  %v7791 = vadd.f32 %v7789, %v7790
  %v7792 = vsel %vm4054, %v7784, 0.0
  %v7793 = vadd.f32 %v7791, %v7792
  %7794 = vadd.xlane.f32.xlu0 %v7793
  %v7795 = vpop.xlane.xlu0 %7794
  %v7796 = vrot.slane %v7795, 4
  %v7797 = vadd.f32 %v7795, %v7796
  %v7798 = vrot.slane %v7797, 2
  %v7799 = vadd.f32 %v7797, %v7798
  %v7800 = vrot.slane %v7799, 1
  %v7801 = vadd.f32 %v7799, %v7800
  %s7802 = vtos %v7801
  %s7803 = smul.f32 %s7802, 0.0015625
  %v7804 = vmul.f32 %v7773, %v7773
  %v7805 = vmul.f32 %v7776, %v7776
  %v7806 = vmul.f32 %v7781, %v7781
  %v7807 = vmul.f32 %v7784, %v7784
  %v7808 = vsel %vm4054, %v7804, 0.0
  %v7809 = vsel %vm4054, %v7805, 0.0
  %v7810 = vadd.f32 %v7808, %v7809
  %v7811 = vsel %vm4054, %v7806, 0.0
  %v7812 = vadd.f32 %v7810, %v7811
  %v7813 = vsel %vm4054, %v7807, 0.0
  %v7814 = vadd.f32 %v7812, %v7813
  %7815 = vadd.xlane.f32.xlu0 %v7814
  %v7816 = vpop.xlane.xlu0 %7815
  %v7817 = vrot.slane %v7816, 4
  %v7818 = vadd.f32 %v7816, %v7817
  %v7819 = vrot.slane %v7818, 2
  %v7820 = vadd.f32 %v7818, %v7819
  %v7821 = vrot.slane %v7820, 1
  %v7822 = vadd.f32 %v7820, %v7821
  %s7823 = vtos %v7822
  %s7824 = smul.f32 %s7823, 0.0015625
  %s7825 = smul.f32 %s7803, %s7803
  %s7826 = ssub.f32 %s7824, %s7825
  %s7827 = smax.f32 %s7826, 0.0
  %v7828 = vstv %s7803
  %v7829 = vsub.f32 %v7773, %v7828
  %v7830 = vsub.f32 %v7776, %v7828
  %v7831 = vsub.f32 %v7781, %v7828
  %v7832 = vsub.f32 %v7784, %v7828
  %s7833 = sadd.f32 %s7827, 1e-05
  %v7834 = vstv %s7833
  %v7835 = vrsqrt.pop %v7834
  %s7836 = vtos %v7835
  %v7837 = vld [vmem:[%s3 + $0x7d0] sm:$0xff]
  %v7838 = vld [vmem:[%s3 + $0x7d8] sm:$0xff]
  %v7839 = vld [vmem:[%s3 + $0x7e0] sm:$0xff]
  %v7840 = vld [vmem:[%s3 + $0x7e8] sm:$0xff]
  %v7841 = vstv %s7836
  %v7842 = vmul.f32 %v7841, %v7837
  %v7843 = vmul.f32 %v7841, %v7838
  %v7844 = vmul.f32 %v7841, %v7839
  %v7845 = vmul.f32 %v7841, %v7840
  %7847 = vset.pattern.permute.xlu0 0
  %7848 = vperm.xlu0 %7847, %v7842
  %v7849 = vpop.permute.xlu0 %7848
  %7852 = vset.pattern.permute.xlu0 0
  %7853 = vperm.xlu0 %7852, %v7843
  %v7854 = vpop.permute.xlu0 %7853
  %7857 = vset.pattern.permute.xlu0 0
  %7858 = vperm.xlu0 %7857, %v7844
  %v7859 = vpop.permute.xlu0 %7858
  %7862 = vset.pattern.permute.xlu0 0
  %7863 = vperm.xlu0 %7862, %v7845
  %v7864 = vpop.permute.xlu0 %7863
  %v7866 = vmul.f32 %v7829, %v7849
  %v7867 = vmul.f32 %v7830, %v7854
  %v7868 = vmul.f32 %v7831, %v7859
  %v7869 = vmul.f32 %v7832, %v7864
  %v7870 = vld [vmem:[%s3 + $0x7f0] sm:$0xff]
  %v7871 = vld [vmem:[%s3 + $0x7f8] sm:$0xff]
  %v7872 = vld [vmem:[%s3 + $0x800] sm:$0xff]
  %v7873 = vld [vmem:[%s3 + $0x808] sm:$0xff]
  %7875 = vset.pattern.permute.xlu0 0
  %7876 = vperm.xlu0 %7875, %v7870
  %v7877 = vpop.permute.xlu0 %7876
  %7880 = vset.pattern.permute.xlu0 0
  %7881 = vperm.xlu0 %7880, %v7871
  %v7882 = vpop.permute.xlu0 %7881
  %7885 = vset.pattern.permute.xlu0 0
  %7886 = vperm.xlu0 %7885, %v7872
  %v7887 = vpop.permute.xlu0 %7886
  %7890 = vset.pattern.permute.xlu0 0
  %7891 = vperm.xlu0 %7890, %v7873
  %v7892 = vpop.permute.xlu0 %7891
  %v7894 = vadd.f32 %v7866, %v7877
  %v7895 = vadd.f32 %v7867, %v7882
  %v7896 = vadd.f32 %v7868, %v7887
  %v7897 = vadd.f32 %v7869, %v7892
  %vm7898 = vcmp.ge.f32.partialorder %v7894, 0.0
  %vm7899 = vcmp.ge.f32.partialorder %v7895, 0.0
  %vm7900 = vcmp.ge.f32.partialorder %v7896, 0.0
  %vm7901 = vcmp.ge.f32.partialorder %v7897, 0.0
  %v7902 = vmul.f32 %v7894, 0.01
  %v7903 = vmul.f32 %v7895, 0.01
  %v7904 = vmul.f32 %v7896, 0.01
  %v7905 = vmul.f32 %v7897, 0.01
  %v7906 = vsel %vm7898, %v7894, %v7902
  %v7907 = vsel %vm7899, %v7895, %v7903
  %v7908 = vsel %vm7900, %v7896, %v7904
  %v7909 = vsel %vm7901, %v7897, %v7905
  %v7910 = vpack.c.bf16 %v7907, %v7906
  %v7911 = vpack.c.bf16 %v7909, %v7908
  %v7913 = vsel %vm4054, %v7910, 0
  %v7916 = vsel %vm4054, %v7911, 0
  %7918 = vmatprep.subr.bf16.mxu0 0
  %7919 = vmatpush1.bf16.msra.mxu0 0
  %7920 = vmatprep.subr.bf16.mxu0 0
  %7921 = vmatpush1.bf16.msra.mxu0 0
  %7922 = vmatprep.subr.bf16.mxu0 0
  %7923 = vmatpush1.bf16.msra.mxu0 0
  %7924 = vmatprep.subr.bf16.mxu0 0
  %7925 = vmatpush1.bf16.msra.mxu0 0
  %7926 = vmatprep.subr.bf16.mxu0 0
  %7927 = vmatpush1.bf16.msra.mxu0 0
  %7928 = vmatprep.subr.bf16.mxu0 0
  %7929 = vmatpush1.bf16.msra.mxu0 0
  %7930 = vmatprep.subr.bf16.mxu0 0
  %7931 = vmatpush1.bf16.msra.mxu0 %v4199
  %7932 = vmatprep.subr.bf16.mxu0 0
  %7933 = vmatpush1.bf16.msra.mxu0 %v4189
  %7934 = vmatprep.subr.bf16.mxu0 0
  %7935 = vmatpush2.bf16.msra.mxu0 0
  %7936 = vmatprep.subr.bf16.mxu0 0
  %7937 = vmatpush2.bf16.msra.mxu0 0
  %7938 = vmatprep.subr.bf16.mxu0 0
  %7939 = vmatpush2.bf16.msra.mxu0 0
  %7940 = vmatprep.subr.bf16.mxu0 0
  %7941 = vmatpush2.bf16.msra.mxu0 0
  %7942 = vmatprep.subr.bf16.mxu0 0
  %7943 = vmatpush2.bf16.msra.mxu0 0
  %7944 = vmatprep.subr.bf16.mxu0 0
  %7945 = vmatpush2.bf16.msra.mxu0 0
  %7946 = vmatprep.subr.bf16.mxu0 0
  %7947 = vmatpush2.bf16.msra.mxu0 0
  %7948 = vmatprep.subr.bf16.mxu0 0
  %7949 = vmatpush2.bf16.msra.mxu0 0
  %7950 = vmatprep.mubr.bf16.mxu0 0
  %7951 = vmatmul.mubr.bf16.gmra.mxu0 %v7913
  %v7952 = vpop.f32.mrf.mxu0
  %v7953 = vadd.f32 0.0, %v7952
  %v7954 = vpop.f32.mrf.mxu0
  %v7955 = vpop.f32.mrf.mxu0
  %v7956 = vadd.f32 0.0, %v7955
  %v7957 = vpop.f32.mrf.mxu0
  %7958 = vmatprep.mubr.bf16.mxu0 0
  %7959 = vmatmul.mubr.bf16.gmra.mxu0 %v7916
  %v7960 = vpop.f32.mrf.mxu0
  %v7961 = vadd.f32 0.0, %v7960
  %v7962 = vpop.f32.mrf.mxu0
  %v7963 = vpop.f32.mrf.mxu0
  %v7964 = vadd.f32 0.0, %v7963
  %v7965 = vpop.f32.mrf.mxu0
  %7966 = vdwg.mxu0
  %7967 = vmatprep.subr.bf16.mxu0 0
  %7968 = vmatpush1.bf16.msra.mxu0 0
  %7969 = vmatprep.subr.bf16.mxu0 0
  %7970 = vmatpush1.bf16.msra.mxu0 0
  %7971 = vmatprep.subr.bf16.mxu0 0
  %7972 = vmatpush1.bf16.msra.mxu0 0
  %7973 = vmatprep.subr.bf16.mxu0 0
  %7974 = vmatpush1.bf16.msra.mxu0 0
  %7975 = vmatprep.subr.bf16.mxu0 0
  %7976 = vmatpush1.bf16.msra.mxu0 0
  %7977 = vmatprep.subr.bf16.mxu0 0
  %7978 = vmatpush1.bf16.msra.mxu0 0
  %7979 = vmatprep.subr.bf16.mxu0 0
  %7980 = vmatpush1.bf16.msra.mxu0 %v4263
  %7981 = vmatprep.subr.bf16.mxu0 0
  %7982 = vmatpush1.bf16.msra.mxu0 %v4259
  %7983 = vmatprep.subr.bf16.mxu0 0
  %7984 = vmatpush2.bf16.msra.mxu0 0
  %7985 = vmatprep.subr.bf16.mxu0 0
  %7986 = vmatpush2.bf16.msra.mxu0 0
  %7987 = vmatprep.subr.bf16.mxu0 0
  %7988 = vmatpush2.bf16.msra.mxu0 0
  %7989 = vmatprep.subr.bf16.mxu0 0
  %7990 = vmatpush2.bf16.msra.mxu0 0
  %7991 = vmatprep.subr.bf16.mxu0 0
  %7992 = vmatpush2.bf16.msra.mxu0 0
  %7993 = vmatprep.subr.bf16.mxu0 0
  %7994 = vmatpush2.bf16.msra.mxu0 0
  %7995 = vmatprep.subr.bf16.mxu0 0
  %7996 = vmatpush2.bf16.msra.mxu0 0
  %7997 = vmatprep.subr.bf16.mxu0 0
  %7998 = vmatpush2.bf16.msra.mxu0 0
  %7999 = vmatprep.mubr.bf16.mxu0 0
  %8000 = vmatmul.mubr.bf16.gmra.mxu0 %v7913
  %v8001 = vpop.f32.mrf.mxu0
  %v8002 = vadd.f32 0.0, %v8001
  %v8003 = vpop.f32.mrf.mxu0
  %v8004 = vpop.f32.mrf.mxu0
  %v8005 = vadd.f32 0.0, %v8004
  %v8006 = vpop.f32.mrf.mxu0
  %8007 = vmatprep.mubr.bf16.mxu0 0
  %8008 = vmatmul.mubr.bf16.gmra.mxu0 %v7916
  %v8009 = vpop.f32.mrf.mxu0
  %v8010 = vadd.f32 0.0, %v8009
  %v8011 = vpop.f32.mrf.mxu0
  %v8012 = vpop.f32.mrf.mxu0
  %v8013 = vadd.f32 0.0, %v8012
  %v8014 = vpop.f32.mrf.mxu0
  %8015 = vdwg.mxu0
  %v8016 = vpack.c.bf16 %v7956, %v7953
  %v8017 = vpack.c.bf16 %v7964, %v7961
  %v8018 = vpack.c.bf16 %v8005, %v8002
  %v8019 = vpack.c.bf16 %v8013, %v8010
  %v8020 = vld [vmem:[%s2 + $0x80] sm:$0xf]
  %v8021 = vld [vmem:[%s2 + $0x84] sm:$0xf]
  %v8022 = vld [vmem:[%s2 + $0x88] sm:$0xf]
  %v8023 = vld [vmem:[%s2 + $0x8c] sm:$0xf]
  %v8024 = vld [vmem:[%s3 + $0x810] sm:$0xff]
  %v8025 = vld [vmem:[%s3 + $0x818] sm:$0xff]
  %v8026 = vld [vmem:[%s3 + $0x820] sm:$0xff]
  %v8027 = vld [vmem:[%s3 + $0x828] sm:$0xff]
  %8029 = vset.pattern.permute.xlu0 0
  %8030 = vperm.xlu0 %8029, %v8024
  %v8031 = vpop.permute.xlu0 %8030
  %8034 = vset.pattern.permute.xlu0 0
  %8035 = vperm.xlu0 %8034, %v8025
  %v8036 = vpop.permute.xlu0 %8035
  %8039 = vset.pattern.permute.xlu0 0
  %8040 = vperm.xlu0 %8039, %v8026
  %v8041 = vpop.permute.xlu0 %8040
  %8044 = vset.pattern.permute.xlu0 0
  %8045 = vperm.xlu0 %8044, %v8027
  %v8046 = vpop.permute.xlu0 %8045
  %v8052 = vunpack.c.l.b16 %v8020
  %v8053 = vunpack.c.l.b16 %v8021
  %v8054 = vunpack.c.l.b16 %v8022
  %v8055 = vunpack.c.l.b16 %v8023
  %v8056 = vpack.c.b16 %v8053, %v8052
  %v8057 = vpack.c.b16 %v8055, %v8054
  %v8059 = vsel %vm4356, %v8056, 0
  %v8062 = vsel %vm4356, %v8057, 0
  %8064 = vmatprep.subr.bf16.mxu0 0
  %8065 = vmatpush1.bf16.msra.mxu0 0
  %8066 = vmatprep.subr.bf16.mxu0 0
  %8067 = vmatpush1.bf16.msra.mxu0 0
  %8068 = vmatprep.subr.bf16.mxu0 0
  %8069 = vmatpush1.bf16.msra.mxu0 %v8019
  %8070 = vmatprep.subr.bf16.mxu0 0
  %8071 = vmatpush1.bf16.msra.mxu0 %v8018
  %8072 = vmatprep.subr.bf16.mxu0 0
  %8073 = vmatpush1.bf16.msra.mxu0 %v7911
  %8074 = vmatprep.subr.bf16.mxu0 0
  %8075 = vmatpush1.bf16.msra.mxu0 %v7910
  %8076 = vmatprep.subr.bf16.mxu0 0
  %8077 = vmatpush1.bf16.msra.mxu0 %v8017
  %8078 = vmatprep.subr.bf16.mxu0 0
  %8079 = vmatpush1.bf16.msra.mxu0 %v8016
  %8080 = vmatprep.subr.bf16.mxu0 0
  %8081 = vmatpush2.bf16.msra.mxu0 0
  %8082 = vmatprep.subr.bf16.mxu0 0
  %8083 = vmatpush2.bf16.msra.mxu0 0
  %8084 = vmatprep.subr.bf16.mxu0 0
  %8085 = vmatpush2.bf16.msra.mxu0 0
  %8086 = vmatprep.subr.bf16.mxu0 0
  %8087 = vmatpush2.bf16.msra.mxu0 0
  %8088 = vmatprep.subr.bf16.mxu0 0
  %8089 = vmatpush2.bf16.msra.mxu0 0
  %8090 = vmatprep.subr.bf16.mxu0 0
  %8091 = vmatpush2.bf16.msra.mxu0 0
  %8092 = vmatprep.subr.bf16.mxu0 0
  %8093 = vmatpush2.bf16.msra.mxu0 0
  %8094 = vmatprep.subr.bf16.mxu0 0
  %8095 = vmatpush2.bf16.msra.mxu0 0
  %8096 = vmatprep.mubr.bf16.mxu0 0
  %8097 = vmatmul.mubr.bf16.gmra.mxu0 %v8059
  %v8098 = vpop.f32.mrf.mxu0
  %v8099 = vadd.f32 %v8031, %v8098
  %v8100 = vpop.f32.mrf.mxu0
  %v8101 = vpop.f32.mrf.mxu0
  %v8102 = vadd.f32 %v8036, %v8101
  %v8103 = vpop.f32.mrf.mxu0
  %8104 = vmatprep.mubr.bf16.mxu0 0
  %8105 = vmatmul.mubr.bf16.gmra.mxu0 %v8062
  %v8106 = vpop.f32.mrf.mxu0
  %v8107 = vadd.f32 %v8041, %v8106
  %v8108 = vpop.f32.mrf.mxu0
  %v8109 = vpop.f32.mrf.mxu0
  %v8110 = vadd.f32 %v8046, %v8109
  %v8111 = vpop.f32.mrf.mxu0
  %8112 = vdwg.mxu0
  %v8113 = vadd.f32 %v7757, %v8099
  %v8114 = vadd.f32 %v7760, %v8102
  %v8115 = vadd.f32 %v7765, %v8107
  %v8116 = vadd.f32 %v7768, %v8110
  %v8117 = vsel %vm4054, %v8113, 0.0
  %v8118 = vsel %vm4054, %v8114, 0.0
  %v8119 = vadd.f32 %v8117, %v8118
  %v8120 = vsel %vm4054, %v8115, 0.0
  %v8121 = vadd.f32 %v8119, %v8120
  %v8122 = vsel %vm4054, %v8116, 0.0
  %v8123 = vadd.f32 %v8121, %v8122
  %8124 = vadd.xlane.f32.xlu0 %v8123
  %v8125 = vpop.xlane.xlu0 %8124
  %v8126 = vrot.slane %v8125, 4
  %v8127 = vadd.f32 %v8125, %v8126
  %v8128 = vrot.slane %v8127, 2
  %v8129 = vadd.f32 %v8127, %v8128
  %v8130 = vrot.slane %v8129, 1
  %v8131 = vadd.f32 %v8129, %v8130
  %s8132 = vtos %v8131
  %s8133 = smul.f32 %s8132, 0.0015625
  %v8134 = vmul.f32 %v8113, %v8113
  %v8135 = vmul.f32 %v8114, %v8114
  %v8136 = vmul.f32 %v8115, %v8115
  %v8137 = vmul.f32 %v8116, %v8116
  %v8138 = vsel %vm4054, %v8134, 0.0
  %v8139 = vsel %vm4054, %v8135, 0.0
  %v8140 = vadd.f32 %v8138, %v8139
  %v8141 = vsel %vm4054, %v8136, 0.0
  %v8142 = vadd.f32 %v8140, %v8141
  %v8143 = vsel %vm4054, %v8137, 0.0
  %v8144 = vadd.f32 %v8142, %v8143
  %8145 = vadd.xlane.f32.xlu0 %v8144
  %v8146 = vpop.xlane.xlu0 %8145
  %v8147 = vrot.slane %v8146, 4
  %v8148 = vadd.f32 %v8146, %v8147
  %v8149 = vrot.slane %v8148, 2
  %v8150 = vadd.f32 %v8148, %v8149
  %v8151 = vrot.slane %v8150, 1
  %v8152 = vadd.f32 %v8150, %v8151
  %s8153 = vtos %v8152
  %s8154 = smul.f32 %s8153, 0.0015625
  %s8155 = smul.f32 %s8133, %s8133
  %s8156 = ssub.f32 %s8154, %s8155
  %s8157 = smax.f32 %s8156, 0.0
  %v8158 = vstv %s8133
  %v8159 = vsub.f32 %v8113, %v8158
  %v8160 = vsub.f32 %v8114, %v8158
  %v8161 = vsub.f32 %v8115, %v8158
  %v8162 = vsub.f32 %v8116, %v8158
  %s8163 = sadd.f32 %s8157, 1e-05
  %v8164 = vstv %s8163
  %v8165 = vrsqrt.pop %v8164
  %s8166 = vtos %v8165
  %v8167 = vld [vmem:[%s3 + $0x830] sm:$0xff]
  %v8168 = vld [vmem:[%s3 + $0x838] sm:$0xff]
  %v8169 = vld [vmem:[%s3 + $0x840] sm:$0xff]
  %v8170 = vld [vmem:[%s3 + $0x848] sm:$0xff]
  %v8171 = vstv %s8166
  %v8172 = vmul.f32 %v8171, %v8167
  %v8173 = vmul.f32 %v8171, %v8168
  %v8174 = vmul.f32 %v8171, %v8169
  %v8175 = vmul.f32 %v8171, %v8170
  %8177 = vset.pattern.permute.xlu0 0
  %8178 = vperm.xlu0 %8177, %v8172
  %v8179 = vpop.permute.xlu0 %8178
  %8182 = vset.pattern.permute.xlu0 0
  %8183 = vperm.xlu0 %8182, %v8173
  %v8184 = vpop.permute.xlu0 %8183
  %8187 = vset.pattern.permute.xlu0 0
  %8188 = vperm.xlu0 %8187, %v8174
  %v8189 = vpop.permute.xlu0 %8188
  %8192 = vset.pattern.permute.xlu0 0
  %8193 = vperm.xlu0 %8192, %v8175
  %v8194 = vpop.permute.xlu0 %8193
  %v8196 = vmul.f32 %v8159, %v8179
  %v8197 = vmul.f32 %v8160, %v8184
  %v8198 = vmul.f32 %v8161, %v8189
  %v8199 = vmul.f32 %v8162, %v8194
  %v8200 = vld [vmem:[%s3 + $0x850] sm:$0xff]
  %v8201 = vld [vmem:[%s3 + $0x858] sm:$0xff]
  %v8202 = vld [vmem:[%s3 + $0x860] sm:$0xff]
  %v8203 = vld [vmem:[%s3 + $0x868] sm:$0xff]
  %8205 = vset.pattern.permute.xlu0 0
  %8206 = vperm.xlu0 %8205, %v8200
  %v8207 = vpop.permute.xlu0 %8206
  %8210 = vset.pattern.permute.xlu0 0
  %8211 = vperm.xlu0 %8210, %v8201
  %v8212 = vpop.permute.xlu0 %8211
  %8215 = vset.pattern.permute.xlu0 0
  %8216 = vperm.xlu0 %8215, %v8202
  %v8217 = vpop.permute.xlu0 %8216
  %8220 = vset.pattern.permute.xlu0 0
  %8221 = vperm.xlu0 %8220, %v8203
  %v8222 = vpop.permute.xlu0 %8221
  %v8224 = vadd.f32 %v8196, %v8207
  %v8225 = vadd.f32 %v8197, %v8212
  %v8226 = vadd.f32 %v8198, %v8217
  %v8227 = vadd.f32 %v8199, %v8222
  %vm8228 = vcmp.ge.f32.partialorder %v8224, 0.0
  %vm8229 = vcmp.ge.f32.partialorder %v8225, 0.0
  %vm8230 = vcmp.ge.f32.partialorder %v8226, 0.0
  %vm8231 = vcmp.ge.f32.partialorder %v8227, 0.0
  %v8232 = vmul.f32 %v8224, 0.01
  %v8233 = vmul.f32 %v8225, 0.01
  %v8234 = vmul.f32 %v8226, 0.01
  %v8235 = vmul.f32 %v8227, 0.01
  %v8236 = vsel %vm8228, %v8224, %v8232
  %v8237 = vsel %vm8229, %v8225, %v8233
  %v8238 = vsel %vm8230, %v8226, %v8234
  %v8239 = vsel %vm8231, %v8227, %v8235
  %v8240 = vpack.c.bf16 %v8237, %v8236
  %v8241 = vpack.c.bf16 %v8239, %v8238
  %v8242 = vld [vmem:[%s2 + $0xf4] sm:$0xf]
  %v8243 = vld [vmem:[%s2 + $0xf8] sm:$0xf]
  %v8244 = vld [vmem:[%s2 + $0xfc] sm:$0x3]
  %v8248 = vunpack.c.l.b16 %v8242
  %v8249 = vunpack.c.l.b16 %v8243
  %v8250 = vunpack.c.l.b16 %v8244
  %v8251 = vpack.c.b16 %v8249, %v8248
  %v8252 = vpack.c.b16 %v8250, %v8250
  %v8255 = vsel %vm4054, %v8240, 0
  %v8258 = vsel %vm4054, %v8241, 0
  %v8261 = vsel %vm2285, %v8252, 0
  %8263 = vmatprep.subr.bf16.mxu0 0
  %8264 = vmatpush1.bf16.msra.mxu0 0
  %8265 = vmatprep.subr.bf16.mxu0 0
  %8266 = vmatpush1.bf16.msra.mxu0 0
  %8267 = vmatprep.subr.bf16.mxu0 0
  %8268 = vmatpush1.bf16.msra.mxu0 0
  %8269 = vmatprep.subr.bf16.mxu0 0
  %8270 = vmatpush1.bf16.msra.mxu0 0
  %8271 = vmatprep.subr.bf16.mxu0 0
  %8272 = vmatpush1.bf16.msra.mxu0 0
  %8273 = vmatprep.subr.bf16.mxu0 0
  %8274 = vmatpush1.bf16.msra.mxu0 0
  %8275 = vmatprep.subr.bf16.mxu0 0
  %8276 = vmatpush1.bf16.msra.mxu0 %v8261
  %8277 = vmatprep.subr.bf16.mxu0 0
  %8278 = vmatpush1.bf16.msra.mxu0 %v8251
  %8279 = vmatprep.subr.bf16.mxu0 0
  %8280 = vmatpush2.bf16.msra.mxu0 0
  %8281 = vmatprep.subr.bf16.mxu0 0
  %8282 = vmatpush2.bf16.msra.mxu0 0
  %8283 = vmatprep.subr.bf16.mxu0 0
  %8284 = vmatpush2.bf16.msra.mxu0 0
  %8285 = vmatprep.subr.bf16.mxu0 0
  %8286 = vmatpush2.bf16.msra.mxu0 0
  %8287 = vmatprep.subr.bf16.mxu0 0
  %8288 = vmatpush2.bf16.msra.mxu0 0
  %8289 = vmatprep.subr.bf16.mxu0 0
  %8290 = vmatpush2.bf16.msra.mxu0 0
  %8291 = vmatprep.subr.bf16.mxu0 0
  %8292 = vmatpush2.bf16.msra.mxu0 0
  %8293 = vmatprep.subr.bf16.mxu0 0
  %8294 = vmatpush2.bf16.msra.mxu0 0
  %8295 = vmatprep.mubr.bf16.mxu0 0
  %8296 = vmatmul.mubr.bf16.gmra.mxu0 %v8255
  %v8297 = vpop.f32.mrf.mxu0
  %v8298 = vadd.f32 0.0, %v8297
  %v8299 = vpop.f32.mrf.mxu0
  %v8300 = vpop.f32.mrf.mxu0
  %v8301 = vadd.f32 0.0, %v8300
  %v8302 = vpop.f32.mrf.mxu0
  %8303 = vmatprep.mubr.bf16.mxu0 0
  %8304 = vmatmul.mubr.bf16.gmra.mxu0 %v8258
  %v8305 = vpop.f32.mrf.mxu0
  %v8306 = vadd.f32 0.0, %v8305
  %v8307 = vpop.f32.mrf.mxu0
  %v8308 = vpop.f32.mrf.mxu0
  %v8309 = vadd.f32 0.0, %v8308
  %v8310 = vpop.f32.mrf.mxu0
  %8311 = vdwg.mxu0
  %v8312 = vsel %vm1216, %v8298, 0.0
  %v8313 = vsel %vm1216, %v8301, 0.0
  %v8314 = vadd.f32 %v8312, %v8313
  %v8315 = vsel %vm1216, %v8306, 0.0
  %v8316 = vadd.f32 %v8314, %v8315
  %v8317 = vsel %vm1216, %v8309, 0.0
  %v8318 = vadd.f32 %v8316, %v8317
  %8319 = vadd.xlane.f32.xlu0 %v8318
  %v8320 = vpop.xlane.xlu0 %8319
  %v8321 = vrot.slane %v8320, 4
  %v8322 = vadd.f32 %v8320, %v8321
  %v8323 = vrot.slane %v8322, 2
  %v8324 = vadd.f32 %v8322, %v8323
  %v8325 = vrot.slane %v8324, 1
  %v8326 = vadd.f32 %v8324, %v8325
  %s8327 = vtos %v8326
  %s8328 = smul.f32 %s8327, 0.0003125
  %v8329 = vmul.f32 %v8298, %v8298
  %v8330 = vmul.f32 %v8301, %v8301
  %v8331 = vmul.f32 %v8306, %v8306
  %v8332 = vmul.f32 %v8309, %v8309
  %v8333 = vsel %vm1216, %v8329, 0.0
  %v8334 = vsel %vm1216, %v8330, 0.0
  %v8335 = vadd.f32 %v8333, %v8334
  %v8336 = vsel %vm1216, %v8331, 0.0
  %v8337 = vadd.f32 %v8335, %v8336
  %v8338 = vsel %vm1216, %v8332, 0.0
  %v8339 = vadd.f32 %v8337, %v8338
  %8340 = vadd.xlane.f32.xlu0 %v8339
  %v8341 = vpop.xlane.xlu0 %8340
  %v8342 = vrot.slane %v8341, 4
  %v8343 = vadd.f32 %v8341, %v8342
  %v8344 = vrot.slane %v8343, 2
  %v8345 = vadd.f32 %v8343, %v8344
  %v8346 = vrot.slane %v8345, 1
  %v8347 = vadd.f32 %v8345, %v8346
  %s8348 = vtos %v8347
  %s8349 = smul.f32 %s8348, 0.0003125
  %s8350 = smul.f32 %s8328, %s8328
  %s8351 = ssub.f32 %s8349, %s8350
  %s8352 = smax.f32 %s8351, 0.0
  %v8353 = vstv %s8328
  %v8354 = vsub.f32 %v8298, %v8353
  %v8355 = vsub.f32 %v8301, %v8353
  %v8356 = vsub.f32 %v8306, %v8353
  %v8357 = vsub.f32 %v8309, %v8353
  %s8358 = sadd.f32 %s8352, 1e-05
  %v8359 = vstv %s8358
  %v8360 = vrsqrt.pop %v8359
  %s8361 = vtos %v8360
  %v8362 = vld [vmem:[%s3 + $0xab0] sm:$0xff]
  %v8363 = vld [vmem:[%s3 + $0xab8] sm:$0xff]
  %v8364 = vld [vmem:[%s3 + $0xac0] sm:$0xff]
  %v8365 = vld [vmem:[%s3 + $0xac8] sm:$0xff]
  %v8366 = vstv %s8361
  %v8367 = vmul.f32 %v8366, %v8362
  %v8368 = vmul.f32 %v8366, %v8363
  %v8369 = vmul.f32 %v8366, %v8364
  %v8370 = vmul.f32 %v8366, %v8365
  %8372 = vset.pattern.permute.xlu0 0
  %8373 = vperm.xlu0 %8372, %v8367
  %v8374 = vpop.permute.xlu0 %8373
  %8377 = vset.pattern.permute.xlu0 0
  %8378 = vperm.xlu0 %8377, %v8368
  %v8379 = vpop.permute.xlu0 %8378
  %8382 = vset.pattern.permute.xlu0 0
  %8383 = vperm.xlu0 %8382, %v8369
  %v8384 = vpop.permute.xlu0 %8383
  %8387 = vset.pattern.permute.xlu0 0
  %8388 = vperm.xlu0 %8387, %v8370
  %v8389 = vpop.permute.xlu0 %8388
  %v8391 = vmul.f32 %v8354, %v8374
  %v8392 = vmul.f32 %v8355, %v8379
  %v8393 = vmul.f32 %v8356, %v8384
  %v8394 = vmul.f32 %v8357, %v8389
  %v8395 = vld [vmem:[%s3 + $0xad0] sm:$0xff]
  %v8396 = vld [vmem:[%s3 + $0xad8] sm:$0xff]
  %v8397 = vld [vmem:[%s3 + $0xae0] sm:$0xff]
  %v8398 = vld [vmem:[%s3 + $0xae8] sm:$0xff]
  %8400 = vset.pattern.permute.xlu0 0
  %8401 = vperm.xlu0 %8400, %v8395
  %v8402 = vpop.permute.xlu0 %8401
  %8405 = vset.pattern.permute.xlu0 0
  %8406 = vperm.xlu0 %8405, %v8396
  %v8407 = vpop.permute.xlu0 %8406
  %8410 = vset.pattern.permute.xlu0 0
  %8411 = vperm.xlu0 %8410, %v8397
  %v8412 = vpop.permute.xlu0 %8411
  %8415 = vset.pattern.permute.xlu0 0
  %8416 = vperm.xlu0 %8415, %v8398
  %v8417 = vpop.permute.xlu0 %8416
  %v8419 = vadd.f32 %v8391, %v8402
  %v8420 = vadd.f32 %v8392, %v8407
  %v8421 = vadd.f32 %v8393, %v8412
  %v8422 = vadd.f32 %v8394, %v8417
  %v8423 = vsel %vm1216, %v3342, 0.0
  %v8424 = vsel %vm1216, %v3343, 0.0
  %v8425 = vadd.f32 %v8423, %v8424
  %v8426 = vsel %vm1216, %v3344, 0.0
  %v8427 = vadd.f32 %v8425, %v8426
  %v8428 = vsel %vm1216, %v3345, 0.0
  %v8429 = vadd.f32 %v8427, %v8428
  %8430 = vadd.xlane.f32.xlu0 %v8429
  %v8431 = vpop.xlane.xlu0 %8430
  %v8432 = vrot.slane %v8431, 4
  %v8433 = vadd.f32 %v8431, %v8432
  %v8434 = vrot.slane %v8433, 2
  %v8435 = vadd.f32 %v8433, %v8434
  %v8436 = vrot.slane %v8435, 1
  %v8437 = vadd.f32 %v8435, %v8436
  %s8438 = vtos %v8437
  %s8439 = smul.f32 %s8438, 0.0003125
  %v8440 = vmul.f32 %v3342, %v3342
  %v8441 = vmul.f32 %v3343, %v3343
  %v8442 = vmul.f32 %v3344, %v3344
  %v8443 = vmul.f32 %v3345, %v3345
  %v8444 = vsel %vm1216, %v8440, 0.0
  %v8445 = vsel %vm1216, %v8441, 0.0
  %v8446 = vadd.f32 %v8444, %v8445
  %v8447 = vsel %vm1216, %v8442, 0.0
  %v8448 = vadd.f32 %v8446, %v8447
  %v8449 = vsel %vm1216, %v8443, 0.0
  %v8450 = vadd.f32 %v8448, %v8449
  %8451 = vadd.xlane.f32.xlu0 %v8450
  %v8452 = vpop.xlane.xlu0 %8451
  %v8453 = vrot.slane %v8452, 4
  %v8454 = vadd.f32 %v8452, %v8453
  %v8455 = vrot.slane %v8454, 2
  %v8456 = vadd.f32 %v8454, %v8455
  %v8457 = vrot.slane %v8456, 1
  %v8458 = vadd.f32 %v8456, %v8457
  %s8459 = vtos %v8458
  %s8460 = smul.f32 %s8459, 0.0003125
  %s8461 = smul.f32 %s8439, %s8439
  %s8462 = ssub.f32 %s8460, %s8461
  %s8463 = smax.f32 %s8462, 0.0
  %v8464 = vstv %s8439
  %v8465 = vsub.f32 %v3342, %v8464
  %v8466 = vsub.f32 %v3343, %v8464
  %v8467 = vsub.f32 %v3344, %v8464
  %v8468 = vsub.f32 %v3345, %v8464
  %s8469 = sadd.f32 %s8463, 1e-05
  %v8470 = vstv %s8469
  %v8471 = vrsqrt.pop %v8470
  %s8472 = vtos %v8471
  %v8473 = vld [vmem:[%s3 + $0xaf0] sm:$0xff]
  %v8474 = vld [vmem:[%s3 + $0xaf8] sm:$0xff]
  %v8475 = vld [vmem:[%s3 + $0xb00] sm:$0xff]
  %v8476 = vld [vmem:[%s3 + $0xb08] sm:$0xff]
  %v8477 = vstv %s8472
  %v8478 = vmul.f32 %v8477, %v8473
  %v8479 = vmul.f32 %v8477, %v8474
  %v8480 = vmul.f32 %v8477, %v8475
  %v8481 = vmul.f32 %v8477, %v8476
  %8483 = vset.pattern.permute.xlu0 0
  %8484 = vperm.xlu0 %8483, %v8478
  %v8485 = vpop.permute.xlu0 %8484
  %8488 = vset.pattern.permute.xlu0 0
  %8489 = vperm.xlu0 %8488, %v8479
  %v8490 = vpop.permute.xlu0 %8489
  %8493 = vset.pattern.permute.xlu0 0
  %8494 = vperm.xlu0 %8493, %v8480
  %v8495 = vpop.permute.xlu0 %8494
  %8498 = vset.pattern.permute.xlu0 0
  %8499 = vperm.xlu0 %8498, %v8481
  %v8500 = vpop.permute.xlu0 %8499
  %v8502 = vmul.f32 %v8465, %v8485
  %v8503 = vmul.f32 %v8466, %v8490
  %v8504 = vmul.f32 %v8467, %v8495
  %v8505 = vmul.f32 %v8468, %v8500
  %v8506 = vld [vmem:[%s3 + $0xb10] sm:$0xff]
  %v8507 = vld [vmem:[%s3 + $0xb18] sm:$0xff]
  %v8508 = vld [vmem:[%s3 + $0xb20] sm:$0xff]
  %v8509 = vld [vmem:[%s3 + $0xb28] sm:$0xff]
  %8511 = vset.pattern.permute.xlu0 0
  %8512 = vperm.xlu0 %8511, %v8506
  %v8513 = vpop.permute.xlu0 %8512
  %8516 = vset.pattern.permute.xlu0 0
  %8517 = vperm.xlu0 %8516, %v8507
  %v8518 = vpop.permute.xlu0 %8517
  %8521 = vset.pattern.permute.xlu0 0
  %8522 = vperm.xlu0 %8521, %v8508
  %v8523 = vpop.permute.xlu0 %8522
  %8526 = vset.pattern.permute.xlu0 0
  %8527 = vperm.xlu0 %8526, %v8509
  %v8528 = vpop.permute.xlu0 %8527
  %v8530 = vadd.f32 %v8502, %v8513
  %v8531 = vadd.f32 %v8503, %v8518
  %v8532 = vadd.f32 %v8504, %v8523
  %v8533 = vadd.f32 %v8505, %v8528
  %v8534 = vpack.c.bf16 %v8420, %v8419
  %v8535 = vpack.c.bf16 %v8422, %v8421
  %v8536 = vpack.c.bf16 %v8531, %v8530
  %v8537 = vpack.c.bf16 %v8533, %v8532
  %v8538 = vld [vmem:[%s2 + $0xe4] sm:$0xf]
  %v8539 = vld [vmem:[%s2 + $0xe8] sm:$0xf]
  %v8540 = vld [vmem:[%s2 + $0xec] sm:$0xf]
  %v8541 = vld [vmem:[%s2 + $0xf0] sm:$0xf]
  %v8542 = vld [vmem:[%s3 + $0xa90] sm:$0xff]
  %v8543 = vld [vmem:[%s3 + $0xa98] sm:$0xff]
  %v8544 = vld [vmem:[%s3 + $0xaa0] sm:$0xff]
  %v8545 = vld [vmem:[%s3 + $0xaa8] sm:$0xff]
  %8547 = vset.pattern.permute.xlu0 0
  %8548 = vperm.xlu0 %8547, %v8542
  %v8549 = vpop.permute.xlu0 %8548
  %8552 = vset.pattern.permute.xlu0 0
  %8553 = vperm.xlu0 %8552, %v8543
  %v8554 = vpop.permute.xlu0 %8553
  %8557 = vset.pattern.permute.xlu0 0
  %8558 = vperm.xlu0 %8557, %v8544
  %v8559 = vpop.permute.xlu0 %8558
  %8562 = vset.pattern.permute.xlu0 0
  %8563 = vperm.xlu0 %8562, %v8545
  %v8564 = vpop.permute.xlu0 %8563
  %v8570 = vunpack.c.l.b16 %v8538
  %v8571 = vunpack.c.l.b16 %v8539
  %v8572 = vunpack.c.l.b16 %v8540
  %v8573 = vunpack.c.l.b16 %v8541
  %v8574 = vpack.c.b16 %v8571, %v8570
  %v8575 = vpack.c.b16 %v8573, %v8572
  %v8577 = vsel %vm6372, %v8574, 0
  %v8580 = vsel %vm6372, %v8575, 0
  %8582 = vmatprep.subr.bf16.mxu0 0
  %8583 = vmatpush1.bf16.msra.mxu0 0
  %8584 = vmatprep.subr.bf16.mxu0 0
  %8585 = vmatpush1.bf16.msra.mxu0 0
  %8586 = vmatprep.subr.bf16.mxu0 0
  %8587 = vmatpush1.bf16.msra.mxu0 0
  %8588 = vmatprep.subr.bf16.mxu0 0
  %8589 = vmatpush1.bf16.msra.mxu0 0
  %8590 = vmatprep.subr.bf16.mxu0 0
  %8591 = vmatpush1.bf16.msra.mxu0 %v8537
  %8592 = vmatprep.subr.bf16.mxu0 0
  %8593 = vmatpush1.bf16.msra.mxu0 %v8536
  %8594 = vmatprep.subr.bf16.mxu0 0
  %8595 = vmatpush1.bf16.msra.mxu0 %v8535
  %8596 = vmatprep.subr.bf16.mxu0 0
  %8597 = vmatpush1.bf16.msra.mxu0 %v8534
  %8598 = vmatprep.subr.bf16.mxu0 0
  %8599 = vmatpush2.bf16.msra.mxu0 0
  %8600 = vmatprep.subr.bf16.mxu0 0
  %8601 = vmatpush2.bf16.msra.mxu0 0
  %8602 = vmatprep.subr.bf16.mxu0 0
  %8603 = vmatpush2.bf16.msra.mxu0 0
  %8604 = vmatprep.subr.bf16.mxu0 0
  %8605 = vmatpush2.bf16.msra.mxu0 0
  %8606 = vmatprep.subr.bf16.mxu0 0
  %8607 = vmatpush2.bf16.msra.mxu0 0
  %8608 = vmatprep.subr.bf16.mxu0 0
  %8609 = vmatpush2.bf16.msra.mxu0 0
  %8610 = vmatprep.subr.bf16.mxu0 0
  %8611 = vmatpush2.bf16.msra.mxu0 0
  %8612 = vmatprep.subr.bf16.mxu0 0
  %8613 = vmatpush2.bf16.msra.mxu0 0
  %8614 = vmatprep.mubr.bf16.mxu0 0
  %8615 = vmatmul.mubr.bf16.gmra.mxu0 %v8577
  %v8616 = vpop.f32.mrf.mxu0
  %v8617 = vadd.f32 %v8549, %v8616
  %v8618 = vpop.f32.mrf.mxu0
  %v8619 = vpop.f32.mrf.mxu0
  %v8620 = vadd.f32 %v8554, %v8619
  %v8621 = vpop.f32.mrf.mxu0
  %8622 = vmatprep.mubr.bf16.mxu0 0
  %8623 = vmatmul.mubr.bf16.gmra.mxu0 %v8580
  %v8624 = vpop.f32.mrf.mxu0
  %v8625 = vadd.f32 %v8559, %v8624
  %v8626 = vpop.f32.mrf.mxu0
  %v8627 = vpop.f32.mrf.mxu0
  %v8628 = vadd.f32 %v8564, %v8627
  %v8629 = vpop.f32.mrf.mxu0
  %8630 = vdwg.mxu0
  %v8631 = vpack.c.bf16 %v8620, %v8617
  %v8632 = vpack.c.bf16 %v8628, %v8625
  %v8634 = vsel %vm1216, %v8631, 0
  %v8637 = vsel %vm1216, %v8632, 0
  %8639 = vmatprep.subr.bf16.mxu0 0
  %8640 = vmatpush1.bf16.msra.mxu0 0
  %8641 = vmatprep.subr.bf16.mxu0 0
  %8642 = vmatpush1.bf16.msra.mxu0 %v2287
  %8643 = vmatprep.subr.bf16.mxu0 0
  %8644 = vmatpush1.bf16.msra.mxu0 %v2220
  %8645 = vmatprep.subr.bf16.mxu0 0
  %8646 = vmatpush1.bf16.msra.mxu0 %v2219
  %8647 = vmatprep.subr.bf16.mxu0 0
  %8648 = vmatpush1.bf16.msra.mxu0 %v2218
  %8649 = vmatprep.subr.bf16.mxu0 0
  %8650 = vmatpush1.bf16.msra.mxu0 %v2217
  %8651 = vmatprep.subr.bf16.mxu0 0
  %8652 = vmatpush1.bf16.msra.mxu0 %v2216
  %8653 = vmatprep.subr.bf16.mxu0 0
  %8654 = vmatpush1.bf16.msra.mxu0 %v2215
  %8655 = vmatprep.subr.bf16.mxu0 0
  %8656 = vmatpush2.bf16.msra.mxu0 0
  %8657 = vmatprep.subr.bf16.mxu0 0
  %8658 = vmatpush2.bf16.msra.mxu0 0
  %8659 = vmatprep.subr.bf16.mxu0 0
  %8660 = vmatpush2.bf16.msra.mxu0 0
  %8661 = vmatprep.subr.bf16.mxu0 0
  %8662 = vmatpush2.bf16.msra.mxu0 0
  %8663 = vmatprep.subr.bf16.mxu0 0
  %8664 = vmatpush2.bf16.msra.mxu0 0
  %8665 = vmatprep.subr.bf16.mxu0 0
  %8666 = vmatpush2.bf16.msra.mxu0 0
  %8667 = vmatprep.subr.bf16.mxu0 0
  %8668 = vmatpush2.bf16.msra.mxu0 0
  %8669 = vmatprep.subr.bf16.mxu0 0
  %8670 = vmatpush2.bf16.msra.mxu0 0
  %8671 = vmatprep.mubr.bf16.mxu0 0
  %8672 = vmatmul.mubr.bf16.gmra.mxu0 %v8634
  %v8673 = vpop.f32.mrf.mxu0
  %v8674 = vadd.f32 0.0, %v8673
  %v8675 = vpop.f32.mrf.mxu0
  %v8676 = vpop.f32.mrf.mxu0
  %v8677 = vadd.f32 0.0, %v8676
  %v8678 = vpop.f32.mrf.mxu0
  %8679 = vmatprep.mubr.bf16.mxu0 0
  %8680 = vmatmul.mubr.bf16.gmra.mxu0 %v8637
  %v8681 = vpop.f32.mrf.mxu0
  %v8682 = vadd.f32 0.0, %v8681
  %v8683 = vpop.f32.mrf.mxu0
  %v8684 = vpop.f32.mrf.mxu0
  %v8685 = vadd.f32 0.0, %v8684
  %v8686 = vpop.f32.mrf.mxu0
  %8687 = vdwg.mxu0
  %8688 = vmatprep.subr.bf16.mxu0 0
  %8689 = vmatpush1.bf16.msra.mxu0 0
  %8690 = vmatprep.subr.bf16.mxu0 0
  %8691 = vmatpush1.bf16.msra.mxu0 %v2546
  %8692 = vmatprep.subr.bf16.mxu0 0
  %8693 = vmatpush1.bf16.msra.mxu0 %v2537
  %8694 = vmatprep.subr.bf16.mxu0 0
  %8695 = vmatpush1.bf16.msra.mxu0 %v2536
  %8696 = vmatprep.subr.bf16.mxu0 0
  %8697 = vmatpush1.bf16.msra.mxu0 %v2535
  %8698 = vmatprep.subr.bf16.mxu0 0
  %8699 = vmatpush1.bf16.msra.mxu0 %v2534
  %8700 = vmatprep.subr.bf16.mxu0 0
  %8701 = vmatpush1.bf16.msra.mxu0 %v2533
  %8702 = vmatprep.subr.bf16.mxu0 0
  %8703 = vmatpush1.bf16.msra.mxu0 %v2532
  %8704 = vmatprep.subr.bf16.mxu0 0
  %8705 = vmatpush2.bf16.msra.mxu0 0
  %8706 = vmatprep.subr.bf16.mxu0 0
  %8707 = vmatpush2.bf16.msra.mxu0 0
  %8708 = vmatprep.subr.bf16.mxu0 0
  %8709 = vmatpush2.bf16.msra.mxu0 0
  %8710 = vmatprep.subr.bf16.mxu0 0
  %8711 = vmatpush2.bf16.msra.mxu0 0
  %8712 = vmatprep.subr.bf16.mxu0 0
  %8713 = vmatpush2.bf16.msra.mxu0 0
  %8714 = vmatprep.subr.bf16.mxu0 0
  %8715 = vmatpush2.bf16.msra.mxu0 0
  %8716 = vmatprep.subr.bf16.mxu0 0
  %8717 = vmatpush2.bf16.msra.mxu0 0
  %8718 = vmatprep.subr.bf16.mxu0 0
  %8719 = vmatpush2.bf16.msra.mxu0 0
  %8720 = vmatprep.mubr.bf16.mxu0 0
  %8721 = vmatmul.mubr.bf16.gmra.mxu0 %v8634
  %v8722 = vpop.f32.mrf.mxu0
  %v8723 = vadd.f32 0.0, %v8722
  %v8724 = vpop.f32.mrf.mxu0
  %v8725 = vpop.f32.mrf.mxu0
  %v8726 = vadd.f32 0.0, %v8725
  %v8727 = vpop.f32.mrf.mxu0
  %8728 = vmatprep.mubr.bf16.mxu0 0
  %8729 = vmatmul.mubr.bf16.gmra.mxu0 %v8637
  %v8730 = vpop.f32.mrf.mxu0
  %v8731 = vadd.f32 0.0, %v8730
  %v8732 = vpop.f32.mrf.mxu0
  %v8733 = vpop.f32.mrf.mxu0
  %v8734 = vadd.f32 0.0, %v8733
  %v8735 = vpop.f32.mrf.mxu0
  %8736 = vdwg.mxu0
  %v8737 = vpack.c.bf16 %v8677, %v8674
  %v8738 = vpack.c.bf16 %v8685, %v8682
  %v8739 = vpack.c.bf16 %v8726, %v8723
  %v8740 = vpack.c.bf16 %v8734, %v8731
  %v8741 = vld [vmem:[%s2 + $0x90] sm:$0xf]
  %v8742 = vld [vmem:[%s2 + $0x94] sm:$0xf]
  %v8743 = vld [vmem:[%s2 + $0x98] sm:$0xf]
  %v8744 = vld [vmem:[%s2 + $0x9c] sm:$0xf]
  %v8745 = vld [vmem:[%s2 + $0xa0] sm:$0xf]
  %v8746 = vld [vmem:[%s2 + $0xa4] sm:$0xf]
  %v8747 = vld [vmem:[%s2 + $0xa8] sm:$0xf]
  %v8748 = vld [vmem:[%s2 + $0xac] sm:$0xf]
  %v8749 = vld [vmem:[%s3 + $0x870] sm:$0xff]
  %v8750 = vld [vmem:[%s3 + $0x878] sm:$0xff]
  %v8751 = vld [vmem:[%s3 + $0x880] sm:$0xff]
  %v8752 = vld [vmem:[%s3 + $0x888] sm:$0xff]
  %v8753 = vld [vmem:[%s3 + $0x890] sm:$0xff]
  %v8754 = vld [vmem:[%s3 + $0x898] sm:$0xff]
  %v8755 = vld [vmem:[%s3 + $0x8a0] sm:$0xff]
  %v8756 = vld [vmem:[%s3 + $0x8a8] sm:$0xff]
  %8758 = vset.pattern.permute.xlu0 0
  %8759 = vperm.xlu0 %8758, %v8749
  %v8760 = vpop.permute.xlu0 %8759
  %8763 = vset.pattern.permute.xlu0 0
  %8764 = vperm.xlu0 %8763, %v8750
  %v8765 = vpop.permute.xlu0 %8764
  %8768 = vset.pattern.permute.xlu0 0
  %8769 = vperm.xlu0 %8768, %v8751
  %v8770 = vpop.permute.xlu0 %8769
  %8773 = vset.pattern.permute.xlu0 0
  %8774 = vperm.xlu0 %8773, %v8752
  %v8775 = vpop.permute.xlu0 %8774
  %8778 = vset.pattern.permute.xlu0 0
  %8779 = vperm.xlu0 %8778, %v8753
  %v8780 = vpop.permute.xlu0 %8779
  %8783 = vset.pattern.permute.xlu0 0
  %8784 = vperm.xlu0 %8783, %v8754
  %v8785 = vpop.permute.xlu0 %8784
  %8788 = vset.pattern.permute.xlu0 0
  %8789 = vperm.xlu0 %8788, %v8755
  %v8790 = vpop.permute.xlu0 %8789
  %8793 = vset.pattern.permute.xlu0 0
  %8794 = vperm.xlu0 %8793, %v8756
  %v8795 = vpop.permute.xlu0 %8794
  %v8805 = vunpack.c.l.b16 %v8741
  %v8806 = vunpack.c.l.b16 %v8742
  %v8807 = vunpack.c.l.b16 %v8743
  %v8808 = vunpack.c.l.b16 %v8744
  %v8809 = vunpack.c.l.b16 %v8745
  %v8810 = vunpack.c.l.b16 %v8746
  %v8811 = vunpack.c.l.b16 %v8747
  %v8812 = vunpack.c.l.b16 %v8748
  %v8813 = vpack.c.b16 %v8806, %v8805
  %v8814 = vpack.c.b16 %v8808, %v8807
  %v8815 = vpack.c.b16 %v8810, %v8809
  %v8816 = vpack.c.b16 %v8812, %v8811
  %v8818 = vsel %vm4356, %v8813, 0
  %v8821 = vsel %vm4356, %v8814, 0
  %v8824 = vsel %vm4356, %v8815, 0
  %v8827 = vsel %vm4356, %v8816, 0
  %8829 = vmatprep.subr.bf16.mxu0 0
  %8830 = vmatpush1.bf16.msra.mxu0 0
  %8831 = vmatprep.subr.bf16.mxu0 0
  %8832 = vmatpush1.bf16.msra.mxu0 0
  %8833 = vmatprep.subr.bf16.mxu0 0
  %8834 = vmatpush1.bf16.msra.mxu0 %v8740
  %8835 = vmatprep.subr.bf16.mxu0 0
  %8836 = vmatpush1.bf16.msra.mxu0 %v8739
  %8837 = vmatprep.subr.bf16.mxu0 0
  %8838 = vmatpush1.bf16.msra.mxu0 %v8632
  %8839 = vmatprep.subr.bf16.mxu0 0
  %8840 = vmatpush1.bf16.msra.mxu0 %v8631
  %8841 = vmatprep.subr.bf16.mxu0 0
  %8842 = vmatpush1.bf16.msra.mxu0 %v8738
  %8843 = vmatprep.subr.bf16.mxu0 0
  %8844 = vmatpush1.bf16.msra.mxu0 %v8737
  %8845 = vmatprep.subr.bf16.mxu0 0
  %8846 = vmatpush2.bf16.msra.mxu0 0
  %8847 = vmatprep.subr.bf16.mxu0 0
  %8848 = vmatpush2.bf16.msra.mxu0 0
  %8849 = vmatprep.subr.bf16.mxu0 0
  %8850 = vmatpush2.bf16.msra.mxu0 0
  %8851 = vmatprep.subr.bf16.mxu0 0
  %8852 = vmatpush2.bf16.msra.mxu0 0
  %8853 = vmatprep.subr.bf16.mxu0 0
  %8854 = vmatpush2.bf16.msra.mxu0 0
  %8855 = vmatprep.subr.bf16.mxu0 0
  %8856 = vmatpush2.bf16.msra.mxu0 0
  %8857 = vmatprep.subr.bf16.mxu0 0
  %8858 = vmatpush2.bf16.msra.mxu0 0
  %8859 = vmatprep.subr.bf16.mxu0 0
  %8860 = vmatpush2.bf16.msra.mxu0 0
  %8861 = vmatprep.mubr.bf16.mxu0 0
  %8862 = vmatmul.mubr.bf16.gmra.mxu0 %v8818
  %v8863 = vpop.f32.mrf.mxu0
  %v8864 = vadd.f32 %v8760, %v8863
  %v8865 = vpop.f32.mrf.mxu0
  %v8866 = vpop.f32.mrf.mxu0
  %v8867 = vadd.f32 %v8765, %v8866
  %v8868 = vpop.f32.mrf.mxu0
  %8869 = vmatprep.mubr.bf16.mxu0 0
  %8870 = vmatmul.mubr.bf16.gmra.mxu0 %v8821
  %v8871 = vpop.f32.mrf.mxu0
  %v8872 = vadd.f32 %v8770, %v8871
  %v8873 = vpop.f32.mrf.mxu0
  %v8874 = vpop.f32.mrf.mxu0
  %v8875 = vadd.f32 %v8775, %v8874
  %v8876 = vpop.f32.mrf.mxu0
  %8877 = vmatprep.mubr.bf16.mxu0 0
  %8878 = vmatmul.mubr.bf16.gmra.mxu0 %v8824
  %v8879 = vpop.f32.mrf.mxu0
  %v8880 = vadd.f32 %v8780, %v8879
  %v8881 = vpop.f32.mrf.mxu0
  %v8882 = vpop.f32.mrf.mxu0
  %v8883 = vadd.f32 %v8785, %v8882
  %v8884 = vpop.f32.mrf.mxu0
  %8885 = vmatprep.mubr.bf16.mxu0 0
  %8886 = vmatmul.mubr.bf16.gmra.mxu0 %v8827
  %v8887 = vpop.f32.mrf.mxu0
  %v8888 = vadd.f32 %v8790, %v8887
  %v8889 = vpop.f32.mrf.mxu0
  %v8890 = vpop.f32.mrf.mxu0
  %v8891 = vadd.f32 %v8795, %v8890
  %v8892 = vpop.f32.mrf.mxu0
  %8893 = vdwg.mxu0
  %v8894 = vsel %vm1216, %v8880, 0.0
  %v8895 = vsel %vm1216, %v8883, 0.0
  %v8896 = vadd.f32 %v8894, %v8895
  %v8897 = vsel %vm1216, %v8888, 0.0
  %v8898 = vadd.f32 %v8896, %v8897
  %v8899 = vsel %vm1216, %v8891, 0.0
  %v8900 = vadd.f32 %v8898, %v8899
  %8901 = vadd.xlane.f32.xlu0 %v8900
  %v8902 = vpop.xlane.xlu0 %8901
  %v8903 = vrot.slane %v8902, 4
  %v8904 = vadd.f32 %v8902, %v8903
  %v8905 = vrot.slane %v8904, 2
  %v8906 = vadd.f32 %v8904, %v8905
  %v8907 = vrot.slane %v8906, 1
  %v8908 = vadd.f32 %v8906, %v8907
  %s8909 = vtos %v8908
  %s8910 = smul.f32 %s8909, 0.0003125
  %v8911 = vmul.f32 %v8880, %v8880
  %v8912 = vmul.f32 %v8883, %v8883
  %v8913 = vmul.f32 %v8888, %v8888
  %v8914 = vmul.f32 %v8891, %v8891
  %v8915 = vsel %vm1216, %v8911, 0.0
  %v8916 = vsel %vm1216, %v8912, 0.0
  %v8917 = vadd.f32 %v8915, %v8916
  %v8918 = vsel %vm1216, %v8913, 0.0
  %v8919 = vadd.f32 %v8917, %v8918
  %v8920 = vsel %vm1216, %v8914, 0.0
  %v8921 = vadd.f32 %v8919, %v8920
  %8922 = vadd.xlane.f32.xlu0 %v8921
  %v8923 = vpop.xlane.xlu0 %8922
  %v8924 = vrot.slane %v8923, 4
  %v8925 = vadd.f32 %v8923, %v8924
  %v8926 = vrot.slane %v8925, 2
  %v8927 = vadd.f32 %v8925, %v8926
  %v8928 = vrot.slane %v8927, 1
  %v8929 = vadd.f32 %v8927, %v8928
  %s8930 = vtos %v8929
  %s8931 = smul.f32 %s8930, 0.0003125
  %s8932 = smul.f32 %s8910, %s8910
  %s8933 = ssub.f32 %s8931, %s8932
  %s8934 = smax.f32 %s8933, 0.0
  %v8935 = vstv %s8910
  %v8936 = vsub.f32 %v8880, %v8935
  %v8937 = vsub.f32 %v8883, %v8935
  %v8938 = vsub.f32 %v8888, %v8935
  %v8939 = vsub.f32 %v8891, %v8935
  %s8940 = sadd.f32 %s8934, 1e-05
  %v8941 = vstv %s8940
  %v8942 = vrsqrt.pop %v8941
  %s8943 = vtos %v8942
  %v8944 = vld [vmem:[%s3 + $0x8b0] sm:$0xff]
  %v8945 = vld [vmem:[%s3 + $0x8b8] sm:$0xff]
  %v8946 = vld [vmem:[%s3 + $0x8c0] sm:$0xff]
  %v8947 = vld [vmem:[%s3 + $0x8c8] sm:$0xff]
  %v8948 = vstv %s8943
  %v8949 = vmul.f32 %v8948, %v8944
  %v8950 = vmul.f32 %v8948, %v8945
  %v8951 = vmul.f32 %v8948, %v8946
  %v8952 = vmul.f32 %v8948, %v8947
  %8954 = vset.pattern.permute.xlu0 0
  %8955 = vperm.xlu0 %8954, %v8949
  %v8956 = vpop.permute.xlu0 %8955
  %8959 = vset.pattern.permute.xlu0 0
  %8960 = vperm.xlu0 %8959, %v8950
  %v8961 = vpop.permute.xlu0 %8960
  %8964 = vset.pattern.permute.xlu0 0
  %8965 = vperm.xlu0 %8964, %v8951
  %v8966 = vpop.permute.xlu0 %8965
  %8969 = vset.pattern.permute.xlu0 0
  %8970 = vperm.xlu0 %8969, %v8952
  %v8971 = vpop.permute.xlu0 %8970
  %v8973 = vmul.f32 %v8936, %v8956
  %v8974 = vmul.f32 %v8937, %v8961
  %v8975 = vmul.f32 %v8938, %v8966
  %v8976 = vmul.f32 %v8939, %v8971
  %v8977 = vld [vmem:[%s3 + $0x8d0] sm:$0xff]
  %v8978 = vld [vmem:[%s3 + $0x8d8] sm:$0xff]
  %v8979 = vld [vmem:[%s3 + $0x8e0] sm:$0xff]
  %v8980 = vld [vmem:[%s3 + $0x8e8] sm:$0xff]
  %8982 = vset.pattern.permute.xlu0 0
  %8983 = vperm.xlu0 %8982, %v8977
  %v8984 = vpop.permute.xlu0 %8983
  %8987 = vset.pattern.permute.xlu0 0
  %8988 = vperm.xlu0 %8987, %v8978
  %v8989 = vpop.permute.xlu0 %8988
  %8992 = vset.pattern.permute.xlu0 0
  %8993 = vperm.xlu0 %8992, %v8979
  %v8994 = vpop.permute.xlu0 %8993
  %8997 = vset.pattern.permute.xlu0 0
  %8998 = vperm.xlu0 %8997, %v8980
  %v8999 = vpop.permute.xlu0 %8998
  %v9001 = vadd.f32 %v8973, %v8984
  %v9002 = vadd.f32 %v8974, %v8989
  %v9003 = vadd.f32 %v8975, %v8994
  %v9004 = vadd.f32 %v8976, %v8999
  %vm9005 = vcmp.ge.f32.partialorder %v9001, 0.0
  %vm9006 = vcmp.ge.f32.partialorder %v9002, 0.0
  %vm9007 = vcmp.ge.f32.partialorder %v9003, 0.0
  %vm9008 = vcmp.ge.f32.partialorder %v9004, 0.0
  %v9009 = vmul.f32 %v9001, 0.01
  %v9010 = vmul.f32 %v9002, 0.01
  %v9011 = vmul.f32 %v9003, 0.01
  %v9012 = vmul.f32 %v9004, 0.01
  %v9013 = vsel %vm9005, %v9001, %v9009
  %v9014 = vsel %vm9006, %v9002, %v9010
  %v9015 = vsel %vm9007, %v9003, %v9011
  %v9016 = vsel %vm9008, %v9004, %v9012
  %v9017 = vpack.c.bf16 %v9014, %v9013
  %v9018 = vpack.c.bf16 %v9016, %v9015
  %v9020 = vsel %vm1216, %v9017, 0
  %v9023 = vsel %vm1216, %v9018, 0
  %9025 = vmatprep.subr.bf16.mxu0 0
  %9026 = vmatpush1.bf16.msra.mxu0 0
  %9027 = vmatprep.subr.bf16.mxu0 0
  %9028 = vmatpush1.bf16.msra.mxu0 %v2287
  %9029 = vmatprep.subr.bf16.mxu0 0
  %9030 = vmatpush1.bf16.msra.mxu0 %v2220
  %9031 = vmatprep.subr.bf16.mxu0 0
  %9032 = vmatpush1.bf16.msra.mxu0 %v2219
  %9033 = vmatprep.subr.bf16.mxu0 0
  %9034 = vmatpush1.bf16.msra.mxu0 %v2218
  %9035 = vmatprep.subr.bf16.mxu0 0
  %9036 = vmatpush1.bf16.msra.mxu0 %v2217
  %9037 = vmatprep.subr.bf16.mxu0 0
  %9038 = vmatpush1.bf16.msra.mxu0 %v2216
  %9039 = vmatprep.subr.bf16.mxu0 0
  %9040 = vmatpush1.bf16.msra.mxu0 %v2215
  %9041 = vmatprep.subr.bf16.mxu0 0
  %9042 = vmatpush2.bf16.msra.mxu0 0
  %9043 = vmatprep.subr.bf16.mxu0 0
  %9044 = vmatpush2.bf16.msra.mxu0 0
  %9045 = vmatprep.subr.bf16.mxu0 0
  %9046 = vmatpush2.bf16.msra.mxu0 0
  %9047 = vmatprep.subr.bf16.mxu0 0
  %9048 = vmatpush2.bf16.msra.mxu0 0
  %9049 = vmatprep.subr.bf16.mxu0 0
  %9050 = vmatpush2.bf16.msra.mxu0 0
  %9051 = vmatprep.subr.bf16.mxu0 0
  %9052 = vmatpush2.bf16.msra.mxu0 0
  %9053 = vmatprep.subr.bf16.mxu0 0
  %9054 = vmatpush2.bf16.msra.mxu0 0
  %9055 = vmatprep.subr.bf16.mxu0 0
  %9056 = vmatpush2.bf16.msra.mxu0 0
  %9057 = vmatprep.mubr.bf16.mxu0 0
  %9058 = vmatmul.mubr.bf16.gmra.mxu0 %v9020
  %v9059 = vpop.f32.mrf.mxu0
  %v9060 = vadd.f32 0.0, %v9059
  %v9061 = vpop.f32.mrf.mxu0
  %v9062 = vpop.f32.mrf.mxu0
  %v9063 = vadd.f32 0.0, %v9062
  %v9064 = vpop.f32.mrf.mxu0
  %9065 = vmatprep.mubr.bf16.mxu0 0
  %9066 = vmatmul.mubr.bf16.gmra.mxu0 %v9023
  %v9067 = vpop.f32.mrf.mxu0
  %v9068 = vadd.f32 0.0, %v9067
  %v9069 = vpop.f32.mrf.mxu0
  %v9070 = vpop.f32.mrf.mxu0
  %v9071 = vadd.f32 0.0, %v9070
  %v9072 = vpop.f32.mrf.mxu0
  %9073 = vdwg.mxu0
  %9074 = vmatprep.subr.bf16.mxu0 0
  %9075 = vmatpush1.bf16.msra.mxu0 0
  %9076 = vmatprep.subr.bf16.mxu0 0
  %9077 = vmatpush1.bf16.msra.mxu0 %v2546
  %9078 = vmatprep.subr.bf16.mxu0 0
  %9079 = vmatpush1.bf16.msra.mxu0 %v2537
  %9080 = vmatprep.subr.bf16.mxu0 0
  %9081 = vmatpush1.bf16.msra.mxu0 %v2536
  %9082 = vmatprep.subr.bf16.mxu0 0
  %9083 = vmatpush1.bf16.msra.mxu0 %v2535
  %9084 = vmatprep.subr.bf16.mxu0 0
  %9085 = vmatpush1.bf16.msra.mxu0 %v2534
  %9086 = vmatprep.subr.bf16.mxu0 0
  %9087 = vmatpush1.bf16.msra.mxu0 %v2533
  %9088 = vmatprep.subr.bf16.mxu0 0
  %9089 = vmatpush1.bf16.msra.mxu0 %v2532
  %9090 = vmatprep.subr.bf16.mxu0 0
  %9091 = vmatpush2.bf16.msra.mxu0 0
  %9092 = vmatprep.subr.bf16.mxu0 0
  %9093 = vmatpush2.bf16.msra.mxu0 0
  %9094 = vmatprep.subr.bf16.mxu0 0
  %9095 = vmatpush2.bf16.msra.mxu0 0
  %9096 = vmatprep.subr.bf16.mxu0 0
  %9097 = vmatpush2.bf16.msra.mxu0 0
  %9098 = vmatprep.subr.bf16.mxu0 0
  %9099 = vmatpush2.bf16.msra.mxu0 0
  %9100 = vmatprep.subr.bf16.mxu0 0
  %9101 = vmatpush2.bf16.msra.mxu0 0
  %9102 = vmatprep.subr.bf16.mxu0 0
  %9103 = vmatpush2.bf16.msra.mxu0 0
  %9104 = vmatprep.subr.bf16.mxu0 0
  %9105 = vmatpush2.bf16.msra.mxu0 0
  %9106 = vmatprep.mubr.bf16.mxu0 0
  %9107 = vmatmul.mubr.bf16.gmra.mxu0 %v9020
  %v9108 = vpop.f32.mrf.mxu0
  %v9109 = vadd.f32 0.0, %v9108
  %v9110 = vpop.f32.mrf.mxu0
  %v9111 = vpop.f32.mrf.mxu0
  %v9112 = vadd.f32 0.0, %v9111
  %v9113 = vpop.f32.mrf.mxu0
  %9114 = vmatprep.mubr.bf16.mxu0 0
  %9115 = vmatmul.mubr.bf16.gmra.mxu0 %v9023
  %v9116 = vpop.f32.mrf.mxu0
  %v9117 = vadd.f32 0.0, %v9116
  %v9118 = vpop.f32.mrf.mxu0
  %v9119 = vpop.f32.mrf.mxu0
  %v9120 = vadd.f32 0.0, %v9119
  %v9121 = vpop.f32.mrf.mxu0
  %9122 = vdwg.mxu0
  %v9123 = vpack.c.bf16 %v9063, %v9060
  %v9124 = vpack.c.bf16 %v9071, %v9068
  %v9125 = vpack.c.bf16 %v9112, %v9109
  %v9126 = vpack.c.bf16 %v9120, %v9117
  %v9127 = vld [vmem:[%s2 + $0xb0] sm:$0xf]
  %v9128 = vld [vmem:[%s2 + $0xb4] sm:$0xf]
  %v9129 = vld [vmem:[%s2 + $0xb8] sm:$0xf]
  %v9130 = vld [vmem:[%s2 + $0xbc] sm:$0xf]
  %v9131 = vld [vmem:[%s3 + $0x8f0] sm:$0xff]
  %v9132 = vld [vmem:[%s3 + $0x8f8] sm:$0xff]
  %v9133 = vld [vmem:[%s3 + $0x900] sm:$0xff]
  %v9134 = vld [vmem:[%s3 + $0x908] sm:$0xff]
  %9136 = vset.pattern.permute.xlu0 0
  %9137 = vperm.xlu0 %9136, %v9131
  %v9138 = vpop.permute.xlu0 %9137
  %9141 = vset.pattern.permute.xlu0 0
  %9142 = vperm.xlu0 %9141, %v9132
  %v9143 = vpop.permute.xlu0 %9142
  %9146 = vset.pattern.permute.xlu0 0
  %9147 = vperm.xlu0 %9146, %v9133
  %v9148 = vpop.permute.xlu0 %9147
  %9151 = vset.pattern.permute.xlu0 0
  %9152 = vperm.xlu0 %9151, %v9134
  %v9153 = vpop.permute.xlu0 %9152
  %v9159 = vunpack.c.l.b16 %v9127
  %v9160 = vunpack.c.l.b16 %v9128
  %v9161 = vunpack.c.l.b16 %v9129
  %v9162 = vunpack.c.l.b16 %v9130
  %v9163 = vpack.c.b16 %v9160, %v9159
  %v9164 = vpack.c.b16 %v9162, %v9161
  %v9166 = vsel %vm4356, %v9163, 0
  %v9169 = vsel %vm4356, %v9164, 0
  %9171 = vmatprep.subr.bf16.mxu0 0
  %9172 = vmatpush1.bf16.msra.mxu0 0
  %9173 = vmatprep.subr.bf16.mxu0 0
  %9174 = vmatpush1.bf16.msra.mxu0 0
  %9175 = vmatprep.subr.bf16.mxu0 0
  %9176 = vmatpush1.bf16.msra.mxu0 %v9126
  %9177 = vmatprep.subr.bf16.mxu0 0
  %9178 = vmatpush1.bf16.msra.mxu0 %v9125
  %9179 = vmatprep.subr.bf16.mxu0 0
  %9180 = vmatpush1.bf16.msra.mxu0 %v9018
  %9181 = vmatprep.subr.bf16.mxu0 0
  %9182 = vmatpush1.bf16.msra.mxu0 %v9017
  %9183 = vmatprep.subr.bf16.mxu0 0
  %9184 = vmatpush1.bf16.msra.mxu0 %v9124
  %9185 = vmatprep.subr.bf16.mxu0 0
  %9186 = vmatpush1.bf16.msra.mxu0 %v9123
  %9187 = vmatprep.subr.bf16.mxu0 0
  %9188 = vmatpush2.bf16.msra.mxu0 0
  %9189 = vmatprep.subr.bf16.mxu0 0
  %9190 = vmatpush2.bf16.msra.mxu0 0
  %9191 = vmatprep.subr.bf16.mxu0 0
  %9192 = vmatpush2.bf16.msra.mxu0 0
  %9193 = vmatprep.subr.bf16.mxu0 0
  %9194 = vmatpush2.bf16.msra.mxu0 0
  %9195 = vmatprep.subr.bf16.mxu0 0
  %9196 = vmatpush2.bf16.msra.mxu0 0
  %9197 = vmatprep.subr.bf16.mxu0 0
  %9198 = vmatpush2.bf16.msra.mxu0 0
  %9199 = vmatprep.subr.bf16.mxu0 0
  %9200 = vmatpush2.bf16.msra.mxu0 0
  %9201 = vmatprep.subr.bf16.mxu0 0
  %9202 = vmatpush2.bf16.msra.mxu0 0
  %9203 = vmatprep.mubr.bf16.mxu0 0
  %9204 = vmatmul.mubr.bf16.gmra.mxu0 %v9166
  %v9205 = vpop.f32.mrf.mxu0
  %v9206 = vadd.f32 %v9138, %v9205
  %v9207 = vpop.f32.mrf.mxu0
  %v9208 = vpop.f32.mrf.mxu0
  %v9209 = vadd.f32 %v9143, %v9208
  %v9210 = vpop.f32.mrf.mxu0
  %9211 = vmatprep.mubr.bf16.mxu0 0
  %9212 = vmatmul.mubr.bf16.gmra.mxu0 %v9169
  %v9213 = vpop.f32.mrf.mxu0
  %v9214 = vadd.f32 %v9148, %v9213
  %v9215 = vpop.f32.mrf.mxu0
  %v9216 = vpop.f32.mrf.mxu0
  %v9217 = vadd.f32 %v9153, %v9216
  %v9218 = vpop.f32.mrf.mxu0
  %9219 = vdwg.mxu0
  %v9220 = vadd.f32 %v8864, %v9206
  %v9221 = vadd.f32 %v8867, %v9209
  %v9222 = vadd.f32 %v8872, %v9214
  %v9223 = vadd.f32 %v8875, %v9217
  %v9224 = vsel %vm1216, %v9220, 0.0
  %v9225 = vsel %vm1216, %v9221, 0.0
  %v9226 = vadd.f32 %v9224, %v9225
  %v9227 = vsel %vm1216, %v9222, 0.0
  %v9228 = vadd.f32 %v9226, %v9227
  %v9229 = vsel %vm1216, %v9223, 0.0
  %v9230 = vadd.f32 %v9228, %v9229
  %9231 = vadd.xlane.f32.xlu0 %v9230
  %v9232 = vpop.xlane.xlu0 %9231
  %v9233 = vrot.slane %v9232, 4
  %v9234 = vadd.f32 %v9232, %v9233
  %v9235 = vrot.slane %v9234, 2
  %v9236 = vadd.f32 %v9234, %v9235
  %v9237 = vrot.slane %v9236, 1
  %v9238 = vadd.f32 %v9236, %v9237
  %s9239 = vtos %v9238
  %s9240 = smul.f32 %s9239, 0.0003125
  %v9241 = vmul.f32 %v9220, %v9220
  %v9242 = vmul.f32 %v9221, %v9221
  %v9243 = vmul.f32 %v9222, %v9222
  %v9244 = vmul.f32 %v9223, %v9223
  %v9245 = vsel %vm1216, %v9241, 0.0
  %v9246 = vsel %vm1216, %v9242, 0.0
  %v9247 = vadd.f32 %v9245, %v9246
  %v9248 = vsel %vm1216, %v9243, 0.0
  %v9249 = vadd.f32 %v9247, %v9248
  %v9250 = vsel %vm1216, %v9244, 0.0
  %v9251 = vadd.f32 %v9249, %v9250
  %9252 = vadd.xlane.f32.xlu0 %v9251
  %v9253 = vpop.xlane.xlu0 %9252
  %v9254 = vrot.slane %v9253, 4
  %v9255 = vadd.f32 %v9253, %v9254
  %v9256 = vrot.slane %v9255, 2
  %v9257 = vadd.f32 %v9255, %v9256
  %v9258 = vrot.slane %v9257, 1
  %v9259 = vadd.f32 %v9257, %v9258
  %s9260 = vtos %v9259
  %s9261 = smul.f32 %s9260, 0.0003125
  %s9262 = smul.f32 %s9240, %s9240
  %s9263 = ssub.f32 %s9261, %s9262
  %s9264 = smax.f32 %s9263, 0.0
  %v9265 = vstv %s9240
  %v9266 = vsub.f32 %v9220, %v9265
  %v9267 = vsub.f32 %v9221, %v9265
  %v9268 = vsub.f32 %v9222, %v9265
  %v9269 = vsub.f32 %v9223, %v9265
  %s9270 = sadd.f32 %s9264, 1e-05
  %v9271 = vstv %s9270
  %v9272 = vrsqrt.pop %v9271
  %s9273 = vtos %v9272
  %v9274 = vld [vmem:[%s3 + $0x910] sm:$0xff]
  %v9275 = vld [vmem:[%s3 + $0x918] sm:$0xff]
  %v9276 = vld [vmem:[%s3 + $0x920] sm:$0xff]
  %v9277 = vld [vmem:[%s3 + $0x928] sm:$0xff]
  %v9278 = vstv %s9273
  %v9279 = vmul.f32 %v9278, %v9274
  %v9280 = vmul.f32 %v9278, %v9275
  %v9281 = vmul.f32 %v9278, %v9276
  %v9282 = vmul.f32 %v9278, %v9277
  %9284 = vset.pattern.permute.xlu0 0
  %9285 = vperm.xlu0 %9284, %v9279
  %v9286 = vpop.permute.xlu0 %9285
  %9289 = vset.pattern.permute.xlu0 0
  %9290 = vperm.xlu0 %9289, %v9280
  %v9291 = vpop.permute.xlu0 %9290
  %9294 = vset.pattern.permute.xlu0 0
  %9295 = vperm.xlu0 %9294, %v9281
  %v9296 = vpop.permute.xlu0 %9295
  %9299 = vset.pattern.permute.xlu0 0
  %9300 = vperm.xlu0 %9299, %v9282
  %v9301 = vpop.permute.xlu0 %9300
  %v9303 = vmul.f32 %v9266, %v9286
  %v9304 = vmul.f32 %v9267, %v9291
  %v9305 = vmul.f32 %v9268, %v9296
  %v9306 = vmul.f32 %v9269, %v9301
  %v9307 = vld [vmem:[%s3 + $0x930] sm:$0xff]
  %v9308 = vld [vmem:[%s3 + $0x938] sm:$0xff]
  %v9309 = vld [vmem:[%s3 + $0x940] sm:$0xff]
  %v9310 = vld [vmem:[%s3 + $0x948] sm:$0xff]
  %9312 = vset.pattern.permute.xlu0 0
  %9313 = vperm.xlu0 %9312, %v9307
  %v9314 = vpop.permute.xlu0 %9313
  %9317 = vset.pattern.permute.xlu0 0
  %9318 = vperm.xlu0 %9317, %v9308
  %v9319 = vpop.permute.xlu0 %9318
  %9322 = vset.pattern.permute.xlu0 0
  %9323 = vperm.xlu0 %9322, %v9309
  %v9324 = vpop.permute.xlu0 %9323
  %9327 = vset.pattern.permute.xlu0 0
  %9328 = vperm.xlu0 %9327, %v9310
  %v9329 = vpop.permute.xlu0 %9328
  %v9331 = vadd.f32 %v9303, %v9314
  %v9332 = vadd.f32 %v9304, %v9319
  %v9333 = vadd.f32 %v9305, %v9324
  %v9334 = vadd.f32 %v9306, %v9329
  %vm9335 = vcmp.ge.f32.partialorder %v9331, 0.0
  %vm9336 = vcmp.ge.f32.partialorder %v9332, 0.0
  %vm9337 = vcmp.ge.f32.partialorder %v9333, 0.0
  %vm9338 = vcmp.ge.f32.partialorder %v9334, 0.0
  %v9339 = vmul.f32 %v9331, 0.01
  %v9340 = vmul.f32 %v9332, 0.01
  %v9341 = vmul.f32 %v9333, 0.01
  %v9342 = vmul.f32 %v9334, 0.01
  %v9343 = vsel %vm9335, %v9331, %v9339
  %v9344 = vsel %vm9336, %v9332, %v9340
  %v9345 = vsel %vm9337, %v9333, %v9341
  %v9346 = vsel %vm9338, %v9334, %v9342
  %v9347 = vld [vmem:[%s2 + $0x100] sm:$0xf]
  %v9348 = vld [vmem:[%s2 + $0x104] sm:$0xf]
  %v9349 = vld [vmem:[%s2 + $0x108] sm:$0xf]
  %v9350 = vld [vmem:[%s2 + $0x10c] sm:$0xf]
  %v9351 = vld [vmem:[%s2 + $0x110] sm:$0xf]
  %v9352 = vld [vmem:[%s2 + $0x114] sm:$0xf]
  %v9353 = vld [vmem:[%s2 + $0x118] sm:$0xf]
  %v9354 = vld [vmem:[%s2 + $0x11c] sm:$0xf]
  %v9355 = vld [vmem:[%s2 + $0x120] sm:$0xf]
  %v9356 = vld [vmem:[%s2 + $0x124] sm:$0xf]
  %v9357 = vld [vmem:[%s2 + $0x128] sm:$0xf]
  %v9358 = vld [vmem:[%s2 + $0x12c] sm:$0xf]
  %v9359 = vld [vmem:[%s2 + $0x130] sm:$0xf]
  %v9360 = vld [vmem:[%s2 + $0x134] sm:$0xf]
  %v9361 = vld [vmem:[%s2 + $0x138] sm:$0xf]
  %v9362 = vld [vmem:[%s2 + $0x13c] sm:$0xf]
  %v9363 = vld [vmem:[%s2 + $0x140] sm:$0xf]
  %v9364 = vld [vmem:[%s2 + $0x144] sm:$0xf]
  %v9365 = vld [vmem:[%s2 + $0x148] sm:$0xf]
  %v9366 = vld [vmem:[%s2 + $0x14c] sm:$0xf]
  %v9367 = vld [vmem:[%s2 + $0x150] sm:$0xf]
  %v9368 = vld [vmem:[%s2 + $0x154] sm:$0xf]
  %v9369 = vld [vmem:[%s2 + $0x158] sm:$0xf]
  %v9370 = vld [vmem:[%s2 + $0x15c] sm:$0xf]
  %v9371 = vld [vmem:[%s2 + $0x160] sm:$0xf]
  %v9372 = vld [vmem:[%s2 + $0x164] sm:$0xf]
  %v9373 = vld [vmem:[%s2 + $0x168] sm:$0xf]
  %v9374 = vld [vmem:[%s2 + $0x16c] sm:$0xf]
  %v9375 = vld [vmem:[%s2 + $0x170] sm:$0xf]
  %v9376 = vld [vmem:[%s2 + $0x174] sm:$0xf]
  %v9377 = vld [vmem:[%s2 + $0x178] sm:$0xf]
  %v9378 = vld [vmem:[%s2 + $0x17c] sm:$0xf]
  %v9379 = vld [vmem:[%s2 + $0x180] sm:$0xf]
  %v9380 = vld [vmem:[%s2 + $0x184] sm:$0xf]
  %v9381 = vld [vmem:[%s2 + $0x188] sm:$0xf]
  %v9382 = vld [vmem:[%s2 + $0x18c] sm:$0xf]
  %v9383 = vld [vmem:[%s2 + $0x190] sm:$0xf]
  %v9384 = vld [vmem:[%s2 + $0x194] sm:$0x3]
  %v9385 = vpack.c.bf16 %v9344, %v9343
  %v9386 = vpack.c.bf16 %v9346, %v9345
  %v9387 = vld [vmem:[%s3 + $0xb30] sm:$0xff]
  %v9388 = vld [vmem:[%s3 + $0xb38] sm:$0xff]
  %v9389 = vld [vmem:[%s3 + $0xb40] sm:$0xff]
  %v9390 = vld [vmem:[%s3 + $0xb48] sm:$0xff]
  %v9391 = vld [vmem:[%s3 + $0xb50] sm:$0xff]
  %v9392 = vld [vmem:[%s3 + $0xb58] sm:$0xff]
  %v9393 = vld [vmem:[%s3 + $0xb60] sm:$0xff]
  %v9394 = vld [vmem:[%s3 + $0xb68] sm:$0xff]
  %v9395 = vld [vmem:[%s3 + $0xb70] sm:$0xff]
  %v9396 = vld [vmem:[%s3 + $0xb78] sm:$0xff]
  %v9397 = vld [vmem:[%s3 + $0xb80] sm:$0xff]
  %v9398 = vld [vmem:[%s3 + $0xb88] sm:$0xff]
  %v9399 = vld [vmem:[%s3 + $0xb90] sm:$0xff]
  %v9400 = vld [vmem:[%s3 + $0xb98] sm:$0xff]
  %v9401 = vld [vmem:[%s3 + $0xba0] sm:$0xff]
  %v9402 = vld [vmem:[%s3 + $0xba8] sm:$0xff]
  %v9403 = vld [vmem:[%s3 + $0xbb0] sm:$0xff]
  %v9404 = vld [vmem:[%s3 + $0xbb8] sm:$0xff]
  %v9405 = vld [vmem:[%s3 + $0xbc0] sm:$0xff]
  %v9406 = vld [vmem:[%s3 + $0xbc8] sm:$0xff]
  %v9407 = vld [vmem:[%s3 + $0xbd0] sm:$0xff]
  %v9408 = vld [vmem:[%s3 + $0xbd8] sm:$0xff]
  %v9409 = vld [vmem:[%s3 + $0xbe0] sm:$0xff]
  %v9410 = vld [vmem:[%s3 + $0xbe8] sm:$0xff]
  %v9411 = vld [vmem:[%s3 + $0xbf0] sm:$0xff]
  %v9412 = vld [vmem:[%s3 + $0xbf8] sm:$0xff]
  %v9413 = vld [vmem:[%s3 + $0xc00] sm:$0xff]
  %v9414 = vld [vmem:[%s3 + $0xc08] sm:$0xff]
  %v9415 = vld [vmem:[%s3 + $0xc10] sm:$0xff]
  %v9416 = vld [vmem:[%s3 + $0xc18] sm:$0xff]
  %v9417 = vld [vmem:[%s3 + $0xc20] sm:$0xff]
  %v9418 = vld [vmem:[%s3 + $0xc28] sm:$0xff]
  %v9419 = vld [vmem:[%s3 + $0xc30] sm:$0xff]
  %v9420 = vld [vmem:[%s3 + $0xc38] sm:$0xff]
  %v9421 = vld [vmem:[%s3 + $0xc40] sm:$0xff]
  %v9422 = vld [vmem:[%s3 + $0xc48] sm:$0xff]
  %v9423 = vld [vmem:[%s3 + $0xc50] sm:$0xff]
  %v9424 = vld [vmem:[%s3 + $0xc58] sm:$0xf]
  %9426 = vset.pattern.permute.xlu0 0
  %9427 = vperm.xlu0 %9426, %v9387
  %v9428 = vpop.permute.xlu0 %9427
  %9431 = vset.pattern.permute.xlu0 0
  %9432 = vperm.xlu0 %9431, %v9388
  %v9433 = vpop.permute.xlu0 %9432
  %9436 = vset.pattern.permute.xlu0 0
  %9437 = vperm.xlu0 %9436, %v9389
  %v9438 = vpop.permute.xlu0 %9437
  %9441 = vset.pattern.permute.xlu0 0
  %9442 = vperm.xlu0 %9441, %v9390
  %v9443 = vpop.permute.xlu0 %9442
  %9446 = vset.pattern.permute.xlu0 0
  %9447 = vperm.xlu0 %9446, %v9391
  %v9448 = vpop.permute.xlu0 %9447
  %9451 = vset.pattern.permute.xlu0 0
  %9452 = vperm.xlu0 %9451, %v9392
  %v9453 = vpop.permute.xlu0 %9452
  %9456 = vset.pattern.permute.xlu0 0
  %9457 = vperm.xlu0 %9456, %v9393
  %v9458 = vpop.permute.xlu0 %9457
  %9461 = vset.pattern.permute.xlu0 0
  %9462 = vperm.xlu0 %9461, %v9394
  %v9463 = vpop.permute.xlu0 %9462
  %9466 = vset.pattern.permute.xlu0 0
  %9467 = vperm.xlu0 %9466, %v9395
  %v9468 = vpop.permute.xlu0 %9467
  %9471 = vset.pattern.permute.xlu0 0
  %9472 = vperm.xlu0 %9471, %v9396
  %v9473 = vpop.permute.xlu0 %9472
  %9476 = vset.pattern.permute.xlu0 0
  %9477 = vperm.xlu0 %9476, %v9397
  %v9478 = vpop.permute.xlu0 %9477
  %9481 = vset.pattern.permute.xlu0 0
  %9482 = vperm.xlu0 %9481, %v9398
  %v9483 = vpop.permute.xlu0 %9482
  %9486 = vset.pattern.permute.xlu0 0
  %9487 = vperm.xlu0 %9486, %v9399
  %v9488 = vpop.permute.xlu0 %9487
  %9491 = vset.pattern.permute.xlu0 0
  %9492 = vperm.xlu0 %9491, %v9400
  %v9493 = vpop.permute.xlu0 %9492
  %9496 = vset.pattern.permute.xlu0 0
  %9497 = vperm.xlu0 %9496, %v9401
  %v9498 = vpop.permute.xlu0 %9497
  %9501 = vset.pattern.permute.xlu0 0
  %9502 = vperm.xlu0 %9501, %v9402
  %v9503 = vpop.permute.xlu0 %9502
  %9506 = vset.pattern.permute.xlu0 0
  %9507 = vperm.xlu0 %9506, %v9403
  %v9508 = vpop.permute.xlu0 %9507
  %9511 = vset.pattern.permute.xlu0 0
  %9512 = vperm.xlu0 %9511, %v9404
  %v9513 = vpop.permute.xlu0 %9512
  %9516 = vset.pattern.permute.xlu0 0
  %9517 = vperm.xlu0 %9516, %v9405
  %v9518 = vpop.permute.xlu0 %9517
  %9521 = vset.pattern.permute.xlu0 0
  %9522 = vperm.xlu0 %9521, %v9406
  %v9523 = vpop.permute.xlu0 %9522
  %9526 = vset.pattern.permute.xlu0 0
  %9527 = vperm.xlu0 %9526, %v9407
  %v9528 = vpop.permute.xlu0 %9527
  %9531 = vset.pattern.permute.xlu0 0
  %9532 = vperm.xlu0 %9531, %v9408
  %v9533 = vpop.permute.xlu0 %9532
  %9536 = vset.pattern.permute.xlu0 0
  %9537 = vperm.xlu0 %9536, %v9409
  %v9538 = vpop.permute.xlu0 %9537
  %9541 = vset.pattern.permute.xlu0 0
  %9542 = vperm.xlu0 %9541, %v9410
  %v9543 = vpop.permute.xlu0 %9542
  %9546 = vset.pattern.permute.xlu0 0
  %9547 = vperm.xlu0 %9546, %v9411
  %v9548 = vpop.permute.xlu0 %9547
  %9551 = vset.pattern.permute.xlu0 0
  %9552 = vperm.xlu0 %9551, %v9412
  %v9553 = vpop.permute.xlu0 %9552
  %9556 = vset.pattern.permute.xlu0 0
  %9557 = vperm.xlu0 %9556, %v9413
  %v9558 = vpop.permute.xlu0 %9557
  %9561 = vset.pattern.permute.xlu0 0
  %9562 = vperm.xlu0 %9561, %v9414
  %v9563 = vpop.permute.xlu0 %9562
  %9566 = vset.pattern.permute.xlu0 0
  %9567 = vperm.xlu0 %9566, %v9415
  %v9568 = vpop.permute.xlu0 %9567
  %9571 = vset.pattern.permute.xlu0 0
  %9572 = vperm.xlu0 %9571, %v9416
  %v9573 = vpop.permute.xlu0 %9572
  %9576 = vset.pattern.permute.xlu0 0
  %9577 = vperm.xlu0 %9576, %v9417
  %v9578 = vpop.permute.xlu0 %9577
  %9581 = vset.pattern.permute.xlu0 0
  %9582 = vperm.xlu0 %9581, %v9418
  %v9583 = vpop.permute.xlu0 %9582
  %9586 = vset.pattern.permute.xlu0 0
  %9587 = vperm.xlu0 %9586, %v9419
  %v9588 = vpop.permute.xlu0 %9587
  %9591 = vset.pattern.permute.xlu0 0
  %9592 = vperm.xlu0 %9591, %v9420
  %v9593 = vpop.permute.xlu0 %9592
  %9596 = vset.pattern.permute.xlu0 0
  %9597 = vperm.xlu0 %9596, %v9421
  %v9598 = vpop.permute.xlu0 %9597
  %9601 = vset.pattern.permute.xlu0 0
  %9602 = vperm.xlu0 %9601, %v9422
  %v9603 = vpop.permute.xlu0 %9602
  %9606 = vset.pattern.permute.xlu0 0
  %9607 = vperm.xlu0 %9606, %v9423
  %v9608 = vpop.permute.xlu0 %9607
  %9611 = vset.pattern.permute.xlu0 0
  %9612 = vperm.xlu0 %9611, %v9424
  %v9613 = vpop.permute.xlu0 %9612
  %v9653 = vunpack.c.l.b16 %v9347
  %v9654 = vunpack.c.l.b16 %v9348
  %v9655 = vunpack.c.l.b16 %v9349
  %v9656 = vunpack.c.l.b16 %v9350
  %v9657 = vunpack.c.l.b16 %v9351
  %v9658 = vunpack.c.l.b16 %v9352
  %v9659 = vunpack.c.l.b16 %v9353
  %v9660 = vunpack.c.l.b16 %v9354
  %v9661 = vunpack.c.l.b16 %v9355
  %v9662 = vunpack.c.l.b16 %v9356
  %v9663 = vunpack.c.l.b16 %v9357
  %v9664 = vunpack.c.l.b16 %v9358
  %v9665 = vunpack.c.l.b16 %v9359
  %v9666 = vunpack.c.l.b16 %v9360
  %v9667 = vunpack.c.l.b16 %v9361
  %v9668 = vunpack.c.l.b16 %v9362
  %v9669 = vunpack.c.l.b16 %v9363
  %v9670 = vunpack.c.l.b16 %v9364
  %v9671 = vunpack.c.l.b16 %v9365
  %v9672 = vunpack.c.l.b16 %v9366
  %v9673 = vunpack.c.l.b16 %v9367
  %v9674 = vunpack.c.l.b16 %v9368
  %v9675 = vunpack.c.l.b16 %v9369
  %v9676 = vunpack.c.l.b16 %v9370
  %v9677 = vunpack.c.l.b16 %v9371
  %v9678 = vunpack.c.l.b16 %v9372
  %v9679 = vunpack.c.l.b16 %v9373
  %v9680 = vunpack.c.l.b16 %v9374
  %v9681 = vunpack.c.l.b16 %v9375
  %v9682 = vunpack.c.l.b16 %v9376
  %v9683 = vunpack.c.l.b16 %v9377
  %v9684 = vunpack.c.l.b16 %v9378
  %v9685 = vunpack.c.l.b16 %v9379
  %v9686 = vunpack.c.l.b16 %v9380
  %v9687 = vunpack.c.l.b16 %v9381
  %v9688 = vunpack.c.l.b16 %v9382
  %v9689 = vunpack.c.l.b16 %v9383
  %v9690 = vunpack.c.l.b16 %v9384
  %v9691 = vpack.c.b16 %v9654, %v9653
  %v9692 = vpack.c.b16 %v9656, %v9655
  %v9693 = vpack.c.b16 %v9658, %v9657
  %v9694 = vpack.c.b16 %v9660, %v9659
  %v9695 = vpack.c.b16 %v9662, %v9661
  %v9696 = vpack.c.b16 %v9664, %v9663
  %v9697 = vpack.c.b16 %v9666, %v9665
  %v9698 = vpack.c.b16 %v9668, %v9667
  %v9699 = vpack.c.b16 %v9670, %v9669
  %v9700 = vpack.c.b16 %v9672, %v9671
  %v9701 = vpack.c.b16 %v9674, %v9673
  %v9702 = vpack.c.b16 %v9676, %v9675
  %v9703 = vpack.c.b16 %v9678, %v9677
  %v9704 = vpack.c.b16 %v9680, %v9679
  %v9705 = vpack.c.b16 %v9682, %v9681
  %v9706 = vpack.c.b16 %v9684, %v9683
  %v9707 = vpack.c.b16 %v9686, %v9685
  %v9708 = vpack.c.b16 %v9688, %v9687
  %v9709 = vpack.c.b16 %v9690, %v9689
  %v9711 = vsel %vm3976, %v9691, 0
  %v9714 = vsel %vm3976, %v9692, 0
  %v9717 = vsel %vm3976, %v9693, 0
  %v9720 = vsel %vm3976, %v9694, 0
  %v9723 = vsel %vm3976, %v9695, 0
  %v9726 = vsel %vm3976, %v9696, 0
  %v9729 = vsel %vm3976, %v9697, 0
  %v9732 = vsel %vm3976, %v9698, 0
  %v9735 = vsel %vm3976, %v9699, 0
  %v9738 = vsel %vm3976, %v9700, 0
  %v9741 = vsel %vm3976, %v9701, 0
  %v9744 = vsel %vm3976, %v9702, 0
  %v9747 = vsel %vm3976, %v9703, 0
  %v9750 = vsel %vm3976, %v9704, 0
  %v9753 = vsel %vm3976, %v9705, 0
  %v9756 = vsel %vm3976, %v9706, 0
  %v9759 = vsel %vm3976, %v9707, 0
  %v9762 = vsel %vm3976, %v9708, 0
  %v9765 = vsel %vm3976, %v9709, 0
  %9767 = vmatprep.subr.bf16.mxu0 0
  %9768 = vmatpush1.bf16.msra.mxu0 0
  %9769 = vmatprep.subr.bf16.mxu0 0
  %9770 = vmatpush1.bf16.msra.mxu0 0
  %9771 = vmatprep.subr.bf16.mxu0 0
  %9772 = vmatpush1.bf16.msra.mxu0 0
  %9773 = vmatprep.subr.bf16.mxu0 0
  %9774 = vmatpush1.bf16.msra.mxu0 0
  %9775 = vmatprep.subr.bf16.mxu0 0
  %9776 = vmatpush1.bf16.msra.mxu0 0
  %9777 = vmatprep.subr.bf16.mxu0 0
  %9778 = vmatpush1.bf16.msra.mxu0 0
  %9779 = vmatprep.subr.bf16.mxu0 0
  %9780 = vmatpush1.bf16.msra.mxu0 %v9386
  %9781 = vmatprep.subr.bf16.mxu0 0
  %9782 = vmatpush1.bf16.msra.mxu0 %v9385
  %9783 = vmatprep.subr.bf16.mxu0 0
  %9784 = vmatpush2.bf16.msra.mxu0 0
  %9785 = vmatprep.subr.bf16.mxu0 0
  %9786 = vmatpush2.bf16.msra.mxu0 0
  %9787 = vmatprep.subr.bf16.mxu0 0
  %9788 = vmatpush2.bf16.msra.mxu0 0
  %9789 = vmatprep.subr.bf16.mxu0 0
  %9790 = vmatpush2.bf16.msra.mxu0 0
  %9791 = vmatprep.subr.bf16.mxu0 0
  %9792 = vmatpush2.bf16.msra.mxu0 0
  %9793 = vmatprep.subr.bf16.mxu0 0
  %9794 = vmatpush2.bf16.msra.mxu0 0
  %9795 = vmatprep.subr.bf16.mxu0 0
  %9796 = vmatpush2.bf16.msra.mxu0 0
  %9797 = vmatprep.subr.bf16.mxu0 0
  %9798 = vmatpush2.bf16.msra.mxu0 0
  %9799 = vmatprep.mubr.bf16.mxu0 0
  %9800 = vmatmul.mubr.bf16.gmra.mxu0 %v9711
  %v9801 = vpop.f32.mrf.mxu0
  %v9802 = vadd.f32 %v9428, %v9801
  %v9803 = vpop.f32.mrf.mxu0
  %v9804 = vpop.f32.mrf.mxu0
  %v9805 = vadd.f32 %v9433, %v9804
  %v9806 = vpop.f32.mrf.mxu0
  %9807 = vmatprep.mubr.bf16.mxu0 0
  %9808 = vmatmul.mubr.bf16.gmra.mxu0 %v9714
  %v9809 = vpop.f32.mrf.mxu0
  %v9810 = vadd.f32 %v9438, %v9809
  %v9811 = vpop.f32.mrf.mxu0
  %v9812 = vpop.f32.mrf.mxu0
  %v9813 = vadd.f32 %v9443, %v9812
  %v9814 = vpop.f32.mrf.mxu0
  %9815 = vmatprep.mubr.bf16.mxu0 0
  %9816 = vmatmul.mubr.bf16.gmra.mxu0 %v9717
  %v9817 = vpop.f32.mrf.mxu0
  %v9818 = vadd.f32 %v9448, %v9817
  %v9819 = vpop.f32.mrf.mxu0
  %v9820 = vpop.f32.mrf.mxu0
  %v9821 = vadd.f32 %v9453, %v9820
  %v9822 = vpop.f32.mrf.mxu0
  %9823 = vmatprep.mubr.bf16.mxu0 0
  %9824 = vmatmul.mubr.bf16.gmra.mxu0 %v9720
  %v9825 = vpop.f32.mrf.mxu0
  %v9826 = vadd.f32 %v9458, %v9825
  %v9827 = vpop.f32.mrf.mxu0
  %v9828 = vpop.f32.mrf.mxu0
  %v9829 = vadd.f32 %v9463, %v9828
  %v9830 = vpop.f32.mrf.mxu0
  %9831 = vmatprep.mubr.bf16.mxu0 0
  %9832 = vmatmul.mubr.bf16.gmra.mxu0 %v9723
  %v9833 = vpop.f32.mrf.mxu0
  %v9834 = vadd.f32 %v9468, %v9833
  %v9835 = vpop.f32.mrf.mxu0
  %v9836 = vpop.f32.mrf.mxu0
  %v9837 = vadd.f32 %v9473, %v9836
  %v9838 = vpop.f32.mrf.mxu0
  %9839 = vmatprep.mubr.bf16.mxu0 0
  %9840 = vmatmul.mubr.bf16.gmra.mxu0 %v9726
  %v9841 = vpop.f32.mrf.mxu0
  %v9842 = vadd.f32 %v9478, %v9841
  %v9843 = vpop.f32.mrf.mxu0
  %v9844 = vpop.f32.mrf.mxu0
  %v9845 = vadd.f32 %v9483, %v9844
  %v9846 = vpop.f32.mrf.mxu0
  %9847 = vmatprep.mubr.bf16.mxu0 0
  %9848 = vmatmul.mubr.bf16.gmra.mxu0 %v9729
  %v9849 = vpop.f32.mrf.mxu0
  %v9850 = vadd.f32 %v9488, %v9849
  %v9851 = vpop.f32.mrf.mxu0
  %v9852 = vpop.f32.mrf.mxu0
  %v9853 = vadd.f32 %v9493, %v9852
  %v9854 = vpop.f32.mrf.mxu0
  %9855 = vmatprep.mubr.bf16.mxu0 0
  %9856 = vmatmul.mubr.bf16.gmra.mxu0 %v9732
  %v9857 = vpop.f32.mrf.mxu0
  %v9858 = vadd.f32 %v9498, %v9857
  %v9859 = vpop.f32.mrf.mxu0
  %v9860 = vpop.f32.mrf.mxu0
  %v9861 = vadd.f32 %v9503, %v9860
  %v9862 = vpop.f32.mrf.mxu0
  %9863 = vmatprep.mubr.bf16.mxu0 0
  %9864 = vmatmul.mubr.bf16.gmra.mxu0 %v9735
  %v9865 = vpop.f32.mrf.mxu0
  %v9866 = vadd.f32 %v9508, %v9865
  %v9867 = vpop.f32.mrf.mxu0
  %v9868 = vpop.f32.mrf.mxu0
  %v9869 = vadd.f32 %v9513, %v9868
  %v9870 = vpop.f32.mrf.mxu0
  %9871 = vmatprep.mubr.bf16.mxu0 0
  %9872 = vmatmul.mubr.bf16.gmra.mxu0 %v9738
  %v9873 = vpop.f32.mrf.mxu0
  %v9874 = vadd.f32 %v9518, %v9873
  %v9875 = vpop.f32.mrf.mxu0
  %v9876 = vpop.f32.mrf.mxu0
  %v9877 = vadd.f32 %v9523, %v9876
  %v9878 = vpop.f32.mrf.mxu0
  %9879 = vmatprep.mubr.bf16.mxu0 0
  %9880 = vmatmul.mubr.bf16.gmra.mxu0 %v9741
  %v9881 = vpop.f32.mrf.mxu0
  %v9882 = vadd.f32 %v9528, %v9881
  %v9883 = vpop.f32.mrf.mxu0
  %v9884 = vpop.f32.mrf.mxu0
  %v9885 = vadd.f32 %v9533, %v9884
  %v9886 = vpop.f32.mrf.mxu0
  %9887 = vmatprep.mubr.bf16.mxu0 0
  %9888 = vmatmul.mubr.bf16.gmra.mxu0 %v9744
  %v9889 = vpop.f32.mrf.mxu0
  %v9890 = vadd.f32 %v9538, %v9889
  %v9891 = vpop.f32.mrf.mxu0
  %v9892 = vpop.f32.mrf.mxu0
  %v9893 = vadd.f32 %v9543, %v9892
  %v9894 = vpop.f32.mrf.mxu0
  %9895 = vmatprep.mubr.bf16.mxu0 0
  %9896 = vmatmul.mubr.bf16.gmra.mxu0 %v9747
  %v9897 = vpop.f32.mrf.mxu0
  %v9898 = vadd.f32 %v9548, %v9897
  %v9899 = vpop.f32.mrf.mxu0
  %v9900 = vpop.f32.mrf.mxu0
  %v9901 = vadd.f32 %v9553, %v9900
  %v9902 = vpop.f32.mrf.mxu0
  %9903 = vmatprep.mubr.bf16.mxu0 0
  %9904 = vmatmul.mubr.bf16.gmra.mxu0 %v9750
  %v9905 = vpop.f32.mrf.mxu0
  %v9906 = vadd.f32 %v9558, %v9905
  %v9907 = vpop.f32.mrf.mxu0
  %v9908 = vpop.f32.mrf.mxu0
  %v9909 = vadd.f32 %v9563, %v9908
  %v9910 = vpop.f32.mrf.mxu0
  %9911 = vmatprep.mubr.bf16.mxu0 0
  %9912 = vmatmul.mubr.bf16.gmra.mxu0 %v9753
  %v9913 = vpop.f32.mrf.mxu0
  %v9914 = vadd.f32 %v9568, %v9913
  %v9915 = vpop.f32.mrf.mxu0
  %v9916 = vpop.f32.mrf.mxu0
  %v9917 = vadd.f32 %v9573, %v9916
  %v9918 = vpop.f32.mrf.mxu0
  %9919 = vmatprep.mubr.bf16.mxu0 0
  %9920 = vmatmul.mubr.bf16.gmra.mxu0 %v9756
  %v9921 = vpop.f32.mrf.mxu0
  %v9922 = vadd.f32 %v9578, %v9921
  %v9923 = vpop.f32.mrf.mxu0
  %v9924 = vpop.f32.mrf.mxu0
  %v9925 = vadd.f32 %v9583, %v9924
  %v9926 = vpop.f32.mrf.mxu0
  %9927 = vmatprep.mubr.bf16.mxu0 0
  %9928 = vmatmul.mubr.bf16.gmra.mxu0 %v9759
  %v9929 = vpop.f32.mrf.mxu0
  %v9930 = vadd.f32 %v9588, %v9929
  %v9931 = vpop.f32.mrf.mxu0
  %v9932 = vpop.f32.mrf.mxu0
  %v9933 = vadd.f32 %v9593, %v9932
  %v9934 = vpop.f32.mrf.mxu0
  %9935 = vmatprep.mubr.bf16.mxu0 0
  %9936 = vmatmul.mubr.bf16.gmra.mxu0 %v9762
  %v9937 = vpop.f32.mrf.mxu0
  %v9938 = vadd.f32 %v9598, %v9937
  %v9939 = vpop.f32.mrf.mxu0
  %v9940 = vpop.f32.mrf.mxu0
  %v9941 = vadd.f32 %v9603, %v9940
  %v9942 = vpop.f32.mrf.mxu0
  %9943 = vmatprep.mubr.bf16.mxu0 0
  %9944 = vmatmul.mubr.bf16.gmra.mxu0 %v9765
  %v9945 = vpop.f32.mrf.mxu0
  %v9946 = vadd.f32 %v9608, %v9945
  %v9947 = vpop.f32.mrf.mxu0
  %v9948 = vpop.f32.mrf.mxu0
  %v9949 = vadd.f32 %v9613, %v9948
  %v9950 = vpop.f32.mrf.mxu0
  %9951 = vdwg.mxu0
  %9952 = vst.msk [vmem:[%s4] sm:$0xff] %vm1216, %v9802
  %9953 = vst.msk [vmem:[%s4 + $0x8] sm:$0xff] %vm1216, %v9805
  %9954 = vst.msk [vmem:[%s4 + $0x10] sm:$0xff] %vm1216, %v9810
  %9955 = vst.msk [vmem:[%s4 + $0x18] sm:$0xff] %vm1216, %v9813
  %9956 = vst.msk [vmem:[%s4 + $0x20] sm:$0xff] %vm1216, %v9818
  %9957 = vst.msk [vmem:[%s4 + $0x28] sm:$0xff] %vm1216, %v9821
  %9958 = vst.msk [vmem:[%s4 + $0x30] sm:$0xff] %vm1216, %v9826
  %9959 = vst.msk [vmem:[%s4 + $0x38] sm:$0xff] %vm1216, %v9829
  %9960 = vst.msk [vmem:[%s4 + $0x40] sm:$0xff] %vm1216, %v9834
  %9961 = vst.msk [vmem:[%s4 + $0x48] sm:$0xff] %vm1216, %v9837
  %9962 = vst.msk [vmem:[%s4 + $0x50] sm:$0xff] %vm1216, %v9842
  %9963 = vst.msk [vmem:[%s4 + $0x58] sm:$0xff] %vm1216, %v9845
  %9964 = vst.msk [vmem:[%s4 + $0x60] sm:$0xff] %vm1216, %v9850
  %9965 = vst.msk [vmem:[%s4 + $0x68] sm:$0xff] %vm1216, %v9853
  %9966 = vst.msk [vmem:[%s4 + $0x70] sm:$0xff] %vm1216, %v9858
  %9967 = vst.msk [vmem:[%s4 + $0x78] sm:$0xff] %vm1216, %v9861
  %9968 = vst.msk [vmem:[%s4 + $0x80] sm:$0xff] %vm1216, %v9866
  %9969 = vst.msk [vmem:[%s4 + $0x88] sm:$0xff] %vm1216, %v9869
  %9970 = vst.msk [vmem:[%s4 + $0x90] sm:$0xff] %vm1216, %v9874
  %9971 = vst.msk [vmem:[%s4 + $0x98] sm:$0xff] %vm1216, %v9877
  %9972 = vst.msk [vmem:[%s4 + $0xa0] sm:$0xff] %vm1216, %v9882
  %9973 = vst.msk [vmem:[%s4 + $0xa8] sm:$0xff] %vm1216, %v9885
  %9974 = vst.msk [vmem:[%s4 + $0xb0] sm:$0xff] %vm1216, %v9890
  %9975 = vst.msk [vmem:[%s4 + $0xb8] sm:$0xff] %vm1216, %v9893
  %9976 = vst.msk [vmem:[%s4 + $0xc0] sm:$0xff] %vm1216, %v9898
  %9977 = vst.msk [vmem:[%s4 + $0xc8] sm:$0xff] %vm1216, %v9901
  %9978 = vst.msk [vmem:[%s4 + $0xd0] sm:$0xff] %vm1216, %v9906
  %9979 = vst.msk [vmem:[%s4 + $0xd8] sm:$0xff] %vm1216, %v9909
  %9980 = vst.msk [vmem:[%s4 + $0xe0] sm:$0xff] %vm1216, %v9914
  %9981 = vst.msk [vmem:[%s4 + $0xe8] sm:$0xff] %vm1216, %v9917
  %9982 = vst.msk [vmem:[%s4 + $0xf0] sm:$0xff] %vm1216, %v9922
  %9983 = vst.msk [vmem:[%s4 + $0xf8] sm:$0xff] %vm1216, %v9925
  %9984 = vst.msk [vmem:[%s4 + $0x100] sm:$0xff] %vm1216, %v9930
  %9985 = vst.msk [vmem:[%s4 + $0x108] sm:$0xff] %vm1216, %v9933
  %9986 = vst.msk [vmem:[%s4 + $0x110] sm:$0xff] %vm1216, %v9938
  %9987 = vst.msk [vmem:[%s4 + $0x118] sm:$0xff] %vm1216, %v9941
  %9988 = vst.msk [vmem:[%s4 + $0x120] sm:$0xff] %vm1216, %v9946
  %9989 = vst.msk [vmem:[%s4 + $0x128] sm:$0xf] %vm1290, %v9949
  // Predicated region
  $region18: #{forward.1} parent=0 // pred_check
    _
  $region19: #{forward.1} parent=0 // pred_check_branch
    %9991 = sbr.rel (0) target = $region21
  $region20: #{forward.1} parent=0 // pred_region
    _
  $region21: #{forward.1} parent=0 // pred_fallthru
    _
  // Predicated region
  $region22: #{forward.1} parent=0 // pred_check
    _
  $region23: #{forward.1} parent=0 // pred_check_branch
    %9993 = sbr.rel (0) target = $region25
  $region24: #{forward.1} parent=0 // pred_region
    _
  $region25: #{forward.1} parent=0 // pred_fallthru
    _

</llo_original>
